<compile_context>
chip_gen: v7x
topology: tpu7x:2x2x1
jax: 0.10.0
libtpu: 0.0.40
codegen_flags: <defaults>
</compile_context>

<pallas_src>
import functools

import jax
import jax.numpy as jnp
from jax import lax
from jax.experimental import pallas as pl
from jax.experimental.pallas import tpu as pltpu

CPAD = 128  # every channel dim is carried padded to the 128-lane width


def _pad_last(x, target):
    pad = target - x.shape[-1]
    if pad == 0:
        return x
    cfg = [(0, 0)] * (x.ndim - 1) + [(0, pad)]
    return jnp.pad(x, cfg)


# ----------------------------------------------------------------------------
# Kernel A: fused ConvTranspose2d(2,2,s=2) -> one matmul producing all 4 taps
# ----------------------------------------------------------------------------
def _upconv_kernel(x_ref, w_ref, b_ref, o_ref):
    o_ref[...] = (jnp.dot(x_ref[...], w_ref[...], preferred_element_type=jnp.float32)
                  + b_ref[...]).astype(o_ref.dtype)


def upconv(x_flat, w_packed, b_packed):
    """x_flat: (N, H*W, CPAD); w_packed: (CPAD, 4*CPAD); b_packed: (1, 4*CPAD)."""
    N, HW, _ = x_flat.shape
    return pl.pallas_call(
        _upconv_kernel,
        out_shape=jax.ShapeDtypeStruct((N, HW, 4 * CPAD), jnp.float32),
        grid=(N,),
        in_specs=[
            pl.BlockSpec((None, HW, CPAD), lambda n: (n, 0, 0)),
            pl.BlockSpec((CPAD, 4 * CPAD), lambda n: (0, 0)),
            pl.BlockSpec((1, 4 * CPAD), lambda n: (0, 0)),
        ],
        out_specs=pl.BlockSpec((None, HW, 4 * CPAD), lambda n: (n, 0, 0)),
        compiler_params=pltpu.CompilerParams(dimension_semantics=("parallel",)),
    )(x_flat, w_packed, b_packed)


# ----------------------------------------------------------------------------
# Kernel B: fused [concat(up, skip) -> Conv3x3 valid -> ReLU -> Conv3x3 valid]
# Inputs are flattened NHWC planes (rows = H*W, row stride = W).  A shift
# s = i*W + j selects the (i, j) conv tap; invalid ("wrapped") rows land only in
# output rows the host never reads, so no masking is needed in the hot loop.
# ----------------------------------------------------------------------------
def _double_conv_kernel(up_ref, enc_ref, w1u_ref, w1e_ref, b1_ref, w2_ref, b2_ref,
                        o_ref, h1_ref, *, Wu, L1, L2):
    # conv1 over the (virtual) concat: accumulate the up- and skip-channel groups
    acc1 = jnp.zeros((L1, CPAD), jnp.float32)
    for i in range(3):
        for j in range(3):
            s = i * Wu + j
            t = i * 3 + j
            acc1 = acc1 + jnp.dot(up_ref[pl.ds(s, L1), :], w1u_ref[t],
                                  preferred_element_type=jnp.float32)
            acc1 = acc1 + jnp.dot(enc_ref[pl.ds(s, L1), :], w1e_ref[t],
                                  preferred_element_type=jnp.float32)
    h1_ref[...] = jnp.maximum(acc1 + b1_ref[...], 0.0)     # conv1 + bias + ReLU (VMEM)

    # conv2 on the VMEM-resident conv1 activations (same row stride Wu)
    acc2 = jnp.zeros((L2, CPAD), jnp.float32)
    for i in range(3):
        for j in range(3):
            s = i * Wu + j
            t = i * 3 + j
            acc2 = acc2 + jnp.dot(h1_ref[pl.ds(s, L2), :], w2_ref[t],
                                  preferred_element_type=jnp.float32)
    o_ref[...] = jnp.zeros_like(o_ref)
    o_ref[pl.ds(0, L2), :] = (acc2 + b2_ref[...]).astype(o_ref.dtype)


def double_conv(up_flat, enc_flat, w1u, w1e, b1, w2, b2, Hu, Wu):
    """up_flat/enc_flat: (N, Hu*Wu, CPAD). Returns flat (N, Hu*Wu, CPAD); valid conv2
    outputs live at flat rows oh*Wu + ow for oh < Hu-4, ow < Wu-4."""
    N, HW, _ = up_flat.shape
    S = 2 * Wu + 2                 # maximum tap shift
    L1 = HW - S                    # rows computed for conv1
    L2 = HW - 2 * S                # rows computed for conv2
    kernel = functools.partial(_double_conv_kernel, Wu=Wu, L1=L1, L2=L2)
    return pl.pallas_call(
        kernel,
        out_shape=jax.ShapeDtypeStruct((N, HW, CPAD), jnp.float32),
        grid=(N,),
        in_specs=[
            pl.BlockSpec((None, HW, CPAD), lambda n: (n, 0, 0)),
            pl.BlockSpec((None, HW, CPAD), lambda n: (n, 0, 0)),
            pl.BlockSpec((9, CPAD, CPAD), lambda n: (0, 0, 0)),
            pl.BlockSpec((9, CPAD, CPAD), lambda n: (0, 0, 0)),
            pl.BlockSpec((1, CPAD), lambda n: (0, 0)),
            pl.BlockSpec((9, CPAD, CPAD), lambda n: (0, 0, 0)),
            pl.BlockSpec((1, CPAD), lambda n: (0, 0)),
        ],
        out_specs=pl.BlockSpec((None, HW, CPAD), lambda n: (n, 0, 0)),
        scratch_shapes=[pltpu.VMEM((L1, CPAD), jnp.float32)],
        compiler_params=pltpu.CompilerParams(dimension_semantics=("parallel",)),
    )(up_flat, enc_flat, w1u, w1e, b1, w2, b2)


# ----------------------------------------------------------------------------
# One-time weight packing (torch layout -> padded, MXU-ready matrices)
# ----------------------------------------------------------------------------
def _pack_conv3(w_oihw):
    a = jnp.transpose(w_oihw, (2, 3, 1, 0))                      # (3,3,Ci,Co)
    a = jnp.pad(a, ((0, 0), (0, 0),
                    (0, CPAD - a.shape[2]), (0, CPAD - a.shape[3])))
    return a.reshape(9, CPAD, CPAD)                              # tap t = i*3 + j


def pack_params(params, channels=(64, 32, 16)):
    packed = []
    for idx in range(len(channels) - 1):
        p = params[idx]
        cin, cout = channels[idx], channels[idx + 1]
        # ConvTranspose2d weight [Cin, Cout, 2, 2] -> [CPAD, 4*CPAD], col = t*CPAD + co
        wt = jnp.transpose(p["up_w"], (2, 3, 0, 1))              # (2,2,Cin,Cout)
        wt = jnp.pad(wt, ((0, 0), (0, 0), (0, CPAD - cin), (0, CPAD - cout)))
        up_w = jnp.transpose(wt, (2, 0, 1, 3)).reshape(CPAD, 4 * CPAD)
        up_b = jnp.tile(jnp.pad(p["up_b"], (0, CPAD - cout)), 4).reshape(1, 4 * CPAD)
        # conv1: split K into (up, skip) channel groups (torch cat order: [up, skip])
        cu = cout
        c1u = _pack_conv3(p["c1_w"][:, :cu, :, :])
        c1e = _pack_conv3(p["c1_w"][:, cu:, :, :])
        c1b = jnp.pad(p["c1_b"], (0, CPAD - cout)).reshape(1, CPAD)
        c2 = _pack_conv3(p["c2_w"])
        c2b = jnp.pad(p["c2_b"], (0, CPAD - cout)).reshape(1, CPAD)
        packed.append(dict(up_w=up_w, up_b=up_b, c1u=c1u, c1e=c1e, c1b=c1b,
                           c2=c2, c2b=c2b))
    return packed


# ----------------------------------------------------------------------------
# Decoder forward (packed params)
# ----------------------------------------------------------------------------
def decoder_forward(packed, x_nchw, enc_feats_nchw, channels=(64, 32, 16)):
    x = _pad_last(jnp.transpose(x_nchw, (0, 2, 3, 1)), CPAD)          # NCHW -> NHWC, pad once
    encs = [_pad_last(jnp.transpose(e, (0, 2, 3, 1)), CPAD) for e in enc_feats_nchw]
    for idx in range(len(channels) - 1):
        p = packed[idx]
        N, H, W, _ = x.shape
        # UpBlock: single fused 4-tap matmul, then pixel shuffle (cheap XLA transpose)
        taps = upconv(x.reshape(N, H * W, CPAD), p["up_w"], p["up_b"])
        Hu, Wu = 2 * H, 2 * W
        up = taps.reshape(N, H, W, 2, 2, CPAD).transpose(0, 1, 3, 2, 4, 5)
        up = up.reshape(N, Hu, Wu, CPAD)
        # center-crop skip (torchvision CenterCrop semantics)
        enc = encs[idx]
        top = int(round((enc.shape[1] - Hu) / 2.0))
        left = int(round((enc.shape[2] - Wu) / 2.0))
        enc = enc[:, top:top + Hu, left:left + Wu, :]
        # fused concat + conv3x3 + ReLU + conv3x3 (one kernel, VMEM-resident)
        out_flat = double_conv(up.reshape(N, Hu * Wu, CPAD),
                               enc.reshape(N, Hu * Wu, CPAD),
                               p["c1u"], p["c1e"], p["c1b"], p["c2"], p["c2b"], Hu, Wu)
        x = out_flat.reshape(N, Hu, Wu, CPAD)[:, :Hu - 4, :Wu - 4, :]
    x = x[..., :channels[-1]]
    return jnp.transpose(x, (0, 3, 1, 2))                             # NHWC -> NCHW


def init_params(key, channels=(64, 32, 16)):
    params = []
    for idx in range(len(channels) - 1):
        cin, cout = channels[idx], channels[idx + 1]
        key, *ks = jax.random.split(key, 7)
        params.append(dict(
            up_w=0.1 * jax.random.normal(ks[0], (cin, cout, 2, 2), jnp.float32),
            up_b=0.1 * jax.random.normal(ks[1], (cout,), jnp.float32),
            c1_w=0.1 * jax.random.normal(ks[2], (cout, cin, 3, 3), jnp.float32),
            c1_b=0.1 * jax.random.normal(ks[3], (cout,), jnp.float32),
            c2_w=0.1 * jax.random.normal(ks[4], (cout, cout, 3, 3), jnp.float32),
            c2_b=0.1 * jax.random.normal(ks[5], (cout,), jnp.float32),
        ))
    return params


# ----------------------------------------------------------------------------
# Pure-JAX reference (PyTorch semantics, NCHW)
# ----------------------------------------------------------------------------
def _ref_conv_transpose(x, w, b):
    y = jnp.einsum("nchw,cokl->nohkwl", x, w)
    N, Cout, H, _, W, _ = y.shape
    return y.reshape(N, Cout, 2 * H, 2 * W) + b[None, :, None, None]


def _ref_conv2d(x, w, b):
    dn = lax.conv_dimension_numbers(x.shape, w.shape, ("NCHW", "OIHW", "NCHW"))
    return lax.conv_general_dilated(x, w, (1, 1), "VALID", dimension_numbers=dn) \
        + b[None, :, None, None]


def ref_decoder(params, x, enc_feats, channels):
    for idx in range(len(channels) - 1):
        p = params[idx]
        x = _ref_conv_transpose(x, p["up_w"], p["up_b"])
        _, _, H, W = x.shape
        enc = enc_feats[idx]
        _, _, Hin, Win = enc.shape
        top = int(round((Hin - H) / 2.0))
        left = int(round((Win - W) / 2.0))
        enc = enc[:, :, top:top + H, left:left + W]
        x = jnp.concatenate([x, enc], axis=1)
        x = jnp.maximum(_ref_conv2d(x, p["c1_w"], p["c1_b"]), 0.0)
        x = _ref_conv2d(x, p["c2_w"], p["c2_b"])
    return x


if __name__ == "__main__":
    channels = (64, 32, 16)
    key = jax.random.PRNGKey(0)
    kp, kx, k0, k1 = jax.random.split(key, 4)

    params = init_params(kp, channels)
    packed = pack_params(params, channels)

    x = jax.random.normal(kx, (2, 64, 4, 4), jnp.float32)               # bottleneck features
    enc_feats = [jax.random.normal(k0, (2, 32, 10, 10), jnp.float32),   # skip for stage 0
                 jax.random.normal(k1, (2, 16, 12, 12), jnp.float32)]   # skip for stage 1

    fwd = jax.jit(functools.partial(decoder_forward, channels=channels))
    out = jax.block_until_ready(fwd(packed, x, enc_feats))

    ref = ref_decoder(params, x, enc_feats, channels)
    assert out.shape == (2, 16, 4, 4), out.shape
    err = float(jnp.max(jnp.abs(out - ref)))
    assert jnp.allclose(out, ref, atol=1e-3, rtol=1e-3), err
    print("KERNEL_OK")
</pallas_src>

<mosaic_0001>
module attributes {stable_mosaic.version = 11 : i64} {
  func.func @_upconv_kernel(%arg0: i32, %arg1: memref<1x16x128xf32, #tpu.memory_space<vmem>>, %arg2: memref<128x512xf32, #tpu.memory_space<vmem>>, %arg3: memref<1x512xf32, #tpu.memory_space<vmem>>, %arg4: memref<1x16x512xf32, #tpu.memory_space<vmem>>) attributes {dimension_semantics = [#tpu.dimension_semantics<parallel>], iteration_bounds = array<i64: 2>, scalar_prefetch = 0 : i64, scratch_operands = 0 : i64, tpu.core_type = #tpu.core_type<tc>, window_params = [{transform_indices = @transform_0, window_bounds = array<i64: 1, 16, 128>}, {pipeline_mode = #tpu.pipeline_mode<synchronous>, transform_indices = @transform_1, window_bounds = array<i64: 128, 512>}, {pipeline_mode = #tpu.pipeline_mode<synchronous>, transform_indices = @transform_2, window_bounds = array<i64: 1, 512>}, {transform_indices = @transform_3, window_bounds = array<i64: 1, 16, 512>}]} {
    %c0 = arith.constant 0 : index
    %c0_0 = arith.constant 0 : index
    %c0_1 = arith.constant 0 : index
    %0 = vector.load %arg1[%c0, %c0_0, %c0_1] : memref<1x16x128xf32, #tpu.memory_space<vmem>>, vector<1x16x128xf32>
    %1 = vector.shape_cast %0 : vector<1x16x128xf32> to vector<16x128xf32>
    %c0_2 = arith.constant 0 : index
    %c0_3 = arith.constant 0 : index
    %2 = vector.load %arg2[%c0_2, %c0_3] : memref<128x512xf32, #tpu.memory_space<vmem>>, vector<128x512xf32>
    %cst = arith.constant dense<0.000000e+00> : vector<16x512xf32>
    %3 = tpu.matmul %1, %2, %cst {dimension_numbers = #tpu.dot_dimension_numbers<[1], [0], [0], [1], [0, 0, 1, 1], [], []>} : vector<16x128xf32>, vector<128x512xf32>, vector<16x512xf32> -> vector<16x512xf32>
    %c0_4 = arith.constant 0 : index
    %c0_5 = arith.constant 0 : index
    %4 = vector.load %arg3[%c0_4, %c0_5] : memref<1x512xf32, #tpu.memory_space<vmem>>, vector<1x512xf32>
    %5 = vector.broadcast %4 : vector<1x512xf32> to vector<16x512xf32>
    %6 = arith.addf %3, %5 : vector<16x512xf32>
    %c0_6 = arith.constant 0 : index
    %c0_7 = arith.constant 0 : index
    %c0_8 = arith.constant 0 : index
    %7 = vector.load %arg4[%c0_6, %c0_7, %c0_8] : memref<1x16x512xf32, #tpu.memory_space<vmem>>, vector<1x16x512xf32>
    %8 = vector.shape_cast %7 : vector<1x16x512xf32> to vector<16x512xf32>
    %9 = vector.shape_cast %6 : vector<16x512xf32> to vector<1x16x512xf32>
    tpu.vector_store %arg4[%c0_6, %c0_7, %c0_8], %9 {strides = array<i32>} : memref<1x16x512xf32, #tpu.memory_space<vmem>>, vector<1x16x512xf32>,
    return
  }
  func.func @transform_0(%arg0: i32) -> (i32, i32, i32) {
    %c0_i32 = arith.constant 0 : i32
    %c0_i32_0 = arith.constant 0 : i32
    %c0_i32_1 = arith.constant 0 : i32
    return %arg0, %c0_i32, %c0_i32_0 : i32, i32, i32
  }
  func.func @transform_1(%arg0: i32) -> (i32, i32) {
    %c0_i32 = arith.constant 0 : i32
    %c0_i32_0 = arith.constant 0 : i32
    %c0_i32_1 = arith.constant 0 : i32
    return %c0_i32, %c0_i32_0 : i32, i32
  }
  func.func @transform_2(%arg0: i32) -> (i32, i32) {
    %c0_i32 = arith.constant 0 : i32
    %c0_i32_0 = arith.constant 0 : i32
    %c0_i32_1 = arith.constant 0 : i32
    return %c0_i32, %c0_i32_0 : i32, i32
  }
  func.func @transform_3(%arg0: i32) -> (i32, i32, i32) {
    %c0_i32 = arith.constant 0 : i32
    %c0_i32_0 = arith.constant 0 : i32
    %c0_i32_1 = arith.constant 0 : i32
    return %arg0, %c0_i32, %c0_i32_0 : i32, i32, i32
  }
}

module attributes {stable_mosaic.version = 11 : i64} {
  func.func @_double_conv_kernel(%arg0: i32, %arg1: memref<1x64x128xf32, #tpu.memory_space<vmem>>, %arg2: memref<1x64x128xf32, #tpu.memory_space<vmem>>, %arg3: memref<9x128x128xf32, #tpu.memory_space<vmem>>, %arg4: memref<9x128x128xf32, #tpu.memory_space<vmem>>, %arg5: memref<1x128xf32, #tpu.memory_space<vmem>>, %arg6: memref<9x128x128xf32, #tpu.memory_space<vmem>>, %arg7: memref<1x128xf32, #tpu.memory_space<vmem>>, %arg8: memref<1x64x128xf32, #tpu.memory_space<vmem>>, %arg9: memref<46x128xf32, #tpu.memory_space<vmem>>) attributes {dimension_semantics = [#tpu.dimension_semantics<parallel>], iteration_bounds = array<i64: 2>, scalar_prefetch = 0 : i64, scratch_operands = 1 : i64, tpu.core_type = #tpu.core_type<tc>, window_params = [{transform_indices = @transform_0, window_bounds = array<i64: 1, 64, 128>}, {transform_indices = @transform_1, window_bounds = array<i64: 1, 64, 128>}, {pipeline_mode = #tpu.pipeline_mode<synchronous>, transform_indices = @transform_2, window_bounds = array<i64: 9, 128, 128>}, {pipeline_mode = #tpu.pipeline_mode<synchronous>, transform_indices = @transform_3, window_bounds = array<i64: 9, 128, 128>}, {pipeline_mode = #tpu.pipeline_mode<synchronous>, transform_indices = @transform_4, window_bounds = array<i64: 1, 128>}, {pipeline_mode = #tpu.pipeline_mode<synchronous>, transform_indices = @transform_5, window_bounds = array<i64: 9, 128, 128>}, {pipeline_mode = #tpu.pipeline_mode<synchronous>, transform_indices = @transform_6, window_bounds = array<i64: 1, 128>}, {transform_indices = @transform_7, window_bounds = array<i64: 1, 64, 128>}]} {
    %cst = arith.constant 0.000000e+00 : f32
    %0 = vector.broadcast %cst : f32 to vector<46x128xf32>
    %c0 = arith.constant 0 : index
    %c0_0 = arith.constant 0 : index
    %c0_1 = arith.constant 0 : index
    %1 = vector.load %arg1[%c0, %c0_0, %c0_1] : memref<1x64x128xf32, #tpu.memory_space<vmem>>, vector<1x46x128xf32>
    %2 = vector.shape_cast %1 : vector<1x46x128xf32> to vector<46x128xf32>
    %c0_2 = arith.constant 0 : index
    %c0_3 = arith.constant 0 : index
    %c0_4 = arith.constant 0 : index
    %3 = vector.load %arg3[%c0_2, %c0_3, %c0_4] : memref<9x128x128xf32, #tpu.memory_space<vmem>>, vector<1x128x128xf32>
    %4 = vector.shape_cast %3 : vector<1x128x128xf32> to vector<128x128xf32>
    %cst_5 = arith.constant dense<0.000000e+00> : vector<46x128xf32>
    %5 = tpu.matmul %2, %4, %cst_5 {dimension_numbers = #tpu.dot_dimension_numbers<[1], [0], [0], [1], [0, 0, 1, 1], [], []>} : vector<46x128xf32>, vector<128x128xf32>, vector<46x128xf32> -> vector<46x128xf32>
    %6 = arith.addf %0, %5 : vector<46x128xf32>
    %c0_6 = arith.constant 0 : index
    %c0_7 = arith.constant 0 : index
    %c0_8 = arith.constant 0 : index
    %7 = vector.load %arg2[%c0_6, %c0_7, %c0_8] : memref<1x64x128xf32, #tpu.memory_space<vmem>>, vector<1x46x128xf32>
    %8 = vector.shape_cast %7 : vector<1x46x128xf32> to vector<46x128xf32>
    %c0_9 = arith.constant 0 : index
    %c0_10 = arith.constant 0 : index
    %c0_11 = arith.constant 0 : index
    %9 = vector.load %arg4[%c0_9, %c0_10, %c0_11] : memref<9x128x128xf32, #tpu.memory_space<vmem>>, vector<1x128x128xf32>
    %10 = vector.shape_cast %9 : vector<1x128x128xf32> to vector<128x128xf32>
    %cst_12 = arith.constant dense<0.000000e+00> : vector<46x128xf32>
    %11 = tpu.matmul %8, %10, %cst_12 {dimension_numbers = #tpu.dot_dimension_numbers<[1], [0], [0], [1], [0, 0, 1, 1], [], []>} : vector<46x128xf32>, vector<128x128xf32>, vector<46x128xf32> -> vector<46x128xf32>
    %12 = arith.addf %6, %11 : vector<46x128xf32>
    %c0_13 = arith.constant 0 : index
    %c1 = arith.constant 1 : index
    %c0_14 = arith.constant 0 : index
    %13 = vector.load %arg1[%c0_13, %c1, %c0_14] : memref<1x64x128xf32, #tpu.memory_space<vmem>>, vector<1x46x128xf32>
    %14 = vector.shape_cast %13 : vector<1x46x128xf32> to vector<46x128xf32>
    %c1_15 = arith.constant 1 : index
    %c0_16 = arith.constant 0 : index
    %c0_17 = arith.constant 0 : index
    %15 = vector.load %arg3[%c1_15, %c0_16, %c0_17] : memref<9x128x128xf32, #tpu.memory_space<vmem>>, vector<1x128x128xf32>
    %16 = vector.shape_cast %15 : vector<1x128x128xf32> to vector<128x128xf32>
    %cst_18 = arith.constant dense<0.000000e+00> : vector<46x128xf32>
    %17 = tpu.matmul %14, %16, %cst_18 {dimension_numbers = #tpu.dot_dimension_numbers<[1], [0], [0], [1], [0, 0, 1, 1], [], []>} : vector<46x128xf32>, vector<128x128xf32>, vector<46x128xf32> -> vector<46x128xf32>
    %18 = arith.addf %12, %17 : vector<46x128xf32>
    %c0_19 = arith.constant 0 : index
    %c1_20 = arith.constant 1 : index
    %c0_21 = arith.constant 0 : index
    %19 = vector.load %arg2[%c0_19, %c1_20, %c0_21] : memref<1x64x128xf32, #tpu.memory_space<vmem>>, vector<1x46x128xf32>
    %20 = vector.shape_cast %19 : vector<1x46x128xf32> to vector<46x128xf32>
    %c1_22 = arith.constant 1 : index
    %c0_23 = arith.constant 0 : index
    %c0_24 = arith.constant 0 : index
    %21 = vector.load %arg4[%c1_22, %c0_23, %c0_24] : memref<9x128x128xf32, #tpu.memory_space<vmem>>, vector<1x128x128xf32>
    %22 = vector.shape_cast %21 : vector<1x128x128xf32> to vector<128x128xf32>
    %cst_25 = arith.constant dense<0.000000e+00> : vector<46x128xf32>
    %23 = tpu.matmul %20, %22, %cst_25 {dimension_numbers = #tpu.dot_dimension_numbers<[1], [0], [0], [1], [0, 0, 1, 1], [], []>} : vector<46x128xf32>, vector<128x128xf32>, vector<46x128xf32> -> vector<46x128xf32>
    %24 = arith.addf %18, %23 : vector<46x128xf32>
    %c0_26 = arith.constant 0 : index
    %c2 = arith.constant 2 : index
    %c0_27 = arith.constant 0 : index
    %25 = vector.load %arg1[%c0_26, %c2, %c0_27] : memref<1x64x128xf32, #tpu.memory_space<vmem>>, vector<1x46x128xf32>
    %26 = vector.shape_cast %25 : vector<1x46x128xf32> to vector<46x128xf32>
    %c2_28 = arith.constant 2 : index
    %c0_29 = arith.constant 0 : index
    %c0_30 = arith.constant 0 : index
    %27 = vector.load %arg3[%c2_28, %c0_29, %c0_30] : memref<9x128x128xf32, #tpu.memory_space<vmem>>, vector<1x128x128xf32>
    %28 = vector.shape_cast %27 : vector<1x128x128xf32> to vector<128x128xf32>
    %cst_31 = arith.constant dense<0.000000e+00> : vector<46x128xf32>
    %29 = tpu.matmul %26, %28, %cst_31 {dimension_numbers = #tpu.dot_dimension_numbers<[1], [0], [0], [1], [0, 0, 1, 1], [], []>} : vector<46x128xf32>, vector<128x128xf32>, vector<46x128xf32> -> vector<46x128xf32>
    %30 = arith.addf %24, %29 : vector<46x128xf32>
    %c0_32 = arith.constant 0 : index
    %c2_33 = arith.constant 2 : index
    %c0_34 = arith.constant 0 : index
    %31 = vector.load %arg2[%c0_32, %c2_33, %c0_34] : memref<1x64x128xf32, #tpu.memory_space<vmem>>, vector<1x46x128xf32>
    %32 = vector.shape_cast %31 : vector<1x46x128xf32> to vector<46x128xf32>
    %c2_35 = arith.constant 2 : index
    %c0_36 = arith.constant 0 : index
    %c0_37 = arith.constant 0 : index
    %33 = vector.load %arg4[%c2_35, %c0_36, %c0_37] : memref<9x128x128xf32, #tpu.memory_space<vmem>>, vector<1x128x128xf32>
    %34 = vector.shape_cast %33 : vector<1x128x128xf32> to vector<128x128xf32>
    %cst_38 = arith.constant dense<0.000000e+00> : vector<46x128xf32>
    %35 = tpu.matmul %32, %34, %cst_38 {dimension_numbers = #tpu.dot_dimension_numbers<[1], [0], [0], [1], [0, 0, 1, 1], [], []>} : vector<46x128xf32>, vector<128x128xf32>, vector<46x128xf32> -> vector<46x128xf32>
    %36 = arith.addf %30, %35 : vector<46x128xf32>
    %c0_39 = arith.constant 0 : index
    %c8 = arith.constant 8 : index
    %c0_40 = arith.constant 0 : index
    %37 = vector.load %arg1[%c0_39, %c8, %c0_40] : memref<1x64x128xf32, #tpu.memory_space<vmem>>, vector<1x46x128xf32>
    %38 = vector.shape_cast %37 : vector<1x46x128xf32> to vector<46x128xf32>
    %c3 = arith.constant 3 : index
    %c0_41 = arith.constant 0 : index
    %c0_42 = arith.constant 0 : index
    %39 = vector.load %arg3[%c3, %c0_41, %c0_42] : memref<9x128x128xf32, #tpu.memory_space<vmem>>, vector<1x128x128xf32>
    %40 = vector.shape_cast %39 : vector<1x128x128xf32> to vector<128x128xf32>
    %cst_43 = arith.constant dense<0.000000e+00> : vector<46x128xf32>
    %41 = tpu.matmul %38, %40, %cst_43 {dimension_numbers = #tpu.dot_dimension_numbers<[1], [0], [0], [1], [0, 0, 1, 1], [], []>} : vector<46x128xf32>, vector<128x128xf32>, vector<46x128xf32> -> vector<46x128xf32>
    %42 = arith.addf %36, %41 : vector<46x128xf32>
    %c0_44 = arith.constant 0 : index
    %c8_45 = arith.constant 8 : index
    %c0_46 = arith.constant 0 : index
    %43 = vector.load %arg2[%c0_44, %c8_45, %c0_46] : memref<1x64x128xf32, #tpu.memory_space<vmem>>, vector<1x46x128xf32>
    %44 = vector.shape_cast %43 : vector<1x46x128xf32> to vector<46x128xf32>
    %c3_47 = arith.constant 3 : index
    %c0_48 = arith.constant 0 : index
    %c0_49 = arith.constant 0 : index
    %45 = vector.load %arg4[%c3_47, %c0_48, %c0_49] : memref<9x128x128xf32, #tpu.memory_space<vmem>>, vector<1x128x128xf32>
    %46 = vector.shape_cast %45 : vector<1x128x128xf32> to vector<128x128xf32>
    %cst_50 = arith.constant dense<0.000000e+00> : vector<46x128xf32>
    %47 = tpu.matmul %44, %46, %cst_50 {dimension_numbers = #tpu.dot_dimension_numbers<[1], [0], [0], [1], [0, 0, 1, 1], [], []>} : vector<46x128xf32>, vector<128x128xf32>, vector<46x128xf32> -> vector<46x128xf32>
    %48 = arith.addf %42, %47 : vector<46x128xf32>
    %c0_51 = arith.constant 0 : index
    %c9 = arith.constant 9 : index
    %c0_52 = arith.constant 0 : index
    %49 = vector.load %arg1[%c0_51, %c9, %c0_52] : memref<1x64x128xf32, #tpu.memory_space<vmem>>, vector<1x46x128xf32>
    %50 = vector.shape_cast %49 : vector<1x46x128xf32> to vector<46x128xf32>
    %c4 = arith.constant 4 : index
    %c0_53 = arith.constant 0 : index
    %c0_54 = arith.constant 0 : index
    %51 = vector.load %arg3[%c4, %c0_53, %c0_54] : memref<9x128x128xf32, #tpu.memory_space<vmem>>, vector<1x128x128xf32>
    %52 = vector.shape_cast %51 : vector<1x128x128xf32> to vector<128x128xf32>
    %cst_55 = arith.constant dense<0.000000e+00> : vector<46x128xf32>
    %53 = tpu.matmul %50, %52, %cst_55 {dimension_numbers = #tpu.dot_dimension_numbers<[1], [0], [0], [1], [0, 0, 1, 1], [], []>} : vector<46x128xf32>, vector<128x128xf32>, vector<46x128xf32> -> vector<46x128xf32>
    %54 = arith.addf %48, %53 : vector<46x128xf32>
    %c0_56 = arith.constant 0 : index
    %c9_57 = arith.constant 9 : index
    %c0_58 = arith.constant 0 : index
    %55 = vector.load %arg2[%c0_56, %c9_57, %c0_58] : memref<1x64x128xf32, #tpu.memory_space<vmem>>, vector<1x46x128xf32>
    %56 = vector.shape_cast %55 : vector<1x46x128xf32> to vector<46x128xf32>
    %c4_59 = arith.constant 4 : index
    %c0_60 = arith.constant 0 : index
    %c0_61 = arith.constant 0 : index
    %57 = vector.load %arg4[%c4_59, %c0_60, %c0_61] : memref<9x128x128xf32, #tpu.memory_space<vmem>>, vector<1x128x128xf32>
    %58 = vector.shape_cast %57 : vector<1x128x128xf32> to vector<128x128xf32>
    %cst_62 = arith.constant dense<0.000000e+00> : vector<46x128xf32>
    %59 = tpu.matmul %56, %58, %cst_62 {dimension_numbers = #tpu.dot_dimension_numbers<[1], [0], [0], [1], [0, 0, 1, 1], [], []>} : vector<46x128xf32>, vector<128x128xf32>, vector<46x128xf32> -> vector<46x128xf32>
    %60 = arith.addf %54, %59 : vector<46x128xf32>
    %c0_63 = arith.constant 0 : index
    %c10 = arith.constant 10 : index
    %c0_64 = arith.constant 0 : index
    %61 = vector.load %arg1[%c0_63, %c10, %c0_64] : memref<1x64x128xf32, #tpu.memory_space<vmem>>, vector<1x46x128xf32>
    %62 = vector.shape_cast %61 : vector<1x46x128xf32> to vector<46x128xf32>
    %c5 = arith.constant 5 : index
    %c0_65 = arith.constant 0 : index
    %c0_66 = arith.constant 0 : index
    %63 = vector.load %arg3[%c5, %c0_65, %c0_66] : memref<9x128x128xf32, #tpu.memory_space<vmem>>, vector<1x128x128xf32>
    %64 = vector.shape_cast %63 : vector<1x128x128xf32> to vector<128x128xf32>
    %cst_67 = arith.constant dense<0.000000e+00> : vector<46x128xf32>
    %65 = tpu.matmul %62, %64, %cst_67 {dimension_numbers = #tpu.dot_dimension_numbers<[1], [0], [0], [1], [0, 0, 1, 1], [], []>} : vector<46x128xf32>, vector<128x128xf32>, vector<46x128xf32> -> vector<46x128xf32>
    %66 = arith.addf %60, %65 : vector<46x128xf32>
    %c0_68 = arith.constant 0 : index
    %c10_69 = arith.constant 10 : index
    %c0_70 = arith.constant 0 : index
    %67 = vector.load %arg2[%c0_68, %c10_69, %c0_70] : memref<1x64x128xf32, #tpu.memory_space<vmem>>, vector<1x46x128xf32>
    %68 = vector.shape_cast %67 : vector<1x46x128xf32> to vector<46x128xf32>
    %c5_71 = arith.constant 5 : index
    %c0_72 = arith.constant 0 : index
    %c0_73 = arith.constant 0 : index
    %69 = vector.load %arg4[%c5_71, %c0_72, %c0_73] : memref<9x128x128xf32, #tpu.memory_space<vmem>>, vector<1x128x128xf32>
    %70 = vector.shape_cast %69 : vector<1x128x128xf32> to vector<128x128xf32>
    %cst_74 = arith.constant dense<0.000000e+00> : vector<46x128xf32>
    %71 = tpu.matmul %68, %70, %cst_74 {dimension_numbers = #tpu.dot_dimension_numbers<[1], [0], [0], [1], [0, 0, 1, 1], [], []>} : vector<46x128xf32>, vector<128x128xf32>, vector<46x128xf32> -> vector<46x128xf32>
    %72 = arith.addf %66, %71 : vector<46x128xf32>
    %c0_75 = arith.constant 0 : index
    %c16 = arith.constant 16 : index
    %c0_76 = arith.constant 0 : index
    %73 = vector.load %arg1[%c0_75, %c16, %c0_76] : memref<1x64x128xf32, #tpu.memory_space<vmem>>, vector<1x46x128xf32>
    %74 = vector.shape_cast %73 : vector<1x46x128xf32> to vector<46x128xf32>
    %c6 = arith.constant 6 : index
    %c0_77 = arith.constant 0 : index
    %c0_78 = arith.constant 0 : index
    %75 = vector.load %arg3[%c6, %c0_77, %c0_78] : memref<9x128x128xf32, #tpu.memory_space<vmem>>, vector<1x128x128xf32>
    %76 = vector.shape_cast %75 : vector<1x128x128xf32> to vector<128x128xf32>
    %cst_79 = arith.constant dense<0.000000e+00> : vector<46x128xf32>
    %77 = tpu.matmul %74, %76, %cst_79 {dimension_numbers = #tpu.dot_dimension_numbers<[1], [0], [0], [1], [0, 0, 1, 1], [], []>} : vector<46x128xf32>, vector<128x128xf32>, vector<46x128xf32> -> vector<46x128xf32>
    %78 = arith.addf %72, %77 : vector<46x128xf32>
    %c0_80 = arith.constant 0 : index
    %c16_81 = arith.constant 16 : index
    %c0_82 = arith.constant 0 : index
    %79 = vector.load %arg2[%c0_80, %c16_81, %c0_82] : memref<1x64x128xf32, #tpu.memory_space<vmem>>, vector<1x46x128xf32>
    %80 = vector.shape_cast %79 : vector<1x46x128xf32> to vector<46x128xf32>
    %c6_83 = arith.constant 6 : index
    %c0_84 = arith.constant 0 : index
    %c0_85 = arith.constant 0 : index
    %81 = vector.load %arg4[%c6_83, %c0_84, %c0_85] : memref<9x128x128xf32, #tpu.memory_space<vmem>>, vector<1x128x128xf32>
    %82 = vector.shape_cast %81 : vector<1x128x128xf32> to vector<128x128xf32>
    %cst_86 = arith.constant dense<0.000000e+00> : vector<46x128xf32>
    %83 = tpu.matmul %80, %82, %cst_86 {dimension_numbers = #tpu.dot_dimension_numbers<[1], [0], [0], [1], [0, 0, 1, 1], [], []>} : vector<46x128xf32>, vector<128x128xf32>, vector<46x128xf32> -> vector<46x128xf32>
    %84 = arith.addf %78, %83 : vector<46x128xf32>
    %c0_87 = arith.constant 0 : index
    %c17 = arith.constant 17 : index
    %c0_88 = arith.constant 0 : index
    %85 = vector.load %arg1[%c0_87, %c17, %c0_88] : memref<1x64x128xf32, #tpu.memory_space<vmem>>, vector<1x46x128xf32>
    %86 = vector.shape_cast %85 : vector<1x46x128xf32> to vector<46x128xf32>
    %c7 = arith.constant 7 : index
    %c0_89 = arith.constant 0 : index
    %c0_90 = arith.constant 0 : index
    %87 = vector.load %arg3[%c7, %c0_89, %c0_90] : memref<9x128x128xf32, #tpu.memory_space<vmem>>, vector<1x128x128xf32>
    %88 = vector.shape_cast %87 : vector<1x128x128xf32> to vector<128x128xf32>
    %cst_91 = arith.constant dense<0.000000e+00> : vector<46x128xf32>
    %89 = tpu.matmul %86, %88, %cst_91 {dimension_numbers = #tpu.dot_dimension_numbers<[1], [0], [0], [1], [0, 0, 1, 1], [], []>} : vector<46x128xf32>, vector<128x128xf32>, vector<46x128xf32> -> vector<46x128xf32>
    %90 = arith.addf %84, %89 : vector<46x128xf32>
    %c0_92 = arith.constant 0 : index
    %c17_93 = arith.constant 17 : index
    %c0_94 = arith.constant 0 : index
    %91 = vector.load %arg2[%c0_92, %c17_93, %c0_94] : memref<1x64x128xf32, #tpu.memory_space<vmem>>, vector<1x46x128xf32>
    %92 = vector.shape_cast %91 : vector<1x46x128xf32> to vector<46x128xf32>
    %c7_95 = arith.constant 7 : index
    %c0_96 = arith.constant 0 : index
    %c0_97 = arith.constant 0 : index
    %93 = vector.load %arg4[%c7_95, %c0_96, %c0_97] : memref<9x128x128xf32, #tpu.memory_space<vmem>>, vector<1x128x128xf32>
    %94 = vector.shape_cast %93 : vector<1x128x128xf32> to vector<128x128xf32>
    %cst_98 = arith.constant dense<0.000000e+00> : vector<46x128xf32>
    %95 = tpu.matmul %92, %94, %cst_98 {dimension_numbers = #tpu.dot_dimension_numbers<[1], [0], [0], [1], [0, 0, 1, 1], [], []>} : vector<46x128xf32>, vector<128x128xf32>, vector<46x128xf32> -> vector<46x128xf32>
    %96 = arith.addf %90, %95 : vector<46x128xf32>
    %c0_99 = arith.constant 0 : index
    %c18 = arith.constant 18 : index
    %c0_100 = arith.constant 0 : index
    %97 = vector.load %arg1[%c0_99, %c18, %c0_100] : memref<1x64x128xf32, #tpu.memory_space<vmem>>, vector<1x46x128xf32>
    %98 = vector.shape_cast %97 : vector<1x46x128xf32> to vector<46x128xf32>
    %c8_101 = arith.constant 8 : index
    %c0_102 = arith.constant 0 : index
    %c0_103 = arith.constant 0 : index
    %99 = vector.load %arg3[%c8_101, %c0_102, %c0_103] : memref<9x128x128xf32, #tpu.memory_space<vmem>>, vector<1x128x128xf32>
    %100 = vector.shape_cast %99 : vector<1x128x128xf32> to vector<128x128xf32>
    %cst_104 = arith.constant dense<0.000000e+00> : vector<46x128xf32>
    %101 = tpu.matmul %98, %100, %cst_104 {dimension_numbers = #tpu.dot_dimension_numbers<[1], [0], [0], [1], [0, 0, 1, 1], [], []>} : vector<46x128xf32>, vector<128x128xf32>, vector<46x128xf32> -> vector<46x128xf32>
    %102 = arith.addf %96, %101 : vector<46x128xf32>
    %c0_105 = arith.constant 0 : index
    %c18_106 = arith.constant 18 : index
    %c0_107 = arith.constant 0 : index
    %103 = vector.load %arg2[%c0_105, %c18_106, %c0_107] : memref<1x64x128xf32, #tpu.memory_space<vmem>>, vector<1x46x128xf32>
    %104 = vector.shape_cast %103 : vector<1x46x128xf32> to vector<46x128xf32>
    %c8_108 = arith.constant 8 : index
    %c0_109 = arith.constant 0 : index
    %c0_110 = arith.constant 0 : index
    %105 = vector.load %arg4[%c8_108, %c0_109, %c0_110] : memref<9x128x128xf32, #tpu.memory_space<vmem>>, vector<1x128x128xf32>
    %106 = vector.shape_cast %105 : vector<1x128x128xf32> to vector<128x128xf32>
    %cst_111 = arith.constant dense<0.000000e+00> : vector<46x128xf32>
    %107 = tpu.matmul %104, %106, %cst_111 {dimension_numbers = #tpu.dot_dimension_numbers<[1], [0], [0], [1], [0, 0, 1, 1], [], []>} : vector<46x128xf32>, vector<128x128xf32>, vector<46x128xf32> -> vector<46x128xf32>
    %108 = arith.addf %102, %107 : vector<46x128xf32>
    %c0_112 = arith.constant 0 : index
    %c0_113 = arith.constant 0 : index
    %109 = vector.load %arg5[%c0_112, %c0_113] : memref<1x128xf32, #tpu.memory_space<vmem>>, vector<1x128xf32>
    %110 = vector.broadcast %109 : vector<1x128xf32> to vector<46x128xf32>
    %111 = arith.addf %108, %110 : vector<46x128xf32>
    %cst_114 = arith.constant 0.000000e+00 : f32
    %112 = vector.broadcast %cst_114 : f32 to vector<46x128xf32>
    %113 = arith.maximumf %111, %112 : vector<46x128xf32>
    %c0_115 = arith.constant 0 : index
    %c0_116 = arith.constant 0 : index
    %114 = vector.load %arg9[%c0_115, %c0_116] : memref<46x128xf32, #tpu.memory_space<vmem>>, vector<46x128xf32>
    tpu.vector_store %arg9[%c0_115, %c0_116], %113 {strides = array<i32>} : memref<46x128xf32, #tpu.memory_space<vmem>>, vector<46x128xf32>,
    %cst_117 = arith.constant 0.000000e+00 : f32
    %115 = vector.broadcast %cst_117 : f32 to vector<28x128xf32>
    %c0_118 = arith.constant 0 : index
    %c0_119 = arith.constant 0 : index
    %116 = vector.load %arg9[%c0_118, %c0_119] : memref<46x128xf32, #tpu.memory_space<vmem>>, vector<28x128xf32>
    %c0_120 = arith.constant 0 : index
    %c0_121 = arith.constant 0 : index
    %c0_122 = arith.constant 0 : index
    %117 = vector.load %arg6[%c0_120, %c0_121, %c0_122] : memref<9x128x128xf32, #tpu.memory_space<vmem>>, vector<1x128x128xf32>
    %118 = vector.shape_cast %117 : vector<1x128x128xf32> to vector<128x128xf32>
    %cst_123 = arith.constant dense<0.000000e+00> : vector<28x128xf32>
    %119 = tpu.matmul %116, %118, %cst_123 {dimension_numbers = #tpu.dot_dimension_numbers<[1], [0], [0], [1], [0, 0, 1, 1], [], []>} : vector<28x128xf32>, vector<128x128xf32>, vector<28x128xf32> -> vector<28x128xf32>
    %120 = arith.addf %115, %119 : vector<28x128xf32>
    %c1_124 = arith.constant 1 : index
    %c0_125 = arith.constant 0 : index
    %121 = vector.load %arg9[%c1_124, %c0_125] : memref<46x128xf32, #tpu.memory_space<vmem>>, vector<28x128xf32>
    %c1_126 = arith.constant 1 : index
    %c0_127 = arith.constant 0 : index
    %c0_128 = arith.constant 0 : index
    %122 = vector.load %arg6[%c1_126, %c0_127, %c0_128] : memref<9x128x128xf32, #tpu.memory_space<vmem>>, vector<1x128x128xf32>
    %123 = vector.shape_cast %122 : vector<1x128x128xf32> to vector<128x128xf32>
    %cst_129 = arith.constant dense<0.000000e+00> : vector<28x128xf32>
    %124 = tpu.matmul %121, %123, %cst_129 {dimension_numbers = #tpu.dot_dimension_numbers<[1], [0], [0], [1], [0, 0, 1, 1], [], []>} : vector<28x128xf32>, vector<128x128xf32>, vector<28x128xf32> -> vector<28x128xf32>
    %125 = arith.addf %120, %124 : vector<28x128xf32>
    %c2_130 = arith.constant 2 : index
    %c0_131 = arith.constant 0 : index
    %126 = vector.load %arg9[%c2_130, %c0_131] : memref<46x128xf32, #tpu.memory_space<vmem>>, vector<28x128xf32>
    %c2_132 = arith.constant 2 : index
    %c0_133 = arith.constant 0 : index
    %c0_134 = arith.constant 0 : index
    %127 = vector.load %arg6[%c2_132, %c0_133, %c0_134] : memref<9x128x128xf32, #tpu.memory_space<vmem>>, vector<1x128x128xf32>
    %128 = vector.shape_cast %127 : vector<1x128x128xf32> to vector<128x128xf32>
    %cst_135 = arith.constant dense<0.000000e+00> : vector<28x128xf32>
    %129 = tpu.matmul %126, %128, %cst_135 {dimension_numbers = #tpu.dot_dimension_numbers<[1], [0], [0], [1], [0, 0, 1, 1], [], []>} : vector<28x128xf32>, vector<128x128xf32>, vector<28x128xf32> -> vector<28x128xf32>
    %130 = arith.addf %125, %129 : vector<28x128xf32>
    %c8_136 = arith.constant 8 : index
    %c0_137 = arith.constant 0 : index
    %131 = vector.load %arg9[%c8_136, %c0_137] : memref<46x128xf32, #tpu.memory_space<vmem>>, vector<28x128xf32>
    %c3_138 = arith.constant 3 : index
    %c0_139 = arith.constant 0 : index
    %c0_140 = arith.constant 0 : index
    %132 = vector.load %arg6[%c3_138, %c0_139, %c0_140] : memref<9x128x128xf32, #tpu.memory_space<vmem>>, vector<1x128x128xf32>
    %133 = vector.shape_cast %132 : vector<1x128x128xf32> to vector<128x128xf32>
    %cst_141 = arith.constant dense<0.000000e+00> : vector<28x128xf32>
    %134 = tpu.matmul %131, %133, %cst_141 {dimension_numbers = #tpu.dot_dimension_numbers<[1], [0], [0], [1], [0, 0, 1, 1], [], []>} : vector<28x128xf32>, vector<128x128xf32>, vector<28x128xf32> -> vector<28x128xf32>
    %135 = arith.addf %130, %134 : vector<28x128xf32>
    %c9_142 = arith.constant 9 : index
    %c0_143 = arith.constant 0 : index
    %136 = vector.load %arg9[%c9_142, %c0_143] : memref<46x128xf32, #tpu.memory_space<vmem>>, vector<28x128xf32>
    %c4_144 = arith.constant 4 : index
    %c0_145 = arith.constant 0 : index
    %c0_146 = arith.constant 0 : index
    %137 = vector.load %arg6[%c4_144, %c0_145, %c0_146] : memref<9x128x128xf32, #tpu.memory_space<vmem>>, vector<1x128x128xf32>
    %138 = vector.shape_cast %137 : vector<1x128x128xf32> to vector<128x128xf32>
    %cst_147 = arith.constant dense<0.000000e+00> : vector<28x128xf32>
    %139 = tpu.matmul %136, %138, %cst_147 {dimension_numbers = #tpu.dot_dimension_numbers<[1], [0], [0], [1], [0, 0, 1, 1], [], []>} : vector<28x128xf32>, vector<128x128xf32>, vector<28x128xf32> -> vector<28x128xf32>
    %140 = arith.addf %135, %139 : vector<28x128xf32>
    %c10_148 = arith.constant 10 : index
    %c0_149 = arith.constant 0 : index
    %141 = vector.load %arg9[%c10_148, %c0_149] : memref<46x128xf32, #tpu.memory_space<vmem>>, vector<28x128xf32>
    %c5_150 = arith.constant 5 : index
    %c0_151 = arith.constant 0 : index
    %c0_152 = arith.constant 0 : index
    %142 = vector.load %arg6[%c5_150, %c0_151, %c0_152] : memref<9x128x128xf32, #tpu.memory_space<vmem>>, vector<1x128x128xf32>
    %143 = vector.shape_cast %142 : vector<1x128x128xf32> to vector<128x128xf32>
    %cst_153 = arith.constant dense<0.000000e+00> : vector<28x128xf32>
    %144 = tpu.matmul %141, %143, %cst_153 {dimension_numbers = #tpu.dot_dimension_numbers<[1], [0], [0], [1], [0, 0, 1, 1], [], []>} : vector<28x128xf32>, vector<128x128xf32>, vector<28x128xf32> -> vector<28x128xf32>
    %145 = arith.addf %140, %144 : vector<28x128xf32>
    %c16_154 = arith.constant 16 : index
    %c0_155 = arith.constant 0 : index
    %146 = vector.load %arg9[%c16_154, %c0_155] : memref<46x128xf32, #tpu.memory_space<vmem>>, vector<28x128xf32>
    %c6_156 = arith.constant 6 : index
    %c0_157 = arith.constant 0 : index
    %c0_158 = arith.constant 0 : index
    %147 = vector.load %arg6[%c6_156, %c0_157, %c0_158] : memref<9x128x128xf32, #tpu.memory_space<vmem>>, vector<1x128x128xf32>
    %148 = vector.shape_cast %147 : vector<1x128x128xf32> to vector<128x128xf32>
    %cst_159 = arith.constant dense<0.000000e+00> : vector<28x128xf32>
    %149 = tpu.matmul %146, %148, %cst_159 {dimension_numbers = #tpu.dot_dimension_numbers<[1], [0], [0], [1], [0, 0, 1, 1], [], []>} : vector<28x128xf32>, vector<128x128xf32>, vector<28x128xf32> -> vector<28x128xf32>
    %150 = arith.addf %145, %149 : vector<28x128xf32>
    %c17_160 = arith.constant 17 : index
    %c0_161 = arith.constant 0 : index
    %151 = vector.load %arg9[%c17_160, %c0_161] : memref<46x128xf32, #tpu.memory_space<vmem>>, vector<28x128xf32>
    %c7_162 = arith.constant 7 : index
    %c0_163 = arith.constant 0 : index
    %c0_164 = arith.constant 0 : index
    %152 = vector.load %arg6[%c7_162, %c0_163, %c0_164] : memref<9x128x128xf32, #tpu.memory_space<vmem>>, vector<1x128x128xf32>
    %153 = vector.shape_cast %152 : vector<1x128x128xf32> to vector<128x128xf32>
    %cst_165 = arith.constant dense<0.000000e+00> : vector<28x128xf32>
    %154 = tpu.matmul %151, %153, %cst_165 {dimension_numbers = #tpu.dot_dimension_numbers<[1], [0], [0], [1], [0, 0, 1, 1], [], []>} : vector<28x128xf32>, vector<128x128xf32>, vector<28x128xf32> -> vector<28x128xf32>
    %155 = arith.addf %150, %154 : vector<28x128xf32>
    %c18_166 = arith.constant 18 : index
    %c0_167 = arith.constant 0 : index
    %156 = vector.load %arg9[%c18_166, %c0_167] : memref<46x128xf32, #tpu.memory_space<vmem>>, vector<28x128xf32>
    %c8_168 = arith.constant 8 : index
    %c0_169 = arith.constant 0 : index
    %c0_170 = arith.constant 0 : index
    %157 = vector.load %arg6[%c8_168, %c0_169, %c0_170] : memref<9x128x128xf32, #tpu.memory_space<vmem>>, vector<1x128x128xf32>
    %158 = vector.shape_cast %157 : vector<1x128x128xf32> to vector<128x128xf32>
    %cst_171 = arith.constant dense<0.000000e+00> : vector<28x128xf32>
    %159 = tpu.matmul %156, %158, %cst_171 {dimension_numbers = #tpu.dot_dimension_numbers<[1], [0], [0], [1], [0, 0, 1, 1], [], []>} : vector<28x128xf32>, vector<128x128xf32>, vector<28x128xf32> -> vector<28x128xf32>
    %160 = arith.addf %155, %159 : vector<28x128xf32>
    %cst_172 = arith.constant 0.000000e+00 : f32
    %161 = vector.broadcast %cst_172 : f32 to vector<64x128xf32>
    %c0_173 = arith.constant 0 : index
    %c0_174 = arith.constant 0 : index
    %c0_175 = arith.constant 0 : index
    %162 = vector.load %arg8[%c0_173, %c0_174, %c0_175] : memref<1x64x128xf32, #tpu.memory_space<vmem>>, vector<1x64x128xf32>
    %163 = vector.shape_cast %162 : vector<1x64x128xf32> to vector<64x128xf32>
    %164 = vector.shape_cast %161 : vector<64x128xf32> to vector<1x64x128xf32>
    tpu.vector_store %arg8[%c0_173, %c0_174, %c0_175], %164 {strides = array<i32>} : memref<1x64x128xf32, #tpu.memory_space<vmem>>, vector<1x64x128xf32>,
    %c0_176 = arith.constant 0 : index
    %c0_177 = arith.constant 0 : index
    %165 = vector.load %arg7[%c0_176, %c0_177] : memref<1x128xf32, #tpu.memory_space<vmem>>, vector<1x128xf32>
    %166 = vector.broadcast %165 : vector<1x128xf32> to vector<28x128xf32>
    %167 = arith.addf %160, %166 : vector<28x128xf32>
    %c0_178 = arith.constant 0 : index
    %c0_179 = arith.constant 0 : index
    %c0_180 = arith.constant 0 : index
    %168 = vector.load %arg8[%c0_178, %c0_179, %c0_180] : memref<1x64x128xf32, #tpu.memory_space<vmem>>, vector<1x28x128xf32>
    %169 = vector.shape_cast %168 : vector<1x28x128xf32> to vector<28x128xf32>
    %170 = vector.shape_cast %167 : vector<28x128xf32> to vector<1x28x128xf32>
    tpu.vector_store %arg8[%c0_178, %c0_179, %c0_180], %170 {strides = array<i32>} : memref<1x64x128xf32, #tpu.memory_space<vmem>>, vector<1x28x128xf32>,
    return
  }
  func.func @transform_0(%arg0: i32) -> (i32, i32, i32) {
    %c0_i32 = arith.constant 0 : i32
    %c0_i32_0 = arith.constant 0 : i32
    %c0_i32_1 = arith.constant 0 : i32
    return %arg0, %c0_i32, %c0_i32_0 : i32, i32, i32
  }
  func.func @transform_1(%arg0: i32) -> (i32, i32, i32) {
    %c0_i32 = arith.constant 0 : i32
    %c0_i32_0 = arith.constant 0 : i32
    %c0_i32_1 = arith.constant 0 : i32
    return %arg0, %c0_i32, %c0_i32_0 : i32, i32, i32
  }
  func.func @transform_2(%arg0: i32) -> (i32, i32, i32) {
    %c0_i32 = arith.constant 0 : i32
    %c0_i32_0 = arith.constant 0 : i32
    %c0_i32_1 = arith.constant 0 : i32
    %c0_i32_2 = arith.constant 0 : i32
    return %c0_i32, %c0_i32_0, %c0_i32_1 : i32, i32, i32
  }
  func.func @transform_3(%arg0: i32) -> (i32, i32, i32) {
    %c0_i32 = arith.constant 0 : i32
    %c0_i32_0 = arith.constant 0 : i32
    %c0_i32_1 = arith.constant 0 : i32
    %c0_i32_2 = arith.constant 0 : i32
    return %c0_i32, %c0_i32_0, %c0_i32_1 : i32, i32, i32
  }
  func.func @transform_4(%arg0: i32) -> (i32, i32) {
    %c0_i32 = arith.constant 0 : i32
    %c0_i32_0 = arith.constant 0 : i32
    %c0_i32_1 = arith.constant 0 : i32
    return %c0_i32, %c0_i32_0 : i32, i32
  }
  func.func @transform_5(%arg0: i32) -> (i32, i32, i32) {
    %c0_i32 = arith.constant 0 : i32
    %c0_i32_0 = arith.constant 0 : i32
    %c0_i32_1 = arith.constant 0 : i32
    %c0_i32_2 = arith.constant 0 : i32
    return %c0_i32, %c0_i32_0, %c0_i32_1 : i32, i32, i32
  }
  func.func @transform_6(%arg0: i32) -> (i32, i32) {
    %c0_i32 = arith.constant 0 : i32
    %c0_i32_0 = arith.constant 0 : i32
    %c0_i32_1 = arith.constant 0 : i32
    return %c0_i32, %c0_i32_0 : i32, i32
  }
  func.func @transform_7(%arg0: i32) -> (i32, i32, i32) {
    %c0_i32 = arith.constant 0 : i32
    %c0_i32_0 = arith.constant 0 : i32
    %c0_i32_1 = arith.constant 0 : i32
    return %arg0, %c0_i32, %c0_i32_0 : i32, i32, i32
  }
}

module attributes {stable_mosaic.version = 11 : i64} {
  func.func @_upconv_kernel(%arg0: i32, %arg1: memref<1x16x128xf32, #tpu.memory_space<vmem>>, %arg2: memref<128x512xf32, #tpu.memory_space<vmem>>, %arg3: memref<1x512xf32, #tpu.memory_space<vmem>>, %arg4: memref<1x16x512xf32, #tpu.memory_space<vmem>>) attributes {dimension_semantics = [#tpu.dimension_semantics<parallel>], iteration_bounds = array<i64: 2>, scalar_prefetch = 0 : i64, scratch_operands = 0 : i64, tpu.core_type = #tpu.core_type<tc>, window_params = [{transform_indices = @transform_0, window_bounds = array<i64: 1, 16, 128>}, {pipeline_mode = #tpu.pipeline_mode<synchronous>, transform_indices = @transform_1, window_bounds = array<i64: 128, 512>}, {pipeline_mode = #tpu.pipeline_mode<synchronous>, transform_indices = @transform_2, window_bounds = array<i64: 1, 512>}, {transform_indices = @transform_3, window_bounds = array<i64: 1, 16, 512>}]} {
    %c0 = arith.constant 0 : index
    %c0_0 = arith.constant 0 : index
    %c0_1 = arith.constant 0 : index
    %0 = vector.load %arg1[%c0, %c0_0, %c0_1] : memref<1x16x128xf32, #tpu.memory_space<vmem>>, vector<1x16x128xf32>
    %1 = vector.shape_cast %0 : vector<1x16x128xf32> to vector<16x128xf32>
    %c0_2 = arith.constant 0 : index
    %c0_3 = arith.constant 0 : index
    %2 = vector.load %arg2[%c0_2, %c0_3] : memref<128x512xf32, #tpu.memory_space<vmem>>, vector<128x512xf32>
    %cst = arith.constant dense<0.000000e+00> : vector<16x512xf32>
    %3 = tpu.matmul %1, %2, %cst {dimension_numbers = #tpu.dot_dimension_numbers<[1], [0], [0], [1], [0, 0, 1, 1], [], []>} : vector<16x128xf32>, vector<128x512xf32>, vector<16x512xf32> -> vector<16x512xf32>
    %c0_4 = arith.constant 0 : index
    %c0_5 = arith.constant 0 : index
    %4 = vector.load %arg3[%c0_4, %c0_5] : memref<1x512xf32, #tpu.memory_space<vmem>>, vector<1x512xf32>
    %5 = vector.broadcast %4 : vector<1x512xf32> to vector<16x512xf32>
    %6 = arith.addf %3, %5 : vector<16x512xf32>
    %c0_6 = arith.constant 0 : index
    %c0_7 = arith.constant 0 : index
    %c0_8 = arith.constant 0 : index
    %7 = vector.load %arg4[%c0_6, %c0_7, %c0_8] : memref<1x16x512xf32, #tpu.memory_space<vmem>>, vector<1x16x512xf32>
    %8 = vector.shape_cast %7 : vector<1x16x512xf32> to vector<16x512xf32>
    %9 = vector.shape_cast %6 : vector<16x512xf32> to vector<1x16x512xf32>
    tpu.vector_store %arg4[%c0_6, %c0_7, %c0_8], %9 {strides = array<i32>} : memref<1x16x512xf32, #tpu.memory_space<vmem>>, vector<1x16x512xf32>,
    return
  }
  func.func @transform_0(%arg0: i32) -> (i32, i32, i32) {
    %c0_i32 = arith.constant 0 : i32
    %c0_i32_0 = arith.constant 0 : i32
    %c0_i32_1 = arith.constant 0 : i32
    return %arg0, %c0_i32, %c0_i32_0 : i32, i32, i32
  }
  func.func @transform_1(%arg0: i32) -> (i32, i32) {
    %c0_i32 = arith.constant 0 : i32
    %c0_i32_0 = arith.constant 0 : i32
    %c0_i32_1 = arith.constant 0 : i32
    return %c0_i32, %c0_i32_0 : i32, i32
  }
  func.func @transform_2(%arg0: i32) -> (i32, i32) {
    %c0_i32 = arith.constant 0 : i32
    %c0_i32_0 = arith.constant 0 : i32
    %c0_i32_1 = arith.constant 0 : i32
    return %c0_i32, %c0_i32_0 : i32, i32
  }
  func.func @transform_3(%arg0: i32) -> (i32, i32, i32) {
    %c0_i32 = arith.constant 0 : i32
    %c0_i32_0 = arith.constant 0 : i32
    %c0_i32_1 = arith.constant 0 : i32
    return %arg0, %c0_i32, %c0_i32_0 : i32, i32, i32
  }
}

module attributes {stable_mosaic.version = 11 : i64} {
  func.func @_double_conv_kernel(%arg0: i32, %arg1: memref<1x64x128xf32, #tpu.memory_space<vmem>>, %arg2: memref<1x64x128xf32, #tpu.memory_space<vmem>>, %arg3: memref<9x128x128xf32, #tpu.memory_space<vmem>>, %arg4: memref<9x128x128xf32, #tpu.memory_space<vmem>>, %arg5: memref<1x128xf32, #tpu.memory_space<vmem>>, %arg6: memref<9x128x128xf32, #tpu.memory_space<vmem>>, %arg7: memref<1x128xf32, #tpu.memory_space<vmem>>, %arg8: memref<1x64x128xf32, #tpu.memory_space<vmem>>, %arg9: memref<46x128xf32, #tpu.memory_space<vmem>>) attributes {dimension_semantics = [#tpu.dimension_semantics<parallel>], iteration_bounds = array<i64: 2>, scalar_prefetch = 0 : i64, scratch_operands = 1 : i64, tpu.core_type = #tpu.core_type<tc>, window_params = [{transform_indices = @transform_0, window_bounds = array<i64: 1, 64, 128>}, {transform_indices = @transform_1, window_bounds = array<i64: 1, 64, 128>}, {pipeline_mode = #tpu.pipeline_mode<synchronous>, transform_indices = @transform_2, window_bounds = array<i64: 9, 128, 128>}, {pipeline_mode = #tpu.pipeline_mode<synchronous>, transform_indices = @transform_3, window_bounds = array<i64: 9, 128, 128>}, {pipeline_mode = #tpu.pipeline_mode<synchronous>, transform_indices = @transform_4, window_bounds = array<i64: 1, 128>}, {pipeline_mode = #tpu.pipeline_mode<synchronous>, transform_indices = @transform_5, window_bounds = array<i64: 9, 128, 128>}, {pipeline_mode = #tpu.pipeline_mode<synchronous>, transform_indices = @transform_6, window_bounds = array<i64: 1, 128>}, {transform_indices = @transform_7, window_bounds = array<i64: 1, 64, 128>}]} {
    %cst = arith.constant 0.000000e+00 : f32
    %0 = vector.broadcast %cst : f32 to vector<46x128xf32>
    %c0 = arith.constant 0 : index
    %c0_0 = arith.constant 0 : index
    %c0_1 = arith.constant 0 : index
    %1 = vector.load %arg1[%c0, %c0_0, %c0_1] : memref<1x64x128xf32, #tpu.memory_space<vmem>>, vector<1x46x128xf32>
    %2 = vector.shape_cast %1 : vector<1x46x128xf32> to vector<46x128xf32>
    %c0_2 = arith.constant 0 : index
    %c0_3 = arith.constant 0 : index
    %c0_4 = arith.constant 0 : index
    %3 = vector.load %arg3[%c0_2, %c0_3, %c0_4] : memref<9x128x128xf32, #tpu.memory_space<vmem>>, vector<1x128x128xf32>
    %4 = vector.shape_cast %3 : vector<1x128x128xf32> to vector<128x128xf32>
    %cst_5 = arith.constant dense<0.000000e+00> : vector<46x128xf32>
    %5 = tpu.matmul %2, %4, %cst_5 {dimension_numbers = #tpu.dot_dimension_numbers<[1], [0], [0], [1], [0, 0, 1, 1], [], []>} : vector<46x128xf32>, vector<128x128xf32>, vector<46x128xf32> -> vector<46x128xf32>
    %6 = arith.addf %0, %5 : vector<46x128xf32>
    %c0_6 = arith.constant 0 : index
    %c0_7 = arith.constant 0 : index
    %c0_8 = arith.constant 0 : index
    %7 = vector.load %arg2[%c0_6, %c0_7, %c0_8] : memref<1x64x128xf32, #tpu.memory_space<vmem>>, vector<1x46x128xf32>
    %8 = vector.shape_cast %7 : vector<1x46x128xf32> to vector<46x128xf32>
    %c0_9 = arith.constant 0 : index
    %c0_10 = arith.constant 0 : index
    %c0_11 = arith.constant 0 : index
    %9 = vector.load %arg4[%c0_9, %c0_10, %c0_11] : memref<9x128x128xf32, #tpu.memory_space<vmem>>, vector<1x128x128xf32>
    %10 = vector.shape_cast %9 : vector<1x128x128xf32> to vector<128x128xf32>
    %cst_12 = arith.constant dense<0.000000e+00> : vector<46x128xf32>
    %11 = tpu.matmul %8, %10, %cst_12 {dimension_numbers = #tpu.dot_dimension_numbers<[1], [0], [0], [1], [0, 0, 1, 1], [], []>} : vector<46x128xf32>, vector<128x128xf32>, vector<46x128xf32> -> vector<46x128xf32>
    %12 = arith.addf %6, %11 : vector<46x128xf32>
    %c0_13 = arith.constant 0 : index
    %c1 = arith.constant 1 : index
    %c0_14 = arith.constant 0 : index
    %13 = vector.load %arg1[%c0_13, %c1, %c0_14] : memref<1x64x128xf32, #tpu.memory_space<vmem>>, vector<1x46x128xf32>
    %14 = vector.shape_cast %13 : vector<1x46x128xf32> to vector<46x128xf32>
    %c1_15 = arith.constant 1 : index
    %c0_16 = arith.constant 0 : index
    %c0_17 = arith.constant 0 : index
    %15 = vector.load %arg3[%c1_15, %c0_16, %c0_17] : memref<9x128x128xf32, #tpu.memory_space<vmem>>, vector<1x128x128xf32>
    %16 = vector.shape_cast %15 : vector<1x128x128xf32> to vector<128x128xf32>
    %cst_18 = arith.constant dense<0.000000e+00> : vector<46x128xf32>
    %17 = tpu.matmul %14, %16, %cst_18 {dimension_numbers = #tpu.dot_dimension_numbers<[1], [0], [0], [1], [0, 0, 1, 1], [], []>} : vector<46x128xf32>, vector<128x128xf32>, vector<46x128xf32> -> vector<46x128xf32>
    %18 = arith.addf %12, %17 : vector<46x128xf32>
    %c0_19 = arith.constant 0 : index
    %c1_20 = arith.constant 1 : index
    %c0_21 = arith.constant 0 : index
    %19 = vector.load %arg2[%c0_19, %c1_20, %c0_21] : memref<1x64x128xf32, #tpu.memory_space<vmem>>, vector<1x46x128xf32>
    %20 = vector.shape_cast %19 : vector<1x46x128xf32> to vector<46x128xf32>
    %c1_22 = arith.constant 1 : index
    %c0_23 = arith.constant 0 : index
    %c0_24 = arith.constant 0 : index
    %21 = vector.load %arg4[%c1_22, %c0_23, %c0_24] : memref<9x128x128xf32, #tpu.memory_space<vmem>>, vector<1x128x128xf32>
    %22 = vector.shape_cast %21 : vector<1x128x128xf32> to vector<128x128xf32>
    %cst_25 = arith.constant dense<0.000000e+00> : vector<46x128xf32>
    %23 = tpu.matmul %20, %22, %cst_25 {dimension_numbers = #tpu.dot_dimension_numbers<[1], [0], [0], [1], [0, 0, 1, 1], [], []>} : vector<46x128xf32>, vector<128x128xf32>, vector<46x128xf32> -> vector<46x128xf32>
    %24 = arith.addf %18, %23 : vector<46x128xf32>
    %c0_26 = arith.constant 0 : index
    %c2 = arith.constant 2 : index
    %c0_27 = arith.constant 0 : index
    %25 = vector.load %arg1[%c0_26, %c2, %c0_27] : memref<1x64x128xf32, #tpu.memory_space<vmem>>, vector<1x46x128xf32>
    %26 = vector.shape_cast %25 : vector<1x46x128xf32> to vector<46x128xf32>
    %c2_28 = arith.constant 2 : index
    %c0_29 = arith.constant 0 : index
    %c0_30 = arith.constant 0 : index
    %27 = vector.load %arg3[%c2_28, %c0_29, %c0_30] : memref<9x128x128xf32, #tpu.memory_space<vmem>>, vector<1x128x128xf32>
    %28 = vector.shape_cast %27 : vector<1x128x128xf32> to vector<128x128xf32>
    %cst_31 = arith.constant dense<0.000000e+00> : vector<46x128xf32>
    %29 = tpu.matmul %26, %28, %cst_31 {dimension_numbers = #tpu.dot_dimension_numbers<[1], [0], [0], [1], [0, 0, 1, 1], [], []>} : vector<46x128xf32>, vector<128x128xf32>, vector<46x128xf32> -> vector<46x128xf32>
    %30 = arith.addf %24, %29 : vector<46x128xf32>
    %c0_32 = arith.constant 0 : index
    %c2_33 = arith.constant 2 : index
    %c0_34 = arith.constant 0 : index
    %31 = vector.load %arg2[%c0_32, %c2_33, %c0_34] : memref<1x64x128xf32, #tpu.memory_space<vmem>>, vector<1x46x128xf32>
    %32 = vector.shape_cast %31 : vector<1x46x128xf32> to vector<46x128xf32>
    %c2_35 = arith.constant 2 : index
    %c0_36 = arith.constant 0 : index
    %c0_37 = arith.constant 0 : index
    %33 = vector.load %arg4[%c2_35, %c0_36, %c0_37] : memref<9x128x128xf32, #tpu.memory_space<vmem>>, vector<1x128x128xf32>
    %34 = vector.shape_cast %33 : vector<1x128x128xf32> to vector<128x128xf32>
    %cst_38 = arith.constant dense<0.000000e+00> : vector<46x128xf32>
    %35 = tpu.matmul %32, %34, %cst_38 {dimension_numbers = #tpu.dot_dimension_numbers<[1], [0], [0], [1], [0, 0, 1, 1], [], []>} : vector<46x128xf32>, vector<128x128xf32>, vector<46x128xf32> -> vector<46x128xf32>
    %36 = arith.addf %30, %35 : vector<46x128xf32>
    %c0_39 = arith.constant 0 : index
    %c8 = arith.constant 8 : index
    %c0_40 = arith.constant 0 : index
    %37 = vector.load %arg1[%c0_39, %c8, %c0_40] : memref<1x64x128xf32, #tpu.memory_space<vmem>>, vector<1x46x128xf32>
    %38 = vector.shape_cast %37 : vector<1x46x128xf32> to vector<46x128xf32>
    %c3 = arith.constant 3 : index
    %c0_41 = arith.constant 0 : index
    %c0_42 = arith.constant 0 : index
    %39 = vector.load %arg3[%c3, %c0_41, %c0_42] : memref<9x128x128xf32, #tpu.memory_space<vmem>>, vector<1x128x128xf32>
    %40 = vector.shape_cast %39 : vector<1x128x128xf32> to vector<128x128xf32>
    %cst_43 = arith.constant dense<0.000000e+00> : vector<46x128xf32>
    %41 = tpu.matmul %38, %40, %cst_43 {dimension_numbers = #tpu.dot_dimension_numbers<[1], [0], [0], [1], [0, 0, 1, 1], [], []>} : vector<46x128xf32>, vector<128x128xf32>, vector<46x128xf32> -> vector<46x128xf32>
    %42 = arith.addf %36, %41 : vector<46x128xf32>
    %c0_44 = arith.constant 0 : index
    %c8_45 = arith.constant 8 : index
    %c0_46 = arith.constant 0 : index
    %43 = vector.load %arg2[%c0_44, %c8_45, %c0_46] : memref<1x64x128xf32, #tpu.memory_space<vmem>>, vector<1x46x128xf32>
    %44 = vector.shape_cast %43 : vector<1x46x128xf32> to vector<46x128xf32>
    %c3_47 = arith.constant 3 : index
    %c0_48 = arith.constant 0 : index
    %c0_49 = arith.constant 0 : index
    %45 = vector.load %arg4[%c3_47, %c0_48, %c0_49] : memref<9x128x128xf32, #tpu.memory_space<vmem>>, vector<1x128x128xf32>
    %46 = vector.shape_cast %45 : vector<1x128x128xf32> to vector<128x128xf32>
    %cst_50 = arith.constant dense<0.000000e+00> : vector<46x128xf32>
    %47 = tpu.matmul %44, %46, %cst_50 {dimension_numbers = #tpu.dot_dimension_numbers<[1], [0], [0], [1], [0, 0, 1, 1], [], []>} : vector<46x128xf32>, vector<128x128xf32>, vector<46x128xf32> -> vector<46x128xf32>
    %48 = arith.addf %42, %47 : vector<46x128xf32>
    %c0_51 = arith.constant 0 : index
    %c9 = arith.constant 9 : index
    %c0_52 = arith.constant 0 : index
    %49 = vector.load %arg1[%c0_51, %c9, %c0_52] : memref<1x64x128xf32, #tpu.memory_space<vmem>>, vector<1x46x128xf32>
    %50 = vector.shape_cast %49 : vector<1x46x128xf32> to vector<46x128xf32>
    %c4 = arith.constant 4 : index
    %c0_53 = arith.constant 0 : index
    %c0_54 = arith.constant 0 : index
    %51 = vector.load %arg3[%c4, %c0_53, %c0_54] : memref<9x128x128xf32, #tpu.memory_space<vmem>>, vector<1x128x128xf32>
    %52 = vector.shape_cast %51 : vector<1x128x128xf32> to vector<128x128xf32>
    %cst_55 = arith.constant dense<0.000000e+00> : vector<46x128xf32>
    %53 = tpu.matmul %50, %52, %cst_55 {dimension_numbers = #tpu.dot_dimension_numbers<[1], [0], [0], [1], [0, 0, 1, 1], [], []>} : vector<46x128xf32>, vector<128x128xf32>, vector<46x128xf32> -> vector<46x128xf32>
    %54 = arith.addf %48, %53 : vector<46x128xf32>
    %c0_56 = arith.constant 0 : index
    %c9_57 = arith.constant 9 : index
    %c0_58 = arith.constant 0 : index
    %55 = vector.load %arg2[%c0_56, %c9_57, %c0_58] : memref<1x64x128xf32, #tpu.memory_space<vmem>>, vector<1x46x128xf32>
    %56 = vector.shape_cast %55 : vector<1x46x128xf32> to vector<46x128xf32>
    %c4_59 = arith.constant 4 : index
    %c0_60 = arith.constant 0 : index
    %c0_61 = arith.constant 0 : index
    %57 = vector.load %arg4[%c4_59, %c0_60, %c0_61] : memref<9x128x128xf32, #tpu.memory_space<vmem>>, vector<1x128x128xf32>
    %58 = vector.shape_cast %57 : vector<1x128x128xf32> to vector<128x128xf32>
    %cst_62 = arith.constant dense<0.000000e+00> : vector<46x128xf32>
    %59 = tpu.matmul %56, %58, %cst_62 {dimension_numbers = #tpu.dot_dimension_numbers<[1], [0], [0], [1], [0, 0, 1, 1], [], []>} : vector<46x128xf32>, vector<128x128xf32>, vector<46x128xf32> -> vector<46x128xf32>
    %60 = arith.addf %54, %59 : vector<46x128xf32>
    %c0_63 = arith.constant 0 : index
    %c10 = arith.constant 10 : index
    %c0_64 = arith.constant 0 : index
    %61 = vector.load %arg1[%c0_63, %c10, %c0_64] : memref<1x64x128xf32, #tpu.memory_space<vmem>>, vector<1x46x128xf32>
    %62 = vector.shape_cast %61 : vector<1x46x128xf32> to vector<46x128xf32>
    %c5 = arith.constant 5 : index
    %c0_65 = arith.constant 0 : index
    %c0_66 = arith.constant 0 : index
    %63 = vector.load %arg3[%c5, %c0_65, %c0_66] : memref<9x128x128xf32, #tpu.memory_space<vmem>>, vector<1x128x128xf32>
    %64 = vector.shape_cast %63 : vector<1x128x128xf32> to vector<128x128xf32>
    %cst_67 = arith.constant dense<0.000000e+00> : vector<46x128xf32>
    %65 = tpu.matmul %62, %64, %cst_67 {dimension_numbers = #tpu.dot_dimension_numbers<[1], [0], [0], [1], [0, 0, 1, 1], [], []>} : vector<46x128xf32>, vector<128x128xf32>, vector<46x128xf32> -> vector<46x128xf32>
    %66 = arith.addf %60, %65 : vector<46x128xf32>
    %c0_68 = arith.constant 0 : index
    %c10_69 = arith.constant 10 : index
    %c0_70 = arith.constant 0 : index
    %67 = vector.load %arg2[%c0_68, %c10_69, %c0_70] : memref<1x64x128xf32, #tpu.memory_space<vmem>>, vector<1x46x128xf32>
    %68 = vector.shape_cast %67 : vector<1x46x128xf32> to vector<46x128xf32>
    %c5_71 = arith.constant 5 : index
    %c0_72 = arith.constant 0 : index
    %c0_73 = arith.constant 0 : index
    %69 = vector.load %arg4[%c5_71, %c0_72, %c0_73] : memref<9x128x128xf32, #tpu.memory_space<vmem>>, vector<1x128x128xf32>
    %70 = vector.shape_cast %69 : vector<1x128x128xf32> to vector<128x128xf32>
    %cst_74 = arith.constant dense<0.000000e+00> : vector<46x128xf32>
    %71 = tpu.matmul %68, %70, %cst_74 {dimension_numbers = #tpu.dot_dimension_numbers<[1], [0], [0], [1], [0, 0, 1, 1], [], []>} : vector<46x128xf32>, vector<128x128xf32>, vector<46x128xf32> -> vector<46x128xf32>
    %72 = arith.addf %66, %71 : vector<46x128xf32>
    %c0_75 = arith.constant 0 : index
    %c16 = arith.constant 16 : index
    %c0_76 = arith.constant 0 : index
    %73 = vector.load %arg1[%c0_75, %c16, %c0_76] : memref<1x64x128xf32, #tpu.memory_space<vmem>>, vector<1x46x128xf32>
    %74 = vector.shape_cast %73 : vector<1x46x128xf32> to vector<46x128xf32>
    %c6 = arith.constant 6 : index
    %c0_77 = arith.constant 0 : index
    %c0_78 = arith.constant 0 : index
    %75 = vector.load %arg3[%c6, %c0_77, %c0_78] : memref<9x128x128xf32, #tpu.memory_space<vmem>>, vector<1x128x128xf32>
    %76 = vector.shape_cast %75 : vector<1x128x128xf32> to vector<128x128xf32>
    %cst_79 = arith.constant dense<0.000000e+00> : vector<46x128xf32>
    %77 = tpu.matmul %74, %76, %cst_79 {dimension_numbers = #tpu.dot_dimension_numbers<[1], [0], [0], [1], [0, 0, 1, 1], [], []>} : vector<46x128xf32>, vector<128x128xf32>, vector<46x128xf32> -> vector<46x128xf32>
    %78 = arith.addf %72, %77 : vector<46x128xf32>
    %c0_80 = arith.constant 0 : index
    %c16_81 = arith.constant 16 : index
    %c0_82 = arith.constant 0 : index
    %79 = vector.load %arg2[%c0_80, %c16_81, %c0_82] : memref<1x64x128xf32, #tpu.memory_space<vmem>>, vector<1x46x128xf32>
    %80 = vector.shape_cast %79 : vector<1x46x128xf32> to vector<46x128xf32>
    %c6_83 = arith.constant 6 : index
    %c0_84 = arith.constant 0 : index
    %c0_85 = arith.constant 0 : index
    %81 = vector.load %arg4[%c6_83, %c0_84, %c0_85] : memref<9x128x128xf32, #tpu.memory_space<vmem>>, vector<1x128x128xf32>
    %82 = vector.shape_cast %81 : vector<1x128x128xf32> to vector<128x128xf32>
    %cst_86 = arith.constant dense<0.000000e+00> : vector<46x128xf32>
    %83 = tpu.matmul %80, %82, %cst_86 {dimension_numbers = #tpu.dot_dimension_numbers<[1], [0], [0], [1], [0, 0, 1, 1], [], []>} : vector<46x128xf32>, vector<128x128xf32>, vector<46x128xf32> -> vector<46x128xf32>
    %84 = arith.addf %78, %83 : vector<46x128xf32>
    %c0_87 = arith.constant 0 : index
    %c17 = arith.constant 17 : index
    %c0_88 = arith.constant 0 : index
    %85 = vector.load %arg1[%c0_87, %c17, %c0_88] : memref<1x64x128xf32, #tpu.memory_space<vmem>>, vector<1x46x128xf32>
    %86 = vector.shape_cast %85 : vector<1x46x128xf32> to vector<46x128xf32>
    %c7 = arith.constant 7 : index
    %c0_89 = arith.constant 0 : index
    %c0_90 = arith.constant 0 : index
    %87 = vector.load %arg3[%c7, %c0_89, %c0_90] : memref<9x128x128xf32, #tpu.memory_space<vmem>>, vector<1x128x128xf32>
    %88 = vector.shape_cast %87 : vector<1x128x128xf32> to vector<128x128xf32>
    %cst_91 = arith.constant dense<0.000000e+00> : vector<46x128xf32>
    %89 = tpu.matmul %86, %88, %cst_91 {dimension_numbers = #tpu.dot_dimension_numbers<[1], [0], [0], [1], [0, 0, 1, 1], [], []>} : vector<46x128xf32>, vector<128x128xf32>, vector<46x128xf32> -> vector<46x128xf32>
    %90 = arith.addf %84, %89 : vector<46x128xf32>
    %c0_92 = arith.constant 0 : index
    %c17_93 = arith.constant 17 : index
    %c0_94 = arith.constant 0 : index
    %91 = vector.load %arg2[%c0_92, %c17_93, %c0_94] : memref<1x64x128xf32, #tpu.memory_space<vmem>>, vector<1x46x128xf32>
    %92 = vector.shape_cast %91 : vector<1x46x128xf32> to vector<46x128xf32>
    %c7_95 = arith.constant 7 : index
    %c0_96 = arith.constant 0 : index
    %c0_97 = arith.constant 0 : index
    %93 = vector.load %arg4[%c7_95, %c0_96, %c0_97] : memref<9x128x128xf32, #tpu.memory_space<vmem>>, vector<1x128x128xf32>
    %94 = vector.shape_cast %93 : vector<1x128x128xf32> to vector<128x128xf32>
    %cst_98 = arith.constant dense<0.000000e+00> : vector<46x128xf32>
    %95 = tpu.matmul %92, %94, %cst_98 {dimension_numbers = #tpu.dot_dimension_numbers<[1], [0], [0], [1], [0, 0, 1, 1], [], []>} : vector<46x128xf32>, vector<128x128xf32>, vector<46x128xf32> -> vector<46x128xf32>
    %96 = arith.addf %90, %95 : vector<46x128xf32>
    %c0_99 = arith.constant 0 : index
    %c18 = arith.constant 18 : index
    %c0_100 = arith.constant 0 : index
    %97 = vector.load %arg1[%c0_99, %c18, %c0_100] : memref<1x64x128xf32, #tpu.memory_space<vmem>>, vector<1x46x128xf32>
    %98 = vector.shape_cast %97 : vector<1x46x128xf32> to vector<46x128xf32>
    %c8_101 = arith.constant 8 : index
    %c0_102 = arith.constant 0 : index
    %c0_103 = arith.constant 0 : index
    %99 = vector.load %arg3[%c8_101, %c0_102, %c0_103] : memref<9x128x128xf32, #tpu.memory_space<vmem>>, vector<1x128x128xf32>
    %100 = vector.shape_cast %99 : vector<1x128x128xf32> to vector<128x128xf32>
    %cst_104 = arith.constant dense<0.000000e+00> : vector<46x128xf32>
    %101 = tpu.matmul %98, %100, %cst_104 {dimension_numbers = #tpu.dot_dimension_numbers<[1], [0], [0], [1], [0, 0, 1, 1], [], []>} : vector<46x128xf32>, vector<128x128xf32>, vector<46x128xf32> -> vector<46x128xf32>
    %102 = arith.addf %96, %101 : vector<46x128xf32>
    %c0_105 = arith.constant 0 : index
    %c18_106 = arith.constant 18 : index
    %c0_107 = arith.constant 0 : index
    %103 = vector.load %arg2[%c0_105, %c18_106, %c0_107] : memref<1x64x128xf32, #tpu.memory_space<vmem>>, vector<1x46x128xf32>
    %104 = vector.shape_cast %103 : vector<1x46x128xf32> to vector<46x128xf32>
    %c8_108 = arith.constant 8 : index
    %c0_109 = arith.constant 0 : index
    %c0_110 = arith.constant 0 : index
    %105 = vector.load %arg4[%c8_108, %c0_109, %c0_110] : memref<9x128x128xf32, #tpu.memory_space<vmem>>, vector<1x128x128xf32>
    %106 = vector.shape_cast %105 : vector<1x128x128xf32> to vector<128x128xf32>
    %cst_111 = arith.constant dense<0.000000e+00> : vector<46x128xf32>
    %107 = tpu.matmul %104, %106, %cst_111 {dimension_numbers = #tpu.dot_dimension_numbers<[1], [0], [0], [1], [0, 0, 1, 1], [], []>} : vector<46x128xf32>, vector<128x128xf32>, vector<46x128xf32> -> vector<46x128xf32>
    %108 = arith.addf %102, %107 : vector<46x128xf32>
    %c0_112 = arith.constant 0 : index
    %c0_113 = arith.constant 0 : index
    %109 = vector.load %arg5[%c0_112, %c0_113] : memref<1x128xf32, #tpu.memory_space<vmem>>, vector<1x128xf32>
    %110 = vector.broadcast %109 : vector<1x128xf32> to vector<46x128xf32>
    %111 = arith.addf %108, %110 : vector<46x128xf32>
    %cst_114 = arith.constant 0.000000e+00 : f32
    %112 = vector.broadcast %cst_114 : f32 to vector<46x128xf32>
    %113 = arith.maximumf %111, %112 : vector<46x128xf32>
    %c0_115 = arith.constant 0 : index
    %c0_116 = arith.constant 0 : index
    %114 = vector.load %arg9[%c0_115, %c0_116] : memref<46x128xf32, #tpu.memory_space<vmem>>, vector<46x128xf32>
    tpu.vector_store %arg9[%c0_115, %c0_116], %113 {strides = array<i32>} : memref<46x128xf32, #tpu.memory_space<vmem>>, vector<46x128xf32>,
    %cst_117 = arith.constant 0.000000e+00 : f32
    %115 = vector.broadcast %cst_117 : f32 to vector<28x128xf32>
    %c0_118 = arith.constant 0 : index
    %c0_119 = arith.constant 0 : index
    %116 = vector.load %arg9[%c0_118, %c0_119] : memref<46x128xf32, #tpu.memory_space<vmem>>, vector<28x128xf32>
    %c0_120 = arith.constant 0 : index
    %c0_121 = arith.constant 0 : index
    %c0_122 = arith.constant 0 : index
    %117 = vector.load %arg6[%c0_120, %c0_121, %c0_122] : memref<9x128x128xf32, #tpu.memory_space<vmem>>, vector<1x128x128xf32>
    %118 = vector.shape_cast %117 : vector<1x128x128xf32> to vector<128x128xf32>
    %cst_123 = arith.constant dense<0.000000e+00> : vector<28x128xf32>
    %119 = tpu.matmul %116, %118, %cst_123 {dimension_numbers = #tpu.dot_dimension_numbers<[1], [0], [0], [1], [0, 0, 1, 1], [], []>} : vector<28x128xf32>, vector<128x128xf32>, vector<28x128xf32> -> vector<28x128xf32>
    %120 = arith.addf %115, %119 : vector<28x128xf32>
    %c1_124 = arith.constant 1 : index
    %c0_125 = arith.constant 0 : index
    %121 = vector.load %arg9[%c1_124, %c0_125] : memref<46x128xf32, #tpu.memory_space<vmem>>, vector<28x128xf32>
    %c1_126 = arith.constant 1 : index
    %c0_127 = arith.constant 0 : index
    %c0_128 = arith.constant 0 : index
    %122 = vector.load %arg6[%c1_126, %c0_127, %c0_128] : memref<9x128x128xf32, #tpu.memory_space<vmem>>, vector<1x128x128xf32>
    %123 = vector.shape_cast %122 : vector<1x128x128xf32> to vector<128x128xf32>
    %cst_129 = arith.constant dense<0.000000e+00> : vector<28x128xf32>
    %124 = tpu.matmul %121, %123, %cst_129 {dimension_numbers = #tpu.dot_dimension_numbers<[1], [0], [0], [1], [0, 0, 1, 1], [], []>} : vector<28x128xf32>, vector<128x128xf32>, vector<28x128xf32> -> vector<28x128xf32>
    %125 = arith.addf %120, %124 : vector<28x128xf32>
    %c2_130 = arith.constant 2 : index
    %c0_131 = arith.constant 0 : index
    %126 = vector.load %arg9[%c2_130, %c0_131] : memref<46x128xf32, #tpu.memory_space<vmem>>, vector<28x128xf32>
    %c2_132 = arith.constant 2 : index
    %c0_133 = arith.constant 0 : index
    %c0_134 = arith.constant 0 : index
    %127 = vector.load %arg6[%c2_132, %c0_133, %c0_134] : memref<9x128x128xf32, #tpu.memory_space<vmem>>, vector<1x128x128xf32>
    %128 = vector.shape_cast %127 : vector<1x128x128xf32> to vector<128x128xf32>
    %cst_135 = arith.constant dense<0.000000e+00> : vector<28x128xf32>
    %129 = tpu.matmul %126, %128, %cst_135 {dimension_numbers = #tpu.dot_dimension_numbers<[1], [0], [0], [1], [0, 0, 1, 1], [], []>} : vector<28x128xf32>, vector<128x128xf32>, vector<28x128xf32> -> vector<28x128xf32>
    %130 = arith.addf %125, %129 : vector<28x128xf32>
    %c8_136 = arith.constant 8 : index
    %c0_137 = arith.constant 0 : index
    %131 = vector.load %arg9[%c8_136, %c0_137] : memref<46x128xf32, #tpu.memory_space<vmem>>, vector<28x128xf32>
    %c3_138 = arith.constant 3 : index
    %c0_139 = arith.constant 0 : index
    %c0_140 = arith.constant 0 : index
    %132 = vector.load %arg6[%c3_138, %c0_139, %c0_140] : memref<9x128x128xf32, #tpu.memory_space<vmem>>, vector<1x128x128xf32>
    %133 = vector.shape_cast %132 : vector<1x128x128xf32> to vector<128x128xf32>
    %cst_141 = arith.constant dense<0.000000e+00> : vector<28x128xf32>
    %134 = tpu.matmul %131, %133, %cst_141 {dimension_numbers = #tpu.dot_dimension_numbers<[1], [0], [0], [1], [0, 0, 1, 1], [], []>} : vector<28x128xf32>, vector<128x128xf32>, vector<28x128xf32> -> vector<28x128xf32>
    %135 = arith.addf %130, %134 : vector<28x128xf32>
    %c9_142 = arith.constant 9 : index
    %c0_143 = arith.constant 0 : index
    %136 = vector.load %arg9[%c9_142, %c0_143] : memref<46x128xf32, #tpu.memory_space<vmem>>, vector<28x128xf32>
    %c4_144 = arith.constant 4 : index
    %c0_145 = arith.constant 0 : index
    %c0_146 = arith.constant 0 : index
    %137 = vector.load %arg6[%c4_144, %c0_145, %c0_146] : memref<9x128x128xf32, #tpu.memory_space<vmem>>, vector<1x128x128xf32>
    %138 = vector.shape_cast %137 : vector<1x128x128xf32> to vector<128x128xf32>
    %cst_147 = arith.constant dense<0.000000e+00> : vector<28x128xf32>
    %139 = tpu.matmul %136, %138, %cst_147 {dimension_numbers = #tpu.dot_dimension_numbers<[1], [0], [0], [1], [0, 0, 1, 1], [], []>} : vector<28x128xf32>, vector<128x128xf32>, vector<28x128xf32> -> vector<28x128xf32>
    %140 = arith.addf %135, %139 : vector<28x128xf32>
    %c10_148 = arith.constant 10 : index
    %c0_149 = arith.constant 0 : index
    %141 = vector.load %arg9[%c10_148, %c0_149] : memref<46x128xf32, #tpu.memory_space<vmem>>, vector<28x128xf32>
    %c5_150 = arith.constant 5 : index
    %c0_151 = arith.constant 0 : index
    %c0_152 = arith.constant 0 : index
    %142 = vector.load %arg6[%c5_150, %c0_151, %c0_152] : memref<9x128x128xf32, #tpu.memory_space<vmem>>, vector<1x128x128xf32>
    %143 = vector.shape_cast %142 : vector<1x128x128xf32> to vector<128x128xf32>
    %cst_153 = arith.constant dense<0.000000e+00> : vector<28x128xf32>
    %144 = tpu.matmul %141, %143, %cst_153 {dimension_numbers = #tpu.dot_dimension_numbers<[1], [0], [0], [1], [0, 0, 1, 1], [], []>} : vector<28x128xf32>, vector<128x128xf32>, vector<28x128xf32> -> vector<28x128xf32>
    %145 = arith.addf %140, %144 : vector<28x128xf32>
    %c16_154 = arith.constant 16 : index
    %c0_155 = arith.constant 0 : index
    %146 = vector.load %arg9[%c16_154, %c0_155] : memref<46x128xf32, #tpu.memory_space<vmem>>, vector<28x128xf32>
    %c6_156 = arith.constant 6 : index
    %c0_157 = arith.constant 0 : index
    %c0_158 = arith.constant 0 : index
    %147 = vector.load %arg6[%c6_156, %c0_157, %c0_158] : memref<9x128x128xf32, #tpu.memory_space<vmem>>, vector<1x128x128xf32>
    %148 = vector.shape_cast %147 : vector<1x128x128xf32> to vector<128x128xf32>
    %cst_159 = arith.constant dense<0.000000e+00> : vector<28x128xf32>
    %149 = tpu.matmul %146, %148, %cst_159 {dimension_numbers = #tpu.dot_dimension_numbers<[1], [0], [0], [1], [0, 0, 1, 1], [], []>} : vector<28x128xf32>, vector<128x128xf32>, vector<28x128xf32> -> vector<28x128xf32>
    %150 = arith.addf %145, %149 : vector<28x128xf32>
    %c17_160 = arith.constant 17 : index
    %c0_161 = arith.constant 0 : index
    %151 = vector.load %arg9[%c17_160, %c0_161] : memref<46x128xf32, #tpu.memory_space<vmem>>, vector<28x128xf32>
    %c7_162 = arith.constant 7 : index
    %c0_163 = arith.constant 0 : index
    %c0_164 = arith.constant 0 : index
    %152 = vector.load %arg6[%c7_162, %c0_163, %c0_164] : memref<9x128x128xf32, #tpu.memory_space<vmem>>, vector<1x128x128xf32>
    %153 = vector.shape_cast %152 : vector<1x128x128xf32> to vector<128x128xf32>
    %cst_165 = arith.constant dense<0.000000e+00> : vector<28x128xf32>
    %154 = tpu.matmul %151, %153, %cst_165 {dimension_numbers = #tpu.dot_dimension_numbers<[1], [0], [0], [1], [0, 0, 1, 1], [], []>} : vector<28x128xf32>, vector<128x128xf32>, vector<28x128xf32> -> vector<28x128xf32>
    %155 = arith.addf %150, %154 : vector<28x128xf32>
    %c18_166 = arith.constant 18 : index
    %c0_167 = arith.constant 0 : index
    %156 = vector.load %arg9[%c18_166, %c0_167] : memref<46x128xf32, #tpu.memory_space<vmem>>, vector<28x128xf32>
    %c8_168 = arith.constant 8 : index
    %c0_169 = arith.constant 0 : index
    %c0_170 = arith.constant 0 : index
    %157 = vector.load %arg6[%c8_168, %c0_169, %c0_170] : memref<9x128x128xf32, #tpu.memory_space<vmem>>, vector<1x128x128xf32>
    %158 = vector.shape_cast %157 : vector<1x128x128xf32> to vector<128x128xf32>
    %cst_171 = arith.constant dense<0.000000e+00> : vector<28x128xf32>
    %159 = tpu.matmul %156, %158, %cst_171 {dimension_numbers = #tpu.dot_dimension_numbers<[1], [0], [0], [1], [0, 0, 1, 1], [], []>} : vector<28x128xf32>, vector<128x128xf32>, vector<28x128xf32> -> vector<28x128xf32>
    %160 = arith.addf %155, %159 : vector<28x128xf32>
    %cst_172 = arith.constant 0.000000e+00 : f32
    %161 = vector.broadcast %cst_172 : f32 to vector<64x128xf32>
    %c0_173 = arith.constant 0 : index
    %c0_174 = arith.constant 0 : index
    %c0_175 = arith.constant 0 : index
    %162 = vector.load %arg8[%c0_173, %c0_174, %c0_175] : memref<1x64x128xf32, #tpu.memory_space<vmem>>, vector<1x64x128xf32>
    %163 = vector.shape_cast %162 : vector<1x64x128xf32> to vector<64x128xf32>
    %164 = vector.shape_cast %161 : vector<64x128xf32> to vector<1x64x128xf32>
    tpu.vector_store %arg8[%c0_173, %c0_174, %c0_175], %164 {strides = array<i32>} : memref<1x64x128xf32, #tpu.memory_space<vmem>>, vector<1x64x128xf32>,
    %c0_176 = arith.constant 0 : index
    %c0_177 = arith.constant 0 : index
    %165 = vector.load %arg7[%c0_176, %c0_177] : memref<1x128xf32, #tpu.memory_space<vmem>>, vector<1x128xf32>
    %166 = vector.broadcast %165 : vector<1x128xf32> to vector<28x128xf32>
    %167 = arith.addf %160, %166 : vector<28x128xf32>
    %c0_178 = arith.constant 0 : index
    %c0_179 = arith.constant 0 : index
    %c0_180 = arith.constant 0 : index
    %168 = vector.load %arg8[%c0_178, %c0_179, %c0_180] : memref<1x64x128xf32, #tpu.memory_space<vmem>>, vector<1x28x128xf32>
    %169 = vector.shape_cast %168 : vector<1x28x128xf32> to vector<28x128xf32>
    %170 = vector.shape_cast %167 : vector<28x128xf32> to vector<1x28x128xf32>
    tpu.vector_store %arg8[%c0_178, %c0_179, %c0_180], %170 {strides = array<i32>} : memref<1x64x128xf32, #tpu.memory_space<vmem>>, vector<1x28x128xf32>,
    return
  }
  func.func @transform_0(%arg0: i32) -> (i32, i32, i32) {
    %c0_i32 = arith.constant 0 : i32
    %c0_i32_0 = arith.constant 0 : i32
    %c0_i32_1 = arith.constant 0 : i32
    return %arg0, %c0_i32, %c0_i32_0 : i32, i32, i32
  }
  func.func @transform_1(%arg0: i32) -> (i32, i32, i32) {
    %c0_i32 = arith.constant 0 : i32
    %c0_i32_0 = arith.constant 0 : i32
    %c0_i32_1 = arith.constant 0 : i32
    return %arg0, %c0_i32, %c0_i32_0 : i32, i32, i32
  }
  func.func @transform_2(%arg0: i32) -> (i32, i32, i32) {
    %c0_i32 = arith.constant 0 : i32
    %c0_i32_0 = arith.constant 0 : i32
    %c0_i32_1 = arith.constant 0 : i32
    %c0_i32_2 = arith.constant 0 : i32
    return %c0_i32, %c0_i32_0, %c0_i32_1 : i32, i32, i32
  }
  func.func @transform_3(%arg0: i32) -> (i32, i32, i32) {
    %c0_i32 = arith.constant 0 : i32
    %c0_i32_0 = arith.constant 0 : i32
    %c0_i32_1 = arith.constant 0 : i32
    %c0_i32_2 = arith.constant 0 : i32
    return %c0_i32, %c0_i32_0, %c0_i32_1 : i32, i32, i32
  }
  func.func @transform_4(%arg0: i32) -> (i32, i32) {
    %c0_i32 = arith.constant 0 : i32
    %c0_i32_0 = arith.constant 0 : i32
    %c0_i32_1 = arith.constant 0 : i32
    return %c0_i32, %c0_i32_0 : i32, i32
  }
  func.func @transform_5(%arg0: i32) -> (i32, i32, i32) {
    %c0_i32 = arith.constant 0 : i32
    %c0_i32_0 = arith.constant 0 : i32
    %c0_i32_1 = arith.constant 0 : i32
    %c0_i32_2 = arith.constant 0 : i32
    return %c0_i32, %c0_i32_0, %c0_i32_1 : i32, i32, i32
  }
  func.func @transform_6(%arg0: i32) -> (i32, i32) {
    %c0_i32 = arith.constant 0 : i32
    %c0_i32_0 = arith.constant 0 : i32
    %c0_i32_1 = arith.constant 0 : i32
    return %c0_i32, %c0_i32_0 : i32, i32
  }
  func.func @transform_7(%arg0: i32) -> (i32, i32, i32) {
    %c0_i32 = arith.constant 0 : i32
    %c0_i32_0 = arith.constant 0 : i32
    %c0_i32_1 = arith.constant 0 : i32
    return %arg0, %c0_i32, %c0_i32_0 : i32, i32, i32
  }
}

</mosaic_0001>

<llo_original>
// kernel: decoder_forward.4
$region0: #{decoder_forward.4}
  #allocation0 [shape = 'u32[]', space=smem, size = 0x4, offset = 0x4, fixed_abs, tag = 'smem constant byte address 0x4 - core index']
  #allocation1 [shape = 'u32[144,128]{1,0:T(1,128)}', space=vmem, size = 0x12000, scoped, tag = 'internal scratch']
  %s0 = inlined_call_operand.vmem [shape: f32[2,16,128], index: 0, kind: input, shape index: {}]
  %s1 = inlined_call_operand.hbm [shape: f32[128,512], index: 1, kind: input, shape index: {}]
  %s2 = inlined_call_operand.hbm [shape: f32[1,512], index: 2, kind: input, shape index: {}]
  %s3 = inlined_call_operand.vmem [shape: f32[2,16,512], index: 3, kind: output, shape index: {}]
  %s4 = sld [smem:[#allocation0]]
  $region53: #{decoder_forward.4} parent=0
    _
  %s6 = ssub.s32 1, %s4
  %s7 = scalar_select 0, %s6, %s4
  $region1: #{decoder_forward.4} parent=0
    #allocation2 [shape = 'u8[262144]{0}', space=vmem, size = 0x40000, scoped, tag = 'input window, operand 1, single buffered']
    #allocation3 [shape = 's32[2]{0}', space=sflag, size = 0x8, scoped, tag = 'scoped memory for decoder_forward.4']
    #allocation4 [shape = 'u8[2048]{0}', space=vmem, size = 0x800, scoped, tag = 'input window, operand 2, single buffered']
    #allocation5 [shape = 's32[1]{0}', space=sflag, size = 0x4, scoped, tag = 'scoped memory for decoder_forward.4']
    %8 = vsyncpa [#allocation3], 0
    %9 = vsyncpa [#allocation5], 0
    loop: start=0, step=1, limit=4
    $region2: #{decoder_forward.4} parent=1 // loop_pre_header
      _
    $region3: #{decoder_forward.4} parent=1 // loop_header
      %s11 = sphi 0, %s15
      %p12 = scmp.ge.s32.totalorder %s11, 4
      %s21 = sphi 0, %s23
      %s24 = sphi 0, %s21
      %s25 = sphi 0, %s24
      %s41 = sphi 0, %s25
      %s45 = sphi 0, %s45
      %s47 = sphi 0, %s45
      %s48 = sphi 0, %s47
      %s62 = sphi 0, %s48
      %s66 = sphi 0, %s66
      %s68 = sphi 0, %s66
      %s69 = sphi 0, %s68
      %s83 = sphi 0, %s69
      %s89 = sphi 0, %s91
      %s92 = sphi 0, %s89
      %s93 = sphi 0, %s92
      %s109 = sphi 0, %s93
    $region4: #{decoder_forward.4} parent=1 // loop_header_branch
      %14 = sbr.rel (%p12) target = $region8
    $region5: #{decoder_forward.4} parent=1 // loop_body
      %s16 = ssub.s32 %s11, 1
      %s17 = ssub.s32 %s11, 2
      %s18 = sadd.s32 %s11, 1
      %s19 = ssub.s32 %s11, %s18
      %p20 = scmp.eq.s32.totalorder %s19, 0
      %s22 = sadd.s32 %s21, 1
      %s23 = scalar_select %p20, %s21, %s22
      %p26 = pneg %p20
      %p27 = scmp.eq.s32.totalorder %s11, 1
      %p28 = por %p26, %p27
      %p29 = scmp.ne.s32.totalorder %s21, %s24
      %p30 = scmp.eq.s32.totalorder %s11, 0
      %p31 = por %p29, %p30
      %p32 = scmp.ne.s32.totalorder %s21, %s24
      %p33 = scmp.eq.s32.totalorder %s16, 1
      %p34 = por %p32, %p33
      %p35 = scmp.ne.s32.totalorder %s24, %s25
      %p36 = scmp.eq.s32.totalorder %s16, 0
      %p37 = por %p35, %p36
      %p38 = scmp.ne.s32.totalorder %s24, %s25
      %p39 = scmp.eq.s32.totalorder %s17, 1
      %p40 = por %p38, %p39
      %p42 = scmp.ne.s32.totalorder %s25, %s41
      %p43 = scmp.eq.s32.totalorder %s17, 0
      %p44 = por %p42, %p43
      %s46 = sadd.s32 %s45, 1
      %p49 = scmp.eq.s32.totalorder %s11, 1
      %p50 = scmp.ne.s32.totalorder %s45, %s47
      %p51 = scmp.eq.s32.totalorder %s11, 0
      %p52 = por %p50, %p51
      %p53 = scmp.ne.s32.totalorder %s45, %s47
      %p54 = scmp.eq.s32.totalorder %s16, 1
      %p55 = por %p53, %p54
      %p56 = scmp.ne.s32.totalorder %s47, %s48
      %p57 = scmp.eq.s32.totalorder %s16, 0
      %p58 = por %p56, %p57
      %p59 = scmp.ne.s32.totalorder %s47, %s48
      %p60 = scmp.eq.s32.totalorder %s17, 1
      %p61 = por %p59, %p60
      %p63 = scmp.ne.s32.totalorder %s48, %s62
      %p64 = scmp.eq.s32.totalorder %s17, 0
      %p65 = por %p63, %p64
      %s67 = sadd.s32 %s66, 1
      %p70 = scmp.eq.s32.totalorder %s11, 1
      %p71 = scmp.ne.s32.totalorder %s66, %s68
      %p72 = scmp.eq.s32.totalorder %s11, 0
      %p73 = por %p71, %p72
      %p74 = scmp.ne.s32.totalorder %s66, %s68
      %p75 = scmp.eq.s32.totalorder %s16, 1
      %p76 = por %p74, %p75
      %p77 = scmp.ne.s32.totalorder %s68, %s69
      %p78 = scmp.eq.s32.totalorder %s16, 0
      %p79 = por %p77, %p78
      %p80 = scmp.ne.s32.totalorder %s68, %s69
      %p81 = scmp.eq.s32.totalorder %s17, 1
      %p82 = por %p80, %p81
      %p84 = scmp.ne.s32.totalorder %s69, %s83
      %p85 = scmp.eq.s32.totalorder %s17, 0
      %p86 = por %p84, %p85
      %s87 = ssub.s32 %s11, %s18
      %p88 = scmp.eq.s32.totalorder %s87, 0
      %s90 = sadd.s32 %s89, 1
      %s91 = scalar_select %p88, %s89, %s90
      %p94 = pneg %p88
      %p95 = scmp.eq.s32.totalorder %s11, 1
      %p96 = por %p94, %p95
      %p97 = scmp.ne.s32.totalorder %s89, %s92
      %p98 = scmp.eq.s32.totalorder %s11, 0
      %p99 = por %p97, %p98
      %p100 = scmp.ne.s32.totalorder %s89, %s92
      %p101 = scmp.eq.s32.totalorder %s16, 1
      %p102 = por %p100, %p101
      %p103 = scmp.ne.s32.totalorder %s92, %s93
      %p104 = scmp.eq.s32.totalorder %s16, 0
      %p105 = por %p103, %p104
      %p106 = scmp.ne.s32.totalorder %s92, %s93
      %p107 = scmp.eq.s32.totalorder %s17, 1
      %p108 = por %p106, %p107
      %p110 = scmp.ne.s32.totalorder %s93, %s109
      %p111 = scmp.eq.s32.totalorder %s17, 0
      %p112 = por %p110, %p111
      %p113 = scmp.le.s32.totalorder 1, %s11
      %p114 = scmp.lt.s32.totalorder %s11, 3
      %p115 = pnand %p113, %p114
      %p116 = pneg %p115
      // Predicated region
      $region9: #{decoder_forward.4} parent=5 // pred_check
        _
      $region10: #{decoder_forward.4} parent=5 // pred_check_branch
        %118 = sbr.rel (%p115) target = $region12
      $region11: #{decoder_forward.4} parent=5 // pred_region
        %s119 = ssub.s32 %s11, 1
        // Predicated region
        $region13: #{decoder_forward.4} parent=11 // pred_check
          %p120 = pneg %p58
        $region14: #{decoder_forward.4} parent=11 // pred_check_branch
          %122 = sbr.rel (%p120) target = $region16
        $region15: #{decoder_forward.4} parent=11 // pred_region
          %s124 = ssub.s32 8192, 8192
          %125 = vsyncadd [#allocation3], %s124
          %s126 = sshll.u32 [#allocation2], 4
          %s127 = int_to_ptr.vmem [resolvable:$true] %s126
          %132 = dma.hbm_to_vmem [thread:$0]  %s1, 8192, %s127, [#allocation3], 512, 512, 32
        $region16: #{decoder_forward.4} parent=11 // pred_fallthru
          _
        // Predicated region
        $region17: #{decoder_forward.4} parent=11 // pred_check
          %p133 = pneg %p79
        $region18: #{decoder_forward.4} parent=11 // pred_check_branch
          %135 = sbr.rel (%p133) target = $region20
        $region19: #{decoder_forward.4} parent=11 // pred_region
          %s137 = ssub.s32 64, 64
          %138 = vsyncadd [#allocation5], %s137
          %s140 = sshll.u32 [#allocation4], 4
          %s141 = int_to_ptr.vmem [resolvable:$true] %s140
          %143 = dma.hbm_to_vmem [thread:$0]  %s2, 64, %s141, [#allocation5]
        $region20: #{decoder_forward.4} parent=11 // pred_fallthru
          _
      $region12: #{decoder_forward.4} parent=5 // pred_fallthru
        _
      %p144 = scmp.lt.s32.totalorder %s11, 2
      // Predicated region
      $region21: #{decoder_forward.4} parent=5 // pred_check
        %p145 = pneg %p144
      $region22: #{decoder_forward.4} parent=5 // pred_check_branch
        %147 = sbr.rel (%p145) target = $region24
      $region23: #{decoder_forward.4} parent=5 // pred_region
        // Predicated region
        $region25: #{decoder_forward.4} parent=23 // pred_check
          %p148 = pneg %p31
        $region26: #{decoder_forward.4} parent=23 // pred_check_branch
          %150 = sbr.rel (%p148) target = $region28
        $region27: #{decoder_forward.4} parent=23 // pred_region
          %p151 = scmp.lt.s32.totalorder %s11, 1
          %s152 = scalar_select %p151, %s11, 1
          %s153 = smul.addr %s152, 2
          %s154 = smul.addr %s153, 8
          %s155 = scalar_lea.vmem %s0, %s154
        $region28: #{decoder_forward.4} parent=23 // pred_fallthru
          _
      $region24: #{decoder_forward.4} parent=5 // pred_fallthru
        _
      %p156 = scmp.le.s32.totalorder 1, %s11
      %p157 = scmp.lt.s32.totalorder %s11, 3
      %p158 = pnand %p156, %p157
      %p159 = pneg %p158
      // Predicated region
      $region29: #{decoder_forward.4} parent=5 // pred_check
        _
      $region30: #{decoder_forward.4} parent=5 // pred_check_branch
        %161 = sbr.rel (%p158) target = $region32
      $region31: #{decoder_forward.4} parent=5 // pred_region
        %s162 = ssub.s32 %s11, 1
        // Predicated region
        $region33: #{decoder_forward.4} parent=31 // pred_check
          %p163 = pneg %p58
        $region34: #{decoder_forward.4} parent=31 // pred_check_branch
          %165 = sbr.rel (%p163) target = $region36
        $region35: #{decoder_forward.4} parent=31 // pred_region
          %166 = dma.done [#allocation3], 8192
        $region36: #{decoder_forward.4} parent=31 // pred_fallthru
          _
        // Predicated region
        $region37: #{decoder_forward.4} parent=31 // pred_check
          %p167 = pneg %p79
        $region38: #{decoder_forward.4} parent=31 // pred_check_branch
          %169 = sbr.rel (%p167) target = $region40
        $region39: #{decoder_forward.4} parent=31 // pred_region
          %170 = dma.done [#allocation5], 64
        $region40: #{decoder_forward.4} parent=31 // pred_fallthru
          _
        %p171 = scmp.lt.s32.totalorder %s16, 1
        %s172 = scalar_select %p171, %s16, 1
        %s173 = smul.addr %s172, 2
        %s174 = smul.addr %s173, 8
        %s175 = scalar_lea.vmem %s0, %s174
        %p176 = pneg %p37
        %p177 = pneg %p34
        %p178 = pneg %p58
        %p179 = pneg %p55
        %p180 = pneg %p79
        %p181 = pneg %p76
        %p182 = pneg %p105
        %p183 = pneg %p102
        %p184 = scmp.lt.s32.totalorder %s16, 1
        %s185 = scalar_select %p184, %s16, 1
        %s186 = smul.addr %s185, 8
        %s187 = smul.addr %s186, 8
        %s188 = scalar_lea.vmem %s3, %s187
        %p189 = scmp.lt.s32.totalorder %s16, 1
        %s190 = scalar_select %p189, %s16, 1
        %s191 = smul.addr %s190, 2
        %s192 = smul.addr %s191, 8
        %s193 = scalar_lea.vmem %s0, %s192
        %p194 = scmp.lt.s32.totalorder %s16, 1
        %s195 = scalar_select %p194, %s16, 1
        %s196 = smul.addr %s195, 8
        %s197 = smul.addr %s196, 8
        %s198 = scalar_lea.vmem %s3, %s197
        %v199 = vld [vmem:[%s193] sm:$0xff]
        %v200 = vld [vmem:[%s193 + $0x8] sm:$0xff]
        %v201 = vld [vmem:[#allocation2] sm:$0xff]
        %v202 = vld [vmem:[#allocation2 + $0x8] sm:$0xff]
        %v203 = vld [vmem:[#allocation2 + $0x10] sm:$0xff]
        %v204 = vld [vmem:[#allocation2 + $0x18] sm:$0xff]
        %v205 = vld [vmem:[#allocation2 + $0x20] sm:$0xff]
        %v206 = vld [vmem:[#allocation2 + $0x28] sm:$0xff]
        %v207 = vld [vmem:[#allocation2 + $0x30] sm:$0xff]
        %v208 = vld [vmem:[#allocation2 + $0x38] sm:$0xff]
        %v209 = vld [vmem:[#allocation2 + $0x40] sm:$0xff]
        %v210 = vld [vmem:[#allocation2 + $0x48] sm:$0xff]
        %v211 = vld [vmem:[#allocation2 + $0x50] sm:$0xff]
        %v212 = vld [vmem:[#allocation2 + $0x58] sm:$0xff]
        %v213 = vld [vmem:[#allocation2 + $0x60] sm:$0xff]
        %v214 = vld [vmem:[#allocation2 + $0x68] sm:$0xff]
        %v215 = vld [vmem:[#allocation2 + $0x70] sm:$0xff]
        %v216 = vld [vmem:[#allocation2 + $0x78] sm:$0xff]
        %v217 = vld [vmem:[#allocation2 + $0x80] sm:$0xff]
        %v218 = vld [vmem:[#allocation2 + $0x88] sm:$0xff]
        %v219 = vld [vmem:[#allocation2 + $0x90] sm:$0xff]
        %v220 = vld [vmem:[#allocation2 + $0x98] sm:$0xff]
        %v221 = vld [vmem:[#allocation2 + $0xa0] sm:$0xff]
        %v222 = vld [vmem:[#allocation2 + $0xa8] sm:$0xff]
        %v223 = vld [vmem:[#allocation2 + $0xb0] sm:$0xff]
        %v224 = vld [vmem:[#allocation2 + $0xb8] sm:$0xff]
        %v225 = vld [vmem:[#allocation2 + $0xc0] sm:$0xff]
        %v226 = vld [vmem:[#allocation2 + $0xc8] sm:$0xff]
        %v227 = vld [vmem:[#allocation2 + $0xd0] sm:$0xff]
        %v228 = vld [vmem:[#allocation2 + $0xd8] sm:$0xff]
        %v229 = vld [vmem:[#allocation2 + $0xe0] sm:$0xff]
        %v230 = vld [vmem:[#allocation2 + $0xe8] sm:$0xff]
        %v231 = vld [vmem:[#allocation2 + $0xf0] sm:$0xff]
        %v232 = vld [vmem:[#allocation2 + $0xf8] sm:$0xff]
        %v233 = vld [vmem:[#allocation2 + $0x100] sm:$0xff]
        %v234 = vld [vmem:[#allocation2 + $0x108] sm:$0xff]
        %v235 = vld [vmem:[#allocation2 + $0x110] sm:$0xff]
        %v236 = vld [vmem:[#allocation2 + $0x118] sm:$0xff]
        %v237 = vld [vmem:[#allocation2 + $0x120] sm:$0xff]
        %v238 = vld [vmem:[#allocation2 + $0x128] sm:$0xff]
        %v239 = vld [vmem:[#allocation2 + $0x130] sm:$0xff]
        %v240 = vld [vmem:[#allocation2 + $0x138] sm:$0xff]
        %v241 = vld [vmem:[#allocation2 + $0x140] sm:$0xff]
        %v242 = vld [vmem:[#allocation2 + $0x148] sm:$0xff]
        %v243 = vld [vmem:[#allocation2 + $0x150] sm:$0xff]
        %v244 = vld [vmem:[#allocation2 + $0x158] sm:$0xff]
        %v245 = vld [vmem:[#allocation2 + $0x160] sm:$0xff]
        %v246 = vld [vmem:[#allocation2 + $0x168] sm:$0xff]
        %v247 = vld [vmem:[#allocation2 + $0x170] sm:$0xff]
        %v248 = vld [vmem:[#allocation2 + $0x178] sm:$0xff]
        %v249 = vld [vmem:[#allocation2 + $0x180] sm:$0xff]
        %v250 = vld [vmem:[#allocation2 + $0x188] sm:$0xff]
        %v251 = vld [vmem:[#allocation2 + $0x190] sm:$0xff]
        %v252 = vld [vmem:[#allocation2 + $0x198] sm:$0xff]
        %v253 = vld [vmem:[#allocation2 + $0x1a0] sm:$0xff]
        %v254 = vld [vmem:[#allocation2 + $0x1a8] sm:$0xff]
        %v255 = vld [vmem:[#allocation2 + $0x1b0] sm:$0xff]
        %v256 = vld [vmem:[#allocation2 + $0x1b8] sm:$0xff]
        %v257 = vld [vmem:[#allocation2 + $0x1c0] sm:$0xff]
        %v258 = vld [vmem:[#allocation2 + $0x1c8] sm:$0xff]
        %v259 = vld [vmem:[#allocation2 + $0x1d0] sm:$0xff]
        %v260 = vld [vmem:[#allocation2 + $0x1d8] sm:$0xff]
        %v261 = vld [vmem:[#allocation2 + $0x1e0] sm:$0xff]
        %v262 = vld [vmem:[#allocation2 + $0x1e8] sm:$0xff]
        %v263 = vld [vmem:[#allocation2 + $0x1f0] sm:$0xff]
        %v264 = vld [vmem:[#allocation2 + $0x1f8] sm:$0xff]
        %v265 = vld [vmem:[#allocation4] sm:$0xf]
        %v267 = vlaneseq
        %v268 = vshrl.u32 %v267, 7
        %v269 = vsub.s32 0, %v268
        %v270 = vrot.slane %v265, %v269
        %v271 = vlaneseq
        %v272 = vshrl.u32 %v271, 7
        %v273 = vsub.s32 1, %v272
        %v274 = vrot.slane %v265, %v273
        %v275 = vlaneseq
        %v276 = vshrl.u32 %v275, 7
        %v277 = vsub.s32 2, %v276
        %v278 = vrot.slane %v265, %v277
        %v279 = vlaneseq
        %v280 = vshrl.u32 %v279, 7
        %v281 = vsub.s32 3, %v280
        %v282 = vrot.slane %v265, %v281
        %287 = vmatprep.subr.mxu0 %v202
        %288 = vmatpush1.msra.mxu0 %v201
        %289 = vmatprep.subr.mxu0 %v206
        %290 = vmatpush1.msra.mxu0 %v205
        %291 = vmatprep.subr.mxu0 %v210
        %292 = vmatpush1.msra.mxu0 %v209
        %293 = vmatprep.subr.mxu0 %v214
        %294 = vmatpush1.msra.mxu0 %v213
        %295 = vmatprep.subr.mxu0 %v218
        %296 = vmatpush1.msra.mxu0 %v217
        %297 = vmatprep.subr.mxu0 %v222
        %298 = vmatpush1.msra.mxu0 %v221
        %299 = vmatprep.subr.mxu0 %v226
        %300 = vmatpush1.msra.mxu0 %v225
        %301 = vmatprep.subr.mxu0 %v230
        %302 = vmatpush1.msra.mxu0 %v229
        %303 = vmatprep.subr.mxu0 %v234
        %304 = vmatpush1.msra.mxu0 %v233
        %305 = vmatprep.subr.mxu0 %v238
        %306 = vmatpush1.msra.mxu0 %v237
        %307 = vmatprep.subr.mxu0 %v242
        %308 = vmatpush1.msra.mxu0 %v241
        %309 = vmatprep.subr.mxu0 %v246
        %310 = vmatpush1.msra.mxu0 %v245
        %311 = vmatprep.subr.mxu0 %v250
        %312 = vmatpush1.msra.mxu0 %v249
        %313 = vmatprep.subr.mxu0 %v254
        %314 = vmatpush1.msra.mxu0 %v253
        %315 = vmatprep.subr.mxu0 %v258
        %316 = vmatpush1.msra.mxu0 %v257
        %317 = vmatprep.subr.mxu0 %v262
        %318 = vmatpush1.msra.mxu0 %v261
        %319 = vmatprep.subr.mxu0 0.0
        %320 = vmatpush1.msra.mxu0 0.0
        %321 = vmatprep.subr.mxu0 0.0
        %322 = vmatpush1.msra.mxu0 0.0
        %323 = vmatprep.subr.mxu0 0.0
        %324 = vmatpush1.msra.mxu0 0.0
        %325 = vmatprep.subr.mxu0 0.0
        %326 = vmatpush1.msra.mxu0 0.0
        %327 = vmatprep.subr.mxu0 0.0
        %328 = vmatpush1.msra.mxu0 0.0
        %329 = vmatprep.subr.mxu0 0.0
        %330 = vmatpush1.msra.mxu0 0.0
        %331 = vmatprep.subr.mxu0 0.0
        %332 = vmatpush1.msra.mxu0 0.0
        %333 = vmatprep.subr.mxu0 0.0
        %334 = vmatpush1.msra.mxu0 0.0
        %335 = vmatprep.subr.mxu0 0.0
        %336 = vmatpush1.msra.mxu0 0.0
        %337 = vmatprep.subr.mxu0 0.0
        %338 = vmatpush1.msra.mxu0 0.0
        %339 = vmatprep.subr.mxu0 0.0
        %340 = vmatpush1.msra.mxu0 0.0
        %341 = vmatprep.subr.mxu0 0.0
        %342 = vmatpush1.msra.mxu0 0.0
        %343 = vmatprep.subr.mxu0 0.0
        %344 = vmatpush1.msra.mxu0 0.0
        %345 = vmatprep.subr.mxu0 0.0
        %346 = vmatpush1.msra.mxu0 0.0
        %347 = vmatprep.subr.mxu0 0.0
        %348 = vmatpush1.msra.mxu0 0.0
        %349 = vmatprep.subr.mxu0 0.0
        %350 = vmatpush1.msra.mxu0 0.0
        %351 = vmatprep.mubr.f32.mxu0 0.0
        %352 = vmatmul.mubr.f32.gmra.mrb[0].mxu0 %v199
        %v353 = vpop.f32.mrb[0].mxu0
        %v354 = vadd.f32 %v270, %v353
        %v355 = vpop.f32.mrb[0].mxu0
        %v356 = vadd.f32 %v274, %v355
        %357 = vmatprep.mubr.f32.mxu0 0.0
        %358 = vmatmul.mubr.f32.gmra.mrb[0].mxu0 %v200
        %v359 = vpop.f32.mrb[0].mxu0
        %v360 = vadd.f32 %v270, %v359
        %v361 = vpop.f32.mrb[0].mxu0
        %v362 = vadd.f32 %v274, %v361
        %363 = vdwg.mxu0
        %364 = vmatprep.subr.mxu0 %v204
        %365 = vmatpush1.msra.mxu0 %v203
        %366 = vmatprep.subr.mxu0 %v208
        %367 = vmatpush1.msra.mxu0 %v207
        %368 = vmatprep.subr.mxu0 %v212
        %369 = vmatpush1.msra.mxu0 %v211
        %370 = vmatprep.subr.mxu0 %v216
        %371 = vmatpush1.msra.mxu0 %v215
        %372 = vmatprep.subr.mxu0 %v220
        %373 = vmatpush1.msra.mxu0 %v219
        %374 = vmatprep.subr.mxu0 %v224
        %375 = vmatpush1.msra.mxu0 %v223
        %376 = vmatprep.subr.mxu0 %v228
        %377 = vmatpush1.msra.mxu0 %v227
        %378 = vmatprep.subr.mxu0 %v232
        %379 = vmatpush1.msra.mxu0 %v231
        %380 = vmatprep.subr.mxu0 %v236
        %381 = vmatpush1.msra.mxu0 %v235
        %382 = vmatprep.subr.mxu0 %v240
        %383 = vmatpush1.msra.mxu0 %v239
        %384 = vmatprep.subr.mxu0 %v244
        %385 = vmatpush1.msra.mxu0 %v243
        %386 = vmatprep.subr.mxu0 %v248
        %387 = vmatpush1.msra.mxu0 %v247
        %388 = vmatprep.subr.mxu0 %v252
        %389 = vmatpush1.msra.mxu0 %v251
        %390 = vmatprep.subr.mxu0 %v256
        %391 = vmatpush1.msra.mxu0 %v255
        %392 = vmatprep.subr.mxu0 %v260
        %393 = vmatpush1.msra.mxu0 %v259
        %394 = vmatprep.subr.mxu0 %v264
        %395 = vmatpush1.msra.mxu0 %v263
        %396 = vmatprep.subr.mxu0 0.0
        %397 = vmatpush1.msra.mxu0 0.0
        %398 = vmatprep.subr.mxu0 0.0
        %399 = vmatpush1.msra.mxu0 0.0
        %400 = vmatprep.subr.mxu0 0.0
        %401 = vmatpush1.msra.mxu0 0.0
        %402 = vmatprep.subr.mxu0 0.0
        %403 = vmatpush1.msra.mxu0 0.0
        %404 = vmatprep.subr.mxu0 0.0
        %405 = vmatpush1.msra.mxu0 0.0
        %406 = vmatprep.subr.mxu0 0.0
        %407 = vmatpush1.msra.mxu0 0.0
        %408 = vmatprep.subr.mxu0 0.0
        %409 = vmatpush1.msra.mxu0 0.0
        %410 = vmatprep.subr.mxu0 0.0
        %411 = vmatpush1.msra.mxu0 0.0
        %412 = vmatprep.subr.mxu0 0.0
        %413 = vmatpush1.msra.mxu0 0.0
        %414 = vmatprep.subr.mxu0 0.0
        %415 = vmatpush1.msra.mxu0 0.0
        %416 = vmatprep.subr.mxu0 0.0
        %417 = vmatpush1.msra.mxu0 0.0
        %418 = vmatprep.subr.mxu0 0.0
        %419 = vmatpush1.msra.mxu0 0.0
        %420 = vmatprep.subr.mxu0 0.0
        %421 = vmatpush1.msra.mxu0 0.0
        %422 = vmatprep.subr.mxu0 0.0
        %423 = vmatpush1.msra.mxu0 0.0
        %424 = vmatprep.subr.mxu0 0.0
        %425 = vmatpush1.msra.mxu0 0.0
        %426 = vmatprep.subr.mxu0 0.0
        %427 = vmatpush1.msra.mxu0 0.0
        %428 = vmatprep.mubr.f32.mxu0 0.0
        %429 = vmatmul.mubr.f32.gmra.mrb[0].mxu0 %v199
        %v430 = vpop.f32.mrb[0].mxu0
        %v431 = vadd.f32 %v278, %v430
        %v432 = vpop.f32.mrb[0].mxu0
        %v433 = vadd.f32 %v282, %v432
        %434 = vmatprep.mubr.f32.mxu0 0.0
        %435 = vmatmul.mubr.f32.gmra.mrb[0].mxu0 %v200
        %v436 = vpop.f32.mrb[0].mxu0
        %v437 = vadd.f32 %v278, %v436
        %v438 = vpop.f32.mrb[0].mxu0
        %v439 = vadd.f32 %v282, %v438
        %440 = vdwg.mxu0
        %441 = vst [vmem:[%s198] sm:$0xff] %v354
        %442 = vst [vmem:[%s198 + $0x8] sm:$0xff] %v356
        %443 = vst [vmem:[%s198 + $0x10] sm:$0xff] %v431
        %444 = vst [vmem:[%s198 + $0x18] sm:$0xff] %v433
        %445 = vst [vmem:[%s198 + $0x20] sm:$0xff] %v360
        %446 = vst [vmem:[%s198 + $0x28] sm:$0xff] %v362
        %447 = vst [vmem:[%s198 + $0x30] sm:$0xff] %v437
        %448 = vst [vmem:[%s198 + $0x38] sm:$0xff] %v439
        %p449 = scmp.lt.s32.totalorder %s16, 1
        %s450 = scalar_select %p449, %s16, 1
        %s451 = smul.addr %s450, 8
        %s452 = smul.addr %s451, 8
        %s453 = scalar_lea.vmem %s3, %s452
        // Predicated region
        $region41: #{decoder_forward.4} parent=31 // pred_check
          %p454 = pneg %p102
        $region42: #{decoder_forward.4} parent=31 // pred_check_branch
          %456 = sbr.rel (%p454) target = $region44
        $region43: #{decoder_forward.4} parent=31 // pred_region
          _
        $region44: #{decoder_forward.4} parent=31 // pred_fallthru
          _
      $region32: #{decoder_forward.4} parent=5 // pred_fallthru
        _
      %p457 = scmp.le.s32.totalorder 2, %s11
      // Predicated region
      $region45: #{decoder_forward.4} parent=5 // pred_check
        %p458 = pneg %p457
      $region46: #{decoder_forward.4} parent=5 // pred_check_branch
        %460 = sbr.rel (%p458) target = $region48
      $region47: #{decoder_forward.4} parent=5 // pred_region
        %s461 = ssub.s32 %s11, 2
        // Predicated region
        $region49: #{decoder_forward.4} parent=47 // pred_check
          %p462 = pneg %p108
        $region50: #{decoder_forward.4} parent=47 // pred_check_branch
          %464 = sbr.rel (%p462) target = $region52
        $region51: #{decoder_forward.4} parent=47 // pred_region
          %p465 = scmp.lt.s32.totalorder %s17, 1
          %s466 = scalar_select %p465, %s17, 1
          %s467 = smul.addr %s466, 8
          %s468 = smul.addr %s467, 8
          %s469 = scalar_lea.vmem %s3, %s468
        $region52: #{decoder_forward.4} parent=47 // pred_fallthru
          _
      $region48: #{decoder_forward.4} parent=5 // pred_fallthru
        _
    $region6: #{decoder_forward.4} parent=1 // loop_footer
      %s15 = sadd.s32 1, %s11
    $region7: #{decoder_forward.4} parent=1 // loop_footer_branch
      %10 = sbr.rel target = $region3
    $region8: #{decoder_forward.4} parent=1 // loop_exit
      _
    %470 = vsyncpa [#allocation3], 1
    %s471 = scalar_lea.sflag [#allocation3], 1
    %472 = vsyncpa %s471, 1
    %473 = vsyncpa [#allocation5], 1

// kernel: decoder_forward.6
$region0: #{decoder_forward.6}
  #allocation0 [shape = 'u32[]', space=smem, size = 0x4, offset = 0x4, fixed_abs, tag = 'smem constant byte address 0x4 - core index']
  #allocation1 [shape = 'u32[144,128]{1,0:T(1,128)}', space=vmem, size = 0x12000, scoped, tag = 'internal scratch']
  %s0 = inlined_call_operand.vmem [shape: f32[2,16,128], index: 0, kind: input, shape index: {}]
  %s1 = inlined_call_operand.vmem [shape: f32[128,512], index: 1, kind: input, shape index: {}]
  %s2 = inlined_call_operand.vmem [shape: f32[1,512], index: 2, kind: input, shape index: {}]
  %s3 = inlined_call_operand.vmem [shape: f32[2,16,512], index: 3, kind: output, shape index: {}]
  %s4 = sld [smem:[#allocation0]]
  $region45: #{decoder_forward.6} parent=0
    _
  %s6 = ssub.s32 1, %s4
  %s7 = scalar_select 0, %s6, %s4
  loop: start=0, step=1, limit=4
  $region2: #{decoder_forward.6} parent=0 // loop_pre_header
    _
  $region3: #{decoder_forward.6} parent=0 // loop_header
    %s9 = sphi 0, %s13
    %p10 = scmp.ge.s32.totalorder %s9, 4
    %s19 = sphi 0, %s21
    %s22 = sphi 0, %s19
    %s23 = sphi 0, %s22
    %s39 = sphi 0, %s23
    %s43 = sphi 0, %s43
    %s45 = sphi 0, %s43
    %s46 = sphi 0, %s45
    %s60 = sphi 0, %s46
    %s64 = sphi 0, %s64
    %s66 = sphi 0, %s64
    %s67 = sphi 0, %s66
    %s81 = sphi 0, %s67
    %s87 = sphi 0, %s89
    %s90 = sphi 0, %s87
    %s91 = sphi 0, %s90
    %s107 = sphi 0, %s91
  $region4: #{decoder_forward.6} parent=0 // loop_header_branch
    %12 = sbr.rel (%p10) target = $region8
  $region5: #{decoder_forward.6} parent=0 // loop_body
    %s14 = ssub.s32 %s9, 1
    %s15 = ssub.s32 %s9, 2
    %s16 = sadd.s32 %s9, 1
    %s17 = ssub.s32 %s9, %s16
    %p18 = scmp.eq.s32.totalorder %s17, 0
    %s20 = sadd.s32 %s19, 1
    %s21 = scalar_select %p18, %s19, %s20
    %p24 = pneg %p18
    %p25 = scmp.eq.s32.totalorder %s9, 1
    %p26 = por %p24, %p25
    %p27 = scmp.ne.s32.totalorder %s19, %s22
    %p28 = scmp.eq.s32.totalorder %s9, 0
    %p29 = por %p27, %p28
    %p30 = scmp.ne.s32.totalorder %s19, %s22
    %p31 = scmp.eq.s32.totalorder %s14, 1
    %p32 = por %p30, %p31
    %p33 = scmp.ne.s32.totalorder %s22, %s23
    %p34 = scmp.eq.s32.totalorder %s14, 0
    %p35 = por %p33, %p34
    %p36 = scmp.ne.s32.totalorder %s22, %s23
    %p37 = scmp.eq.s32.totalorder %s15, 1
    %p38 = por %p36, %p37
    %p40 = scmp.ne.s32.totalorder %s23, %s39
    %p41 = scmp.eq.s32.totalorder %s15, 0
    %p42 = por %p40, %p41
    %s44 = sadd.s32 %s43, 1
    %p47 = scmp.eq.s32.totalorder %s9, 1
    %p48 = scmp.ne.s32.totalorder %s43, %s45
    %p49 = scmp.eq.s32.totalorder %s9, 0
    %p50 = por %p48, %p49
    %p51 = scmp.ne.s32.totalorder %s43, %s45
    %p52 = scmp.eq.s32.totalorder %s14, 1
    %p53 = por %p51, %p52
    %p54 = scmp.ne.s32.totalorder %s45, %s46
    %p55 = scmp.eq.s32.totalorder %s14, 0
    %p56 = por %p54, %p55
    %p57 = scmp.ne.s32.totalorder %s45, %s46
    %p58 = scmp.eq.s32.totalorder %s15, 1
    %p59 = por %p57, %p58
    %p61 = scmp.ne.s32.totalorder %s46, %s60
    %p62 = scmp.eq.s32.totalorder %s15, 0
    %p63 = por %p61, %p62
    %s65 = sadd.s32 %s64, 1
    %p68 = scmp.eq.s32.totalorder %s9, 1
    %p69 = scmp.ne.s32.totalorder %s64, %s66
    %p70 = scmp.eq.s32.totalorder %s9, 0
    %p71 = por %p69, %p70
    %p72 = scmp.ne.s32.totalorder %s64, %s66
    %p73 = scmp.eq.s32.totalorder %s14, 1
    %p74 = por %p72, %p73
    %p75 = scmp.ne.s32.totalorder %s66, %s67
    %p76 = scmp.eq.s32.totalorder %s14, 0
    %p77 = por %p75, %p76
    %p78 = scmp.ne.s32.totalorder %s66, %s67
    %p79 = scmp.eq.s32.totalorder %s15, 1
    %p80 = por %p78, %p79
    %p82 = scmp.ne.s32.totalorder %s67, %s81
    %p83 = scmp.eq.s32.totalorder %s15, 0
    %p84 = por %p82, %p83
    %s85 = ssub.s32 %s9, %s16
    %p86 = scmp.eq.s32.totalorder %s85, 0
    %s88 = sadd.s32 %s87, 1
    %s89 = scalar_select %p86, %s87, %s88
    %p92 = pneg %p86
    %p93 = scmp.eq.s32.totalorder %s9, 1
    %p94 = por %p92, %p93
    %p95 = scmp.ne.s32.totalorder %s87, %s90
    %p96 = scmp.eq.s32.totalorder %s9, 0
    %p97 = por %p95, %p96
    %p98 = scmp.ne.s32.totalorder %s87, %s90
    %p99 = scmp.eq.s32.totalorder %s14, 1
    %p100 = por %p98, %p99
    %p101 = scmp.ne.s32.totalorder %s90, %s91
    %p102 = scmp.eq.s32.totalorder %s14, 0
    %p103 = por %p101, %p102
    %p104 = scmp.ne.s32.totalorder %s90, %s91
    %p105 = scmp.eq.s32.totalorder %s15, 1
    %p106 = por %p104, %p105
    %p108 = scmp.ne.s32.totalorder %s91, %s107
    %p109 = scmp.eq.s32.totalorder %s15, 0
    %p110 = por %p108, %p109
    %p111 = scmp.le.s32.totalorder 1, %s9
    %p112 = scmp.lt.s32.totalorder %s9, 3
    %p113 = pnand %p111, %p112
    %p114 = pneg %p113
    // Predicated region
    $region9: #{decoder_forward.6} parent=5 // pred_check
      _
    $region10: #{decoder_forward.6} parent=5 // pred_check_branch
      %116 = sbr.rel (%p113) target = $region12
    $region11: #{decoder_forward.6} parent=5 // pred_region
      %s117 = ssub.s32 %s9, 1
      // Predicated region
      $region13: #{decoder_forward.6} parent=11 // pred_check
        %p118 = pneg %p56
      $region14: #{decoder_forward.6} parent=11 // pred_check_branch
        %120 = sbr.rel (%p118) target = $region16
      $region15: #{decoder_forward.6} parent=11 // pred_region
        _
      $region16: #{decoder_forward.6} parent=11 // pred_fallthru
        _
      // Predicated region
      $region17: #{decoder_forward.6} parent=11 // pred_check
        %p121 = pneg %p77
      $region18: #{decoder_forward.6} parent=11 // pred_check_branch
        %123 = sbr.rel (%p121) target = $region20
      $region19: #{decoder_forward.6} parent=11 // pred_region
        _
      $region20: #{decoder_forward.6} parent=11 // pred_fallthru
        _
    $region12: #{decoder_forward.6} parent=5 // pred_fallthru
      _
    %p124 = scmp.lt.s32.totalorder %s9, 2
    // Predicated region
    $region21: #{decoder_forward.6} parent=5 // pred_check
      %p125 = pneg %p124
    $region22: #{decoder_forward.6} parent=5 // pred_check_branch
      %127 = sbr.rel (%p125) target = $region24
    $region23: #{decoder_forward.6} parent=5 // pred_region
      // Predicated region
      $region25: #{decoder_forward.6} parent=23 // pred_check
        %p128 = pneg %p29
      $region26: #{decoder_forward.6} parent=23 // pred_check_branch
        %130 = sbr.rel (%p128) target = $region28
      $region27: #{decoder_forward.6} parent=23 // pred_region
        %p131 = scmp.lt.s32.totalorder %s9, 1
        %s132 = scalar_select %p131, %s9, 1
        %s133 = smul.addr %s132, 2
        %s134 = smul.addr %s133, 8
        %s135 = scalar_lea.vmem %s0, %s134
      $region28: #{decoder_forward.6} parent=23 // pred_fallthru
        _
    $region24: #{decoder_forward.6} parent=5 // pred_fallthru
      _
    %p136 = scmp.le.s32.totalorder 1, %s9
    %p137 = scmp.lt.s32.totalorder %s9, 3
    %p138 = pnand %p136, %p137
    %p139 = pneg %p138
    // Predicated region
    $region29: #{decoder_forward.6} parent=5 // pred_check
      _
    $region30: #{decoder_forward.6} parent=5 // pred_check_branch
      %141 = sbr.rel (%p138) target = $region32
    $region31: #{decoder_forward.6} parent=5 // pred_region
      %s142 = ssub.s32 %s9, 1
      %p143 = scmp.lt.s32.totalorder %s14, 1
      %s144 = scalar_select %p143, %s14, 1
      %s145 = smul.addr %s144, 2
      %s146 = smul.addr %s145, 8
      %s147 = scalar_lea.vmem %s0, %s146
      %p148 = pneg %p35
      %p149 = pneg %p32
      %p150 = pneg %p56
      %p151 = pneg %p53
      %p152 = pneg %p77
      %p153 = pneg %p74
      %p154 = pneg %p103
      %p155 = pneg %p100
      %p156 = scmp.lt.s32.totalorder %s14, 1
      %s157 = scalar_select %p156, %s14, 1
      %s158 = smul.addr %s157, 8
      %s159 = smul.addr %s158, 8
      %s160 = scalar_lea.vmem %s3, %s159
      %p161 = scmp.lt.s32.totalorder %s14, 1
      %s162 = scalar_select %p161, %s14, 1
      %s163 = smul.addr %s162, 2
      %s164 = smul.addr %s163, 8
      %s165 = scalar_lea.vmem %s0, %s164
      %p166 = scmp.lt.s32.totalorder %s14, 1
      %s167 = scalar_select %p166, %s14, 1
      %s168 = smul.addr %s167, 8
      %s169 = smul.addr %s168, 8
      %s170 = scalar_lea.vmem %s3, %s169
      %v171 = vld [vmem:[%s165] sm:$0xff]
      %v172 = vld [vmem:[%s165 + $0x8] sm:$0xff]
      %v173 = vld [vmem:[%s1] sm:$0xff]
      %v174 = vld [vmem:[%s1 + $0x8] sm:$0xff]
      %v175 = vld [vmem:[%s1 + $0x10] sm:$0xff]
      %v176 = vld [vmem:[%s1 + $0x18] sm:$0xff]
      %v177 = vld [vmem:[%s1 + $0x20] sm:$0xff]
      %v178 = vld [vmem:[%s1 + $0x28] sm:$0xff]
      %v179 = vld [vmem:[%s1 + $0x30] sm:$0xff]
      %v180 = vld [vmem:[%s1 + $0x38] sm:$0xff]
      %v181 = vld [vmem:[%s1 + $0x40] sm:$0xff]
      %v182 = vld [vmem:[%s1 + $0x48] sm:$0xff]
      %v183 = vld [vmem:[%s1 + $0x50] sm:$0xff]
      %v184 = vld [vmem:[%s1 + $0x58] sm:$0xff]
      %v185 = vld [vmem:[%s1 + $0x60] sm:$0xff]
      %v186 = vld [vmem:[%s1 + $0x68] sm:$0xff]
      %v187 = vld [vmem:[%s1 + $0x70] sm:$0xff]
      %v188 = vld [vmem:[%s1 + $0x78] sm:$0xff]
      %v189 = vld [vmem:[%s1 + $0x80] sm:$0xff]
      %v190 = vld [vmem:[%s1 + $0x88] sm:$0xff]
      %v191 = vld [vmem:[%s1 + $0x90] sm:$0xff]
      %v192 = vld [vmem:[%s1 + $0x98] sm:$0xff]
      %v193 = vld [vmem:[%s1 + $0xa0] sm:$0xff]
      %v194 = vld [vmem:[%s1 + $0xa8] sm:$0xff]
      %v195 = vld [vmem:[%s1 + $0xb0] sm:$0xff]
      %v196 = vld [vmem:[%s1 + $0xb8] sm:$0xff]
      %v197 = vld [vmem:[%s1 + $0xc0] sm:$0xff]
      %v198 = vld [vmem:[%s1 + $0xc8] sm:$0xff]
      %v199 = vld [vmem:[%s1 + $0xd0] sm:$0xff]
      %v200 = vld [vmem:[%s1 + $0xd8] sm:$0xff]
      %v201 = vld [vmem:[%s1 + $0xe0] sm:$0xff]
      %v202 = vld [vmem:[%s1 + $0xe8] sm:$0xff]
      %v203 = vld [vmem:[%s1 + $0xf0] sm:$0xff]
      %v204 = vld [vmem:[%s1 + $0xf8] sm:$0xff]
      %v205 = vld [vmem:[%s1 + $0x100] sm:$0xff]
      %v206 = vld [vmem:[%s1 + $0x108] sm:$0xff]
      %v207 = vld [vmem:[%s1 + $0x110] sm:$0xff]
      %v208 = vld [vmem:[%s1 + $0x118] sm:$0xff]
      %v209 = vld [vmem:[%s1 + $0x120] sm:$0xff]
      %v210 = vld [vmem:[%s1 + $0x128] sm:$0xff]
      %v211 = vld [vmem:[%s1 + $0x130] sm:$0xff]
      %v212 = vld [vmem:[%s1 + $0x138] sm:$0xff]
      %v213 = vld [vmem:[%s1 + $0x140] sm:$0xff]
      %v214 = vld [vmem:[%s1 + $0x148] sm:$0xff]
      %v215 = vld [vmem:[%s1 + $0x150] sm:$0xff]
      %v216 = vld [vmem:[%s1 + $0x158] sm:$0xff]
      %v217 = vld [vmem:[%s1 + $0x160] sm:$0xff]
      %v218 = vld [vmem:[%s1 + $0x168] sm:$0xff]
      %v219 = vld [vmem:[%s1 + $0x170] sm:$0xff]
      %v220 = vld [vmem:[%s1 + $0x178] sm:$0xff]
      %v221 = vld [vmem:[%s1 + $0x180] sm:$0xff]
      %v222 = vld [vmem:[%s1 + $0x188] sm:$0xff]
      %v223 = vld [vmem:[%s1 + $0x190] sm:$0xff]
      %v224 = vld [vmem:[%s1 + $0x198] sm:$0xff]
      %v225 = vld [vmem:[%s1 + $0x1a0] sm:$0xff]
      %v226 = vld [vmem:[%s1 + $0x1a8] sm:$0xff]
      %v227 = vld [vmem:[%s1 + $0x1b0] sm:$0xff]
      %v228 = vld [vmem:[%s1 + $0x1b8] sm:$0xff]
      %v229 = vld [vmem:[%s1 + $0x1c0] sm:$0xff]
      %v230 = vld [vmem:[%s1 + $0x1c8] sm:$0xff]
      %v231 = vld [vmem:[%s1 + $0x1d0] sm:$0xff]
      %v232 = vld [vmem:[%s1 + $0x1d8] sm:$0xff]
      %v233 = vld [vmem:[%s1 + $0x1e0] sm:$0xff]
      %v234 = vld [vmem:[%s1 + $0x1e8] sm:$0xff]
      %v235 = vld [vmem:[%s1 + $0x1f0] sm:$0xff]
      %v236 = vld [vmem:[%s1 + $0x1f8] sm:$0xff]
      %v237 = vld [vmem:[%s2] sm:$0xf]
      %v239 = vlaneseq
      %v240 = vshrl.u32 %v239, 7
      %v241 = vsub.s32 0, %v240
      %v242 = vrot.slane %v237, %v241
      %v243 = vlaneseq
      %v244 = vshrl.u32 %v243, 7
      %v245 = vsub.s32 1, %v244
      %v246 = vrot.slane %v237, %v245
      %v247 = vlaneseq
      %v248 = vshrl.u32 %v247, 7
      %v249 = vsub.s32 2, %v248
      %v250 = vrot.slane %v237, %v249
      %v251 = vlaneseq
      %v252 = vshrl.u32 %v251, 7
      %v253 = vsub.s32 3, %v252
      %v254 = vrot.slane %v237, %v253
      %259 = vmatprep.subr.mxu0 %v174
      %260 = vmatpush1.msra.mxu0 %v173
      %261 = vmatprep.subr.mxu0 %v178
      %262 = vmatpush1.msra.mxu0 %v177
      %263 = vmatprep.subr.mxu0 %v182
      %264 = vmatpush1.msra.mxu0 %v181
      %265 = vmatprep.subr.mxu0 %v186
      %266 = vmatpush1.msra.mxu0 %v185
      %267 = vmatprep.subr.mxu0 %v190
      %268 = vmatpush1.msra.mxu0 %v189
      %269 = vmatprep.subr.mxu0 %v194
      %270 = vmatpush1.msra.mxu0 %v193
      %271 = vmatprep.subr.mxu0 %v198
      %272 = vmatpush1.msra.mxu0 %v197
      %273 = vmatprep.subr.mxu0 %v202
      %274 = vmatpush1.msra.mxu0 %v201
      %275 = vmatprep.subr.mxu0 %v206
      %276 = vmatpush1.msra.mxu0 %v205
      %277 = vmatprep.subr.mxu0 %v210
      %278 = vmatpush1.msra.mxu0 %v209
      %279 = vmatprep.subr.mxu0 %v214
      %280 = vmatpush1.msra.mxu0 %v213
      %281 = vmatprep.subr.mxu0 %v218
      %282 = vmatpush1.msra.mxu0 %v217
      %283 = vmatprep.subr.mxu0 %v222
      %284 = vmatpush1.msra.mxu0 %v221
      %285 = vmatprep.subr.mxu0 %v226
      %286 = vmatpush1.msra.mxu0 %v225
      %287 = vmatprep.subr.mxu0 %v230
      %288 = vmatpush1.msra.mxu0 %v229
      %289 = vmatprep.subr.mxu0 %v234
      %290 = vmatpush1.msra.mxu0 %v233
      %291 = vmatprep.subr.mxu0 0.0
      %292 = vmatpush1.msra.mxu0 0.0
      %293 = vmatprep.subr.mxu0 0.0
      %294 = vmatpush1.msra.mxu0 0.0
      %295 = vmatprep.subr.mxu0 0.0
      %296 = vmatpush1.msra.mxu0 0.0
      %297 = vmatprep.subr.mxu0 0.0
      %298 = vmatpush1.msra.mxu0 0.0
      %299 = vmatprep.subr.mxu0 0.0
      %300 = vmatpush1.msra.mxu0 0.0
      %301 = vmatprep.subr.mxu0 0.0
      %302 = vmatpush1.msra.mxu0 0.0
      %303 = vmatprep.subr.mxu0 0.0
      %304 = vmatpush1.msra.mxu0 0.0
      %305 = vmatprep.subr.mxu0 0.0
      %306 = vmatpush1.msra.mxu0 0.0
      %307 = vmatprep.subr.mxu0 0.0
      %308 = vmatpush1.msra.mxu0 0.0
      %309 = vmatprep.subr.mxu0 0.0
      %310 = vmatpush1.msra.mxu0 0.0
      %311 = vmatprep.subr.mxu0 0.0
      %312 = vmatpush1.msra.mxu0 0.0
      %313 = vmatprep.subr.mxu0 0.0
      %314 = vmatpush1.msra.mxu0 0.0
      %315 = vmatprep.subr.mxu0 0.0
      %316 = vmatpush1.msra.mxu0 0.0
      %317 = vmatprep.subr.mxu0 0.0
      %318 = vmatpush1.msra.mxu0 0.0
      %319 = vmatprep.subr.mxu0 0.0
      %320 = vmatpush1.msra.mxu0 0.0
      %321 = vmatprep.subr.mxu0 0.0
      %322 = vmatpush1.msra.mxu0 0.0
      %323 = vmatprep.mubr.f32.mxu0 0.0
      %324 = vmatmul.mubr.f32.gmra.mrb[0].mxu0 %v171
      %v325 = vpop.f32.mrb[0].mxu0
      %v326 = vadd.f32 %v242, %v325
      %v327 = vpop.f32.mrb[0].mxu0
      %v328 = vadd.f32 %v246, %v327
      %329 = vmatprep.mubr.f32.mxu0 0.0
      %330 = vmatmul.mubr.f32.gmra.mrb[0].mxu0 %v172
      %v331 = vpop.f32.mrb[0].mxu0
      %v332 = vadd.f32 %v242, %v331
      %v333 = vpop.f32.mrb[0].mxu0
      %v334 = vadd.f32 %v246, %v333
      %335 = vdwg.mxu0
      %336 = vmatprep.subr.mxu0 %v176
      %337 = vmatpush1.msra.mxu0 %v175
      %338 = vmatprep.subr.mxu0 %v180
      %339 = vmatpush1.msra.mxu0 %v179
      %340 = vmatprep.subr.mxu0 %v184
      %341 = vmatpush1.msra.mxu0 %v183
      %342 = vmatprep.subr.mxu0 %v188
      %343 = vmatpush1.msra.mxu0 %v187
      %344 = vmatprep.subr.mxu0 %v192
      %345 = vmatpush1.msra.mxu0 %v191
      %346 = vmatprep.subr.mxu0 %v196
      %347 = vmatpush1.msra.mxu0 %v195
      %348 = vmatprep.subr.mxu0 %v200
      %349 = vmatpush1.msra.mxu0 %v199
      %350 = vmatprep.subr.mxu0 %v204
      %351 = vmatpush1.msra.mxu0 %v203
      %352 = vmatprep.subr.mxu0 %v208
      %353 = vmatpush1.msra.mxu0 %v207
      %354 = vmatprep.subr.mxu0 %v212
      %355 = vmatpush1.msra.mxu0 %v211
      %356 = vmatprep.subr.mxu0 %v216
      %357 = vmatpush1.msra.mxu0 %v215
      %358 = vmatprep.subr.mxu0 %v220
      %359 = vmatpush1.msra.mxu0 %v219
      %360 = vmatprep.subr.mxu0 %v224
      %361 = vmatpush1.msra.mxu0 %v223
      %362 = vmatprep.subr.mxu0 %v228
      %363 = vmatpush1.msra.mxu0 %v227
      %364 = vmatprep.subr.mxu0 %v232
      %365 = vmatpush1.msra.mxu0 %v231
      %366 = vmatprep.subr.mxu0 %v236
      %367 = vmatpush1.msra.mxu0 %v235
      %368 = vmatprep.subr.mxu0 0.0
      %369 = vmatpush1.msra.mxu0 0.0
      %370 = vmatprep.subr.mxu0 0.0
      %371 = vmatpush1.msra.mxu0 0.0
      %372 = vmatprep.subr.mxu0 0.0
      %373 = vmatpush1.msra.mxu0 0.0
      %374 = vmatprep.subr.mxu0 0.0
      %375 = vmatpush1.msra.mxu0 0.0
      %376 = vmatprep.subr.mxu0 0.0
      %377 = vmatpush1.msra.mxu0 0.0
      %378 = vmatprep.subr.mxu0 0.0
      %379 = vmatpush1.msra.mxu0 0.0
      %380 = vmatprep.subr.mxu0 0.0
      %381 = vmatpush1.msra.mxu0 0.0
      %382 = vmatprep.subr.mxu0 0.0
      %383 = vmatpush1.msra.mxu0 0.0
      %384 = vmatprep.subr.mxu0 0.0
      %385 = vmatpush1.msra.mxu0 0.0
      %386 = vmatprep.subr.mxu0 0.0
      %387 = vmatpush1.msra.mxu0 0.0
      %388 = vmatprep.subr.mxu0 0.0
      %389 = vmatpush1.msra.mxu0 0.0
      %390 = vmatprep.subr.mxu0 0.0
      %391 = vmatpush1.msra.mxu0 0.0
      %392 = vmatprep.subr.mxu0 0.0
      %393 = vmatpush1.msra.mxu0 0.0
      %394 = vmatprep.subr.mxu0 0.0
      %395 = vmatpush1.msra.mxu0 0.0
      %396 = vmatprep.subr.mxu0 0.0
      %397 = vmatpush1.msra.mxu0 0.0
      %398 = vmatprep.subr.mxu0 0.0
      %399 = vmatpush1.msra.mxu0 0.0
      %400 = vmatprep.mubr.f32.mxu0 0.0
      %401 = vmatmul.mubr.f32.gmra.mrb[0].mxu0 %v171
      %v402 = vpop.f32.mrb[0].mxu0
      %v403 = vadd.f32 %v250, %v402
      %v404 = vpop.f32.mrb[0].mxu0
      %v405 = vadd.f32 %v254, %v404
      %406 = vmatprep.mubr.f32.mxu0 0.0
      %407 = vmatmul.mubr.f32.gmra.mrb[0].mxu0 %v172
      %v408 = vpop.f32.mrb[0].mxu0
      %v409 = vadd.f32 %v250, %v408
      %v410 = vpop.f32.mrb[0].mxu0
      %v411 = vadd.f32 %v254, %v410
      %412 = vdwg.mxu0
      %413 = vst [vmem:[%s170] sm:$0xff] %v326
      %414 = vst [vmem:[%s170 + $0x8] sm:$0xff] %v328
      %415 = vst [vmem:[%s170 + $0x10] sm:$0xff] %v403
      %416 = vst [vmem:[%s170 + $0x18] sm:$0xff] %v405
      %417 = vst [vmem:[%s170 + $0x20] sm:$0xff] %v332
      %418 = vst [vmem:[%s170 + $0x28] sm:$0xff] %v334
      %419 = vst [vmem:[%s170 + $0x30] sm:$0xff] %v409
      %420 = vst [vmem:[%s170 + $0x38] sm:$0xff] %v411
      %p421 = scmp.lt.s32.totalorder %s14, 1
      %s422 = scalar_select %p421, %s14, 1
      %s423 = smul.addr %s422, 8
      %s424 = smul.addr %s423, 8
      %s425 = scalar_lea.vmem %s3, %s424
      // Predicated region
      $region33: #{decoder_forward.6} parent=31 // pred_check
        %p426 = pneg %p100
      $region34: #{decoder_forward.6} parent=31 // pred_check_branch
        %428 = sbr.rel (%p426) target = $region36
      $region35: #{decoder_forward.6} parent=31 // pred_region
        _
      $region36: #{decoder_forward.6} parent=31 // pred_fallthru
        _
    $region32: #{decoder_forward.6} parent=5 // pred_fallthru
      _
    %p429 = scmp.le.s32.totalorder 2, %s9
    // Predicated region
    $region37: #{decoder_forward.6} parent=5 // pred_check
      %p430 = pneg %p429
    $region38: #{decoder_forward.6} parent=5 // pred_check_branch
      %432 = sbr.rel (%p430) target = $region40
    $region39: #{decoder_forward.6} parent=5 // pred_region
      %s433 = ssub.s32 %s9, 2
      // Predicated region
      $region41: #{decoder_forward.6} parent=39 // pred_check
        %p434 = pneg %p106
      $region42: #{decoder_forward.6} parent=39 // pred_check_branch
        %436 = sbr.rel (%p434) target = $region44
      $region43: #{decoder_forward.6} parent=39 // pred_region
        %p437 = scmp.lt.s32.totalorder %s15, 1
        %s438 = scalar_select %p437, %s15, 1
        %s439 = smul.addr %s438, 8
        %s440 = smul.addr %s439, 8
        %s441 = scalar_lea.vmem %s3, %s440
      $region44: #{decoder_forward.6} parent=39 // pred_fallthru
        _
    $region40: #{decoder_forward.6} parent=5 // pred_fallthru
      _
  $region6: #{decoder_forward.6} parent=0 // loop_footer
    %s13 = sadd.s32 1, %s9
  $region7: #{decoder_forward.6} parent=0 // loop_footer_branch
    %8 = sbr.rel target = $region3
  $region8: #{decoder_forward.6} parent=0 // loop_exit
    _

// kernel: decoder_forward.5
$region0: #{decoder_forward.5}
  #allocation0 [shape = 'u32[]', space=smem, size = 0x4, offset = 0x4, fixed_abs, tag = 'smem constant byte address 0x4 - core index']
  #allocation1 [shape = 'u32[144,128]{1,0:T(1,128)}', space=vmem, size = 0x12000, scoped, tag = 'internal scratch']
  #allocation2 [shape = 'f32[46,128]{1,0:T(8,128)}', space=vmem, size = 0x6000, scoped, tag = 'scratch operand']
  %s0 = inlined_call_operand.vmem [shape: f32[2,64,128], index: 0, kind: input, shape index: {}]
  %s1 = inlined_call_operand.vmem [shape: f32[2,64,128], index: 1, kind: input, shape index: {}]
  %s2 = inlined_call_operand.vmem [shape: f32[9,128,128], index: 2, kind: input, shape index: {}]
  %s3 = inlined_call_operand.hbm [shape: f32[9,128,128], index: 3, kind: input, shape index: {}]
  %s4 = inlined_call_operand.vmem [shape: f32[1,128], index: 4, kind: input, shape index: {}]
  %s5 = inlined_call_operand.hbm [shape: f32[9,128,128], index: 5, kind: input, shape index: {}]
  %s6 = inlined_call_operand.vmem [shape: f32[1,128], index: 6, kind: input, shape index: {}]
  %s7 = inlined_call_operand.vmem [shape: f32[2,64,128], index: 7, kind: output, shape index: {}]
  %s8 = sld [smem:[#allocation0]]
  $region69: #{decoder_forward.5} parent=0
    _
  %s10 = ssub.s32 1, %s8
  %s11 = scalar_select 0, %s10, %s8
  $region1: #{decoder_forward.5} parent=0
    #allocation3 [shape = 'u8[589824]{0}', space=vmem, size = 0x90000, scoped, tag = 'input window, operand 3, single buffered']
    #allocation4 [shape = 's32[2]{0}', space=sflag, size = 0x8, scoped, tag = 'scoped memory for decoder_forward.5']
    #allocation5 [shape = 'u8[589824]{0}', space=vmem, size = 0x90000, scoped, tag = 'input window, operand 5, single buffered']
    #allocation6 [shape = 's32[1]{0}', space=sflag, size = 0x4, scoped, tag = 'scoped memory for decoder_forward.5']
    %12 = vsyncpa [#allocation4], 0
    %13 = vsyncpa [#allocation6], 0
    loop: start=0, step=1, limit=4
    $region2: #{decoder_forward.5} parent=1 // loop_pre_header
      _
    $region3: #{decoder_forward.5} parent=1 // loop_header
      %s15 = sphi 0, %s19
      %p16 = scmp.ge.s32.totalorder %s15, 4
      %s25 = sphi 0, %s27
      %s28 = sphi 0, %s25
      %s29 = sphi 0, %s28
      %s45 = sphi 0, %s29
      %s51 = sphi 0, %s53
      %s54 = sphi 0, %s51
      %s55 = sphi 0, %s54
      %s71 = sphi 0, %s55
      %s75 = sphi 0, %s75
      %s77 = sphi 0, %s75
      %s78 = sphi 0, %s77
      %s92 = sphi 0, %s78
      %s96 = sphi 0, %s96
      %s98 = sphi 0, %s96
      %s99 = sphi 0, %s98
      %s113 = sphi 0, %s99
      %s117 = sphi 0, %s117
      %s119 = sphi 0, %s117
      %s120 = sphi 0, %s119
      %s134 = sphi 0, %s120
      %s138 = sphi 0, %s138
      %s140 = sphi 0, %s138
      %s141 = sphi 0, %s140
      %s155 = sphi 0, %s141
      %s159 = sphi 0, %s159
      %s161 = sphi 0, %s159
      %s162 = sphi 0, %s161
      %s176 = sphi 0, %s162
      %s182 = sphi 0, %s184
      %s185 = sphi 0, %s182
      %s186 = sphi 0, %s185
      %s202 = sphi 0, %s186
    $region4: #{decoder_forward.5} parent=1 // loop_header_branch
      %18 = sbr.rel (%p16) target = $region8
    $region5: #{decoder_forward.5} parent=1 // loop_body
      %s20 = ssub.s32 %s15, 1
      %s21 = ssub.s32 %s15, 2
      %s22 = sadd.s32 %s15, 1
      %s23 = ssub.s32 %s15, %s22
      %p24 = scmp.eq.s32.totalorder %s23, 0
      %s26 = sadd.s32 %s25, 1
      %s27 = scalar_select %p24, %s25, %s26
      %p30 = pneg %p24
      %p31 = scmp.eq.s32.totalorder %s15, 1
      %p32 = por %p30, %p31
      %p33 = scmp.ne.s32.totalorder %s25, %s28
      %p34 = scmp.eq.s32.totalorder %s15, 0
      %p35 = por %p33, %p34
      %p36 = scmp.ne.s32.totalorder %s25, %s28
      %p37 = scmp.eq.s32.totalorder %s20, 1
      %p38 = por %p36, %p37
      %p39 = scmp.ne.s32.totalorder %s28, %s29
      %p40 = scmp.eq.s32.totalorder %s20, 0
      %p41 = por %p39, %p40
      %p42 = scmp.ne.s32.totalorder %s28, %s29
      %p43 = scmp.eq.s32.totalorder %s21, 1
      %p44 = por %p42, %p43
      %p46 = scmp.ne.s32.totalorder %s29, %s45
      %p47 = scmp.eq.s32.totalorder %s21, 0
      %p48 = por %p46, %p47
      %s49 = ssub.s32 %s15, %s22
      %p50 = scmp.eq.s32.totalorder %s49, 0
      %s52 = sadd.s32 %s51, 1
      %s53 = scalar_select %p50, %s51, %s52
      %p56 = pneg %p50
      %p57 = scmp.eq.s32.totalorder %s15, 1
      %p58 = por %p56, %p57
      %p59 = scmp.ne.s32.totalorder %s51, %s54
      %p60 = scmp.eq.s32.totalorder %s15, 0
      %p61 = por %p59, %p60
      %p62 = scmp.ne.s32.totalorder %s51, %s54
      %p63 = scmp.eq.s32.totalorder %s20, 1
      %p64 = por %p62, %p63
      %p65 = scmp.ne.s32.totalorder %s54, %s55
      %p66 = scmp.eq.s32.totalorder %s20, 0
      %p67 = por %p65, %p66
      %p68 = scmp.ne.s32.totalorder %s54, %s55
      %p69 = scmp.eq.s32.totalorder %s21, 1
      %p70 = por %p68, %p69
      %p72 = scmp.ne.s32.totalorder %s55, %s71
      %p73 = scmp.eq.s32.totalorder %s21, 0
      %p74 = por %p72, %p73
      %s76 = sadd.s32 %s75, 1
      %p79 = scmp.eq.s32.totalorder %s15, 1
      %p80 = scmp.ne.s32.totalorder %s75, %s77
      %p81 = scmp.eq.s32.totalorder %s15, 0
      %p82 = por %p80, %p81
      %p83 = scmp.ne.s32.totalorder %s75, %s77
      %p84 = scmp.eq.s32.totalorder %s20, 1
      %p85 = por %p83, %p84
      %p86 = scmp.ne.s32.totalorder %s77, %s78
      %p87 = scmp.eq.s32.totalorder %s20, 0
      %p88 = por %p86, %p87
      %p89 = scmp.ne.s32.totalorder %s77, %s78
      %p90 = scmp.eq.s32.totalorder %s21, 1
      %p91 = por %p89, %p90
      %p93 = scmp.ne.s32.totalorder %s78, %s92
      %p94 = scmp.eq.s32.totalorder %s21, 0
      %p95 = por %p93, %p94
      %s97 = sadd.s32 %s96, 1
      %p100 = scmp.eq.s32.totalorder %s15, 1
      %p101 = scmp.ne.s32.totalorder %s96, %s98
      %p102 = scmp.eq.s32.totalorder %s15, 0
      %p103 = por %p101, %p102
      %p104 = scmp.ne.s32.totalorder %s96, %s98
      %p105 = scmp.eq.s32.totalorder %s20, 1
      %p106 = por %p104, %p105
      %p107 = scmp.ne.s32.totalorder %s98, %s99
      %p108 = scmp.eq.s32.totalorder %s20, 0
      %p109 = por %p107, %p108
      %p110 = scmp.ne.s32.totalorder %s98, %s99
      %p111 = scmp.eq.s32.totalorder %s21, 1
      %p112 = por %p110, %p111
      %p114 = scmp.ne.s32.totalorder %s99, %s113
      %p115 = scmp.eq.s32.totalorder %s21, 0
      %p116 = por %p114, %p115
      %s118 = sadd.s32 %s117, 1
      %p121 = scmp.eq.s32.totalorder %s15, 1
      %p122 = scmp.ne.s32.totalorder %s117, %s119
      %p123 = scmp.eq.s32.totalorder %s15, 0
      %p124 = por %p122, %p123
      %p125 = scmp.ne.s32.totalorder %s117, %s119
      %p126 = scmp.eq.s32.totalorder %s20, 1
      %p127 = por %p125, %p126
      %p128 = scmp.ne.s32.totalorder %s119, %s120
      %p129 = scmp.eq.s32.totalorder %s20, 0
      %p130 = por %p128, %p129
      %p131 = scmp.ne.s32.totalorder %s119, %s120
      %p132 = scmp.eq.s32.totalorder %s21, 1
      %p133 = por %p131, %p132
      %p135 = scmp.ne.s32.totalorder %s120, %s134
      %p136 = scmp.eq.s32.totalorder %s21, 0
      %p137 = por %p135, %p136
      %s139 = sadd.s32 %s138, 1
      %p142 = scmp.eq.s32.totalorder %s15, 1
      %p143 = scmp.ne.s32.totalorder %s138, %s140
      %p144 = scmp.eq.s32.totalorder %s15, 0
      %p145 = por %p143, %p144
      %p146 = scmp.ne.s32.totalorder %s138, %s140
      %p147 = scmp.eq.s32.totalorder %s20, 1
      %p148 = por %p146, %p147
      %p149 = scmp.ne.s32.totalorder %s140, %s141
      %p150 = scmp.eq.s32.totalorder %s20, 0
      %p151 = por %p149, %p150
      %p152 = scmp.ne.s32.totalorder %s140, %s141
      %p153 = scmp.eq.s32.totalorder %s21, 1
      %p154 = por %p152, %p153
      %p156 = scmp.ne.s32.totalorder %s141, %s155
      %p157 = scmp.eq.s32.totalorder %s21, 0
      %p158 = por %p156, %p157
      %s160 = sadd.s32 %s159, 1
      %p163 = scmp.eq.s32.totalorder %s15, 1
      %p164 = scmp.ne.s32.totalorder %s159, %s161
      %p165 = scmp.eq.s32.totalorder %s15, 0
      %p166 = por %p164, %p165
      %p167 = scmp.ne.s32.totalorder %s159, %s161
      %p168 = scmp.eq.s32.totalorder %s20, 1
      %p169 = por %p167, %p168
      %p170 = scmp.ne.s32.totalorder %s161, %s162
      %p171 = scmp.eq.s32.totalorder %s20, 0
      %p172 = por %p170, %p171
      %p173 = scmp.ne.s32.totalorder %s161, %s162
      %p174 = scmp.eq.s32.totalorder %s21, 1
      %p175 = por %p173, %p174
      %p177 = scmp.ne.s32.totalorder %s162, %s176
      %p178 = scmp.eq.s32.totalorder %s21, 0
      %p179 = por %p177, %p178
      %s180 = ssub.s32 %s15, %s22
      %p181 = scmp.eq.s32.totalorder %s180, 0
      %s183 = sadd.s32 %s182, 1
      %s184 = scalar_select %p181, %s182, %s183
      %p187 = pneg %p181
      %p188 = scmp.eq.s32.totalorder %s15, 1
      %p189 = por %p187, %p188
      %p190 = scmp.ne.s32.totalorder %s182, %s185
      %p191 = scmp.eq.s32.totalorder %s15, 0
      %p192 = por %p190, %p191
      %p193 = scmp.ne.s32.totalorder %s182, %s185
      %p194 = scmp.eq.s32.totalorder %s20, 1
      %p195 = por %p193, %p194
      %p196 = scmp.ne.s32.totalorder %s185, %s186
      %p197 = scmp.eq.s32.totalorder %s20, 0
      %p198 = por %p196, %p197
      %p199 = scmp.ne.s32.totalorder %s185, %s186
      %p200 = scmp.eq.s32.totalorder %s21, 1
      %p201 = por %p199, %p200
      %p203 = scmp.ne.s32.totalorder %s186, %s202
      %p204 = scmp.eq.s32.totalorder %s21, 0
      %p205 = por %p203, %p204
      %p206 = scmp.le.s32.totalorder 1, %s15
      %p207 = scmp.lt.s32.totalorder %s15, 3
      %p208 = pnand %p206, %p207
      %p209 = pneg %p208
      // Predicated region
      $region9: #{decoder_forward.5} parent=5 // pred_check
        _
      $region10: #{decoder_forward.5} parent=5 // pred_check_branch
        %211 = sbr.rel (%p208) target = $region12
      $region11: #{decoder_forward.5} parent=5 // pred_region
        %s212 = ssub.s32 %s15, 1
        // Predicated region
        $region13: #{decoder_forward.5} parent=11 // pred_check
          %p213 = pneg %p88
        $region14: #{decoder_forward.5} parent=11 // pred_check_branch
          %215 = sbr.rel (%p213) target = $region16
        $region15: #{decoder_forward.5} parent=11 // pred_region
          _
        $region16: #{decoder_forward.5} parent=11 // pred_fallthru
          _
        // Predicated region
        $region17: #{decoder_forward.5} parent=11 // pred_check
          %p216 = pneg %p109
        $region18: #{decoder_forward.5} parent=11 // pred_check_branch
          %218 = sbr.rel (%p216) target = $region20
        $region19: #{decoder_forward.5} parent=11 // pred_region
          %s220 = ssub.s32 18432, 18432
          %221 = vsyncadd [#allocation4], %s220
          %s222 = sshll.u32 [#allocation3], 4
          %s223 = int_to_ptr.vmem [resolvable:$true] %s222
          %228 = dma.hbm_to_vmem [thread:$0]  %s3, 18432, %s223, [#allocation4], 128, 128, 8
        $region20: #{decoder_forward.5} parent=11 // pred_fallthru
          _
        // Predicated region
        $region21: #{decoder_forward.5} parent=11 // pred_check
          %p229 = pneg %p130
        $region22: #{decoder_forward.5} parent=11 // pred_check_branch
          %231 = sbr.rel (%p229) target = $region24
        $region23: #{decoder_forward.5} parent=11 // pred_region
          _
        $region24: #{decoder_forward.5} parent=11 // pred_fallthru
          _
        // Predicated region
        $region25: #{decoder_forward.5} parent=11 // pred_check
          %p232 = pneg %p151
        $region26: #{decoder_forward.5} parent=11 // pred_check_branch
          %234 = sbr.rel (%p232) target = $region28
        $region27: #{decoder_forward.5} parent=11 // pred_region
          %s236 = ssub.s32 18432, 18432
          %237 = vsyncadd [#allocation6], %s236
          %s238 = sshll.u32 [#allocation5], 4
          %s239 = int_to_ptr.vmem [resolvable:$true] %s238
          %244 = dma.hbm_to_vmem [thread:$0]  %s5, 18432, %s239, [#allocation6], 128, 128, 8
        $region28: #{decoder_forward.5} parent=11 // pred_fallthru
          _
        // Predicated region
        $region29: #{decoder_forward.5} parent=11 // pred_check
          %p245 = pneg %p172
        $region30: #{decoder_forward.5} parent=11 // pred_check_branch
          %247 = sbr.rel (%p245) target = $region32
        $region31: #{decoder_forward.5} parent=11 // pred_region
          _
        $region32: #{decoder_forward.5} parent=11 // pred_fallthru
          _
      $region12: #{decoder_forward.5} parent=5 // pred_fallthru
        _
      %p248 = scmp.lt.s32.totalorder %s15, 2
      // Predicated region
      $region33: #{decoder_forward.5} parent=5 // pred_check
        %p249 = pneg %p248
      $region34: #{decoder_forward.5} parent=5 // pred_check_branch
        %251 = sbr.rel (%p249) target = $region36
      $region35: #{decoder_forward.5} parent=5 // pred_region
        // Predicated region
        $region37: #{decoder_forward.5} parent=35 // pred_check
          %p252 = pneg %p35
        $region38: #{decoder_forward.5} parent=35 // pred_check_branch
          %254 = sbr.rel (%p252) target = $region40
        $region39: #{decoder_forward.5} parent=35 // pred_region
          %p255 = scmp.lt.s32.totalorder %s15, 1
          %s256 = scalar_select %p255, %s15, 1
          %s257 = smul.addr %s256, 8
          %s258 = smul.addr %s257, 8
          %s259 = scalar_lea.vmem %s0, %s258
        $region40: #{decoder_forward.5} parent=35 // pred_fallthru
          _
        // Predicated region
        $region41: #{decoder_forward.5} parent=35 // pred_check
          %p260 = pneg %p61
        $region42: #{decoder_forward.5} parent=35 // pred_check_branch
          %262 = sbr.rel (%p260) target = $region44
        $region43: #{decoder_forward.5} parent=35 // pred_region
          %p263 = scmp.lt.s32.totalorder %s15, 1
          %s264 = scalar_select %p263, %s15, 1
          %s265 = smul.addr %s264, 8
          %s266 = smul.addr %s265, 8
          %s267 = scalar_lea.vmem %s1, %s266
        $region44: #{decoder_forward.5} parent=35 // pred_fallthru
          _
      $region36: #{decoder_forward.5} parent=5 // pred_fallthru
        _
      %p268 = scmp.le.s32.totalorder 1, %s15
      %p269 = scmp.lt.s32.totalorder %s15, 3
      %p270 = pnand %p268, %p269
      %p271 = pneg %p270
      // Predicated region
      $region45: #{decoder_forward.5} parent=5 // pred_check
        _
      $region46: #{decoder_forward.5} parent=5 // pred_check_branch
        %273 = sbr.rel (%p270) target = $region48
      $region47: #{decoder_forward.5} parent=5 // pred_region
        %s274 = ssub.s32 %s15, 1
        // Predicated region
        $region49: #{decoder_forward.5} parent=47 // pred_check
          %p275 = pneg %p109
        $region50: #{decoder_forward.5} parent=47 // pred_check_branch
          %277 = sbr.rel (%p275) target = $region52
        $region51: #{decoder_forward.5} parent=47 // pred_region
          %278 = dma.done [#allocation4], 18432
        $region52: #{decoder_forward.5} parent=47 // pred_fallthru
          _
        // Predicated region
        $region53: #{decoder_forward.5} parent=47 // pred_check
          %p279 = pneg %p151
        $region54: #{decoder_forward.5} parent=47 // pred_check_branch
          %281 = sbr.rel (%p279) target = $region56
        $region55: #{decoder_forward.5} parent=47 // pred_region
          %282 = dma.done [#allocation6], 18432
        $region56: #{decoder_forward.5} parent=47 // pred_fallthru
          _
        %p283 = scmp.lt.s32.totalorder %s20, 1
        %s284 = scalar_select %p283, %s20, 1
        %s285 = smul.addr %s284, 8
        %s286 = smul.addr %s285, 8
        %s287 = scalar_lea.vmem %s0, %s286
        %p288 = pneg %p41
        %p289 = pneg %p38
        %p290 = scmp.lt.s32.totalorder %s20, 1
        %s291 = scalar_select %p290, %s20, 1
        %s292 = smul.addr %s291, 8
        %s293 = smul.addr %s292, 8
        %s294 = scalar_lea.vmem %s1, %s293
        %p295 = pneg %p67
        %p296 = pneg %p64
        %p297 = pneg %p88
        %p298 = pneg %p85
        %p299 = pneg %p109
        %p300 = pneg %p106
        %p301 = pneg %p130
        %p302 = pneg %p127
        %p303 = pneg %p151
        %p304 = pneg %p148
        %p305 = pneg %p172
        %p306 = pneg %p169
        %p307 = pneg %p198
        %p308 = pneg %p195
        %p309 = scmp.lt.s32.totalorder %s20, 1
        %s310 = scalar_select %p309, %s20, 1
        %s311 = smul.addr %s310, 8
        %s312 = smul.addr %s311, 8
        %s313 = scalar_lea.vmem %s7, %s312
        %p314 = scmp.lt.s32.totalorder %s20, 1
        %s315 = scalar_select %p314, %s20, 1
        %s316 = smul.addr %s315, 8
        %s317 = smul.addr %s316, 8
        %s318 = scalar_lea.vmem %s0, %s317
        %p319 = scmp.lt.s32.totalorder %s20, 1
        %s320 = scalar_select %p319, %s20, 1
        %s321 = smul.addr %s320, 8
        %s322 = smul.addr %s321, 8
        %s323 = scalar_lea.vmem %s1, %s322
        %p324 = scmp.lt.s32.totalorder %s20, 1
        %s325 = scalar_select %p324, %s20, 1
        %s326 = smul.addr %s325, 8
        %s327 = smul.addr %s326, 8
        %s328 = scalar_lea.vmem %s7, %s327
        %v329 = vld [vmem:[%s318] sm:$0xff]
        %v330 = vld [vmem:[%s318 + $0x8] sm:$0xff]
        %v331 = vld [vmem:[%s318 + $0x10] sm:$0xff]
        %v332 = vld [vmem:[%s318 + $0x18] sm:$0xff]
        %v333 = vld [vmem:[%s318 + $0x20] sm:$0xff]
        %v334 = vld [vmem:[%s318 + $0x28] sm:$0x3f]
        %v335 = vld [vmem:[%s2] sm:$0xff]
        %v336 = vld [vmem:[%s2 + $0x8] sm:$0xff]
        %v337 = vld [vmem:[%s2 + $0x10] sm:$0xff]
        %v338 = vld [vmem:[%s2 + $0x18] sm:$0xff]
        %v339 = vld [vmem:[%s2 + $0x20] sm:$0xff]
        %v340 = vld [vmem:[%s2 + $0x28] sm:$0xff]
        %v341 = vld [vmem:[%s2 + $0x30] sm:$0xff]
        %v342 = vld [vmem:[%s2 + $0x38] sm:$0xff]
        %v343 = vld [vmem:[%s2 + $0x40] sm:$0xff]
        %v344 = vld [vmem:[%s2 + $0x48] sm:$0xff]
        %v345 = vld [vmem:[%s2 + $0x50] sm:$0xff]
        %v346 = vld [vmem:[%s2 + $0x58] sm:$0xff]
        %v347 = vld [vmem:[%s2 + $0x60] sm:$0xff]
        %v348 = vld [vmem:[%s2 + $0x68] sm:$0xff]
        %v349 = vld [vmem:[%s2 + $0x70] sm:$0xff]
        %v350 = vld [vmem:[%s2 + $0x78] sm:$0xff]
        %v351 = vld [vmem:[%s323] sm:$0xff]
        %v352 = vld [vmem:[%s323 + $0x8] sm:$0xff]
        %v353 = vld [vmem:[%s323 + $0x10] sm:$0xff]
        %v354 = vld [vmem:[%s323 + $0x18] sm:$0xff]
        %v355 = vld [vmem:[%s323 + $0x20] sm:$0xff]
        %v356 = vld [vmem:[%s323 + $0x28] sm:$0x3f]
        %v357 = vld [vmem:[#allocation3] sm:$0xff]
        %v358 = vld [vmem:[#allocation3 + $0x8] sm:$0xff]
        %v359 = vld [vmem:[#allocation3 + $0x10] sm:$0xff]
        %v360 = vld [vmem:[#allocation3 + $0x18] sm:$0xff]
        %v361 = vld [vmem:[#allocation3 + $0x20] sm:$0xff]
        %v362 = vld [vmem:[#allocation3 + $0x28] sm:$0xff]
        %v363 = vld [vmem:[#allocation3 + $0x30] sm:$0xff]
        %v364 = vld [vmem:[#allocation3 + $0x38] sm:$0xff]
        %v365 = vld [vmem:[#allocation3 + $0x40] sm:$0xff]
        %v366 = vld [vmem:[#allocation3 + $0x48] sm:$0xff]
        %v367 = vld [vmem:[#allocation3 + $0x50] sm:$0xff]
        %v368 = vld [vmem:[#allocation3 + $0x58] sm:$0xff]
        %v369 = vld [vmem:[#allocation3 + $0x60] sm:$0xff]
        %v370 = vld [vmem:[#allocation3 + $0x68] sm:$0xff]
        %v371 = vld [vmem:[#allocation3 + $0x70] sm:$0xff]
        %v372 = vld [vmem:[#allocation3 + $0x78] sm:$0xff]
        %373 = vmatprep.subr.mxu0 0.0
        %374 = vmatpush1.msra.mxu0 %v357
        %375 = vmatprep.subr.mxu0 0.0
        %376 = vmatpush1.msra.mxu0 %v358
        %377 = vmatprep.subr.mxu0 0.0
        %378 = vmatpush1.msra.mxu0 %v359
        %379 = vmatprep.subr.mxu0 0.0
        %380 = vmatpush1.msra.mxu0 %v360
        %381 = vmatprep.subr.mxu0 0.0
        %382 = vmatpush1.msra.mxu0 %v361
        %383 = vmatprep.subr.mxu0 0.0
        %384 = vmatpush1.msra.mxu0 %v362
        %385 = vmatprep.subr.mxu0 0.0
        %386 = vmatpush1.msra.mxu0 %v363
        %387 = vmatprep.subr.mxu0 0.0
        %388 = vmatpush1.msra.mxu0 %v364
        %389 = vmatprep.subr.mxu0 0.0
        %390 = vmatpush1.msra.mxu0 %v365
        %391 = vmatprep.subr.mxu0 0.0
        %392 = vmatpush1.msra.mxu0 %v366
        %393 = vmatprep.subr.mxu0 0.0
        %394 = vmatpush1.msra.mxu0 %v367
        %395 = vmatprep.subr.mxu0 0.0
        %396 = vmatpush1.msra.mxu0 %v368
        %397 = vmatprep.subr.mxu0 0.0
        %398 = vmatpush1.msra.mxu0 %v369
        %399 = vmatprep.subr.mxu0 0.0
        %400 = vmatpush1.msra.mxu0 %v370
        %401 = vmatprep.subr.mxu0 0.0
        %402 = vmatpush1.msra.mxu0 %v371
        %403 = vmatprep.subr.mxu0 0.0
        %404 = vmatpush1.msra.mxu0 %v372
        %405 = vmatprep.subr.mxu0 0.0
        %406 = vmatpush1.msra.mxu0 0.0
        %407 = vmatprep.subr.mxu0 0.0
        %408 = vmatpush1.msra.mxu0 0.0
        %409 = vmatprep.subr.mxu0 0.0
        %410 = vmatpush1.msra.mxu0 0.0
        %411 = vmatprep.subr.mxu0 0.0
        %412 = vmatpush1.msra.mxu0 0.0
        %413 = vmatprep.subr.mxu0 0.0
        %414 = vmatpush1.msra.mxu0 0.0
        %415 = vmatprep.subr.mxu0 0.0
        %416 = vmatpush1.msra.mxu0 0.0
        %417 = vmatprep.subr.mxu0 0.0
        %418 = vmatpush1.msra.mxu0 0.0
        %419 = vmatprep.subr.mxu0 0.0
        %420 = vmatpush1.msra.mxu0 0.0
        %421 = vmatprep.subr.mxu0 0.0
        %422 = vmatpush1.msra.mxu0 0.0
        %423 = vmatprep.subr.mxu0 0.0
        %424 = vmatpush1.msra.mxu0 0.0
        %425 = vmatprep.subr.mxu0 0.0
        %426 = vmatpush1.msra.mxu0 0.0
        %427 = vmatprep.subr.mxu0 0.0
        %428 = vmatpush1.msra.mxu0 0.0
        %429 = vmatprep.subr.mxu0 0.0
        %430 = vmatpush1.msra.mxu0 0.0
        %431 = vmatprep.subr.mxu0 0.0
        %432 = vmatpush1.msra.mxu0 0.0
        %433 = vmatprep.subr.mxu0 0.0
        %434 = vmatpush1.msra.mxu0 0.0
        %435 = vmatprep.subr.mxu0 0.0
        %436 = vmatpush1.msra.mxu0 0.0
        %437 = vmatprep.mubr.f32.mxu0 0.0
        %438 = vmatmul.mubr.f32.gmra.mrb[0].mxu0 %v351
        %v439 = vpop.f32.mrb[0].mxu0
        %v440 = vadd.f32 0.0, %v439
        %v441 = vpop.f32.mrb[0].mxu0
        %442 = vmatprep.mubr.f32.mxu0 0.0
        %443 = vmatmul.mubr.f32.gmra.mrb[0].mxu0 %v352
        %v444 = vpop.f32.mrb[0].mxu0
        %v445 = vadd.f32 0.0, %v444
        %v446 = vpop.f32.mrb[0].mxu0
        %447 = vmatprep.mubr.f32.mxu0 0.0
        %448 = vmatmul.mubr.f32.gmra.mrb[0].mxu0 %v353
        %v449 = vpop.f32.mrb[0].mxu0
        %v450 = vadd.f32 0.0, %v449
        %v451 = vpop.f32.mrb[0].mxu0
        %452 = vmatprep.mubr.f32.mxu0 0.0
        %453 = vmatmul.mubr.f32.gmra.mrb[0].mxu0 %v354
        %v454 = vpop.f32.mrb[0].mxu0
        %v455 = vadd.f32 0.0, %v454
        %v456 = vpop.f32.mrb[0].mxu0
        %457 = vmatprep.mubr.f32.mxu0 0.0
        %458 = vmatmul.mubr.f32.gmra.mrb[0].mxu0 %v355
        %v459 = vpop.f32.mrb[0].mxu0
        %v460 = vadd.f32 0.0, %v459
        %v461 = vpop.f32.mrb[0].mxu0
        %462 = vmatprep.mubr.f32.mxu0 0.0
        %463 = vmatmul.mubr.f32.gmra.mrb[0].mxu0 %v356
        %v464 = vpop.f32.mrb[0].mxu0
        %v465 = vadd.f32 0.0, %v464
        %v466 = vpop.f32.mrb[0].mxu0
        %467 = vdwg.mxu0
        %468 = vmatprep.subr.mxu0 0.0
        %469 = vmatpush1.msra.mxu0 %v335
        %470 = vmatprep.subr.mxu0 0.0
        %471 = vmatpush1.msra.mxu0 %v336
        %472 = vmatprep.subr.mxu0 0.0
        %473 = vmatpush1.msra.mxu0 %v337
        %474 = vmatprep.subr.mxu0 0.0
        %475 = vmatpush1.msra.mxu0 %v338
        %476 = vmatprep.subr.mxu0 0.0
        %477 = vmatpush1.msra.mxu0 %v339
        %478 = vmatprep.subr.mxu0 0.0
        %479 = vmatpush1.msra.mxu0 %v340
        %480 = vmatprep.subr.mxu0 0.0
        %481 = vmatpush1.msra.mxu0 %v341
        %482 = vmatprep.subr.mxu0 0.0
        %483 = vmatpush1.msra.mxu0 %v342
        %484 = vmatprep.subr.mxu0 0.0
        %485 = vmatpush1.msra.mxu0 %v343
        %486 = vmatprep.subr.mxu0 0.0
        %487 = vmatpush1.msra.mxu0 %v344
        %488 = vmatprep.subr.mxu0 0.0
        %489 = vmatpush1.msra.mxu0 %v345
        %490 = vmatprep.subr.mxu0 0.0
        %491 = vmatpush1.msra.mxu0 %v346
        %492 = vmatprep.subr.mxu0 0.0
        %493 = vmatpush1.msra.mxu0 %v347
        %494 = vmatprep.subr.mxu0 0.0
        %495 = vmatpush1.msra.mxu0 %v348
        %496 = vmatprep.subr.mxu0 0.0
        %497 = vmatpush1.msra.mxu0 %v349
        %498 = vmatprep.subr.mxu0 0.0
        %499 = vmatpush1.msra.mxu0 %v350
        %500 = vmatprep.subr.mxu0 0.0
        %501 = vmatpush1.msra.mxu0 0.0
        %502 = vmatprep.subr.mxu0 0.0
        %503 = vmatpush1.msra.mxu0 0.0
        %504 = vmatprep.subr.mxu0 0.0
        %505 = vmatpush1.msra.mxu0 0.0
        %506 = vmatprep.subr.mxu0 0.0
        %507 = vmatpush1.msra.mxu0 0.0
        %508 = vmatprep.subr.mxu0 0.0
        %509 = vmatpush1.msra.mxu0 0.0
        %510 = vmatprep.subr.mxu0 0.0
        %511 = vmatpush1.msra.mxu0 0.0
        %512 = vmatprep.subr.mxu0 0.0
        %513 = vmatpush1.msra.mxu0 0.0
        %514 = vmatprep.subr.mxu0 0.0
        %515 = vmatpush1.msra.mxu0 0.0
        %516 = vmatprep.subr.mxu0 0.0
        %517 = vmatpush1.msra.mxu0 0.0
        %518 = vmatprep.subr.mxu0 0.0
        %519 = vmatpush1.msra.mxu0 0.0
        %520 = vmatprep.subr.mxu0 0.0
        %521 = vmatpush1.msra.mxu0 0.0
        %522 = vmatprep.subr.mxu0 0.0
        %523 = vmatpush1.msra.mxu0 0.0
        %524 = vmatprep.subr.mxu0 0.0
        %525 = vmatpush1.msra.mxu0 0.0
        %526 = vmatprep.subr.mxu0 0.0
        %527 = vmatpush1.msra.mxu0 0.0
        %528 = vmatprep.subr.mxu0 0.0
        %529 = vmatpush1.msra.mxu0 0.0
        %530 = vmatprep.subr.mxu0 0.0
        %531 = vmatpush1.msra.mxu0 0.0
        %532 = vmatprep.mubr.f32.mxu0 0.0
        %533 = vmatmul.mubr.f32.gmra.mrb[0].mxu0 %v329
        %v534 = vpop.f32.mrb[0].mxu0
        %v535 = vadd.f32 %v440, %v534
        %v536 = vpop.f32.mrb[0].mxu0
        %537 = vmatprep.mubr.f32.mxu0 0.0
        %538 = vmatmul.mubr.f32.gmra.mrb[0].mxu0 %v330
        %v539 = vpop.f32.mrb[0].mxu0
        %v540 = vadd.f32 %v445, %v539
        %v541 = vpop.f32.mrb[0].mxu0
        %542 = vmatprep.mubr.f32.mxu0 0.0
        %543 = vmatmul.mubr.f32.gmra.mrb[0].mxu0 %v331
        %v544 = vpop.f32.mrb[0].mxu0
        %v545 = vadd.f32 %v450, %v544
        %v546 = vpop.f32.mrb[0].mxu0
        %547 = vmatprep.mubr.f32.mxu0 0.0
        %548 = vmatmul.mubr.f32.gmra.mrb[0].mxu0 %v332
        %v549 = vpop.f32.mrb[0].mxu0
        %v550 = vadd.f32 %v455, %v549
        %v551 = vpop.f32.mrb[0].mxu0
        %552 = vmatprep.mubr.f32.mxu0 0.0
        %553 = vmatmul.mubr.f32.gmra.mrb[0].mxu0 %v333
        %v554 = vpop.f32.mrb[0].mxu0
        %v555 = vadd.f32 %v460, %v554
        %v556 = vpop.f32.mrb[0].mxu0
        %557 = vmatprep.mubr.f32.mxu0 0.0
        %558 = vmatmul.mubr.f32.gmra.mrb[0].mxu0 %v334
        %v559 = vpop.f32.mrb[0].mxu0
        %v560 = vadd.f32 %v465, %v559
        %v561 = vpop.f32.mrb[0].mxu0
        %562 = vdwg.mxu0
        %v563 = vld [vmem:[%s318 + $0x1] sm:$0xff]
        %v564 = vld [vmem:[%s318 + $0x9] sm:$0xff]
        %v565 = vld [vmem:[%s318 + $0x11] sm:$0xff]
        %v566 = vld [vmem:[%s318 + $0x19] sm:$0xff]
        %v567 = vld [vmem:[%s318 + $0x21] sm:$0xff]
        %v568 = vld [vmem:[%s318 + $0x29] sm:$0x3f]
        %s569 = scalar_lea.vmem %s2, 128
        %v570 = vld [vmem:[%s569] sm:$0xff]
        %v571 = vld [vmem:[%s569 + $0x8] sm:$0xff]
        %v572 = vld [vmem:[%s569 + $0x10] sm:$0xff]
        %v573 = vld [vmem:[%s569 + $0x18] sm:$0xff]
        %v574 = vld [vmem:[%s569 + $0x20] sm:$0xff]
        %v575 = vld [vmem:[%s569 + $0x28] sm:$0xff]
        %v576 = vld [vmem:[%s569 + $0x30] sm:$0xff]
        %v577 = vld [vmem:[%s569 + $0x38] sm:$0xff]
        %v578 = vld [vmem:[%s569 + $0x40] sm:$0xff]
        %v579 = vld [vmem:[%s569 + $0x48] sm:$0xff]
        %v580 = vld [vmem:[%s569 + $0x50] sm:$0xff]
        %v581 = vld [vmem:[%s569 + $0x58] sm:$0xff]
        %v582 = vld [vmem:[%s569 + $0x60] sm:$0xff]
        %v583 = vld [vmem:[%s569 + $0x68] sm:$0xff]
        %v584 = vld [vmem:[%s569 + $0x70] sm:$0xff]
        %v585 = vld [vmem:[%s569 + $0x78] sm:$0xff]
        %586 = vmatprep.subr.mxu0 0.0
        %587 = vmatpush1.msra.mxu0 %v570
        %588 = vmatprep.subr.mxu0 0.0
        %589 = vmatpush1.msra.mxu0 %v571
        %590 = vmatprep.subr.mxu0 0.0
        %591 = vmatpush1.msra.mxu0 %v572
        %592 = vmatprep.subr.mxu0 0.0
        %593 = vmatpush1.msra.mxu0 %v573
        %594 = vmatprep.subr.mxu0 0.0
        %595 = vmatpush1.msra.mxu0 %v574
        %596 = vmatprep.subr.mxu0 0.0
        %597 = vmatpush1.msra.mxu0 %v575
        %598 = vmatprep.subr.mxu0 0.0
        %599 = vmatpush1.msra.mxu0 %v576
        %600 = vmatprep.subr.mxu0 0.0
        %601 = vmatpush1.msra.mxu0 %v577
        %602 = vmatprep.subr.mxu0 0.0
        %603 = vmatpush1.msra.mxu0 %v578
        %604 = vmatprep.subr.mxu0 0.0
        %605 = vmatpush1.msra.mxu0 %v579
        %606 = vmatprep.subr.mxu0 0.0
        %607 = vmatpush1.msra.mxu0 %v580
        %608 = vmatprep.subr.mxu0 0.0
        %609 = vmatpush1.msra.mxu0 %v581
        %610 = vmatprep.subr.mxu0 0.0
        %611 = vmatpush1.msra.mxu0 %v582
        %612 = vmatprep.subr.mxu0 0.0
        %613 = vmatpush1.msra.mxu0 %v583
        %614 = vmatprep.subr.mxu0 0.0
        %615 = vmatpush1.msra.mxu0 %v584
        %616 = vmatprep.subr.mxu0 0.0
        %617 = vmatpush1.msra.mxu0 %v585
        %618 = vmatprep.subr.mxu0 0.0
        %619 = vmatpush1.msra.mxu0 0.0
        %620 = vmatprep.subr.mxu0 0.0
        %621 = vmatpush1.msra.mxu0 0.0
        %622 = vmatprep.subr.mxu0 0.0
        %623 = vmatpush1.msra.mxu0 0.0
        %624 = vmatprep.subr.mxu0 0.0
        %625 = vmatpush1.msra.mxu0 0.0
        %626 = vmatprep.subr.mxu0 0.0
        %627 = vmatpush1.msra.mxu0 0.0
        %628 = vmatprep.subr.mxu0 0.0
        %629 = vmatpush1.msra.mxu0 0.0
        %630 = vmatprep.subr.mxu0 0.0
        %631 = vmatpush1.msra.mxu0 0.0
        %632 = vmatprep.subr.mxu0 0.0
        %633 = vmatpush1.msra.mxu0 0.0
        %634 = vmatprep.subr.mxu0 0.0
        %635 = vmatpush1.msra.mxu0 0.0
        %636 = vmatprep.subr.mxu0 0.0
        %637 = vmatpush1.msra.mxu0 0.0
        %638 = vmatprep.subr.mxu0 0.0
        %639 = vmatpush1.msra.mxu0 0.0
        %640 = vmatprep.subr.mxu0 0.0
        %641 = vmatpush1.msra.mxu0 0.0
        %642 = vmatprep.subr.mxu0 0.0
        %643 = vmatpush1.msra.mxu0 0.0
        %644 = vmatprep.subr.mxu0 0.0
        %645 = vmatpush1.msra.mxu0 0.0
        %646 = vmatprep.subr.mxu0 0.0
        %647 = vmatpush1.msra.mxu0 0.0
        %648 = vmatprep.subr.mxu0 0.0
        %649 = vmatpush1.msra.mxu0 0.0
        %650 = vmatprep.mubr.f32.mxu0 0.0
        %651 = vmatmul.mubr.f32.gmra.mrb[0].mxu0 %v563
        %v652 = vpop.f32.mrb[0].mxu0
        %v653 = vadd.f32 0.0, %v652
        %v654 = vpop.f32.mrb[0].mxu0
        %655 = vmatprep.mubr.f32.mxu0 0.0
        %656 = vmatmul.mubr.f32.gmra.mrb[0].mxu0 %v564
        %v657 = vpop.f32.mrb[0].mxu0
        %v658 = vadd.f32 0.0, %v657
        %v659 = vpop.f32.mrb[0].mxu0
        %660 = vmatprep.mubr.f32.mxu0 0.0
        %661 = vmatmul.mubr.f32.gmra.mrb[0].mxu0 %v565
        %v662 = vpop.f32.mrb[0].mxu0
        %v663 = vadd.f32 0.0, %v662
        %v664 = vpop.f32.mrb[0].mxu0
        %665 = vmatprep.mubr.f32.mxu0 0.0
        %666 = vmatmul.mubr.f32.gmra.mrb[0].mxu0 %v566
        %v667 = vpop.f32.mrb[0].mxu0
        %v668 = vadd.f32 0.0, %v667
        %v669 = vpop.f32.mrb[0].mxu0
        %670 = vmatprep.mubr.f32.mxu0 0.0
        %671 = vmatmul.mubr.f32.gmra.mrb[0].mxu0 %v567
        %v672 = vpop.f32.mrb[0].mxu0
        %v673 = vadd.f32 0.0, %v672
        %v674 = vpop.f32.mrb[0].mxu0
        %675 = vmatprep.mubr.f32.mxu0 0.0
        %676 = vmatmul.mubr.f32.gmra.mrb[0].mxu0 %v568
        %v677 = vpop.f32.mrb[0].mxu0
        %v678 = vadd.f32 0.0, %v677
        %v679 = vpop.f32.mrb[0].mxu0
        %680 = vdwg.mxu0
        %v681 = vadd.f32 %v535, %v653
        %v682 = vadd.f32 %v540, %v658
        %v683 = vadd.f32 %v545, %v663
        %v684 = vadd.f32 %v550, %v668
        %v685 = vadd.f32 %v555, %v673
        %v686 = vadd.f32 %v560, %v678
        %v687 = vld [vmem:[%s323 + $0x1] sm:$0xff]
        %v688 = vld [vmem:[%s323 + $0x9] sm:$0xff]
        %v689 = vld [vmem:[%s323 + $0x11] sm:$0xff]
        %v690 = vld [vmem:[%s323 + $0x19] sm:$0xff]
        %v691 = vld [vmem:[%s323 + $0x21] sm:$0xff]
        %v692 = vld [vmem:[%s323 + $0x29] sm:$0x3f]
        %s693 = scalar_lea.vmem [#allocation3], 128
        %v694 = vld [vmem:[%s693] sm:$0xff]
        %v695 = vld [vmem:[%s693 + $0x8] sm:$0xff]
        %v696 = vld [vmem:[%s693 + $0x10] sm:$0xff]
        %v697 = vld [vmem:[%s693 + $0x18] sm:$0xff]
        %v698 = vld [vmem:[%s693 + $0x20] sm:$0xff]
        %v699 = vld [vmem:[%s693 + $0x28] sm:$0xff]
        %v700 = vld [vmem:[%s693 + $0x30] sm:$0xff]
        %v701 = vld [vmem:[%s693 + $0x38] sm:$0xff]
        %v702 = vld [vmem:[%s693 + $0x40] sm:$0xff]
        %v703 = vld [vmem:[%s693 + $0x48] sm:$0xff]
        %v704 = vld [vmem:[%s693 + $0x50] sm:$0xff]
        %v705 = vld [vmem:[%s693 + $0x58] sm:$0xff]
        %v706 = vld [vmem:[%s693 + $0x60] sm:$0xff]
        %v707 = vld [vmem:[%s693 + $0x68] sm:$0xff]
        %v708 = vld [vmem:[%s693 + $0x70] sm:$0xff]
        %v709 = vld [vmem:[%s693 + $0x78] sm:$0xff]
        %710 = vmatprep.subr.mxu0 0.0
        %711 = vmatpush1.msra.mxu0 %v694
        %712 = vmatprep.subr.mxu0 0.0
        %713 = vmatpush1.msra.mxu0 %v695
        %714 = vmatprep.subr.mxu0 0.0
        %715 = vmatpush1.msra.mxu0 %v696
        %716 = vmatprep.subr.mxu0 0.0
        %717 = vmatpush1.msra.mxu0 %v697
        %718 = vmatprep.subr.mxu0 0.0
        %719 = vmatpush1.msra.mxu0 %v698
        %720 = vmatprep.subr.mxu0 0.0
        %721 = vmatpush1.msra.mxu0 %v699
        %722 = vmatprep.subr.mxu0 0.0
        %723 = vmatpush1.msra.mxu0 %v700
        %724 = vmatprep.subr.mxu0 0.0
        %725 = vmatpush1.msra.mxu0 %v701
        %726 = vmatprep.subr.mxu0 0.0
        %727 = vmatpush1.msra.mxu0 %v702
        %728 = vmatprep.subr.mxu0 0.0
        %729 = vmatpush1.msra.mxu0 %v703
        %730 = vmatprep.subr.mxu0 0.0
        %731 = vmatpush1.msra.mxu0 %v704
        %732 = vmatprep.subr.mxu0 0.0
        %733 = vmatpush1.msra.mxu0 %v705
        %734 = vmatprep.subr.mxu0 0.0
        %735 = vmatpush1.msra.mxu0 %v706
        %736 = vmatprep.subr.mxu0 0.0
        %737 = vmatpush1.msra.mxu0 %v707
        %738 = vmatprep.subr.mxu0 0.0
        %739 = vmatpush1.msra.mxu0 %v708
        %740 = vmatprep.subr.mxu0 0.0
        %741 = vmatpush1.msra.mxu0 %v709
        %742 = vmatprep.subr.mxu0 0.0
        %743 = vmatpush1.msra.mxu0 0.0
        %744 = vmatprep.subr.mxu0 0.0
        %745 = vmatpush1.msra.mxu0 0.0
        %746 = vmatprep.subr.mxu0 0.0
        %747 = vmatpush1.msra.mxu0 0.0
        %748 = vmatprep.subr.mxu0 0.0
        %749 = vmatpush1.msra.mxu0 0.0
        %750 = vmatprep.subr.mxu0 0.0
        %751 = vmatpush1.msra.mxu0 0.0
        %752 = vmatprep.subr.mxu0 0.0
        %753 = vmatpush1.msra.mxu0 0.0
        %754 = vmatprep.subr.mxu0 0.0
        %755 = vmatpush1.msra.mxu0 0.0
        %756 = vmatprep.subr.mxu0 0.0
        %757 = vmatpush1.msra.mxu0 0.0
        %758 = vmatprep.subr.mxu0 0.0
        %759 = vmatpush1.msra.mxu0 0.0
        %760 = vmatprep.subr.mxu0 0.0
        %761 = vmatpush1.msra.mxu0 0.0
        %762 = vmatprep.subr.mxu0 0.0
        %763 = vmatpush1.msra.mxu0 0.0
        %764 = vmatprep.subr.mxu0 0.0
        %765 = vmatpush1.msra.mxu0 0.0
        %766 = vmatprep.subr.mxu0 0.0
        %767 = vmatpush1.msra.mxu0 0.0
        %768 = vmatprep.subr.mxu0 0.0
        %769 = vmatpush1.msra.mxu0 0.0
        %770 = vmatprep.subr.mxu0 0.0
        %771 = vmatpush1.msra.mxu0 0.0
        %772 = vmatprep.subr.mxu0 0.0
        %773 = vmatpush1.msra.mxu0 0.0
        %774 = vmatprep.mubr.f32.mxu0 0.0
        %775 = vmatmul.mubr.f32.gmra.mrb[0].mxu0 %v687
        %v776 = vpop.f32.mrb[0].mxu0
        %v777 = vadd.f32 0.0, %v776
        %v778 = vpop.f32.mrb[0].mxu0
        %779 = vmatprep.mubr.f32.mxu0 0.0
        %780 = vmatmul.mubr.f32.gmra.mrb[0].mxu0 %v688
        %v781 = vpop.f32.mrb[0].mxu0
        %v782 = vadd.f32 0.0, %v781
        %v783 = vpop.f32.mrb[0].mxu0
        %784 = vmatprep.mubr.f32.mxu0 0.0
        %785 = vmatmul.mubr.f32.gmra.mrb[0].mxu0 %v689
        %v786 = vpop.f32.mrb[0].mxu0
        %v787 = vadd.f32 0.0, %v786
        %v788 = vpop.f32.mrb[0].mxu0
        %789 = vmatprep.mubr.f32.mxu0 0.0
        %790 = vmatmul.mubr.f32.gmra.mrb[0].mxu0 %v690
        %v791 = vpop.f32.mrb[0].mxu0
        %v792 = vadd.f32 0.0, %v791
        %v793 = vpop.f32.mrb[0].mxu0
        %794 = vmatprep.mubr.f32.mxu0 0.0
        %795 = vmatmul.mubr.f32.gmra.mrb[0].mxu0 %v691
        %v796 = vpop.f32.mrb[0].mxu0
        %v797 = vadd.f32 0.0, %v796
        %v798 = vpop.f32.mrb[0].mxu0
        %799 = vmatprep.mubr.f32.mxu0 0.0
        %800 = vmatmul.mubr.f32.gmra.mrb[0].mxu0 %v692
        %v801 = vpop.f32.mrb[0].mxu0
        %v802 = vadd.f32 0.0, %v801
        %v803 = vpop.f32.mrb[0].mxu0
        %804 = vdwg.mxu0
        %v805 = vadd.f32 %v681, %v777
        %v806 = vadd.f32 %v682, %v782
        %v807 = vadd.f32 %v683, %v787
        %v808 = vadd.f32 %v684, %v792
        %v809 = vadd.f32 %v685, %v797
        %v810 = vadd.f32 %v686, %v802
        %v811 = vld [vmem:[%s318 + $0x2] sm:$0xff]
        %v812 = vld [vmem:[%s318 + $0xa] sm:$0xff]
        %v813 = vld [vmem:[%s318 + $0x12] sm:$0xff]
        %v814 = vld [vmem:[%s318 + $0x1a] sm:$0xff]
        %v815 = vld [vmem:[%s318 + $0x22] sm:$0xff]
        %v816 = vld [vmem:[%s318 + $0x2a] sm:$0x3f]
        %s817 = scalar_lea.vmem %s2, 256
        %v818 = vld [vmem:[%s817] sm:$0xff]
        %v819 = vld [vmem:[%s817 + $0x8] sm:$0xff]
        %v820 = vld [vmem:[%s817 + $0x10] sm:$0xff]
        %v821 = vld [vmem:[%s817 + $0x18] sm:$0xff]
        %v822 = vld [vmem:[%s817 + $0x20] sm:$0xff]
        %v823 = vld [vmem:[%s817 + $0x28] sm:$0xff]
        %v824 = vld [vmem:[%s817 + $0x30] sm:$0xff]
        %v825 = vld [vmem:[%s817 + $0x38] sm:$0xff]
        %v826 = vld [vmem:[%s817 + $0x40] sm:$0xff]
        %v827 = vld [vmem:[%s817 + $0x48] sm:$0xff]
        %v828 = vld [vmem:[%s817 + $0x50] sm:$0xff]
        %v829 = vld [vmem:[%s817 + $0x58] sm:$0xff]
        %v830 = vld [vmem:[%s817 + $0x60] sm:$0xff]
        %v831 = vld [vmem:[%s817 + $0x68] sm:$0xff]
        %v832 = vld [vmem:[%s817 + $0x70] sm:$0xff]
        %v833 = vld [vmem:[%s817 + $0x78] sm:$0xff]
        %834 = vmatprep.subr.mxu0 0.0
        %835 = vmatpush1.msra.mxu0 %v818
        %836 = vmatprep.subr.mxu0 0.0
        %837 = vmatpush1.msra.mxu0 %v819
        %838 = vmatprep.subr.mxu0 0.0
        %839 = vmatpush1.msra.mxu0 %v820
        %840 = vmatprep.subr.mxu0 0.0
        %841 = vmatpush1.msra.mxu0 %v821
        %842 = vmatprep.subr.mxu0 0.0
        %843 = vmatpush1.msra.mxu0 %v822
        %844 = vmatprep.subr.mxu0 0.0
        %845 = vmatpush1.msra.mxu0 %v823
        %846 = vmatprep.subr.mxu0 0.0
        %847 = vmatpush1.msra.mxu0 %v824
        %848 = vmatprep.subr.mxu0 0.0
        %849 = vmatpush1.msra.mxu0 %v825
        %850 = vmatprep.subr.mxu0 0.0
        %851 = vmatpush1.msra.mxu0 %v826
        %852 = vmatprep.subr.mxu0 0.0
        %853 = vmatpush1.msra.mxu0 %v827
        %854 = vmatprep.subr.mxu0 0.0
        %855 = vmatpush1.msra.mxu0 %v828
        %856 = vmatprep.subr.mxu0 0.0
        %857 = vmatpush1.msra.mxu0 %v829
        %858 = vmatprep.subr.mxu0 0.0
        %859 = vmatpush1.msra.mxu0 %v830
        %860 = vmatprep.subr.mxu0 0.0
        %861 = vmatpush1.msra.mxu0 %v831
        %862 = vmatprep.subr.mxu0 0.0
        %863 = vmatpush1.msra.mxu0 %v832
        %864 = vmatprep.subr.mxu0 0.0
        %865 = vmatpush1.msra.mxu0 %v833
        %866 = vmatprep.subr.mxu0 0.0
        %867 = vmatpush1.msra.mxu0 0.0
        %868 = vmatprep.subr.mxu0 0.0
        %869 = vmatpush1.msra.mxu0 0.0
        %870 = vmatprep.subr.mxu0 0.0
        %871 = vmatpush1.msra.mxu0 0.0
        %872 = vmatprep.subr.mxu0 0.0
        %873 = vmatpush1.msra.mxu0 0.0
        %874 = vmatprep.subr.mxu0 0.0
        %875 = vmatpush1.msra.mxu0 0.0
        %876 = vmatprep.subr.mxu0 0.0
        %877 = vmatpush1.msra.mxu0 0.0
        %878 = vmatprep.subr.mxu0 0.0
        %879 = vmatpush1.msra.mxu0 0.0
        %880 = vmatprep.subr.mxu0 0.0
        %881 = vmatpush1.msra.mxu0 0.0
        %882 = vmatprep.subr.mxu0 0.0
        %883 = vmatpush1.msra.mxu0 0.0
        %884 = vmatprep.subr.mxu0 0.0
        %885 = vmatpush1.msra.mxu0 0.0
        %886 = vmatprep.subr.mxu0 0.0
        %887 = vmatpush1.msra.mxu0 0.0
        %888 = vmatprep.subr.mxu0 0.0
        %889 = vmatpush1.msra.mxu0 0.0
        %890 = vmatprep.subr.mxu0 0.0
        %891 = vmatpush1.msra.mxu0 0.0
        %892 = vmatprep.subr.mxu0 0.0
        %893 = vmatpush1.msra.mxu0 0.0
        %894 = vmatprep.subr.mxu0 0.0
        %895 = vmatpush1.msra.mxu0 0.0
        %896 = vmatprep.subr.mxu0 0.0
        %897 = vmatpush1.msra.mxu0 0.0
        %898 = vmatprep.mubr.f32.mxu0 0.0
        %899 = vmatmul.mubr.f32.gmra.mrb[0].mxu0 %v811
        %v900 = vpop.f32.mrb[0].mxu0
        %v901 = vadd.f32 0.0, %v900
        %v902 = vpop.f32.mrb[0].mxu0
        %903 = vmatprep.mubr.f32.mxu0 0.0
        %904 = vmatmul.mubr.f32.gmra.mrb[0].mxu0 %v812
        %v905 = vpop.f32.mrb[0].mxu0
        %v906 = vadd.f32 0.0, %v905
        %v907 = vpop.f32.mrb[0].mxu0
        %908 = vmatprep.mubr.f32.mxu0 0.0
        %909 = vmatmul.mubr.f32.gmra.mrb[0].mxu0 %v813
        %v910 = vpop.f32.mrb[0].mxu0
        %v911 = vadd.f32 0.0, %v910
        %v912 = vpop.f32.mrb[0].mxu0
        %913 = vmatprep.mubr.f32.mxu0 0.0
        %914 = vmatmul.mubr.f32.gmra.mrb[0].mxu0 %v814
        %v915 = vpop.f32.mrb[0].mxu0
        %v916 = vadd.f32 0.0, %v915
        %v917 = vpop.f32.mrb[0].mxu0
        %918 = vmatprep.mubr.f32.mxu0 0.0
        %919 = vmatmul.mubr.f32.gmra.mrb[0].mxu0 %v815
        %v920 = vpop.f32.mrb[0].mxu0
        %v921 = vadd.f32 0.0, %v920
        %v922 = vpop.f32.mrb[0].mxu0
        %923 = vmatprep.mubr.f32.mxu0 0.0
        %924 = vmatmul.mubr.f32.gmra.mrb[0].mxu0 %v816
        %v925 = vpop.f32.mrb[0].mxu0
        %v926 = vadd.f32 0.0, %v925
        %v927 = vpop.f32.mrb[0].mxu0
        %928 = vdwg.mxu0
        %v929 = vadd.f32 %v805, %v901
        %v930 = vadd.f32 %v806, %v906
        %v931 = vadd.f32 %v807, %v911
        %v932 = vadd.f32 %v808, %v916
        %v933 = vadd.f32 %v809, %v921
        %v934 = vadd.f32 %v810, %v926
        %v935 = vld [vmem:[%s323 + $0x2] sm:$0xff]
        %v936 = vld [vmem:[%s323 + $0xa] sm:$0xff]
        %v937 = vld [vmem:[%s323 + $0x12] sm:$0xff]
        %v938 = vld [vmem:[%s323 + $0x1a] sm:$0xff]
        %v939 = vld [vmem:[%s323 + $0x22] sm:$0xff]
        %v940 = vld [vmem:[%s323 + $0x2a] sm:$0x3f]
        %s941 = scalar_lea.vmem [#allocation3], 256
        %v942 = vld [vmem:[%s941] sm:$0xff]
        %v943 = vld [vmem:[%s941 + $0x8] sm:$0xff]
        %v944 = vld [vmem:[%s941 + $0x10] sm:$0xff]
        %v945 = vld [vmem:[%s941 + $0x18] sm:$0xff]
        %v946 = vld [vmem:[%s941 + $0x20] sm:$0xff]
        %v947 = vld [vmem:[%s941 + $0x28] sm:$0xff]
        %v948 = vld [vmem:[%s941 + $0x30] sm:$0xff]
        %v949 = vld [vmem:[%s941 + $0x38] sm:$0xff]
        %v950 = vld [vmem:[%s941 + $0x40] sm:$0xff]
        %v951 = vld [vmem:[%s941 + $0x48] sm:$0xff]
        %v952 = vld [vmem:[%s941 + $0x50] sm:$0xff]
        %v953 = vld [vmem:[%s941 + $0x58] sm:$0xff]
        %v954 = vld [vmem:[%s941 + $0x60] sm:$0xff]
        %v955 = vld [vmem:[%s941 + $0x68] sm:$0xff]
        %v956 = vld [vmem:[%s941 + $0x70] sm:$0xff]
        %v957 = vld [vmem:[%s941 + $0x78] sm:$0xff]
        %958 = vmatprep.subr.mxu0 0.0
        %959 = vmatpush1.msra.mxu0 %v942
        %960 = vmatprep.subr.mxu0 0.0
        %961 = vmatpush1.msra.mxu0 %v943
        %962 = vmatprep.subr.mxu0 0.0
        %963 = vmatpush1.msra.mxu0 %v944
        %964 = vmatprep.subr.mxu0 0.0
        %965 = vmatpush1.msra.mxu0 %v945
        %966 = vmatprep.subr.mxu0 0.0
        %967 = vmatpush1.msra.mxu0 %v946
        %968 = vmatprep.subr.mxu0 0.0
        %969 = vmatpush1.msra.mxu0 %v947
        %970 = vmatprep.subr.mxu0 0.0
        %971 = vmatpush1.msra.mxu0 %v948
        %972 = vmatprep.subr.mxu0 0.0
        %973 = vmatpush1.msra.mxu0 %v949
        %974 = vmatprep.subr.mxu0 0.0
        %975 = vmatpush1.msra.mxu0 %v950
        %976 = vmatprep.subr.mxu0 0.0
        %977 = vmatpush1.msra.mxu0 %v951
        %978 = vmatprep.subr.mxu0 0.0
        %979 = vmatpush1.msra.mxu0 %v952
        %980 = vmatprep.subr.mxu0 0.0
        %981 = vmatpush1.msra.mxu0 %v953
        %982 = vmatprep.subr.mxu0 0.0
        %983 = vmatpush1.msra.mxu0 %v954
        %984 = vmatprep.subr.mxu0 0.0
        %985 = vmatpush1.msra.mxu0 %v955
        %986 = vmatprep.subr.mxu0 0.0
        %987 = vmatpush1.msra.mxu0 %v956
        %988 = vmatprep.subr.mxu0 0.0
        %989 = vmatpush1.msra.mxu0 %v957
        %990 = vmatprep.subr.mxu0 0.0
        %991 = vmatpush1.msra.mxu0 0.0
        %992 = vmatprep.subr.mxu0 0.0
        %993 = vmatpush1.msra.mxu0 0.0
        %994 = vmatprep.subr.mxu0 0.0
        %995 = vmatpush1.msra.mxu0 0.0
        %996 = vmatprep.subr.mxu0 0.0
        %997 = vmatpush1.msra.mxu0 0.0
        %998 = vmatprep.subr.mxu0 0.0
        %999 = vmatpush1.msra.mxu0 0.0
        %1000 = vmatprep.subr.mxu0 0.0
        %1001 = vmatpush1.msra.mxu0 0.0
        %1002 = vmatprep.subr.mxu0 0.0
        %1003 = vmatpush1.msra.mxu0 0.0
        %1004 = vmatprep.subr.mxu0 0.0
        %1005 = vmatpush1.msra.mxu0 0.0
        %1006 = vmatprep.subr.mxu0 0.0
        %1007 = vmatpush1.msra.mxu0 0.0
        %1008 = vmatprep.subr.mxu0 0.0
        %1009 = vmatpush1.msra.mxu0 0.0
        %1010 = vmatprep.subr.mxu0 0.0
        %1011 = vmatpush1.msra.mxu0 0.0
        %1012 = vmatprep.subr.mxu0 0.0
        %1013 = vmatpush1.msra.mxu0 0.0
        %1014 = vmatprep.subr.mxu0 0.0
        %1015 = vmatpush1.msra.mxu0 0.0
        %1016 = vmatprep.subr.mxu0 0.0
        %1017 = vmatpush1.msra.mxu0 0.0
        %1018 = vmatprep.subr.mxu0 0.0
        %1019 = vmatpush1.msra.mxu0 0.0
        %1020 = vmatprep.subr.mxu0 0.0
        %1021 = vmatpush1.msra.mxu0 0.0
        %1022 = vmatprep.mubr.f32.mxu0 0.0
        %1023 = vmatmul.mubr.f32.gmra.mrb[0].mxu0 %v935
        %v1024 = vpop.f32.mrb[0].mxu0
        %v1025 = vadd.f32 0.0, %v1024
        %v1026 = vpop.f32.mrb[0].mxu0
        %1027 = vmatprep.mubr.f32.mxu0 0.0
        %1028 = vmatmul.mubr.f32.gmra.mrb[0].mxu0 %v936
        %v1029 = vpop.f32.mrb[0].mxu0
        %v1030 = vadd.f32 0.0, %v1029
        %v1031 = vpop.f32.mrb[0].mxu0
        %1032 = vmatprep.mubr.f32.mxu0 0.0
        %1033 = vmatmul.mubr.f32.gmra.mrb[0].mxu0 %v937
        %v1034 = vpop.f32.mrb[0].mxu0
        %v1035 = vadd.f32 0.0, %v1034
        %v1036 = vpop.f32.mrb[0].mxu0
        %1037 = vmatprep.mubr.f32.mxu0 0.0
        %1038 = vmatmul.mubr.f32.gmra.mrb[0].mxu0 %v938
        %v1039 = vpop.f32.mrb[0].mxu0
        %v1040 = vadd.f32 0.0, %v1039
        %v1041 = vpop.f32.mrb[0].mxu0
        %1042 = vmatprep.mubr.f32.mxu0 0.0
        %1043 = vmatmul.mubr.f32.gmra.mrb[0].mxu0 %v939
        %v1044 = vpop.f32.mrb[0].mxu0
        %v1045 = vadd.f32 0.0, %v1044
        %v1046 = vpop.f32.mrb[0].mxu0
        %1047 = vmatprep.mubr.f32.mxu0 0.0
        %1048 = vmatmul.mubr.f32.gmra.mrb[0].mxu0 %v940
        %v1049 = vpop.f32.mrb[0].mxu0
        %v1050 = vadd.f32 0.0, %v1049
        %v1051 = vpop.f32.mrb[0].mxu0
        %1052 = vdwg.mxu0
        %v1053 = vadd.f32 %v929, %v1025
        %v1054 = vadd.f32 %v930, %v1030
        %v1055 = vadd.f32 %v931, %v1035
        %v1056 = vadd.f32 %v932, %v1040
        %v1057 = vadd.f32 %v933, %v1045
        %v1058 = vadd.f32 %v934, %v1050
        %v1059 = vld [vmem:[%s318 + $0x8] sm:$0xff]
        %v1060 = vld [vmem:[%s318 + $0x10] sm:$0xff]
        %v1061 = vld [vmem:[%s318 + $0x18] sm:$0xff]
        %v1062 = vld [vmem:[%s318 + $0x20] sm:$0xff]
        %v1063 = vld [vmem:[%s318 + $0x28] sm:$0xff]
        %v1064 = vld [vmem:[%s318 + $0x30] sm:$0x3f]
        %s1065 = scalar_lea.vmem %s2, 384
        %v1066 = vld [vmem:[%s1065] sm:$0xff]
        %v1067 = vld [vmem:[%s1065 + $0x8] sm:$0xff]
        %v1068 = vld [vmem:[%s1065 + $0x10] sm:$0xff]
        %v1069 = vld [vmem:[%s1065 + $0x18] sm:$0xff]
        %v1070 = vld [vmem:[%s1065 + $0x20] sm:$0xff]
        %v1071 = vld [vmem:[%s1065 + $0x28] sm:$0xff]
        %v1072 = vld [vmem:[%s1065 + $0x30] sm:$0xff]
        %v1073 = vld [vmem:[%s1065 + $0x38] sm:$0xff]
        %v1074 = vld [vmem:[%s1065 + $0x40] sm:$0xff]
        %v1075 = vld [vmem:[%s1065 + $0x48] sm:$0xff]
        %v1076 = vld [vmem:[%s1065 + $0x50] sm:$0xff]
        %v1077 = vld [vmem:[%s1065 + $0x58] sm:$0xff]
        %v1078 = vld [vmem:[%s1065 + $0x60] sm:$0xff]
        %v1079 = vld [vmem:[%s1065 + $0x68] sm:$0xff]
        %v1080 = vld [vmem:[%s1065 + $0x70] sm:$0xff]
        %v1081 = vld [vmem:[%s1065 + $0x78] sm:$0xff]
        %1082 = vmatprep.subr.mxu0 0.0
        %1083 = vmatpush1.msra.mxu0 %v1066
        %1084 = vmatprep.subr.mxu0 0.0
        %1085 = vmatpush1.msra.mxu0 %v1067
        %1086 = vmatprep.subr.mxu0 0.0
        %1087 = vmatpush1.msra.mxu0 %v1068
        %1088 = vmatprep.subr.mxu0 0.0
        %1089 = vmatpush1.msra.mxu0 %v1069
        %1090 = vmatprep.subr.mxu0 0.0
        %1091 = vmatpush1.msra.mxu0 %v1070
        %1092 = vmatprep.subr.mxu0 0.0
        %1093 = vmatpush1.msra.mxu0 %v1071
        %1094 = vmatprep.subr.mxu0 0.0
        %1095 = vmatpush1.msra.mxu0 %v1072
        %1096 = vmatprep.subr.mxu0 0.0
        %1097 = vmatpush1.msra.mxu0 %v1073
        %1098 = vmatprep.subr.mxu0 0.0
        %1099 = vmatpush1.msra.mxu0 %v1074
        %1100 = vmatprep.subr.mxu0 0.0
        %1101 = vmatpush1.msra.mxu0 %v1075
        %1102 = vmatprep.subr.mxu0 0.0
        %1103 = vmatpush1.msra.mxu0 %v1076
        %1104 = vmatprep.subr.mxu0 0.0
        %1105 = vmatpush1.msra.mxu0 %v1077
        %1106 = vmatprep.subr.mxu0 0.0
        %1107 = vmatpush1.msra.mxu0 %v1078
        %1108 = vmatprep.subr.mxu0 0.0
        %1109 = vmatpush1.msra.mxu0 %v1079
        %1110 = vmatprep.subr.mxu0 0.0
        %1111 = vmatpush1.msra.mxu0 %v1080
        %1112 = vmatprep.subr.mxu0 0.0
        %1113 = vmatpush1.msra.mxu0 %v1081
        %1114 = vmatprep.subr.mxu0 0.0
        %1115 = vmatpush1.msra.mxu0 0.0
        %1116 = vmatprep.subr.mxu0 0.0
        %1117 = vmatpush1.msra.mxu0 0.0
        %1118 = vmatprep.subr.mxu0 0.0
        %1119 = vmatpush1.msra.mxu0 0.0
        %1120 = vmatprep.subr.mxu0 0.0
        %1121 = vmatpush1.msra.mxu0 0.0
        %1122 = vmatprep.subr.mxu0 0.0
        %1123 = vmatpush1.msra.mxu0 0.0
        %1124 = vmatprep.subr.mxu0 0.0
        %1125 = vmatpush1.msra.mxu0 0.0
        %1126 = vmatprep.subr.mxu0 0.0
        %1127 = vmatpush1.msra.mxu0 0.0
        %1128 = vmatprep.subr.mxu0 0.0
        %1129 = vmatpush1.msra.mxu0 0.0
        %1130 = vmatprep.subr.mxu0 0.0
        %1131 = vmatpush1.msra.mxu0 0.0
        %1132 = vmatprep.subr.mxu0 0.0
        %1133 = vmatpush1.msra.mxu0 0.0
        %1134 = vmatprep.subr.mxu0 0.0
        %1135 = vmatpush1.msra.mxu0 0.0
        %1136 = vmatprep.subr.mxu0 0.0
        %1137 = vmatpush1.msra.mxu0 0.0
        %1138 = vmatprep.subr.mxu0 0.0
        %1139 = vmatpush1.msra.mxu0 0.0
        %1140 = vmatprep.subr.mxu0 0.0
        %1141 = vmatpush1.msra.mxu0 0.0
        %1142 = vmatprep.subr.mxu0 0.0
        %1143 = vmatpush1.msra.mxu0 0.0
        %1144 = vmatprep.subr.mxu0 0.0
        %1145 = vmatpush1.msra.mxu0 0.0
        %1146 = vmatprep.mubr.f32.mxu0 0.0
        %1147 = vmatmul.mubr.f32.gmra.mrb[0].mxu0 %v1059
        %v1148 = vpop.f32.mrb[0].mxu0
        %v1149 = vadd.f32 0.0, %v1148
        %v1150 = vpop.f32.mrb[0].mxu0
        %1151 = vmatprep.mubr.f32.mxu0 0.0
        %1152 = vmatmul.mubr.f32.gmra.mrb[0].mxu0 %v1060
        %v1153 = vpop.f32.mrb[0].mxu0
        %v1154 = vadd.f32 0.0, %v1153
        %v1155 = vpop.f32.mrb[0].mxu0
        %1156 = vmatprep.mubr.f32.mxu0 0.0
        %1157 = vmatmul.mubr.f32.gmra.mrb[0].mxu0 %v1061
        %v1158 = vpop.f32.mrb[0].mxu0
        %v1159 = vadd.f32 0.0, %v1158
        %v1160 = vpop.f32.mrb[0].mxu0
        %1161 = vmatprep.mubr.f32.mxu0 0.0
        %1162 = vmatmul.mubr.f32.gmra.mrb[0].mxu0 %v1062
        %v1163 = vpop.f32.mrb[0].mxu0
        %v1164 = vadd.f32 0.0, %v1163
        %v1165 = vpop.f32.mrb[0].mxu0
        %1166 = vmatprep.mubr.f32.mxu0 0.0
        %1167 = vmatmul.mubr.f32.gmra.mrb[0].mxu0 %v1063
        %v1168 = vpop.f32.mrb[0].mxu0
        %v1169 = vadd.f32 0.0, %v1168
        %v1170 = vpop.f32.mrb[0].mxu0
        %1171 = vmatprep.mubr.f32.mxu0 0.0
        %1172 = vmatmul.mubr.f32.gmra.mrb[0].mxu0 %v1064
        %v1173 = vpop.f32.mrb[0].mxu0
        %v1174 = vadd.f32 0.0, %v1173
        %v1175 = vpop.f32.mrb[0].mxu0
        %1176 = vdwg.mxu0
        %v1177 = vadd.f32 %v1053, %v1149
        %v1178 = vadd.f32 %v1054, %v1154
        %v1179 = vadd.f32 %v1055, %v1159
        %v1180 = vadd.f32 %v1056, %v1164
        %v1181 = vadd.f32 %v1057, %v1169
        %v1182 = vadd.f32 %v1058, %v1174
        %v1183 = vld [vmem:[%s323 + $0x8] sm:$0xff]
        %v1184 = vld [vmem:[%s323 + $0x10] sm:$0xff]
        %v1185 = vld [vmem:[%s323 + $0x18] sm:$0xff]
        %v1186 = vld [vmem:[%s323 + $0x20] sm:$0xff]
        %v1187 = vld [vmem:[%s323 + $0x28] sm:$0xff]
        %v1188 = vld [vmem:[%s323 + $0x30] sm:$0x3f]
        %s1189 = scalar_lea.vmem [#allocation3], 384
        %v1190 = vld [vmem:[%s1189] sm:$0xff]
        %v1191 = vld [vmem:[%s1189 + $0x8] sm:$0xff]
        %v1192 = vld [vmem:[%s1189 + $0x10] sm:$0xff]
        %v1193 = vld [vmem:[%s1189 + $0x18] sm:$0xff]
        %v1194 = vld [vmem:[%s1189 + $0x20] sm:$0xff]
        %v1195 = vld [vmem:[%s1189 + $0x28] sm:$0xff]
        %v1196 = vld [vmem:[%s1189 + $0x30] sm:$0xff]
        %v1197 = vld [vmem:[%s1189 + $0x38] sm:$0xff]
        %v1198 = vld [vmem:[%s1189 + $0x40] sm:$0xff]
        %v1199 = vld [vmem:[%s1189 + $0x48] sm:$0xff]
        %v1200 = vld [vmem:[%s1189 + $0x50] sm:$0xff]
        %v1201 = vld [vmem:[%s1189 + $0x58] sm:$0xff]
        %v1202 = vld [vmem:[%s1189 + $0x60] sm:$0xff]
        %v1203 = vld [vmem:[%s1189 + $0x68] sm:$0xff]
        %v1204 = vld [vmem:[%s1189 + $0x70] sm:$0xff]
        %v1205 = vld [vmem:[%s1189 + $0x78] sm:$0xff]
        %1206 = vmatprep.subr.mxu0 0.0
        %1207 = vmatpush1.msra.mxu0 %v1190
        %1208 = vmatprep.subr.mxu0 0.0
        %1209 = vmatpush1.msra.mxu0 %v1191
        %1210 = vmatprep.subr.mxu0 0.0
        %1211 = vmatpush1.msra.mxu0 %v1192
        %1212 = vmatprep.subr.mxu0 0.0
        %1213 = vmatpush1.msra.mxu0 %v1193
        %1214 = vmatprep.subr.mxu0 0.0
        %1215 = vmatpush1.msra.mxu0 %v1194
        %1216 = vmatprep.subr.mxu0 0.0
        %1217 = vmatpush1.msra.mxu0 %v1195
        %1218 = vmatprep.subr.mxu0 0.0
        %1219 = vmatpush1.msra.mxu0 %v1196
        %1220 = vmatprep.subr.mxu0 0.0
        %1221 = vmatpush1.msra.mxu0 %v1197
        %1222 = vmatprep.subr.mxu0 0.0
        %1223 = vmatpush1.msra.mxu0 %v1198
        %1224 = vmatprep.subr.mxu0 0.0
        %1225 = vmatpush1.msra.mxu0 %v1199
        %1226 = vmatprep.subr.mxu0 0.0
        %1227 = vmatpush1.msra.mxu0 %v1200
        %1228 = vmatprep.subr.mxu0 0.0
        %1229 = vmatpush1.msra.mxu0 %v1201
        %1230 = vmatprep.subr.mxu0 0.0
        %1231 = vmatpush1.msra.mxu0 %v1202
        %1232 = vmatprep.subr.mxu0 0.0
        %1233 = vmatpush1.msra.mxu0 %v1203
        %1234 = vmatprep.subr.mxu0 0.0
        %1235 = vmatpush1.msra.mxu0 %v1204
        %1236 = vmatprep.subr.mxu0 0.0
        %1237 = vmatpush1.msra.mxu0 %v1205
        %1238 = vmatprep.subr.mxu0 0.0
        %1239 = vmatpush1.msra.mxu0 0.0
        %1240 = vmatprep.subr.mxu0 0.0
        %1241 = vmatpush1.msra.mxu0 0.0
        %1242 = vmatprep.subr.mxu0 0.0
        %1243 = vmatpush1.msra.mxu0 0.0
        %1244 = vmatprep.subr.mxu0 0.0
        %1245 = vmatpush1.msra.mxu0 0.0
        %1246 = vmatprep.subr.mxu0 0.0
        %1247 = vmatpush1.msra.mxu0 0.0
        %1248 = vmatprep.subr.mxu0 0.0
        %1249 = vmatpush1.msra.mxu0 0.0
        %1250 = vmatprep.subr.mxu0 0.0
        %1251 = vmatpush1.msra.mxu0 0.0
        %1252 = vmatprep.subr.mxu0 0.0
        %1253 = vmatpush1.msra.mxu0 0.0
        %1254 = vmatprep.subr.mxu0 0.0
        %1255 = vmatpush1.msra.mxu0 0.0
        %1256 = vmatprep.subr.mxu0 0.0
        %1257 = vmatpush1.msra.mxu0 0.0
        %1258 = vmatprep.subr.mxu0 0.0
        %1259 = vmatpush1.msra.mxu0 0.0
        %1260 = vmatprep.subr.mxu0 0.0
        %1261 = vmatpush1.msra.mxu0 0.0
        %1262 = vmatprep.subr.mxu0 0.0
        %1263 = vmatpush1.msra.mxu0 0.0
        %1264 = vmatprep.subr.mxu0 0.0
        %1265 = vmatpush1.msra.mxu0 0.0
        %1266 = vmatprep.subr.mxu0 0.0
        %1267 = vmatpush1.msra.mxu0 0.0
        %1268 = vmatprep.subr.mxu0 0.0
        %1269 = vmatpush1.msra.mxu0 0.0
        %1270 = vmatprep.mubr.f32.mxu0 0.0
        %1271 = vmatmul.mubr.f32.gmra.mrb[0].mxu0 %v1183
        %v1272 = vpop.f32.mrb[0].mxu0
        %v1273 = vadd.f32 0.0, %v1272
        %v1274 = vpop.f32.mrb[0].mxu0
        %1275 = vmatprep.mubr.f32.mxu0 0.0
        %1276 = vmatmul.mubr.f32.gmra.mrb[0].mxu0 %v1184
        %v1277 = vpop.f32.mrb[0].mxu0
        %v1278 = vadd.f32 0.0, %v1277
        %v1279 = vpop.f32.mrb[0].mxu0
        %1280 = vmatprep.mubr.f32.mxu0 0.0
        %1281 = vmatmul.mubr.f32.gmra.mrb[0].mxu0 %v1185
        %v1282 = vpop.f32.mrb[0].mxu0
        %v1283 = vadd.f32 0.0, %v1282
        %v1284 = vpop.f32.mrb[0].mxu0
        %1285 = vmatprep.mubr.f32.mxu0 0.0
        %1286 = vmatmul.mubr.f32.gmra.mrb[0].mxu0 %v1186
        %v1287 = vpop.f32.mrb[0].mxu0
        %v1288 = vadd.f32 0.0, %v1287
        %v1289 = vpop.f32.mrb[0].mxu0
        %1290 = vmatprep.mubr.f32.mxu0 0.0
        %1291 = vmatmul.mubr.f32.gmra.mrb[0].mxu0 %v1187
        %v1292 = vpop.f32.mrb[0].mxu0
        %v1293 = vadd.f32 0.0, %v1292
        %v1294 = vpop.f32.mrb[0].mxu0
        %1295 = vmatprep.mubr.f32.mxu0 0.0
        %1296 = vmatmul.mubr.f32.gmra.mrb[0].mxu0 %v1188
        %v1297 = vpop.f32.mrb[0].mxu0
        %v1298 = vadd.f32 0.0, %v1297
        %v1299 = vpop.f32.mrb[0].mxu0
        %1300 = vdwg.mxu0
        %v1301 = vadd.f32 %v1177, %v1273
        %v1302 = vadd.f32 %v1178, %v1278
        %v1303 = vadd.f32 %v1179, %v1283
        %v1304 = vadd.f32 %v1180, %v1288
        %v1305 = vadd.f32 %v1181, %v1293
        %v1306 = vadd.f32 %v1182, %v1298
        %v1307 = vld [vmem:[%s318 + $0x9] sm:$0xff]
        %v1308 = vld [vmem:[%s318 + $0x11] sm:$0xff]
        %v1309 = vld [vmem:[%s318 + $0x19] sm:$0xff]
        %v1310 = vld [vmem:[%s318 + $0x21] sm:$0xff]
        %v1311 = vld [vmem:[%s318 + $0x29] sm:$0xff]
        %v1312 = vld [vmem:[%s318 + $0x31] sm:$0x3f]
        %s1313 = scalar_lea.vmem %s2, 512
        %v1314 = vld [vmem:[%s1313] sm:$0xff]
        %v1315 = vld [vmem:[%s1313 + $0x8] sm:$0xff]
        %v1316 = vld [vmem:[%s1313 + $0x10] sm:$0xff]
        %v1317 = vld [vmem:[%s1313 + $0x18] sm:$0xff]
        %v1318 = vld [vmem:[%s1313 + $0x20] sm:$0xff]
        %v1319 = vld [vmem:[%s1313 + $0x28] sm:$0xff]
        %v1320 = vld [vmem:[%s1313 + $0x30] sm:$0xff]
        %v1321 = vld [vmem:[%s1313 + $0x38] sm:$0xff]
        %v1322 = vld [vmem:[%s1313 + $0x40] sm:$0xff]
        %v1323 = vld [vmem:[%s1313 + $0x48] sm:$0xff]
        %v1324 = vld [vmem:[%s1313 + $0x50] sm:$0xff]
        %v1325 = vld [vmem:[%s1313 + $0x58] sm:$0xff]
        %v1326 = vld [vmem:[%s1313 + $0x60] sm:$0xff]
        %v1327 = vld [vmem:[%s1313 + $0x68] sm:$0xff]
        %v1328 = vld [vmem:[%s1313 + $0x70] sm:$0xff]
        %v1329 = vld [vmem:[%s1313 + $0x78] sm:$0xff]
        %1330 = vmatprep.subr.mxu0 0.0
        %1331 = vmatpush1.msra.mxu0 %v1314
        %1332 = vmatprep.subr.mxu0 0.0
        %1333 = vmatpush1.msra.mxu0 %v1315
        %1334 = vmatprep.subr.mxu0 0.0
        %1335 = vmatpush1.msra.mxu0 %v1316
        %1336 = vmatprep.subr.mxu0 0.0
        %1337 = vmatpush1.msra.mxu0 %v1317
        %1338 = vmatprep.subr.mxu0 0.0
        %1339 = vmatpush1.msra.mxu0 %v1318
        %1340 = vmatprep.subr.mxu0 0.0
        %1341 = vmatpush1.msra.mxu0 %v1319
        %1342 = vmatprep.subr.mxu0 0.0
        %1343 = vmatpush1.msra.mxu0 %v1320
        %1344 = vmatprep.subr.mxu0 0.0
        %1345 = vmatpush1.msra.mxu0 %v1321
        %1346 = vmatprep.subr.mxu0 0.0
        %1347 = vmatpush1.msra.mxu0 %v1322
        %1348 = vmatprep.subr.mxu0 0.0
        %1349 = vmatpush1.msra.mxu0 %v1323
        %1350 = vmatprep.subr.mxu0 0.0
        %1351 = vmatpush1.msra.mxu0 %v1324
        %1352 = vmatprep.subr.mxu0 0.0
        %1353 = vmatpush1.msra.mxu0 %v1325
        %1354 = vmatprep.subr.mxu0 0.0
        %1355 = vmatpush1.msra.mxu0 %v1326
        %1356 = vmatprep.subr.mxu0 0.0
        %1357 = vmatpush1.msra.mxu0 %v1327
        %1358 = vmatprep.subr.mxu0 0.0
        %1359 = vmatpush1.msra.mxu0 %v1328
        %1360 = vmatprep.subr.mxu0 0.0
        %1361 = vmatpush1.msra.mxu0 %v1329
        %1362 = vmatprep.subr.mxu0 0.0
        %1363 = vmatpush1.msra.mxu0 0.0
        %1364 = vmatprep.subr.mxu0 0.0
        %1365 = vmatpush1.msra.mxu0 0.0
        %1366 = vmatprep.subr.mxu0 0.0
        %1367 = vmatpush1.msra.mxu0 0.0
        %1368 = vmatprep.subr.mxu0 0.0
        %1369 = vmatpush1.msra.mxu0 0.0
        %1370 = vmatprep.subr.mxu0 0.0
        %1371 = vmatpush1.msra.mxu0 0.0
        %1372 = vmatprep.subr.mxu0 0.0
        %1373 = vmatpush1.msra.mxu0 0.0
        %1374 = vmatprep.subr.mxu0 0.0
        %1375 = vmatpush1.msra.mxu0 0.0
        %1376 = vmatprep.subr.mxu0 0.0
        %1377 = vmatpush1.msra.mxu0 0.0
        %1378 = vmatprep.subr.mxu0 0.0
        %1379 = vmatpush1.msra.mxu0 0.0
        %1380 = vmatprep.subr.mxu0 0.0
        %1381 = vmatpush1.msra.mxu0 0.0
        %1382 = vmatprep.subr.mxu0 0.0
        %1383 = vmatpush1.msra.mxu0 0.0
        %1384 = vmatprep.subr.mxu0 0.0
        %1385 = vmatpush1.msra.mxu0 0.0
        %1386 = vmatprep.subr.mxu0 0.0
        %1387 = vmatpush1.msra.mxu0 0.0
        %1388 = vmatprep.subr.mxu0 0.0
        %1389 = vmatpush1.msra.mxu0 0.0
        %1390 = vmatprep.subr.mxu0 0.0
        %1391 = vmatpush1.msra.mxu0 0.0
        %1392 = vmatprep.subr.mxu0 0.0
        %1393 = vmatpush1.msra.mxu0 0.0
        %1394 = vmatprep.mubr.f32.mxu0 0.0
        %1395 = vmatmul.mubr.f32.gmra.mrb[0].mxu0 %v1307
        %v1396 = vpop.f32.mrb[0].mxu0
        %v1397 = vadd.f32 0.0, %v1396
        %v1398 = vpop.f32.mrb[0].mxu0
        %1399 = vmatprep.mubr.f32.mxu0 0.0
        %1400 = vmatmul.mubr.f32.gmra.mrb[0].mxu0 %v1308
        %v1401 = vpop.f32.mrb[0].mxu0
        %v1402 = vadd.f32 0.0, %v1401
        %v1403 = vpop.f32.mrb[0].mxu0
        %1404 = vmatprep.mubr.f32.mxu0 0.0
        %1405 = vmatmul.mubr.f32.gmra.mrb[0].mxu0 %v1309
        %v1406 = vpop.f32.mrb[0].mxu0
        %v1407 = vadd.f32 0.0, %v1406
        %v1408 = vpop.f32.mrb[0].mxu0
        %1409 = vmatprep.mubr.f32.mxu0 0.0
        %1410 = vmatmul.mubr.f32.gmra.mrb[0].mxu0 %v1310
        %v1411 = vpop.f32.mrb[0].mxu0
        %v1412 = vadd.f32 0.0, %v1411
        %v1413 = vpop.f32.mrb[0].mxu0
        %1414 = vmatprep.mubr.f32.mxu0 0.0
        %1415 = vmatmul.mubr.f32.gmra.mrb[0].mxu0 %v1311
        %v1416 = vpop.f32.mrb[0].mxu0
        %v1417 = vadd.f32 0.0, %v1416
        %v1418 = vpop.f32.mrb[0].mxu0
        %1419 = vmatprep.mubr.f32.mxu0 0.0
        %1420 = vmatmul.mubr.f32.gmra.mrb[0].mxu0 %v1312
        %v1421 = vpop.f32.mrb[0].mxu0
        %v1422 = vadd.f32 0.0, %v1421
        %v1423 = vpop.f32.mrb[0].mxu0
        %1424 = vdwg.mxu0
        %v1425 = vadd.f32 %v1301, %v1397
        %v1426 = vadd.f32 %v1302, %v1402
        %v1427 = vadd.f32 %v1303, %v1407
        %v1428 = vadd.f32 %v1304, %v1412
        %v1429 = vadd.f32 %v1305, %v1417
        %v1430 = vadd.f32 %v1306, %v1422
        %v1431 = vld [vmem:[%s323 + $0x9] sm:$0xff]
        %v1432 = vld [vmem:[%s323 + $0x11] sm:$0xff]
        %v1433 = vld [vmem:[%s323 + $0x19] sm:$0xff]
        %v1434 = vld [vmem:[%s323 + $0x21] sm:$0xff]
        %v1435 = vld [vmem:[%s323 + $0x29] sm:$0xff]
        %v1436 = vld [vmem:[%s323 + $0x31] sm:$0x3f]
        %s1437 = scalar_lea.vmem [#allocation3], 512
        %v1438 = vld [vmem:[%s1437] sm:$0xff]
        %v1439 = vld [vmem:[%s1437 + $0x8] sm:$0xff]
        %v1440 = vld [vmem:[%s1437 + $0x10] sm:$0xff]
        %v1441 = vld [vmem:[%s1437 + $0x18] sm:$0xff]
        %v1442 = vld [vmem:[%s1437 + $0x20] sm:$0xff]
        %v1443 = vld [vmem:[%s1437 + $0x28] sm:$0xff]
        %v1444 = vld [vmem:[%s1437 + $0x30] sm:$0xff]
        %v1445 = vld [vmem:[%s1437 + $0x38] sm:$0xff]
        %v1446 = vld [vmem:[%s1437 + $0x40] sm:$0xff]
        %v1447 = vld [vmem:[%s1437 + $0x48] sm:$0xff]
        %v1448 = vld [vmem:[%s1437 + $0x50] sm:$0xff]
        %v1449 = vld [vmem:[%s1437 + $0x58] sm:$0xff]
        %v1450 = vld [vmem:[%s1437 + $0x60] sm:$0xff]
        %v1451 = vld [vmem:[%s1437 + $0x68] sm:$0xff]
        %v1452 = vld [vmem:[%s1437 + $0x70] sm:$0xff]
        %v1453 = vld [vmem:[%s1437 + $0x78] sm:$0xff]
        %1454 = vmatprep.subr.mxu0 0.0
        %1455 = vmatpush1.msra.mxu0 %v1438
        %1456 = vmatprep.subr.mxu0 0.0
        %1457 = vmatpush1.msra.mxu0 %v1439
        %1458 = vmatprep.subr.mxu0 0.0
        %1459 = vmatpush1.msra.mxu0 %v1440
        %1460 = vmatprep.subr.mxu0 0.0
        %1461 = vmatpush1.msra.mxu0 %v1441
        %1462 = vmatprep.subr.mxu0 0.0
        %1463 = vmatpush1.msra.mxu0 %v1442
        %1464 = vmatprep.subr.mxu0 0.0
        %1465 = vmatpush1.msra.mxu0 %v1443
        %1466 = vmatprep.subr.mxu0 0.0
        %1467 = vmatpush1.msra.mxu0 %v1444
        %1468 = vmatprep.subr.mxu0 0.0
        %1469 = vmatpush1.msra.mxu0 %v1445
        %1470 = vmatprep.subr.mxu0 0.0
        %1471 = vmatpush1.msra.mxu0 %v1446
        %1472 = vmatprep.subr.mxu0 0.0
        %1473 = vmatpush1.msra.mxu0 %v1447
        %1474 = vmatprep.subr.mxu0 0.0
        %1475 = vmatpush1.msra.mxu0 %v1448
        %1476 = vmatprep.subr.mxu0 0.0
        %1477 = vmatpush1.msra.mxu0 %v1449
        %1478 = vmatprep.subr.mxu0 0.0
        %1479 = vmatpush1.msra.mxu0 %v1450
        %1480 = vmatprep.subr.mxu0 0.0
        %1481 = vmatpush1.msra.mxu0 %v1451
        %1482 = vmatprep.subr.mxu0 0.0
        %1483 = vmatpush1.msra.mxu0 %v1452
        %1484 = vmatprep.subr.mxu0 0.0
        %1485 = vmatpush1.msra.mxu0 %v1453
        %1486 = vmatprep.subr.mxu0 0.0
        %1487 = vmatpush1.msra.mxu0 0.0
        %1488 = vmatprep.subr.mxu0 0.0
        %1489 = vmatpush1.msra.mxu0 0.0
        %1490 = vmatprep.subr.mxu0 0.0
        %1491 = vmatpush1.msra.mxu0 0.0
        %1492 = vmatprep.subr.mxu0 0.0
        %1493 = vmatpush1.msra.mxu0 0.0
        %1494 = vmatprep.subr.mxu0 0.0
        %1495 = vmatpush1.msra.mxu0 0.0
        %1496 = vmatprep.subr.mxu0 0.0
        %1497 = vmatpush1.msra.mxu0 0.0
        %1498 = vmatprep.subr.mxu0 0.0
        %1499 = vmatpush1.msra.mxu0 0.0
        %1500 = vmatprep.subr.mxu0 0.0
        %1501 = vmatpush1.msra.mxu0 0.0
        %1502 = vmatprep.subr.mxu0 0.0
        %1503 = vmatpush1.msra.mxu0 0.0
        %1504 = vmatprep.subr.mxu0 0.0
        %1505 = vmatpush1.msra.mxu0 0.0
        %1506 = vmatprep.subr.mxu0 0.0
        %1507 = vmatpush1.msra.mxu0 0.0
        %1508 = vmatprep.subr.mxu0 0.0
        %1509 = vmatpush1.msra.mxu0 0.0
        %1510 = vmatprep.subr.mxu0 0.0
        %1511 = vmatpush1.msra.mxu0 0.0
        %1512 = vmatprep.subr.mxu0 0.0
        %1513 = vmatpush1.msra.mxu0 0.0
        %1514 = vmatprep.subr.mxu0 0.0
        %1515 = vmatpush1.msra.mxu0 0.0
        %1516 = vmatprep.subr.mxu0 0.0
        %1517 = vmatpush1.msra.mxu0 0.0
        %1518 = vmatprep.mubr.f32.mxu0 0.0
        %1519 = vmatmul.mubr.f32.gmra.mrb[0].mxu0 %v1431
        %v1520 = vpop.f32.mrb[0].mxu0
        %v1521 = vadd.f32 0.0, %v1520
        %v1522 = vpop.f32.mrb[0].mxu0
        %1523 = vmatprep.mubr.f32.mxu0 0.0
        %1524 = vmatmul.mubr.f32.gmra.mrb[0].mxu0 %v1432
        %v1525 = vpop.f32.mrb[0].mxu0
        %v1526 = vadd.f32 0.0, %v1525
        %v1527 = vpop.f32.mrb[0].mxu0
        %1528 = vmatprep.mubr.f32.mxu0 0.0
        %1529 = vmatmul.mubr.f32.gmra.mrb[0].mxu0 %v1433
        %v1530 = vpop.f32.mrb[0].mxu0
        %v1531 = vadd.f32 0.0, %v1530
        %v1532 = vpop.f32.mrb[0].mxu0
        %1533 = vmatprep.mubr.f32.mxu0 0.0
        %1534 = vmatmul.mubr.f32.gmra.mrb[0].mxu0 %v1434
        %v1535 = vpop.f32.mrb[0].mxu0
        %v1536 = vadd.f32 0.0, %v1535
        %v1537 = vpop.f32.mrb[0].mxu0
        %1538 = vmatprep.mubr.f32.mxu0 0.0
        %1539 = vmatmul.mubr.f32.gmra.mrb[0].mxu0 %v1435
        %v1540 = vpop.f32.mrb[0].mxu0
        %v1541 = vadd.f32 0.0, %v1540
        %v1542 = vpop.f32.mrb[0].mxu0
        %1543 = vmatprep.mubr.f32.mxu0 0.0
        %1544 = vmatmul.mubr.f32.gmra.mrb[0].mxu0 %v1436
        %v1545 = vpop.f32.mrb[0].mxu0
        %v1546 = vadd.f32 0.0, %v1545
        %v1547 = vpop.f32.mrb[0].mxu0
        %1548 = vdwg.mxu0
        %v1549 = vadd.f32 %v1425, %v1521
        %v1550 = vadd.f32 %v1426, %v1526
        %v1551 = vadd.f32 %v1427, %v1531
        %v1552 = vadd.f32 %v1428, %v1536
        %v1553 = vadd.f32 %v1429, %v1541
        %v1554 = vadd.f32 %v1430, %v1546
        %v1555 = vld [vmem:[%s318 + $0xa] sm:$0xff]
        %v1556 = vld [vmem:[%s318 + $0x12] sm:$0xff]
        %v1557 = vld [vmem:[%s318 + $0x1a] sm:$0xff]
        %v1558 = vld [vmem:[%s318 + $0x22] sm:$0xff]
        %v1559 = vld [vmem:[%s318 + $0x2a] sm:$0xff]
        %v1560 = vld [vmem:[%s318 + $0x32] sm:$0x3f]
        %s1561 = scalar_lea.vmem %s2, 640
        %v1562 = vld [vmem:[%s1561] sm:$0xff]
        %v1563 = vld [vmem:[%s1561 + $0x8] sm:$0xff]
        %v1564 = vld [vmem:[%s1561 + $0x10] sm:$0xff]
        %v1565 = vld [vmem:[%s1561 + $0x18] sm:$0xff]
        %v1566 = vld [vmem:[%s1561 + $0x20] sm:$0xff]
        %v1567 = vld [vmem:[%s1561 + $0x28] sm:$0xff]
        %v1568 = vld [vmem:[%s1561 + $0x30] sm:$0xff]
        %v1569 = vld [vmem:[%s1561 + $0x38] sm:$0xff]
        %v1570 = vld [vmem:[%s1561 + $0x40] sm:$0xff]
        %v1571 = vld [vmem:[%s1561 + $0x48] sm:$0xff]
        %v1572 = vld [vmem:[%s1561 + $0x50] sm:$0xff]
        %v1573 = vld [vmem:[%s1561 + $0x58] sm:$0xff]
        %v1574 = vld [vmem:[%s1561 + $0x60] sm:$0xff]
        %v1575 = vld [vmem:[%s1561 + $0x68] sm:$0xff]
        %v1576 = vld [vmem:[%s1561 + $0x70] sm:$0xff]
        %v1577 = vld [vmem:[%s1561 + $0x78] sm:$0xff]
        %1578 = vmatprep.subr.mxu0 0.0
        %1579 = vmatpush1.msra.mxu0 %v1562
        %1580 = vmatprep.subr.mxu0 0.0
        %1581 = vmatpush1.msra.mxu0 %v1563
        %1582 = vmatprep.subr.mxu0 0.0
        %1583 = vmatpush1.msra.mxu0 %v1564
        %1584 = vmatprep.subr.mxu0 0.0
        %1585 = vmatpush1.msra.mxu0 %v1565
        %1586 = vmatprep.subr.mxu0 0.0
        %1587 = vmatpush1.msra.mxu0 %v1566
        %1588 = vmatprep.subr.mxu0 0.0
        %1589 = vmatpush1.msra.mxu0 %v1567
        %1590 = vmatprep.subr.mxu0 0.0
        %1591 = vmatpush1.msra.mxu0 %v1568
        %1592 = vmatprep.subr.mxu0 0.0
        %1593 = vmatpush1.msra.mxu0 %v1569
        %1594 = vmatprep.subr.mxu0 0.0
        %1595 = vmatpush1.msra.mxu0 %v1570
        %1596 = vmatprep.subr.mxu0 0.0
        %1597 = vmatpush1.msra.mxu0 %v1571
        %1598 = vmatprep.subr.mxu0 0.0
        %1599 = vmatpush1.msra.mxu0 %v1572
        %1600 = vmatprep.subr.mxu0 0.0
        %1601 = vmatpush1.msra.mxu0 %v1573
        %1602 = vmatprep.subr.mxu0 0.0
        %1603 = vmatpush1.msra.mxu0 %v1574
        %1604 = vmatprep.subr.mxu0 0.0
        %1605 = vmatpush1.msra.mxu0 %v1575
        %1606 = vmatprep.subr.mxu0 0.0
        %1607 = vmatpush1.msra.mxu0 %v1576
        %1608 = vmatprep.subr.mxu0 0.0
        %1609 = vmatpush1.msra.mxu0 %v1577
        %1610 = vmatprep.subr.mxu0 0.0
        %1611 = vmatpush1.msra.mxu0 0.0
        %1612 = vmatprep.subr.mxu0 0.0
        %1613 = vmatpush1.msra.mxu0 0.0
        %1614 = vmatprep.subr.mxu0 0.0
        %1615 = vmatpush1.msra.mxu0 0.0
        %1616 = vmatprep.subr.mxu0 0.0
        %1617 = vmatpush1.msra.mxu0 0.0
        %1618 = vmatprep.subr.mxu0 0.0
        %1619 = vmatpush1.msra.mxu0 0.0
        %1620 = vmatprep.subr.mxu0 0.0
        %1621 = vmatpush1.msra.mxu0 0.0
        %1622 = vmatprep.subr.mxu0 0.0
        %1623 = vmatpush1.msra.mxu0 0.0
        %1624 = vmatprep.subr.mxu0 0.0
        %1625 = vmatpush1.msra.mxu0 0.0
        %1626 = vmatprep.subr.mxu0 0.0
        %1627 = vmatpush1.msra.mxu0 0.0
        %1628 = vmatprep.subr.mxu0 0.0
        %1629 = vmatpush1.msra.mxu0 0.0
        %1630 = vmatprep.subr.mxu0 0.0
        %1631 = vmatpush1.msra.mxu0 0.0
        %1632 = vmatprep.subr.mxu0 0.0
        %1633 = vmatpush1.msra.mxu0 0.0
        %1634 = vmatprep.subr.mxu0 0.0
        %1635 = vmatpush1.msra.mxu0 0.0
        %1636 = vmatprep.subr.mxu0 0.0
        %1637 = vmatpush1.msra.mxu0 0.0
        %1638 = vmatprep.subr.mxu0 0.0
        %1639 = vmatpush1.msra.mxu0 0.0
        %1640 = vmatprep.subr.mxu0 0.0
        %1641 = vmatpush1.msra.mxu0 0.0
        %1642 = vmatprep.mubr.f32.mxu0 0.0
        %1643 = vmatmul.mubr.f32.gmra.mrb[0].mxu0 %v1555
        %v1644 = vpop.f32.mrb[0].mxu0
        %v1645 = vadd.f32 0.0, %v1644
        %v1646 = vpop.f32.mrb[0].mxu0
        %1647 = vmatprep.mubr.f32.mxu0 0.0
        %1648 = vmatmul.mubr.f32.gmra.mrb[0].mxu0 %v1556
        %v1649 = vpop.f32.mrb[0].mxu0
        %v1650 = vadd.f32 0.0, %v1649
        %v1651 = vpop.f32.mrb[0].mxu0
        %1652 = vmatprep.mubr.f32.mxu0 0.0
        %1653 = vmatmul.mubr.f32.gmra.mrb[0].mxu0 %v1557
        %v1654 = vpop.f32.mrb[0].mxu0
        %v1655 = vadd.f32 0.0, %v1654
        %v1656 = vpop.f32.mrb[0].mxu0
        %1657 = vmatprep.mubr.f32.mxu0 0.0
        %1658 = vmatmul.mubr.f32.gmra.mrb[0].mxu0 %v1558
        %v1659 = vpop.f32.mrb[0].mxu0
        %v1660 = vadd.f32 0.0, %v1659
        %v1661 = vpop.f32.mrb[0].mxu0
        %1662 = vmatprep.mubr.f32.mxu0 0.0
        %1663 = vmatmul.mubr.f32.gmra.mrb[0].mxu0 %v1559
        %v1664 = vpop.f32.mrb[0].mxu0
        %v1665 = vadd.f32 0.0, %v1664
        %v1666 = vpop.f32.mrb[0].mxu0
        %1667 = vmatprep.mubr.f32.mxu0 0.0
        %1668 = vmatmul.mubr.f32.gmra.mrb[0].mxu0 %v1560
        %v1669 = vpop.f32.mrb[0].mxu0
        %v1670 = vadd.f32 0.0, %v1669
        %v1671 = vpop.f32.mrb[0].mxu0
        %1672 = vdwg.mxu0
        %v1673 = vadd.f32 %v1549, %v1645
        %v1674 = vadd.f32 %v1550, %v1650
        %v1675 = vadd.f32 %v1551, %v1655
        %v1676 = vadd.f32 %v1552, %v1660
        %v1677 = vadd.f32 %v1553, %v1665
        %v1678 = vadd.f32 %v1554, %v1670
        %v1679 = vld [vmem:[%s323 + $0xa] sm:$0xff]
        %v1680 = vld [vmem:[%s323 + $0x12] sm:$0xff]
        %v1681 = vld [vmem:[%s323 + $0x1a] sm:$0xff]
        %v1682 = vld [vmem:[%s323 + $0x22] sm:$0xff]
        %v1683 = vld [vmem:[%s323 + $0x2a] sm:$0xff]
        %v1684 = vld [vmem:[%s323 + $0x32] sm:$0x3f]
        %s1685 = scalar_lea.vmem [#allocation3], 640
        %v1686 = vld [vmem:[%s1685] sm:$0xff]
        %v1687 = vld [vmem:[%s1685 + $0x8] sm:$0xff]
        %v1688 = vld [vmem:[%s1685 + $0x10] sm:$0xff]
        %v1689 = vld [vmem:[%s1685 + $0x18] sm:$0xff]
        %v1690 = vld [vmem:[%s1685 + $0x20] sm:$0xff]
        %v1691 = vld [vmem:[%s1685 + $0x28] sm:$0xff]
        %v1692 = vld [vmem:[%s1685 + $0x30] sm:$0xff]
        %v1693 = vld [vmem:[%s1685 + $0x38] sm:$0xff]
        %v1694 = vld [vmem:[%s1685 + $0x40] sm:$0xff]
        %v1695 = vld [vmem:[%s1685 + $0x48] sm:$0xff]
        %v1696 = vld [vmem:[%s1685 + $0x50] sm:$0xff]
        %v1697 = vld [vmem:[%s1685 + $0x58] sm:$0xff]
        %v1698 = vld [vmem:[%s1685 + $0x60] sm:$0xff]
        %v1699 = vld [vmem:[%s1685 + $0x68] sm:$0xff]
        %v1700 = vld [vmem:[%s1685 + $0x70] sm:$0xff]
        %v1701 = vld [vmem:[%s1685 + $0x78] sm:$0xff]
        %1702 = vmatprep.subr.mxu0 0.0
        %1703 = vmatpush1.msra.mxu0 %v1686
        %1704 = vmatprep.subr.mxu0 0.0
        %1705 = vmatpush1.msra.mxu0 %v1687
        %1706 = vmatprep.subr.mxu0 0.0
        %1707 = vmatpush1.msra.mxu0 %v1688
        %1708 = vmatprep.subr.mxu0 0.0
        %1709 = vmatpush1.msra.mxu0 %v1689
        %1710 = vmatprep.subr.mxu0 0.0
        %1711 = vmatpush1.msra.mxu0 %v1690
        %1712 = vmatprep.subr.mxu0 0.0
        %1713 = vmatpush1.msra.mxu0 %v1691
        %1714 = vmatprep.subr.mxu0 0.0
        %1715 = vmatpush1.msra.mxu0 %v1692
        %1716 = vmatprep.subr.mxu0 0.0
        %1717 = vmatpush1.msra.mxu0 %v1693
        %1718 = vmatprep.subr.mxu0 0.0
        %1719 = vmatpush1.msra.mxu0 %v1694
        %1720 = vmatprep.subr.mxu0 0.0
        %1721 = vmatpush1.msra.mxu0 %v1695
        %1722 = vmatprep.subr.mxu0 0.0
        %1723 = vmatpush1.msra.mxu0 %v1696
        %1724 = vmatprep.subr.mxu0 0.0
        %1725 = vmatpush1.msra.mxu0 %v1697
        %1726 = vmatprep.subr.mxu0 0.0
        %1727 = vmatpush1.msra.mxu0 %v1698
        %1728 = vmatprep.subr.mxu0 0.0
        %1729 = vmatpush1.msra.mxu0 %v1699
        %1730 = vmatprep.subr.mxu0 0.0
        %1731 = vmatpush1.msra.mxu0 %v1700
        %1732 = vmatprep.subr.mxu0 0.0
        %1733 = vmatpush1.msra.mxu0 %v1701
        %1734 = vmatprep.subr.mxu0 0.0
        %1735 = vmatpush1.msra.mxu0 0.0
        %1736 = vmatprep.subr.mxu0 0.0
        %1737 = vmatpush1.msra.mxu0 0.0
        %1738 = vmatprep.subr.mxu0 0.0
        %1739 = vmatpush1.msra.mxu0 0.0
        %1740 = vmatprep.subr.mxu0 0.0
        %1741 = vmatpush1.msra.mxu0 0.0
        %1742 = vmatprep.subr.mxu0 0.0
        %1743 = vmatpush1.msra.mxu0 0.0
        %1744 = vmatprep.subr.mxu0 0.0
        %1745 = vmatpush1.msra.mxu0 0.0
        %1746 = vmatprep.subr.mxu0 0.0
        %1747 = vmatpush1.msra.mxu0 0.0
        %1748 = vmatprep.subr.mxu0 0.0
        %1749 = vmatpush1.msra.mxu0 0.0
        %1750 = vmatprep.subr.mxu0 0.0
        %1751 = vmatpush1.msra.mxu0 0.0
        %1752 = vmatprep.subr.mxu0 0.0
        %1753 = vmatpush1.msra.mxu0 0.0
        %1754 = vmatprep.subr.mxu0 0.0
        %1755 = vmatpush1.msra.mxu0 0.0
        %1756 = vmatprep.subr.mxu0 0.0
        %1757 = vmatpush1.msra.mxu0 0.0
        %1758 = vmatprep.subr.mxu0 0.0
        %1759 = vmatpush1.msra.mxu0 0.0
        %1760 = vmatprep.subr.mxu0 0.0
        %1761 = vmatpush1.msra.mxu0 0.0
        %1762 = vmatprep.subr.mxu0 0.0
        %1763 = vmatpush1.msra.mxu0 0.0
        %1764 = vmatprep.subr.mxu0 0.0
        %1765 = vmatpush1.msra.mxu0 0.0
        %1766 = vmatprep.mubr.f32.mxu0 0.0
        %1767 = vmatmul.mubr.f32.gmra.mrb[0].mxu0 %v1679
        %v1768 = vpop.f32.mrb[0].mxu0
        %v1769 = vadd.f32 0.0, %v1768
        %v1770 = vpop.f32.mrb[0].mxu0
        %1771 = vmatprep.mubr.f32.mxu0 0.0
        %1772 = vmatmul.mubr.f32.gmra.mrb[0].mxu0 %v1680
        %v1773 = vpop.f32.mrb[0].mxu0
        %v1774 = vadd.f32 0.0, %v1773
        %v1775 = vpop.f32.mrb[0].mxu0
        %1776 = vmatprep.mubr.f32.mxu0 0.0
        %1777 = vmatmul.mubr.f32.gmra.mrb[0].mxu0 %v1681
        %v1778 = vpop.f32.mrb[0].mxu0
        %v1779 = vadd.f32 0.0, %v1778
        %v1780 = vpop.f32.mrb[0].mxu0
        %1781 = vmatprep.mubr.f32.mxu0 0.0
        %1782 = vmatmul.mubr.f32.gmra.mrb[0].mxu0 %v1682
        %v1783 = vpop.f32.mrb[0].mxu0
        %v1784 = vadd.f32 0.0, %v1783
        %v1785 = vpop.f32.mrb[0].mxu0
        %1786 = vmatprep.mubr.f32.mxu0 0.0
        %1787 = vmatmul.mubr.f32.gmra.mrb[0].mxu0 %v1683
        %v1788 = vpop.f32.mrb[0].mxu0
        %v1789 = vadd.f32 0.0, %v1788
        %v1790 = vpop.f32.mrb[0].mxu0
        %1791 = vmatprep.mubr.f32.mxu0 0.0
        %1792 = vmatmul.mubr.f32.gmra.mrb[0].mxu0 %v1684
        %v1793 = vpop.f32.mrb[0].mxu0
        %v1794 = vadd.f32 0.0, %v1793
        %v1795 = vpop.f32.mrb[0].mxu0
        %1796 = vdwg.mxu0
        %v1797 = vadd.f32 %v1673, %v1769
        %v1798 = vadd.f32 %v1674, %v1774
        %v1799 = vadd.f32 %v1675, %v1779
        %v1800 = vadd.f32 %v1676, %v1784
        %v1801 = vadd.f32 %v1677, %v1789
        %v1802 = vadd.f32 %v1678, %v1794
        %v1803 = vld [vmem:[%s318 + $0x10] sm:$0xff]
        %v1804 = vld [vmem:[%s318 + $0x18] sm:$0xff]
        %v1805 = vld [vmem:[%s318 + $0x20] sm:$0xff]
        %v1806 = vld [vmem:[%s318 + $0x28] sm:$0xff]
        %v1807 = vld [vmem:[%s318 + $0x30] sm:$0xff]
        %v1808 = vld [vmem:[%s318 + $0x38] sm:$0x3f]
        %s1809 = scalar_lea.vmem %s2, 768
        %v1810 = vld [vmem:[%s1809] sm:$0xff]
        %v1811 = vld [vmem:[%s1809 + $0x8] sm:$0xff]
        %v1812 = vld [vmem:[%s1809 + $0x10] sm:$0xff]
        %v1813 = vld [vmem:[%s1809 + $0x18] sm:$0xff]
        %v1814 = vld [vmem:[%s1809 + $0x20] sm:$0xff]
        %v1815 = vld [vmem:[%s1809 + $0x28] sm:$0xff]
        %v1816 = vld [vmem:[%s1809 + $0x30] sm:$0xff]
        %v1817 = vld [vmem:[%s1809 + $0x38] sm:$0xff]
        %v1818 = vld [vmem:[%s1809 + $0x40] sm:$0xff]
        %v1819 = vld [vmem:[%s1809 + $0x48] sm:$0xff]
        %v1820 = vld [vmem:[%s1809 + $0x50] sm:$0xff]
        %v1821 = vld [vmem:[%s1809 + $0x58] sm:$0xff]
        %v1822 = vld [vmem:[%s1809 + $0x60] sm:$0xff]
        %v1823 = vld [vmem:[%s1809 + $0x68] sm:$0xff]
        %v1824 = vld [vmem:[%s1809 + $0x70] sm:$0xff]
        %v1825 = vld [vmem:[%s1809 + $0x78] sm:$0xff]
        %1826 = vmatprep.subr.mxu0 0.0
        %1827 = vmatpush1.msra.mxu0 %v1810
        %1828 = vmatprep.subr.mxu0 0.0
        %1829 = vmatpush1.msra.mxu0 %v1811
        %1830 = vmatprep.subr.mxu0 0.0
        %1831 = vmatpush1.msra.mxu0 %v1812
        %1832 = vmatprep.subr.mxu0 0.0
        %1833 = vmatpush1.msra.mxu0 %v1813
        %1834 = vmatprep.subr.mxu0 0.0
        %1835 = vmatpush1.msra.mxu0 %v1814
        %1836 = vmatprep.subr.mxu0 0.0
        %1837 = vmatpush1.msra.mxu0 %v1815
        %1838 = vmatprep.subr.mxu0 0.0
        %1839 = vmatpush1.msra.mxu0 %v1816
        %1840 = vmatprep.subr.mxu0 0.0
        %1841 = vmatpush1.msra.mxu0 %v1817
        %1842 = vmatprep.subr.mxu0 0.0
        %1843 = vmatpush1.msra.mxu0 %v1818
        %1844 = vmatprep.subr.mxu0 0.0
        %1845 = vmatpush1.msra.mxu0 %v1819
        %1846 = vmatprep.subr.mxu0 0.0
        %1847 = vmatpush1.msra.mxu0 %v1820
        %1848 = vmatprep.subr.mxu0 0.0
        %1849 = vmatpush1.msra.mxu0 %v1821
        %1850 = vmatprep.subr.mxu0 0.0
        %1851 = vmatpush1.msra.mxu0 %v1822
        %1852 = vmatprep.subr.mxu0 0.0
        %1853 = vmatpush1.msra.mxu0 %v1823
        %1854 = vmatprep.subr.mxu0 0.0
        %1855 = vmatpush1.msra.mxu0 %v1824
        %1856 = vmatprep.subr.mxu0 0.0
        %1857 = vmatpush1.msra.mxu0 %v1825
        %1858 = vmatprep.subr.mxu0 0.0
        %1859 = vmatpush1.msra.mxu0 0.0
        %1860 = vmatprep.subr.mxu0 0.0
        %1861 = vmatpush1.msra.mxu0 0.0
        %1862 = vmatprep.subr.mxu0 0.0
        %1863 = vmatpush1.msra.mxu0 0.0
        %1864 = vmatprep.subr.mxu0 0.0
        %1865 = vmatpush1.msra.mxu0 0.0
        %1866 = vmatprep.subr.mxu0 0.0
        %1867 = vmatpush1.msra.mxu0 0.0
        %1868 = vmatprep.subr.mxu0 0.0
        %1869 = vmatpush1.msra.mxu0 0.0
        %1870 = vmatprep.subr.mxu0 0.0
        %1871 = vmatpush1.msra.mxu0 0.0
        %1872 = vmatprep.subr.mxu0 0.0
        %1873 = vmatpush1.msra.mxu0 0.0
        %1874 = vmatprep.subr.mxu0 0.0
        %1875 = vmatpush1.msra.mxu0 0.0
        %1876 = vmatprep.subr.mxu0 0.0
        %1877 = vmatpush1.msra.mxu0 0.0
        %1878 = vmatprep.subr.mxu0 0.0
        %1879 = vmatpush1.msra.mxu0 0.0
        %1880 = vmatprep.subr.mxu0 0.0
        %1881 = vmatpush1.msra.mxu0 0.0
        %1882 = vmatprep.subr.mxu0 0.0
        %1883 = vmatpush1.msra.mxu0 0.0
        %1884 = vmatprep.subr.mxu0 0.0
        %1885 = vmatpush1.msra.mxu0 0.0
        %1886 = vmatprep.subr.mxu0 0.0
        %1887 = vmatpush1.msra.mxu0 0.0
        %1888 = vmatprep.subr.mxu0 0.0
        %1889 = vmatpush1.msra.mxu0 0.0
        %1890 = vmatprep.mubr.f32.mxu0 0.0
        %1891 = vmatmul.mubr.f32.gmra.mrb[0].mxu0 %v1803
        %v1892 = vpop.f32.mrb[0].mxu0
        %v1893 = vadd.f32 0.0, %v1892
        %v1894 = vpop.f32.mrb[0].mxu0
        %1895 = vmatprep.mubr.f32.mxu0 0.0
        %1896 = vmatmul.mubr.f32.gmra.mrb[0].mxu0 %v1804
        %v1897 = vpop.f32.mrb[0].mxu0
        %v1898 = vadd.f32 0.0, %v1897
        %v1899 = vpop.f32.mrb[0].mxu0
        %1900 = vmatprep.mubr.f32.mxu0 0.0
        %1901 = vmatmul.mubr.f32.gmra.mrb[0].mxu0 %v1805
        %v1902 = vpop.f32.mrb[0].mxu0
        %v1903 = vadd.f32 0.0, %v1902
        %v1904 = vpop.f32.mrb[0].mxu0
        %1905 = vmatprep.mubr.f32.mxu0 0.0
        %1906 = vmatmul.mubr.f32.gmra.mrb[0].mxu0 %v1806
        %v1907 = vpop.f32.mrb[0].mxu0
        %v1908 = vadd.f32 0.0, %v1907
        %v1909 = vpop.f32.mrb[0].mxu0
        %1910 = vmatprep.mubr.f32.mxu0 0.0
        %1911 = vmatmul.mubr.f32.gmra.mrb[0].mxu0 %v1807
        %v1912 = vpop.f32.mrb[0].mxu0
        %v1913 = vadd.f32 0.0, %v1912
        %v1914 = vpop.f32.mrb[0].mxu0
        %1915 = vmatprep.mubr.f32.mxu0 0.0
        %1916 = vmatmul.mubr.f32.gmra.mrb[0].mxu0 %v1808
        %v1917 = vpop.f32.mrb[0].mxu0
        %v1918 = vadd.f32 0.0, %v1917
        %v1919 = vpop.f32.mrb[0].mxu0
        %1920 = vdwg.mxu0
        %v1921 = vadd.f32 %v1797, %v1893
        %v1922 = vadd.f32 %v1798, %v1898
        %v1923 = vadd.f32 %v1799, %v1903
        %v1924 = vadd.f32 %v1800, %v1908
        %v1925 = vadd.f32 %v1801, %v1913
        %v1926 = vadd.f32 %v1802, %v1918
        %v1927 = vld [vmem:[%s323 + $0x10] sm:$0xff]
        %v1928 = vld [vmem:[%s323 + $0x18] sm:$0xff]
        %v1929 = vld [vmem:[%s323 + $0x20] sm:$0xff]
        %v1930 = vld [vmem:[%s323 + $0x28] sm:$0xff]
        %v1931 = vld [vmem:[%s323 + $0x30] sm:$0xff]
        %v1932 = vld [vmem:[%s323 + $0x38] sm:$0x3f]
        %s1933 = scalar_lea.vmem [#allocation3], 768
        %v1934 = vld [vmem:[%s1933] sm:$0xff]
        %v1935 = vld [vmem:[%s1933 + $0x8] sm:$0xff]
        %v1936 = vld [vmem:[%s1933 + $0x10] sm:$0xff]
        %v1937 = vld [vmem:[%s1933 + $0x18] sm:$0xff]
        %v1938 = vld [vmem:[%s1933 + $0x20] sm:$0xff]
        %v1939 = vld [vmem:[%s1933 + $0x28] sm:$0xff]
        %v1940 = vld [vmem:[%s1933 + $0x30] sm:$0xff]
        %v1941 = vld [vmem:[%s1933 + $0x38] sm:$0xff]
        %v1942 = vld [vmem:[%s1933 + $0x40] sm:$0xff]
        %v1943 = vld [vmem:[%s1933 + $0x48] sm:$0xff]
        %v1944 = vld [vmem:[%s1933 + $0x50] sm:$0xff]
        %v1945 = vld [vmem:[%s1933 + $0x58] sm:$0xff]
        %v1946 = vld [vmem:[%s1933 + $0x60] sm:$0xff]
        %v1947 = vld [vmem:[%s1933 + $0x68] sm:$0xff]
        %v1948 = vld [vmem:[%s1933 + $0x70] sm:$0xff]
        %v1949 = vld [vmem:[%s1933 + $0x78] sm:$0xff]
        %1950 = vmatprep.subr.mxu0 0.0
        %1951 = vmatpush1.msra.mxu0 %v1934
        %1952 = vmatprep.subr.mxu0 0.0
        %1953 = vmatpush1.msra.mxu0 %v1935
        %1954 = vmatprep.subr.mxu0 0.0
        %1955 = vmatpush1.msra.mxu0 %v1936
        %1956 = vmatprep.subr.mxu0 0.0
        %1957 = vmatpush1.msra.mxu0 %v1937
        %1958 = vmatprep.subr.mxu0 0.0
        %1959 = vmatpush1.msra.mxu0 %v1938
        %1960 = vmatprep.subr.mxu0 0.0
        %1961 = vmatpush1.msra.mxu0 %v1939
        %1962 = vmatprep.subr.mxu0 0.0
        %1963 = vmatpush1.msra.mxu0 %v1940
        %1964 = vmatprep.subr.mxu0 0.0
        %1965 = vmatpush1.msra.mxu0 %v1941
        %1966 = vmatprep.subr.mxu0 0.0
        %1967 = vmatpush1.msra.mxu0 %v1942
        %1968 = vmatprep.subr.mxu0 0.0
        %1969 = vmatpush1.msra.mxu0 %v1943
        %1970 = vmatprep.subr.mxu0 0.0
        %1971 = vmatpush1.msra.mxu0 %v1944
        %1972 = vmatprep.subr.mxu0 0.0
        %1973 = vmatpush1.msra.mxu0 %v1945
        %1974 = vmatprep.subr.mxu0 0.0
        %1975 = vmatpush1.msra.mxu0 %v1946
        %1976 = vmatprep.subr.mxu0 0.0
        %1977 = vmatpush1.msra.mxu0 %v1947
        %1978 = vmatprep.subr.mxu0 0.0
        %1979 = vmatpush1.msra.mxu0 %v1948
        %1980 = vmatprep.subr.mxu0 0.0
        %1981 = vmatpush1.msra.mxu0 %v1949
        %1982 = vmatprep.subr.mxu0 0.0
        %1983 = vmatpush1.msra.mxu0 0.0
        %1984 = vmatprep.subr.mxu0 0.0
        %1985 = vmatpush1.msra.mxu0 0.0
        %1986 = vmatprep.subr.mxu0 0.0
        %1987 = vmatpush1.msra.mxu0 0.0
        %1988 = vmatprep.subr.mxu0 0.0
        %1989 = vmatpush1.msra.mxu0 0.0
        %1990 = vmatprep.subr.mxu0 0.0
        %1991 = vmatpush1.msra.mxu0 0.0
        %1992 = vmatprep.subr.mxu0 0.0
        %1993 = vmatpush1.msra.mxu0 0.0
        %1994 = vmatprep.subr.mxu0 0.0
        %1995 = vmatpush1.msra.mxu0 0.0
        %1996 = vmatprep.subr.mxu0 0.0
        %1997 = vmatpush1.msra.mxu0 0.0
        %1998 = vmatprep.subr.mxu0 0.0
        %1999 = vmatpush1.msra.mxu0 0.0
        %2000 = vmatprep.subr.mxu0 0.0
        %2001 = vmatpush1.msra.mxu0 0.0
        %2002 = vmatprep.subr.mxu0 0.0
        %2003 = vmatpush1.msra.mxu0 0.0
        %2004 = vmatprep.subr.mxu0 0.0
        %2005 = vmatpush1.msra.mxu0 0.0
        %2006 = vmatprep.subr.mxu0 0.0
        %2007 = vmatpush1.msra.mxu0 0.0
        %2008 = vmatprep.subr.mxu0 0.0
        %2009 = vmatpush1.msra.mxu0 0.0
        %2010 = vmatprep.subr.mxu0 0.0
        %2011 = vmatpush1.msra.mxu0 0.0
        %2012 = vmatprep.subr.mxu0 0.0
        %2013 = vmatpush1.msra.mxu0 0.0
        %2014 = vmatprep.mubr.f32.mxu0 0.0
        %2015 = vmatmul.mubr.f32.gmra.mrb[0].mxu0 %v1927
        %v2016 = vpop.f32.mrb[0].mxu0
        %v2017 = vadd.f32 0.0, %v2016
        %v2018 = vpop.f32.mrb[0].mxu0
        %2019 = vmatprep.mubr.f32.mxu0 0.0
        %2020 = vmatmul.mubr.f32.gmra.mrb[0].mxu0 %v1928
        %v2021 = vpop.f32.mrb[0].mxu0
        %v2022 = vadd.f32 0.0, %v2021
        %v2023 = vpop.f32.mrb[0].mxu0
        %2024 = vmatprep.mubr.f32.mxu0 0.0
        %2025 = vmatmul.mubr.f32.gmra.mrb[0].mxu0 %v1929
        %v2026 = vpop.f32.mrb[0].mxu0
        %v2027 = vadd.f32 0.0, %v2026
        %v2028 = vpop.f32.mrb[0].mxu0
        %2029 = vmatprep.mubr.f32.mxu0 0.0
        %2030 = vmatmul.mubr.f32.gmra.mrb[0].mxu0 %v1930
        %v2031 = vpop.f32.mrb[0].mxu0
        %v2032 = vadd.f32 0.0, %v2031
        %v2033 = vpop.f32.mrb[0].mxu0
        %2034 = vmatprep.mubr.f32.mxu0 0.0
        %2035 = vmatmul.mubr.f32.gmra.mrb[0].mxu0 %v1931
        %v2036 = vpop.f32.mrb[0].mxu0
        %v2037 = vadd.f32 0.0, %v2036
        %v2038 = vpop.f32.mrb[0].mxu0
        %2039 = vmatprep.mubr.f32.mxu0 0.0
        %2040 = vmatmul.mubr.f32.gmra.mrb[0].mxu0 %v1932
        %v2041 = vpop.f32.mrb[0].mxu0
        %v2042 = vadd.f32 0.0, %v2041
        %v2043 = vpop.f32.mrb[0].mxu0
        %2044 = vdwg.mxu0
        %v2045 = vadd.f32 %v1921, %v2017
        %v2046 = vadd.f32 %v1922, %v2022
        %v2047 = vadd.f32 %v1923, %v2027
        %v2048 = vadd.f32 %v1924, %v2032
        %v2049 = vadd.f32 %v1925, %v2037
        %v2050 = vadd.f32 %v1926, %v2042
        %v2051 = vld [vmem:[%s318 + $0x11] sm:$0xff]
        %v2052 = vld [vmem:[%s318 + $0x19] sm:$0xff]
        %v2053 = vld [vmem:[%s318 + $0x21] sm:$0xff]
        %v2054 = vld [vmem:[%s318 + $0x29] sm:$0xff]
        %v2055 = vld [vmem:[%s318 + $0x31] sm:$0xff]
        %v2056 = vld [vmem:[%s318 + $0x39] sm:$0x3f]
        %s2057 = scalar_lea.vmem %s2, 896
        %v2058 = vld [vmem:[%s2057] sm:$0xff]
        %v2059 = vld [vmem:[%s2057 + $0x8] sm:$0xff]
        %v2060 = vld [vmem:[%s2057 + $0x10] sm:$0xff]
        %v2061 = vld [vmem:[%s2057 + $0x18] sm:$0xff]
        %v2062 = vld [vmem:[%s2057 + $0x20] sm:$0xff]
        %v2063 = vld [vmem:[%s2057 + $0x28] sm:$0xff]
        %v2064 = vld [vmem:[%s2057 + $0x30] sm:$0xff]
        %v2065 = vld [vmem:[%s2057 + $0x38] sm:$0xff]
        %v2066 = vld [vmem:[%s2057 + $0x40] sm:$0xff]
        %v2067 = vld [vmem:[%s2057 + $0x48] sm:$0xff]
        %v2068 = vld [vmem:[%s2057 + $0x50] sm:$0xff]
        %v2069 = vld [vmem:[%s2057 + $0x58] sm:$0xff]
        %v2070 = vld [vmem:[%s2057 + $0x60] sm:$0xff]
        %v2071 = vld [vmem:[%s2057 + $0x68] sm:$0xff]
        %v2072 = vld [vmem:[%s2057 + $0x70] sm:$0xff]
        %v2073 = vld [vmem:[%s2057 + $0x78] sm:$0xff]
        %2074 = vmatprep.subr.mxu0 0.0
        %2075 = vmatpush1.msra.mxu0 %v2058
        %2076 = vmatprep.subr.mxu0 0.0
        %2077 = vmatpush1.msra.mxu0 %v2059
        %2078 = vmatprep.subr.mxu0 0.0
        %2079 = vmatpush1.msra.mxu0 %v2060
        %2080 = vmatprep.subr.mxu0 0.0
        %2081 = vmatpush1.msra.mxu0 %v2061
        %2082 = vmatprep.subr.mxu0 0.0
        %2083 = vmatpush1.msra.mxu0 %v2062
        %2084 = vmatprep.subr.mxu0 0.0
        %2085 = vmatpush1.msra.mxu0 %v2063
        %2086 = vmatprep.subr.mxu0 0.0
        %2087 = vmatpush1.msra.mxu0 %v2064
        %2088 = vmatprep.subr.mxu0 0.0
        %2089 = vmatpush1.msra.mxu0 %v2065
        %2090 = vmatprep.subr.mxu0 0.0
        %2091 = vmatpush1.msra.mxu0 %v2066
        %2092 = vmatprep.subr.mxu0 0.0
        %2093 = vmatpush1.msra.mxu0 %v2067
        %2094 = vmatprep.subr.mxu0 0.0
        %2095 = vmatpush1.msra.mxu0 %v2068
        %2096 = vmatprep.subr.mxu0 0.0
        %2097 = vmatpush1.msra.mxu0 %v2069
        %2098 = vmatprep.subr.mxu0 0.0
        %2099 = vmatpush1.msra.mxu0 %v2070
        %2100 = vmatprep.subr.mxu0 0.0
        %2101 = vmatpush1.msra.mxu0 %v2071
        %2102 = vmatprep.subr.mxu0 0.0
        %2103 = vmatpush1.msra.mxu0 %v2072
        %2104 = vmatprep.subr.mxu0 0.0
        %2105 = vmatpush1.msra.mxu0 %v2073
        %2106 = vmatprep.subr.mxu0 0.0
        %2107 = vmatpush1.msra.mxu0 0.0
        %2108 = vmatprep.subr.mxu0 0.0
        %2109 = vmatpush1.msra.mxu0 0.0
        %2110 = vmatprep.subr.mxu0 0.0
        %2111 = vmatpush1.msra.mxu0 0.0
        %2112 = vmatprep.subr.mxu0 0.0
        %2113 = vmatpush1.msra.mxu0 0.0
        %2114 = vmatprep.subr.mxu0 0.0
        %2115 = vmatpush1.msra.mxu0 0.0
        %2116 = vmatprep.subr.mxu0 0.0
        %2117 = vmatpush1.msra.mxu0 0.0
        %2118 = vmatprep.subr.mxu0 0.0
        %2119 = vmatpush1.msra.mxu0 0.0
        %2120 = vmatprep.subr.mxu0 0.0
        %2121 = vmatpush1.msra.mxu0 0.0
        %2122 = vmatprep.subr.mxu0 0.0
        %2123 = vmatpush1.msra.mxu0 0.0
        %2124 = vmatprep.subr.mxu0 0.0
        %2125 = vmatpush1.msra.mxu0 0.0
        %2126 = vmatprep.subr.mxu0 0.0
        %2127 = vmatpush1.msra.mxu0 0.0
        %2128 = vmatprep.subr.mxu0 0.0
        %2129 = vmatpush1.msra.mxu0 0.0
        %2130 = vmatprep.subr.mxu0 0.0
        %2131 = vmatpush1.msra.mxu0 0.0
        %2132 = vmatprep.subr.mxu0 0.0
        %2133 = vmatpush1.msra.mxu0 0.0
        %2134 = vmatprep.subr.mxu0 0.0
        %2135 = vmatpush1.msra.mxu0 0.0
        %2136 = vmatprep.subr.mxu0 0.0
        %2137 = vmatpush1.msra.mxu0 0.0
        %2138 = vmatprep.mubr.f32.mxu0 0.0
        %2139 = vmatmul.mubr.f32.gmra.mrb[0].mxu0 %v2051
        %v2140 = vpop.f32.mrb[0].mxu0
        %v2141 = vadd.f32 0.0, %v2140
        %v2142 = vpop.f32.mrb[0].mxu0
        %2143 = vmatprep.mubr.f32.mxu0 0.0
        %2144 = vmatmul.mubr.f32.gmra.mrb[0].mxu0 %v2052
        %v2145 = vpop.f32.mrb[0].mxu0
        %v2146 = vadd.f32 0.0, %v2145
        %v2147 = vpop.f32.mrb[0].mxu0
        %2148 = vmatprep.mubr.f32.mxu0 0.0
        %2149 = vmatmul.mubr.f32.gmra.mrb[0].mxu0 %v2053
        %v2150 = vpop.f32.mrb[0].mxu0
        %v2151 = vadd.f32 0.0, %v2150
        %v2152 = vpop.f32.mrb[0].mxu0
        %2153 = vmatprep.mubr.f32.mxu0 0.0
        %2154 = vmatmul.mubr.f32.gmra.mrb[0].mxu0 %v2054
        %v2155 = vpop.f32.mrb[0].mxu0
        %v2156 = vadd.f32 0.0, %v2155
        %v2157 = vpop.f32.mrb[0].mxu0
        %2158 = vmatprep.mubr.f32.mxu0 0.0
        %2159 = vmatmul.mubr.f32.gmra.mrb[0].mxu0 %v2055
        %v2160 = vpop.f32.mrb[0].mxu0
        %v2161 = vadd.f32 0.0, %v2160
        %v2162 = vpop.f32.mrb[0].mxu0
        %2163 = vmatprep.mubr.f32.mxu0 0.0
        %2164 = vmatmul.mubr.f32.gmra.mrb[0].mxu0 %v2056
        %v2165 = vpop.f32.mrb[0].mxu0
        %v2166 = vadd.f32 0.0, %v2165
        %v2167 = vpop.f32.mrb[0].mxu0
        %2168 = vdwg.mxu0
        %v2169 = vadd.f32 %v2045, %v2141
        %v2170 = vadd.f32 %v2046, %v2146
        %v2171 = vadd.f32 %v2047, %v2151
        %v2172 = vadd.f32 %v2048, %v2156
        %v2173 = vadd.f32 %v2049, %v2161
        %v2174 = vadd.f32 %v2050, %v2166
        %v2175 = vld [vmem:[%s323 + $0x11] sm:$0xff]
        %v2176 = vld [vmem:[%s323 + $0x19] sm:$0xff]
        %v2177 = vld [vmem:[%s323 + $0x21] sm:$0xff]
        %v2178 = vld [vmem:[%s323 + $0x29] sm:$0xff]
        %v2179 = vld [vmem:[%s323 + $0x31] sm:$0xff]
        %v2180 = vld [vmem:[%s323 + $0x39] sm:$0x3f]
        %s2181 = scalar_lea.vmem [#allocation3], 896
        %v2182 = vld [vmem:[%s2181] sm:$0xff]
        %v2183 = vld [vmem:[%s2181 + $0x8] sm:$0xff]
        %v2184 = vld [vmem:[%s2181 + $0x10] sm:$0xff]
        %v2185 = vld [vmem:[%s2181 + $0x18] sm:$0xff]
        %v2186 = vld [vmem:[%s2181 + $0x20] sm:$0xff]
        %v2187 = vld [vmem:[%s2181 + $0x28] sm:$0xff]
        %v2188 = vld [vmem:[%s2181 + $0x30] sm:$0xff]
        %v2189 = vld [vmem:[%s2181 + $0x38] sm:$0xff]
        %v2190 = vld [vmem:[%s2181 + $0x40] sm:$0xff]
        %v2191 = vld [vmem:[%s2181 + $0x48] sm:$0xff]
        %v2192 = vld [vmem:[%s2181 + $0x50] sm:$0xff]
        %v2193 = vld [vmem:[%s2181 + $0x58] sm:$0xff]
        %v2194 = vld [vmem:[%s2181 + $0x60] sm:$0xff]
        %v2195 = vld [vmem:[%s2181 + $0x68] sm:$0xff]
        %v2196 = vld [vmem:[%s2181 + $0x70] sm:$0xff]
        %v2197 = vld [vmem:[%s2181 + $0x78] sm:$0xff]
        %2198 = vmatprep.subr.mxu0 0.0
        %2199 = vmatpush1.msra.mxu0 %v2182
        %2200 = vmatprep.subr.mxu0 0.0
        %2201 = vmatpush1.msra.mxu0 %v2183
        %2202 = vmatprep.subr.mxu0 0.0
        %2203 = vmatpush1.msra.mxu0 %v2184
        %2204 = vmatprep.subr.mxu0 0.0
        %2205 = vmatpush1.msra.mxu0 %v2185
        %2206 = vmatprep.subr.mxu0 0.0
        %2207 = vmatpush1.msra.mxu0 %v2186
        %2208 = vmatprep.subr.mxu0 0.0
        %2209 = vmatpush1.msra.mxu0 %v2187
        %2210 = vmatprep.subr.mxu0 0.0
        %2211 = vmatpush1.msra.mxu0 %v2188
        %2212 = vmatprep.subr.mxu0 0.0
        %2213 = vmatpush1.msra.mxu0 %v2189
        %2214 = vmatprep.subr.mxu0 0.0
        %2215 = vmatpush1.msra.mxu0 %v2190
        %2216 = vmatprep.subr.mxu0 0.0
        %2217 = vmatpush1.msra.mxu0 %v2191
        %2218 = vmatprep.subr.mxu0 0.0
        %2219 = vmatpush1.msra.mxu0 %v2192
        %2220 = vmatprep.subr.mxu0 0.0
        %2221 = vmatpush1.msra.mxu0 %v2193
        %2222 = vmatprep.subr.mxu0 0.0
        %2223 = vmatpush1.msra.mxu0 %v2194
        %2224 = vmatprep.subr.mxu0 0.0
        %2225 = vmatpush1.msra.mxu0 %v2195
        %2226 = vmatprep.subr.mxu0 0.0
        %2227 = vmatpush1.msra.mxu0 %v2196
        %2228 = vmatprep.subr.mxu0 0.0
        %2229 = vmatpush1.msra.mxu0 %v2197
        %2230 = vmatprep.subr.mxu0 0.0
        %2231 = vmatpush1.msra.mxu0 0.0
        %2232 = vmatprep.subr.mxu0 0.0
        %2233 = vmatpush1.msra.mxu0 0.0
        %2234 = vmatprep.subr.mxu0 0.0
        %2235 = vmatpush1.msra.mxu0 0.0
        %2236 = vmatprep.subr.mxu0 0.0
        %2237 = vmatpush1.msra.mxu0 0.0
        %2238 = vmatprep.subr.mxu0 0.0
        %2239 = vmatpush1.msra.mxu0 0.0
        %2240 = vmatprep.subr.mxu0 0.0
        %2241 = vmatpush1.msra.mxu0 0.0
        %2242 = vmatprep.subr.mxu0 0.0
        %2243 = vmatpush1.msra.mxu0 0.0
        %2244 = vmatprep.subr.mxu0 0.0
        %2245 = vmatpush1.msra.mxu0 0.0
        %2246 = vmatprep.subr.mxu0 0.0
        %2247 = vmatpush1.msra.mxu0 0.0
        %2248 = vmatprep.subr.mxu0 0.0
        %2249 = vmatpush1.msra.mxu0 0.0
        %2250 = vmatprep.subr.mxu0 0.0
        %2251 = vmatpush1.msra.mxu0 0.0
        %2252 = vmatprep.subr.mxu0 0.0
        %2253 = vmatpush1.msra.mxu0 0.0
        %2254 = vmatprep.subr.mxu0 0.0
        %2255 = vmatpush1.msra.mxu0 0.0
        %2256 = vmatprep.subr.mxu0 0.0
        %2257 = vmatpush1.msra.mxu0 0.0
        %2258 = vmatprep.subr.mxu0 0.0
        %2259 = vmatpush1.msra.mxu0 0.0
        %2260 = vmatprep.subr.mxu0 0.0
        %2261 = vmatpush1.msra.mxu0 0.0
        %2262 = vmatprep.mubr.f32.mxu0 0.0
        %2263 = vmatmul.mubr.f32.gmra.mrb[0].mxu0 %v2175
        %v2264 = vpop.f32.mrb[0].mxu0
        %v2265 = vadd.f32 0.0, %v2264
        %v2266 = vpop.f32.mrb[0].mxu0
        %2267 = vmatprep.mubr.f32.mxu0 0.0
        %2268 = vmatmul.mubr.f32.gmra.mrb[0].mxu0 %v2176
        %v2269 = vpop.f32.mrb[0].mxu0
        %v2270 = vadd.f32 0.0, %v2269
        %v2271 = vpop.f32.mrb[0].mxu0
        %2272 = vmatprep.mubr.f32.mxu0 0.0
        %2273 = vmatmul.mubr.f32.gmra.mrb[0].mxu0 %v2177
        %v2274 = vpop.f32.mrb[0].mxu0
        %v2275 = vadd.f32 0.0, %v2274
        %v2276 = vpop.f32.mrb[0].mxu0
        %2277 = vmatprep.mubr.f32.mxu0 0.0
        %2278 = vmatmul.mubr.f32.gmra.mrb[0].mxu0 %v2178
        %v2279 = vpop.f32.mrb[0].mxu0
        %v2280 = vadd.f32 0.0, %v2279
        %v2281 = vpop.f32.mrb[0].mxu0
        %2282 = vmatprep.mubr.f32.mxu0 0.0
        %2283 = vmatmul.mubr.f32.gmra.mrb[0].mxu0 %v2179
        %v2284 = vpop.f32.mrb[0].mxu0
        %v2285 = vadd.f32 0.0, %v2284
        %v2286 = vpop.f32.mrb[0].mxu0
        %2287 = vmatprep.mubr.f32.mxu0 0.0
        %2288 = vmatmul.mubr.f32.gmra.mrb[0].mxu0 %v2180
        %v2289 = vpop.f32.mrb[0].mxu0
        %v2290 = vadd.f32 0.0, %v2289
        %v2291 = vpop.f32.mrb[0].mxu0
        %2292 = vdwg.mxu0
        %v2293 = vadd.f32 %v2169, %v2265
        %v2294 = vadd.f32 %v2170, %v2270
        %v2295 = vadd.f32 %v2171, %v2275
        %v2296 = vadd.f32 %v2172, %v2280
        %v2297 = vadd.f32 %v2173, %v2285
        %v2298 = vadd.f32 %v2174, %v2290
        %v2299 = vld [vmem:[%s318 + $0x12] sm:$0xff]
        %v2300 = vld [vmem:[%s318 + $0x1a] sm:$0xff]
        %v2301 = vld [vmem:[%s318 + $0x22] sm:$0xff]
        %v2302 = vld [vmem:[%s318 + $0x2a] sm:$0xff]
        %v2303 = vld [vmem:[%s318 + $0x32] sm:$0xff]
        %v2304 = vld [vmem:[%s318 + $0x3a] sm:$0x3f]
        %s2305 = scalar_lea.vmem %s2, 1024
        %v2306 = vld [vmem:[%s2305] sm:$0xff]
        %v2307 = vld [vmem:[%s2305 + $0x8] sm:$0xff]
        %v2308 = vld [vmem:[%s2305 + $0x10] sm:$0xff]
        %v2309 = vld [vmem:[%s2305 + $0x18] sm:$0xff]
        %v2310 = vld [vmem:[%s2305 + $0x20] sm:$0xff]
        %v2311 = vld [vmem:[%s2305 + $0x28] sm:$0xff]
        %v2312 = vld [vmem:[%s2305 + $0x30] sm:$0xff]
        %v2313 = vld [vmem:[%s2305 + $0x38] sm:$0xff]
        %v2314 = vld [vmem:[%s2305 + $0x40] sm:$0xff]
        %v2315 = vld [vmem:[%s2305 + $0x48] sm:$0xff]
        %v2316 = vld [vmem:[%s2305 + $0x50] sm:$0xff]
        %v2317 = vld [vmem:[%s2305 + $0x58] sm:$0xff]
        %v2318 = vld [vmem:[%s2305 + $0x60] sm:$0xff]
        %v2319 = vld [vmem:[%s2305 + $0x68] sm:$0xff]
        %v2320 = vld [vmem:[%s2305 + $0x70] sm:$0xff]
        %v2321 = vld [vmem:[%s2305 + $0x78] sm:$0xff]
        %2322 = vmatprep.subr.mxu0 0.0
        %2323 = vmatpush1.msra.mxu0 %v2306
        %2324 = vmatprep.subr.mxu0 0.0
        %2325 = vmatpush1.msra.mxu0 %v2307
        %2326 = vmatprep.subr.mxu0 0.0
        %2327 = vmatpush1.msra.mxu0 %v2308
        %2328 = vmatprep.subr.mxu0 0.0
        %2329 = vmatpush1.msra.mxu0 %v2309
        %2330 = vmatprep.subr.mxu0 0.0
        %2331 = vmatpush1.msra.mxu0 %v2310
        %2332 = vmatprep.subr.mxu0 0.0
        %2333 = vmatpush1.msra.mxu0 %v2311
        %2334 = vmatprep.subr.mxu0 0.0
        %2335 = vmatpush1.msra.mxu0 %v2312
        %2336 = vmatprep.subr.mxu0 0.0
        %2337 = vmatpush1.msra.mxu0 %v2313
        %2338 = vmatprep.subr.mxu0 0.0
        %2339 = vmatpush1.msra.mxu0 %v2314
        %2340 = vmatprep.subr.mxu0 0.0
        %2341 = vmatpush1.msra.mxu0 %v2315
        %2342 = vmatprep.subr.mxu0 0.0
        %2343 = vmatpush1.msra.mxu0 %v2316
        %2344 = vmatprep.subr.mxu0 0.0
        %2345 = vmatpush1.msra.mxu0 %v2317
        %2346 = vmatprep.subr.mxu0 0.0
        %2347 = vmatpush1.msra.mxu0 %v2318
        %2348 = vmatprep.subr.mxu0 0.0
        %2349 = vmatpush1.msra.mxu0 %v2319
        %2350 = vmatprep.subr.mxu0 0.0
        %2351 = vmatpush1.msra.mxu0 %v2320
        %2352 = vmatprep.subr.mxu0 0.0
        %2353 = vmatpush1.msra.mxu0 %v2321
        %2354 = vmatprep.subr.mxu0 0.0
        %2355 = vmatpush1.msra.mxu0 0.0
        %2356 = vmatprep.subr.mxu0 0.0
        %2357 = vmatpush1.msra.mxu0 0.0
        %2358 = vmatprep.subr.mxu0 0.0
        %2359 = vmatpush1.msra.mxu0 0.0
        %2360 = vmatprep.subr.mxu0 0.0
        %2361 = vmatpush1.msra.mxu0 0.0
        %2362 = vmatprep.subr.mxu0 0.0
        %2363 = vmatpush1.msra.mxu0 0.0
        %2364 = vmatprep.subr.mxu0 0.0
        %2365 = vmatpush1.msra.mxu0 0.0
        %2366 = vmatprep.subr.mxu0 0.0
        %2367 = vmatpush1.msra.mxu0 0.0
        %2368 = vmatprep.subr.mxu0 0.0
        %2369 = vmatpush1.msra.mxu0 0.0
        %2370 = vmatprep.subr.mxu0 0.0
        %2371 = vmatpush1.msra.mxu0 0.0
        %2372 = vmatprep.subr.mxu0 0.0
        %2373 = vmatpush1.msra.mxu0 0.0
        %2374 = vmatprep.subr.mxu0 0.0
        %2375 = vmatpush1.msra.mxu0 0.0
        %2376 = vmatprep.subr.mxu0 0.0
        %2377 = vmatpush1.msra.mxu0 0.0
        %2378 = vmatprep.subr.mxu0 0.0
        %2379 = vmatpush1.msra.mxu0 0.0
        %2380 = vmatprep.subr.mxu0 0.0
        %2381 = vmatpush1.msra.mxu0 0.0
        %2382 = vmatprep.subr.mxu0 0.0
        %2383 = vmatpush1.msra.mxu0 0.0
        %2384 = vmatprep.subr.mxu0 0.0
        %2385 = vmatpush1.msra.mxu0 0.0
        %2386 = vmatprep.mubr.f32.mxu0 0.0
        %2387 = vmatmul.mubr.f32.gmra.mrb[0].mxu0 %v2299
        %v2388 = vpop.f32.mrb[0].mxu0
        %v2389 = vadd.f32 0.0, %v2388
        %v2390 = vpop.f32.mrb[0].mxu0
        %2391 = vmatprep.mubr.f32.mxu0 0.0
        %2392 = vmatmul.mubr.f32.gmra.mrb[0].mxu0 %v2300
        %v2393 = vpop.f32.mrb[0].mxu0
        %v2394 = vadd.f32 0.0, %v2393
        %v2395 = vpop.f32.mrb[0].mxu0
        %2396 = vmatprep.mubr.f32.mxu0 0.0
        %2397 = vmatmul.mubr.f32.gmra.mrb[0].mxu0 %v2301
        %v2398 = vpop.f32.mrb[0].mxu0
        %v2399 = vadd.f32 0.0, %v2398
        %v2400 = vpop.f32.mrb[0].mxu0
        %2401 = vmatprep.mubr.f32.mxu0 0.0
        %2402 = vmatmul.mubr.f32.gmra.mrb[0].mxu0 %v2302
        %v2403 = vpop.f32.mrb[0].mxu0
        %v2404 = vadd.f32 0.0, %v2403
        %v2405 = vpop.f32.mrb[0].mxu0
        %2406 = vmatprep.mubr.f32.mxu0 0.0
        %2407 = vmatmul.mubr.f32.gmra.mrb[0].mxu0 %v2303
        %v2408 = vpop.f32.mrb[0].mxu0
        %v2409 = vadd.f32 0.0, %v2408
        %v2410 = vpop.f32.mrb[0].mxu0
        %2411 = vmatprep.mubr.f32.mxu0 0.0
        %2412 = vmatmul.mubr.f32.gmra.mrb[0].mxu0 %v2304
        %v2413 = vpop.f32.mrb[0].mxu0
        %v2414 = vadd.f32 0.0, %v2413
        %v2415 = vpop.f32.mrb[0].mxu0
        %2416 = vdwg.mxu0
        %v2417 = vadd.f32 %v2293, %v2389
        %v2418 = vadd.f32 %v2294, %v2394
        %v2419 = vadd.f32 %v2295, %v2399
        %v2420 = vadd.f32 %v2296, %v2404
        %v2421 = vadd.f32 %v2297, %v2409
        %v2422 = vadd.f32 %v2298, %v2414
        %v2423 = vld [vmem:[%s323 + $0x12] sm:$0xff]
        %v2424 = vld [vmem:[%s323 + $0x1a] sm:$0xff]
        %v2425 = vld [vmem:[%s323 + $0x22] sm:$0xff]
        %v2426 = vld [vmem:[%s323 + $0x2a] sm:$0xff]
        %v2427 = vld [vmem:[%s323 + $0x32] sm:$0xff]
        %v2428 = vld [vmem:[%s323 + $0x3a] sm:$0x3f]
        %s2429 = scalar_lea.vmem [#allocation3], 1024
        %v2430 = vld [vmem:[%s2429] sm:$0xff]
        %v2431 = vld [vmem:[%s2429 + $0x8] sm:$0xff]
        %v2432 = vld [vmem:[%s2429 + $0x10] sm:$0xff]
        %v2433 = vld [vmem:[%s2429 + $0x18] sm:$0xff]
        %v2434 = vld [vmem:[%s2429 + $0x20] sm:$0xff]
        %v2435 = vld [vmem:[%s2429 + $0x28] sm:$0xff]
        %v2436 = vld [vmem:[%s2429 + $0x30] sm:$0xff]
        %v2437 = vld [vmem:[%s2429 + $0x38] sm:$0xff]
        %v2438 = vld [vmem:[%s2429 + $0x40] sm:$0xff]
        %v2439 = vld [vmem:[%s2429 + $0x48] sm:$0xff]
        %v2440 = vld [vmem:[%s2429 + $0x50] sm:$0xff]
        %v2441 = vld [vmem:[%s2429 + $0x58] sm:$0xff]
        %v2442 = vld [vmem:[%s2429 + $0x60] sm:$0xff]
        %v2443 = vld [vmem:[%s2429 + $0x68] sm:$0xff]
        %v2444 = vld [vmem:[%s2429 + $0x70] sm:$0xff]
        %v2445 = vld [vmem:[%s2429 + $0x78] sm:$0xff]
        %2446 = vmatprep.subr.mxu0 0.0
        %2447 = vmatpush1.msra.mxu0 %v2430
        %2448 = vmatprep.subr.mxu0 0.0
        %2449 = vmatpush1.msra.mxu0 %v2431
        %2450 = vmatprep.subr.mxu0 0.0
        %2451 = vmatpush1.msra.mxu0 %v2432
        %2452 = vmatprep.subr.mxu0 0.0
        %2453 = vmatpush1.msra.mxu0 %v2433
        %2454 = vmatprep.subr.mxu0 0.0
        %2455 = vmatpush1.msra.mxu0 %v2434
        %2456 = vmatprep.subr.mxu0 0.0
        %2457 = vmatpush1.msra.mxu0 %v2435
        %2458 = vmatprep.subr.mxu0 0.0
        %2459 = vmatpush1.msra.mxu0 %v2436
        %2460 = vmatprep.subr.mxu0 0.0
        %2461 = vmatpush1.msra.mxu0 %v2437
        %2462 = vmatprep.subr.mxu0 0.0
        %2463 = vmatpush1.msra.mxu0 %v2438
        %2464 = vmatprep.subr.mxu0 0.0
        %2465 = vmatpush1.msra.mxu0 %v2439
        %2466 = vmatprep.subr.mxu0 0.0
        %2467 = vmatpush1.msra.mxu0 %v2440
        %2468 = vmatprep.subr.mxu0 0.0
        %2469 = vmatpush1.msra.mxu0 %v2441
        %2470 = vmatprep.subr.mxu0 0.0
        %2471 = vmatpush1.msra.mxu0 %v2442
        %2472 = vmatprep.subr.mxu0 0.0
        %2473 = vmatpush1.msra.mxu0 %v2443
        %2474 = vmatprep.subr.mxu0 0.0
        %2475 = vmatpush1.msra.mxu0 %v2444
        %2476 = vmatprep.subr.mxu0 0.0
        %2477 = vmatpush1.msra.mxu0 %v2445
        %2478 = vmatprep.subr.mxu0 0.0
        %2479 = vmatpush1.msra.mxu0 0.0
        %2480 = vmatprep.subr.mxu0 0.0
        %2481 = vmatpush1.msra.mxu0 0.0
        %2482 = vmatprep.subr.mxu0 0.0
        %2483 = vmatpush1.msra.mxu0 0.0
        %2484 = vmatprep.subr.mxu0 0.0
        %2485 = vmatpush1.msra.mxu0 0.0
        %2486 = vmatprep.subr.mxu0 0.0
        %2487 = vmatpush1.msra.mxu0 0.0
        %2488 = vmatprep.subr.mxu0 0.0
        %2489 = vmatpush1.msra.mxu0 0.0
        %2490 = vmatprep.subr.mxu0 0.0
        %2491 = vmatpush1.msra.mxu0 0.0
        %2492 = vmatprep.subr.mxu0 0.0
        %2493 = vmatpush1.msra.mxu0 0.0
        %2494 = vmatprep.subr.mxu0 0.0
        %2495 = vmatpush1.msra.mxu0 0.0
        %2496 = vmatprep.subr.mxu0 0.0
        %2497 = vmatpush1.msra.mxu0 0.0
        %2498 = vmatprep.subr.mxu0 0.0
        %2499 = vmatpush1.msra.mxu0 0.0
        %2500 = vmatprep.subr.mxu0 0.0
        %2501 = vmatpush1.msra.mxu0 0.0
        %2502 = vmatprep.subr.mxu0 0.0
        %2503 = vmatpush1.msra.mxu0 0.0
        %2504 = vmatprep.subr.mxu0 0.0
        %2505 = vmatpush1.msra.mxu0 0.0
        %2506 = vmatprep.subr.mxu0 0.0
        %2507 = vmatpush1.msra.mxu0 0.0
        %2508 = vmatprep.subr.mxu0 0.0
        %2509 = vmatpush1.msra.mxu0 0.0
        %2510 = vmatprep.mubr.f32.mxu0 0.0
        %2511 = vmatmul.mubr.f32.gmra.mrb[0].mxu0 %v2423
        %v2512 = vpop.f32.mrb[0].mxu0
        %v2513 = vadd.f32 0.0, %v2512
        %v2514 = vpop.f32.mrb[0].mxu0
        %2515 = vmatprep.mubr.f32.mxu0 0.0
        %2516 = vmatmul.mubr.f32.gmra.mrb[0].mxu0 %v2424
        %v2517 = vpop.f32.mrb[0].mxu0
        %v2518 = vadd.f32 0.0, %v2517
        %v2519 = vpop.f32.mrb[0].mxu0
        %2520 = vmatprep.mubr.f32.mxu0 0.0
        %2521 = vmatmul.mubr.f32.gmra.mrb[0].mxu0 %v2425
        %v2522 = vpop.f32.mrb[0].mxu0
        %v2523 = vadd.f32 0.0, %v2522
        %v2524 = vpop.f32.mrb[0].mxu0
        %2525 = vmatprep.mubr.f32.mxu0 0.0
        %2526 = vmatmul.mubr.f32.gmra.mrb[0].mxu0 %v2426
        %v2527 = vpop.f32.mrb[0].mxu0
        %v2528 = vadd.f32 0.0, %v2527
        %v2529 = vpop.f32.mrb[0].mxu0
        %2530 = vmatprep.mubr.f32.mxu0 0.0
        %2531 = vmatmul.mubr.f32.gmra.mrb[0].mxu0 %v2427
        %v2532 = vpop.f32.mrb[0].mxu0
        %v2533 = vadd.f32 0.0, %v2532
        %v2534 = vpop.f32.mrb[0].mxu0
        %2535 = vmatprep.mubr.f32.mxu0 0.0
        %2536 = vmatmul.mubr.f32.gmra.mrb[0].mxu0 %v2428
        %v2537 = vpop.f32.mrb[0].mxu0
        %v2538 = vadd.f32 0.0, %v2537
        %v2539 = vpop.f32.mrb[0].mxu0
        %2540 = vdwg.mxu0
        %v2541 = vadd.f32 %v2417, %v2513
        %v2542 = vadd.f32 %v2418, %v2518
        %v2543 = vadd.f32 %v2419, %v2523
        %v2544 = vadd.f32 %v2420, %v2528
        %v2545 = vadd.f32 %v2421, %v2533
        %v2546 = vadd.f32 %v2422, %v2538
        %v2547 = vld [vmem:[%s4] sm:$0x1]
        %v2549 = vlaneseq
        %v2550 = vshrl.u32 %v2549, 7
        %v2551 = vsub.s32 0, %v2550
        %v2552 = vrot.slane %v2547, %v2551
        %v2554 = vadd.f32 %v2541, %v2552
        %v2555 = vadd.f32 %v2542, %v2552
        %v2556 = vadd.f32 %v2543, %v2552
        %v2557 = vadd.f32 %v2544, %v2552
        %v2558 = vadd.f32 %v2545, %v2552
        %v2559 = vadd.f32 %v2546, %v2552
        %v2560 = vmax.f32 %v2554, 0.0
        %v2561 = vmax.f32 %v2555, 0.0
        %v2562 = vmax.f32 %v2556, 0.0
        %v2563 = vmax.f32 %v2557, 0.0
        %v2564 = vmax.f32 %v2558, 0.0
        %v2565 = vmax.f32 %v2559, 0.0
        %2566 = vst [vmem:[#allocation2] sm:$0xff] %v2560
        %2567 = vst [vmem:[#allocation2 + $0x8] sm:$0xff] %v2561
        %2568 = vst [vmem:[#allocation2 + $0x10] sm:$0xff] %v2562
        %2569 = vst [vmem:[#allocation2 + $0x18] sm:$0xff] %v2563
        %2570 = vst [vmem:[#allocation2 + $0x20] sm:$0xff] %v2564
        %2571 = vst [vmem:[#allocation2 + $0x28] sm:$0x3f] %v2565
        %v2572 = vld [vmem:[#allocation2] sm:$0xff]
        %v2573 = vld [vmem:[#allocation2 + $0x8] sm:$0xff]
        %v2574 = vld [vmem:[#allocation2 + $0x10] sm:$0xff]
        %v2575 = vld [vmem:[#allocation2 + $0x18] sm:$0xf]
        %v2576 = vld [vmem:[#allocation5] sm:$0xff]
        %v2577 = vld [vmem:[#allocation5 + $0x8] sm:$0xff]
        %v2578 = vld [vmem:[#allocation5 + $0x10] sm:$0xff]
        %v2579 = vld [vmem:[#allocation5 + $0x18] sm:$0xff]
        %v2580 = vld [vmem:[#allocation5 + $0x20] sm:$0xff]
        %v2581 = vld [vmem:[#allocation5 + $0x28] sm:$0xff]
        %v2582 = vld [vmem:[#allocation5 + $0x30] sm:$0xff]
        %v2583 = vld [vmem:[#allocation5 + $0x38] sm:$0xff]
        %v2584 = vld [vmem:[#allocation5 + $0x40] sm:$0xff]
        %v2585 = vld [vmem:[#allocation5 + $0x48] sm:$0xff]
        %v2586 = vld [vmem:[#allocation5 + $0x50] sm:$0xff]
        %v2587 = vld [vmem:[#allocation5 + $0x58] sm:$0xff]
        %v2588 = vld [vmem:[#allocation5 + $0x60] sm:$0xff]
        %v2589 = vld [vmem:[#allocation5 + $0x68] sm:$0xff]
        %v2590 = vld [vmem:[#allocation5 + $0x70] sm:$0xff]
        %v2591 = vld [vmem:[#allocation5 + $0x78] sm:$0xff]
        %v2592 = vld [vmem:[#allocation2 + $0x1] sm:$0xff]
        %v2593 = vld [vmem:[#allocation2 + $0x9] sm:$0xff]
        %v2594 = vld [vmem:[#allocation2 + $0x11] sm:$0xff]
        %v2595 = vld [vmem:[#allocation2 + $0x19] sm:$0xf]
        %s2596 = scalar_lea.vmem [#allocation5], 128
        %v2597 = vld [vmem:[%s2596] sm:$0xff]
        %v2598 = vld [vmem:[%s2596 + $0x8] sm:$0xff]
        %v2599 = vld [vmem:[%s2596 + $0x10] sm:$0xff]
        %v2600 = vld [vmem:[%s2596 + $0x18] sm:$0xff]
        %v2601 = vld [vmem:[%s2596 + $0x20] sm:$0xff]
        %v2602 = vld [vmem:[%s2596 + $0x28] sm:$0xff]
        %v2603 = vld [vmem:[%s2596 + $0x30] sm:$0xff]
        %v2604 = vld [vmem:[%s2596 + $0x38] sm:$0xff]
        %v2605 = vld [vmem:[%s2596 + $0x40] sm:$0xff]
        %v2606 = vld [vmem:[%s2596 + $0x48] sm:$0xff]
        %v2607 = vld [vmem:[%s2596 + $0x50] sm:$0xff]
        %v2608 = vld [vmem:[%s2596 + $0x58] sm:$0xff]
        %v2609 = vld [vmem:[%s2596 + $0x60] sm:$0xff]
        %v2610 = vld [vmem:[%s2596 + $0x68] sm:$0xff]
        %v2611 = vld [vmem:[%s2596 + $0x70] sm:$0xff]
        %v2612 = vld [vmem:[%s2596 + $0x78] sm:$0xff]
        %2613 = vmatprep.subr.mxu0 0.0
        %2614 = vmatpush1.msra.mxu0 %v2597
        %2615 = vmatprep.subr.mxu0 0.0
        %2616 = vmatpush1.msra.mxu0 %v2598
        %2617 = vmatprep.subr.mxu0 0.0
        %2618 = vmatpush1.msra.mxu0 %v2599
        %2619 = vmatprep.subr.mxu0 0.0
        %2620 = vmatpush1.msra.mxu0 %v2600
        %2621 = vmatprep.subr.mxu0 0.0
        %2622 = vmatpush1.msra.mxu0 %v2601
        %2623 = vmatprep.subr.mxu0 0.0
        %2624 = vmatpush1.msra.mxu0 %v2602
        %2625 = vmatprep.subr.mxu0 0.0
        %2626 = vmatpush1.msra.mxu0 %v2603
        %2627 = vmatprep.subr.mxu0 0.0
        %2628 = vmatpush1.msra.mxu0 %v2604
        %2629 = vmatprep.subr.mxu0 0.0
        %2630 = vmatpush1.msra.mxu0 %v2605
        %2631 = vmatprep.subr.mxu0 0.0
        %2632 = vmatpush1.msra.mxu0 %v2606
        %2633 = vmatprep.subr.mxu0 0.0
        %2634 = vmatpush1.msra.mxu0 %v2607
        %2635 = vmatprep.subr.mxu0 0.0
        %2636 = vmatpush1.msra.mxu0 %v2608
        %2637 = vmatprep.subr.mxu0 0.0
        %2638 = vmatpush1.msra.mxu0 %v2609
        %2639 = vmatprep.subr.mxu0 0.0
        %2640 = vmatpush1.msra.mxu0 %v2610
        %2641 = vmatprep.subr.mxu0 0.0
        %2642 = vmatpush1.msra.mxu0 %v2611
        %2643 = vmatprep.subr.mxu0 0.0
        %2644 = vmatpush1.msra.mxu0 %v2612
        %2645 = vmatprep.subr.mxu0 0.0
        %2646 = vmatpush1.msra.mxu0 0.0
        %2647 = vmatprep.subr.mxu0 0.0
        %2648 = vmatpush1.msra.mxu0 0.0
        %2649 = vmatprep.subr.mxu0 0.0
        %2650 = vmatpush1.msra.mxu0 0.0
        %2651 = vmatprep.subr.mxu0 0.0
        %2652 = vmatpush1.msra.mxu0 0.0
        %2653 = vmatprep.subr.mxu0 0.0
        %2654 = vmatpush1.msra.mxu0 0.0
        %2655 = vmatprep.subr.mxu0 0.0
        %2656 = vmatpush1.msra.mxu0 0.0
        %2657 = vmatprep.subr.mxu0 0.0
        %2658 = vmatpush1.msra.mxu0 0.0
        %2659 = vmatprep.subr.mxu0 0.0
        %2660 = vmatpush1.msra.mxu0 0.0
        %2661 = vmatprep.subr.mxu0 0.0
        %2662 = vmatpush1.msra.mxu0 0.0
        %2663 = vmatprep.subr.mxu0 0.0
        %2664 = vmatpush1.msra.mxu0 0.0
        %2665 = vmatprep.subr.mxu0 0.0
        %2666 = vmatpush1.msra.mxu0 0.0
        %2667 = vmatprep.subr.mxu0 0.0
        %2668 = vmatpush1.msra.mxu0 0.0
        %2669 = vmatprep.subr.mxu0 0.0
        %2670 = vmatpush1.msra.mxu0 0.0
        %2671 = vmatprep.subr.mxu0 0.0
        %2672 = vmatpush1.msra.mxu0 0.0
        %2673 = vmatprep.subr.mxu0 0.0
        %2674 = vmatpush1.msra.mxu0 0.0
        %2675 = vmatprep.subr.mxu0 0.0
        %2676 = vmatpush1.msra.mxu0 0.0
        %2677 = vmatprep.mubr.f32.mxu0 0.0
        %2678 = vmatmul.mubr.f32.gmra.mrb[0].mxu0 %v2592
        %v2679 = vpop.f32.mrb[0].mxu0
        %v2680 = vadd.f32 0.0, %v2679
        %v2681 = vpop.f32.mrb[0].mxu0
        %2682 = vmatprep.mubr.f32.mxu0 0.0
        %2683 = vmatmul.mubr.f32.gmra.mrb[0].mxu0 %v2593
        %v2684 = vpop.f32.mrb[0].mxu0
        %v2685 = vadd.f32 0.0, %v2684
        %v2686 = vpop.f32.mrb[0].mxu0
        %2687 = vmatprep.mubr.f32.mxu0 0.0
        %2688 = vmatmul.mubr.f32.gmra.mrb[0].mxu0 %v2594
        %v2689 = vpop.f32.mrb[0].mxu0
        %v2690 = vadd.f32 0.0, %v2689
        %v2691 = vpop.f32.mrb[0].mxu0
        %2692 = vmatprep.mubr.f32.mxu0 0.0
        %2693 = vmatmul.mubr.f32.gmra.mrb[0].mxu0 %v2595
        %v2694 = vpop.f32.mrb[0].mxu0
        %v2695 = vadd.f32 0.0, %v2694
        %v2696 = vpop.f32.mrb[0].mxu0
        %2697 = vdwg.mxu0
        %2698 = vmatprep.subr.mxu0 0.0
        %2699 = vmatpush1.msra.mxu0 %v2576
        %2700 = vmatprep.subr.mxu0 0.0
        %2701 = vmatpush1.msra.mxu0 %v2577
        %2702 = vmatprep.subr.mxu0 0.0
        %2703 = vmatpush1.msra.mxu0 %v2578
        %2704 = vmatprep.subr.mxu0 0.0
        %2705 = vmatpush1.msra.mxu0 %v2579
        %2706 = vmatprep.subr.mxu0 0.0
        %2707 = vmatpush1.msra.mxu0 %v2580
        %2708 = vmatprep.subr.mxu0 0.0
        %2709 = vmatpush1.msra.mxu0 %v2581
        %2710 = vmatprep.subr.mxu0 0.0
        %2711 = vmatpush1.msra.mxu0 %v2582
        %2712 = vmatprep.subr.mxu0 0.0
        %2713 = vmatpush1.msra.mxu0 %v2583
        %2714 = vmatprep.subr.mxu0 0.0
        %2715 = vmatpush1.msra.mxu0 %v2584
        %2716 = vmatprep.subr.mxu0 0.0
        %2717 = vmatpush1.msra.mxu0 %v2585
        %2718 = vmatprep.subr.mxu0 0.0
        %2719 = vmatpush1.msra.mxu0 %v2586
        %2720 = vmatprep.subr.mxu0 0.0
        %2721 = vmatpush1.msra.mxu0 %v2587
        %2722 = vmatprep.subr.mxu0 0.0
        %2723 = vmatpush1.msra.mxu0 %v2588
        %2724 = vmatprep.subr.mxu0 0.0
        %2725 = vmatpush1.msra.mxu0 %v2589
        %2726 = vmatprep.subr.mxu0 0.0
        %2727 = vmatpush1.msra.mxu0 %v2590
        %2728 = vmatprep.subr.mxu0 0.0
        %2729 = vmatpush1.msra.mxu0 %v2591
        %2730 = vmatprep.subr.mxu0 0.0
        %2731 = vmatpush1.msra.mxu0 0.0
        %2732 = vmatprep.subr.mxu0 0.0
        %2733 = vmatpush1.msra.mxu0 0.0
        %2734 = vmatprep.subr.mxu0 0.0
        %2735 = vmatpush1.msra.mxu0 0.0
        %2736 = vmatprep.subr.mxu0 0.0
        %2737 = vmatpush1.msra.mxu0 0.0
        %2738 = vmatprep.subr.mxu0 0.0
        %2739 = vmatpush1.msra.mxu0 0.0
        %2740 = vmatprep.subr.mxu0 0.0
        %2741 = vmatpush1.msra.mxu0 0.0
        %2742 = vmatprep.subr.mxu0 0.0
        %2743 = vmatpush1.msra.mxu0 0.0
        %2744 = vmatprep.subr.mxu0 0.0
        %2745 = vmatpush1.msra.mxu0 0.0
        %2746 = vmatprep.subr.mxu0 0.0
        %2747 = vmatpush1.msra.mxu0 0.0
        %2748 = vmatprep.subr.mxu0 0.0
        %2749 = vmatpush1.msra.mxu0 0.0
        %2750 = vmatprep.subr.mxu0 0.0
        %2751 = vmatpush1.msra.mxu0 0.0
        %2752 = vmatprep.subr.mxu0 0.0
        %2753 = vmatpush1.msra.mxu0 0.0
        %2754 = vmatprep.subr.mxu0 0.0
        %2755 = vmatpush1.msra.mxu0 0.0
        %2756 = vmatprep.subr.mxu0 0.0
        %2757 = vmatpush1.msra.mxu0 0.0
        %2758 = vmatprep.subr.mxu0 0.0
        %2759 = vmatpush1.msra.mxu0 0.0
        %2760 = vmatprep.subr.mxu0 0.0
        %2761 = vmatpush1.msra.mxu0 0.0
        %2762 = vmatprep.mubr.f32.mxu0 0.0
        %2763 = vmatmul.mubr.f32.gmra.mrb[0].mxu0 %v2572
        %v2764 = vpop.f32.mrb[0].mxu0
        %v2765 = vadd.f32 %v2680, %v2764
        %v2766 = vpop.f32.mrb[0].mxu0
        %2767 = vmatprep.mubr.f32.mxu0 0.0
        %2768 = vmatmul.mubr.f32.gmra.mrb[0].mxu0 %v2573
        %v2769 = vpop.f32.mrb[0].mxu0
        %v2770 = vadd.f32 %v2685, %v2769
        %v2771 = vpop.f32.mrb[0].mxu0
        %2772 = vmatprep.mubr.f32.mxu0 0.0
        %2773 = vmatmul.mubr.f32.gmra.mrb[0].mxu0 %v2574
        %v2774 = vpop.f32.mrb[0].mxu0
        %v2775 = vadd.f32 %v2690, %v2774
        %v2776 = vpop.f32.mrb[0].mxu0
        %2777 = vmatprep.mubr.f32.mxu0 0.0
        %2778 = vmatmul.mubr.f32.gmra.mrb[0].mxu0 %v2575
        %v2779 = vpop.f32.mrb[0].mxu0
        %v2780 = vadd.f32 %v2695, %v2779
        %v2781 = vpop.f32.mrb[0].mxu0
        %2782 = vdwg.mxu0
        %v2783 = vld [vmem:[#allocation2 + $0x2] sm:$0xff]
        %v2784 = vld [vmem:[#allocation2 + $0xa] sm:$0xff]
        %v2785 = vld [vmem:[#allocation2 + $0x12] sm:$0xff]
        %v2786 = vld [vmem:[#allocation2 + $0x1a] sm:$0xf]
        %s2787 = scalar_lea.vmem [#allocation5], 256
        %v2788 = vld [vmem:[%s2787] sm:$0xff]
        %v2789 = vld [vmem:[%s2787 + $0x8] sm:$0xff]
        %v2790 = vld [vmem:[%s2787 + $0x10] sm:$0xff]
        %v2791 = vld [vmem:[%s2787 + $0x18] sm:$0xff]
        %v2792 = vld [vmem:[%s2787 + $0x20] sm:$0xff]
        %v2793 = vld [vmem:[%s2787 + $0x28] sm:$0xff]
        %v2794 = vld [vmem:[%s2787 + $0x30] sm:$0xff]
        %v2795 = vld [vmem:[%s2787 + $0x38] sm:$0xff]
        %v2796 = vld [vmem:[%s2787 + $0x40] sm:$0xff]
        %v2797 = vld [vmem:[%s2787 + $0x48] sm:$0xff]
        %v2798 = vld [vmem:[%s2787 + $0x50] sm:$0xff]
        %v2799 = vld [vmem:[%s2787 + $0x58] sm:$0xff]
        %v2800 = vld [vmem:[%s2787 + $0x60] sm:$0xff]
        %v2801 = vld [vmem:[%s2787 + $0x68] sm:$0xff]
        %v2802 = vld [vmem:[%s2787 + $0x70] sm:$0xff]
        %v2803 = vld [vmem:[%s2787 + $0x78] sm:$0xff]
        %2804 = vmatprep.subr.mxu0 0.0
        %2805 = vmatpush1.msra.mxu0 %v2788
        %2806 = vmatprep.subr.mxu0 0.0
        %2807 = vmatpush1.msra.mxu0 %v2789
        %2808 = vmatprep.subr.mxu0 0.0
        %2809 = vmatpush1.msra.mxu0 %v2790
        %2810 = vmatprep.subr.mxu0 0.0
        %2811 = vmatpush1.msra.mxu0 %v2791
        %2812 = vmatprep.subr.mxu0 0.0
        %2813 = vmatpush1.msra.mxu0 %v2792
        %2814 = vmatprep.subr.mxu0 0.0
        %2815 = vmatpush1.msra.mxu0 %v2793
        %2816 = vmatprep.subr.mxu0 0.0
        %2817 = vmatpush1.msra.mxu0 %v2794
        %2818 = vmatprep.subr.mxu0 0.0
        %2819 = vmatpush1.msra.mxu0 %v2795
        %2820 = vmatprep.subr.mxu0 0.0
        %2821 = vmatpush1.msra.mxu0 %v2796
        %2822 = vmatprep.subr.mxu0 0.0
        %2823 = vmatpush1.msra.mxu0 %v2797
        %2824 = vmatprep.subr.mxu0 0.0
        %2825 = vmatpush1.msra.mxu0 %v2798
        %2826 = vmatprep.subr.mxu0 0.0
        %2827 = vmatpush1.msra.mxu0 %v2799
        %2828 = vmatprep.subr.mxu0 0.0
        %2829 = vmatpush1.msra.mxu0 %v2800
        %2830 = vmatprep.subr.mxu0 0.0
        %2831 = vmatpush1.msra.mxu0 %v2801
        %2832 = vmatprep.subr.mxu0 0.0
        %2833 = vmatpush1.msra.mxu0 %v2802
        %2834 = vmatprep.subr.mxu0 0.0
        %2835 = vmatpush1.msra.mxu0 %v2803
        %2836 = vmatprep.subr.mxu0 0.0
        %2837 = vmatpush1.msra.mxu0 0.0
        %2838 = vmatprep.subr.mxu0 0.0
        %2839 = vmatpush1.msra.mxu0 0.0
        %2840 = vmatprep.subr.mxu0 0.0
        %2841 = vmatpush1.msra.mxu0 0.0
        %2842 = vmatprep.subr.mxu0 0.0
        %2843 = vmatpush1.msra.mxu0 0.0
        %2844 = vmatprep.subr.mxu0 0.0
        %2845 = vmatpush1.msra.mxu0 0.0
        %2846 = vmatprep.subr.mxu0 0.0
        %2847 = vmatpush1.msra.mxu0 0.0
        %2848 = vmatprep.subr.mxu0 0.0
        %2849 = vmatpush1.msra.mxu0 0.0
        %2850 = vmatprep.subr.mxu0 0.0
        %2851 = vmatpush1.msra.mxu0 0.0
        %2852 = vmatprep.subr.mxu0 0.0
        %2853 = vmatpush1.msra.mxu0 0.0
        %2854 = vmatprep.subr.mxu0 0.0
        %2855 = vmatpush1.msra.mxu0 0.0
        %2856 = vmatprep.subr.mxu0 0.0
        %2857 = vmatpush1.msra.mxu0 0.0
        %2858 = vmatprep.subr.mxu0 0.0
        %2859 = vmatpush1.msra.mxu0 0.0
        %2860 = vmatprep.subr.mxu0 0.0
        %2861 = vmatpush1.msra.mxu0 0.0
        %2862 = vmatprep.subr.mxu0 0.0
        %2863 = vmatpush1.msra.mxu0 0.0
        %2864 = vmatprep.subr.mxu0 0.0
        %2865 = vmatpush1.msra.mxu0 0.0
        %2866 = vmatprep.subr.mxu0 0.0
        %2867 = vmatpush1.msra.mxu0 0.0
        %2868 = vmatprep.mubr.f32.mxu0 0.0
        %2869 = vmatmul.mubr.f32.gmra.mrb[0].mxu0 %v2783
        %v2870 = vpop.f32.mrb[0].mxu0
        %v2871 = vadd.f32 0.0, %v2870
        %v2872 = vpop.f32.mrb[0].mxu0
        %2873 = vmatprep.mubr.f32.mxu0 0.0
        %2874 = vmatmul.mubr.f32.gmra.mrb[0].mxu0 %v2784
        %v2875 = vpop.f32.mrb[0].mxu0
        %v2876 = vadd.f32 0.0, %v2875
        %v2877 = vpop.f32.mrb[0].mxu0
        %2878 = vmatprep.mubr.f32.mxu0 0.0
        %2879 = vmatmul.mubr.f32.gmra.mrb[0].mxu0 %v2785
        %v2880 = vpop.f32.mrb[0].mxu0
        %v2881 = vadd.f32 0.0, %v2880
        %v2882 = vpop.f32.mrb[0].mxu0
        %2883 = vmatprep.mubr.f32.mxu0 0.0
        %2884 = vmatmul.mubr.f32.gmra.mrb[0].mxu0 %v2786
        %v2885 = vpop.f32.mrb[0].mxu0
        %v2886 = vadd.f32 0.0, %v2885
        %v2887 = vpop.f32.mrb[0].mxu0
        %2888 = vdwg.mxu0
        %v2889 = vadd.f32 %v2765, %v2871
        %v2890 = vadd.f32 %v2770, %v2876
        %v2891 = vadd.f32 %v2775, %v2881
        %v2892 = vadd.f32 %v2780, %v2886
        %v2893 = vld [vmem:[#allocation2 + $0x8] sm:$0xff]
        %v2894 = vld [vmem:[#allocation2 + $0x10] sm:$0xff]
        %v2895 = vld [vmem:[#allocation2 + $0x18] sm:$0xff]
        %v2896 = vld [vmem:[#allocation2 + $0x20] sm:$0xf]
        %s2897 = scalar_lea.vmem [#allocation5], 384
        %v2898 = vld [vmem:[%s2897] sm:$0xff]
        %v2899 = vld [vmem:[%s2897 + $0x8] sm:$0xff]
        %v2900 = vld [vmem:[%s2897 + $0x10] sm:$0xff]
        %v2901 = vld [vmem:[%s2897 + $0x18] sm:$0xff]
        %v2902 = vld [vmem:[%s2897 + $0x20] sm:$0xff]
        %v2903 = vld [vmem:[%s2897 + $0x28] sm:$0xff]
        %v2904 = vld [vmem:[%s2897 + $0x30] sm:$0xff]
        %v2905 = vld [vmem:[%s2897 + $0x38] sm:$0xff]
        %v2906 = vld [vmem:[%s2897 + $0x40] sm:$0xff]
        %v2907 = vld [vmem:[%s2897 + $0x48] sm:$0xff]
        %v2908 = vld [vmem:[%s2897 + $0x50] sm:$0xff]
        %v2909 = vld [vmem:[%s2897 + $0x58] sm:$0xff]
        %v2910 = vld [vmem:[%s2897 + $0x60] sm:$0xff]
        %v2911 = vld [vmem:[%s2897 + $0x68] sm:$0xff]
        %v2912 = vld [vmem:[%s2897 + $0x70] sm:$0xff]
        %v2913 = vld [vmem:[%s2897 + $0x78] sm:$0xff]
        %2914 = vmatprep.subr.mxu0 0.0
        %2915 = vmatpush1.msra.mxu0 %v2898
        %2916 = vmatprep.subr.mxu0 0.0
        %2917 = vmatpush1.msra.mxu0 %v2899
        %2918 = vmatprep.subr.mxu0 0.0
        %2919 = vmatpush1.msra.mxu0 %v2900
        %2920 = vmatprep.subr.mxu0 0.0
        %2921 = vmatpush1.msra.mxu0 %v2901
        %2922 = vmatprep.subr.mxu0 0.0
        %2923 = vmatpush1.msra.mxu0 %v2902
        %2924 = vmatprep.subr.mxu0 0.0
        %2925 = vmatpush1.msra.mxu0 %v2903
        %2926 = vmatprep.subr.mxu0 0.0
        %2927 = vmatpush1.msra.mxu0 %v2904
        %2928 = vmatprep.subr.mxu0 0.0
        %2929 = vmatpush1.msra.mxu0 %v2905
        %2930 = vmatprep.subr.mxu0 0.0
        %2931 = vmatpush1.msra.mxu0 %v2906
        %2932 = vmatprep.subr.mxu0 0.0
        %2933 = vmatpush1.msra.mxu0 %v2907
        %2934 = vmatprep.subr.mxu0 0.0
        %2935 = vmatpush1.msra.mxu0 %v2908
        %2936 = vmatprep.subr.mxu0 0.0
        %2937 = vmatpush1.msra.mxu0 %v2909
        %2938 = vmatprep.subr.mxu0 0.0
        %2939 = vmatpush1.msra.mxu0 %v2910
        %2940 = vmatprep.subr.mxu0 0.0
        %2941 = vmatpush1.msra.mxu0 %v2911
        %2942 = vmatprep.subr.mxu0 0.0
        %2943 = vmatpush1.msra.mxu0 %v2912
        %2944 = vmatprep.subr.mxu0 0.0
        %2945 = vmatpush1.msra.mxu0 %v2913
        %2946 = vmatprep.subr.mxu0 0.0
        %2947 = vmatpush1.msra.mxu0 0.0
        %2948 = vmatprep.subr.mxu0 0.0
        %2949 = vmatpush1.msra.mxu0 0.0
        %2950 = vmatprep.subr.mxu0 0.0
        %2951 = vmatpush1.msra.mxu0 0.0
        %2952 = vmatprep.subr.mxu0 0.0
        %2953 = vmatpush1.msra.mxu0 0.0
        %2954 = vmatprep.subr.mxu0 0.0
        %2955 = vmatpush1.msra.mxu0 0.0
        %2956 = vmatprep.subr.mxu0 0.0
        %2957 = vmatpush1.msra.mxu0 0.0
        %2958 = vmatprep.subr.mxu0 0.0
        %2959 = vmatpush1.msra.mxu0 0.0
        %2960 = vmatprep.subr.mxu0 0.0
        %2961 = vmatpush1.msra.mxu0 0.0
        %2962 = vmatprep.subr.mxu0 0.0
        %2963 = vmatpush1.msra.mxu0 0.0
        %2964 = vmatprep.subr.mxu0 0.0
        %2965 = vmatpush1.msra.mxu0 0.0
        %2966 = vmatprep.subr.mxu0 0.0
        %2967 = vmatpush1.msra.mxu0 0.0
        %2968 = vmatprep.subr.mxu0 0.0
        %2969 = vmatpush1.msra.mxu0 0.0
        %2970 = vmatprep.subr.mxu0 0.0
        %2971 = vmatpush1.msra.mxu0 0.0
        %2972 = vmatprep.subr.mxu0 0.0
        %2973 = vmatpush1.msra.mxu0 0.0
        %2974 = vmatprep.subr.mxu0 0.0
        %2975 = vmatpush1.msra.mxu0 0.0
        %2976 = vmatprep.subr.mxu0 0.0
        %2977 = vmatpush1.msra.mxu0 0.0
        %2978 = vmatprep.mubr.f32.mxu0 0.0
        %2979 = vmatmul.mubr.f32.gmra.mrb[0].mxu0 %v2893
        %v2980 = vpop.f32.mrb[0].mxu0
        %v2981 = vadd.f32 0.0, %v2980
        %v2982 = vpop.f32.mrb[0].mxu0
        %2983 = vmatprep.mubr.f32.mxu0 0.0
        %2984 = vmatmul.mubr.f32.gmra.mrb[0].mxu0 %v2894
        %v2985 = vpop.f32.mrb[0].mxu0
        %v2986 = vadd.f32 0.0, %v2985
        %v2987 = vpop.f32.mrb[0].mxu0
        %2988 = vmatprep.mubr.f32.mxu0 0.0
        %2989 = vmatmul.mubr.f32.gmra.mrb[0].mxu0 %v2895
        %v2990 = vpop.f32.mrb[0].mxu0
        %v2991 = vadd.f32 0.0, %v2990
        %v2992 = vpop.f32.mrb[0].mxu0
        %2993 = vmatprep.mubr.f32.mxu0 0.0
        %2994 = vmatmul.mubr.f32.gmra.mrb[0].mxu0 %v2896
        %v2995 = vpop.f32.mrb[0].mxu0
        %v2996 = vadd.f32 0.0, %v2995
        %v2997 = vpop.f32.mrb[0].mxu0
        %2998 = vdwg.mxu0
        %v2999 = vadd.f32 %v2889, %v2981
        %v3000 = vadd.f32 %v2890, %v2986
        %v3001 = vadd.f32 %v2891, %v2991
        %v3002 = vadd.f32 %v2892, %v2996
        %v3003 = vld [vmem:[#allocation2 + $0x9] sm:$0xff]
        %v3004 = vld [vmem:[#allocation2 + $0x11] sm:$0xff]
        %v3005 = vld [vmem:[#allocation2 + $0x19] sm:$0xff]
        %v3006 = vld [vmem:[#allocation2 + $0x21] sm:$0xf]
        %s3007 = scalar_lea.vmem [#allocation5], 512
        %v3008 = vld [vmem:[%s3007] sm:$0xff]
        %v3009 = vld [vmem:[%s3007 + $0x8] sm:$0xff]
        %v3010 = vld [vmem:[%s3007 + $0x10] sm:$0xff]
        %v3011 = vld [vmem:[%s3007 + $0x18] sm:$0xff]
        %v3012 = vld [vmem:[%s3007 + $0x20] sm:$0xff]
        %v3013 = vld [vmem:[%s3007 + $0x28] sm:$0xff]
        %v3014 = vld [vmem:[%s3007 + $0x30] sm:$0xff]
        %v3015 = vld [vmem:[%s3007 + $0x38] sm:$0xff]
        %v3016 = vld [vmem:[%s3007 + $0x40] sm:$0xff]
        %v3017 = vld [vmem:[%s3007 + $0x48] sm:$0xff]
        %v3018 = vld [vmem:[%s3007 + $0x50] sm:$0xff]
        %v3019 = vld [vmem:[%s3007 + $0x58] sm:$0xff]
        %v3020 = vld [vmem:[%s3007 + $0x60] sm:$0xff]
        %v3021 = vld [vmem:[%s3007 + $0x68] sm:$0xff]
        %v3022 = vld [vmem:[%s3007 + $0x70] sm:$0xff]
        %v3023 = vld [vmem:[%s3007 + $0x78] sm:$0xff]
        %3024 = vmatprep.subr.mxu0 0.0
        %3025 = vmatpush1.msra.mxu0 %v3008
        %3026 = vmatprep.subr.mxu0 0.0
        %3027 = vmatpush1.msra.mxu0 %v3009
        %3028 = vmatprep.subr.mxu0 0.0
        %3029 = vmatpush1.msra.mxu0 %v3010
        %3030 = vmatprep.subr.mxu0 0.0
        %3031 = vmatpush1.msra.mxu0 %v3011
        %3032 = vmatprep.subr.mxu0 0.0
        %3033 = vmatpush1.msra.mxu0 %v3012
        %3034 = vmatprep.subr.mxu0 0.0
        %3035 = vmatpush1.msra.mxu0 %v3013
        %3036 = vmatprep.subr.mxu0 0.0
        %3037 = vmatpush1.msra.mxu0 %v3014
        %3038 = vmatprep.subr.mxu0 0.0
        %3039 = vmatpush1.msra.mxu0 %v3015
        %3040 = vmatprep.subr.mxu0 0.0
        %3041 = vmatpush1.msra.mxu0 %v3016
        %3042 = vmatprep.subr.mxu0 0.0
        %3043 = vmatpush1.msra.mxu0 %v3017
        %3044 = vmatprep.subr.mxu0 0.0
        %3045 = vmatpush1.msra.mxu0 %v3018
        %3046 = vmatprep.subr.mxu0 0.0
        %3047 = vmatpush1.msra.mxu0 %v3019
        %3048 = vmatprep.subr.mxu0 0.0
        %3049 = vmatpush1.msra.mxu0 %v3020
        %3050 = vmatprep.subr.mxu0 0.0
        %3051 = vmatpush1.msra.mxu0 %v3021
        %3052 = vmatprep.subr.mxu0 0.0
        %3053 = vmatpush1.msra.mxu0 %v3022
        %3054 = vmatprep.subr.mxu0 0.0
        %3055 = vmatpush1.msra.mxu0 %v3023
        %3056 = vmatprep.subr.mxu0 0.0
        %3057 = vmatpush1.msra.mxu0 0.0
        %3058 = vmatprep.subr.mxu0 0.0
        %3059 = vmatpush1.msra.mxu0 0.0
        %3060 = vmatprep.subr.mxu0 0.0
        %3061 = vmatpush1.msra.mxu0 0.0
        %3062 = vmatprep.subr.mxu0 0.0
        %3063 = vmatpush1.msra.mxu0 0.0
        %3064 = vmatprep.subr.mxu0 0.0
        %3065 = vmatpush1.msra.mxu0 0.0
        %3066 = vmatprep.subr.mxu0 0.0
        %3067 = vmatpush1.msra.mxu0 0.0
        %3068 = vmatprep.subr.mxu0 0.0
        %3069 = vmatpush1.msra.mxu0 0.0
        %3070 = vmatprep.subr.mxu0 0.0
        %3071 = vmatpush1.msra.mxu0 0.0
        %3072 = vmatprep.subr.mxu0 0.0
        %3073 = vmatpush1.msra.mxu0 0.0
        %3074 = vmatprep.subr.mxu0 0.0
        %3075 = vmatpush1.msra.mxu0 0.0
        %3076 = vmatprep.subr.mxu0 0.0
        %3077 = vmatpush1.msra.mxu0 0.0
        %3078 = vmatprep.subr.mxu0 0.0
        %3079 = vmatpush1.msra.mxu0 0.0
        %3080 = vmatprep.subr.mxu0 0.0
        %3081 = vmatpush1.msra.mxu0 0.0
        %3082 = vmatprep.subr.mxu0 0.0
        %3083 = vmatpush1.msra.mxu0 0.0
        %3084 = vmatprep.subr.mxu0 0.0
        %3085 = vmatpush1.msra.mxu0 0.0
        %3086 = vmatprep.subr.mxu0 0.0
        %3087 = vmatpush1.msra.mxu0 0.0
        %3088 = vmatprep.mubr.f32.mxu0 0.0
        %3089 = vmatmul.mubr.f32.gmra.mrb[0].mxu0 %v3003
        %v3090 = vpop.f32.mrb[0].mxu0
        %v3091 = vadd.f32 0.0, %v3090
        %v3092 = vpop.f32.mrb[0].mxu0
        %3093 = vmatprep.mubr.f32.mxu0 0.0
        %3094 = vmatmul.mubr.f32.gmra.mrb[0].mxu0 %v3004
        %v3095 = vpop.f32.mrb[0].mxu0
        %v3096 = vadd.f32 0.0, %v3095
        %v3097 = vpop.f32.mrb[0].mxu0
        %3098 = vmatprep.mubr.f32.mxu0 0.0
        %3099 = vmatmul.mubr.f32.gmra.mrb[0].mxu0 %v3005
        %v3100 = vpop.f32.mrb[0].mxu0
        %v3101 = vadd.f32 0.0, %v3100
        %v3102 = vpop.f32.mrb[0].mxu0
        %3103 = vmatprep.mubr.f32.mxu0 0.0
        %3104 = vmatmul.mubr.f32.gmra.mrb[0].mxu0 %v3006
        %v3105 = vpop.f32.mrb[0].mxu0
        %v3106 = vadd.f32 0.0, %v3105
        %v3107 = vpop.f32.mrb[0].mxu0
        %3108 = vdwg.mxu0
        %v3109 = vadd.f32 %v2999, %v3091
        %v3110 = vadd.f32 %v3000, %v3096
        %v3111 = vadd.f32 %v3001, %v3101
        %v3112 = vadd.f32 %v3002, %v3106
        %v3113 = vld [vmem:[#allocation2 + $0xa] sm:$0xff]
        %v3114 = vld [vmem:[#allocation2 + $0x12] sm:$0xff]
        %v3115 = vld [vmem:[#allocation2 + $0x1a] sm:$0xff]
        %v3116 = vld [vmem:[#allocation2 + $0x22] sm:$0xf]
        %s3117 = scalar_lea.vmem [#allocation5], 640
        %v3118 = vld [vmem:[%s3117] sm:$0xff]
        %v3119 = vld [vmem:[%s3117 + $0x8] sm:$0xff]
        %v3120 = vld [vmem:[%s3117 + $0x10] sm:$0xff]
        %v3121 = vld [vmem:[%s3117 + $0x18] sm:$0xff]
        %v3122 = vld [vmem:[%s3117 + $0x20] sm:$0xff]
        %v3123 = vld [vmem:[%s3117 + $0x28] sm:$0xff]
        %v3124 = vld [vmem:[%s3117 + $0x30] sm:$0xff]
        %v3125 = vld [vmem:[%s3117 + $0x38] sm:$0xff]
        %v3126 = vld [vmem:[%s3117 + $0x40] sm:$0xff]
        %v3127 = vld [vmem:[%s3117 + $0x48] sm:$0xff]
        %v3128 = vld [vmem:[%s3117 + $0x50] sm:$0xff]
        %v3129 = vld [vmem:[%s3117 + $0x58] sm:$0xff]
        %v3130 = vld [vmem:[%s3117 + $0x60] sm:$0xff]
        %v3131 = vld [vmem:[%s3117 + $0x68] sm:$0xff]
        %v3132 = vld [vmem:[%s3117 + $0x70] sm:$0xff]
        %v3133 = vld [vmem:[%s3117 + $0x78] sm:$0xff]
        %3134 = vmatprep.subr.mxu0 0.0
        %3135 = vmatpush1.msra.mxu0 %v3118
        %3136 = vmatprep.subr.mxu0 0.0
        %3137 = vmatpush1.msra.mxu0 %v3119
        %3138 = vmatprep.subr.mxu0 0.0
        %3139 = vmatpush1.msra.mxu0 %v3120
        %3140 = vmatprep.subr.mxu0 0.0
        %3141 = vmatpush1.msra.mxu0 %v3121
        %3142 = vmatprep.subr.mxu0 0.0
        %3143 = vmatpush1.msra.mxu0 %v3122
        %3144 = vmatprep.subr.mxu0 0.0
        %3145 = vmatpush1.msra.mxu0 %v3123
        %3146 = vmatprep.subr.mxu0 0.0
        %3147 = vmatpush1.msra.mxu0 %v3124
        %3148 = vmatprep.subr.mxu0 0.0
        %3149 = vmatpush1.msra.mxu0 %v3125
        %3150 = vmatprep.subr.mxu0 0.0
        %3151 = vmatpush1.msra.mxu0 %v3126
        %3152 = vmatprep.subr.mxu0 0.0
        %3153 = vmatpush1.msra.mxu0 %v3127
        %3154 = vmatprep.subr.mxu0 0.0
        %3155 = vmatpush1.msra.mxu0 %v3128
        %3156 = vmatprep.subr.mxu0 0.0
        %3157 = vmatpush1.msra.mxu0 %v3129
        %3158 = vmatprep.subr.mxu0 0.0
        %3159 = vmatpush1.msra.mxu0 %v3130
        %3160 = vmatprep.subr.mxu0 0.0
        %3161 = vmatpush1.msra.mxu0 %v3131
        %3162 = vmatprep.subr.mxu0 0.0
        %3163 = vmatpush1.msra.mxu0 %v3132
        %3164 = vmatprep.subr.mxu0 0.0
        %3165 = vmatpush1.msra.mxu0 %v3133
        %3166 = vmatprep.subr.mxu0 0.0
        %3167 = vmatpush1.msra.mxu0 0.0
        %3168 = vmatprep.subr.mxu0 0.0
        %3169 = vmatpush1.msra.mxu0 0.0
        %3170 = vmatprep.subr.mxu0 0.0
        %3171 = vmatpush1.msra.mxu0 0.0
        %3172 = vmatprep.subr.mxu0 0.0
        %3173 = vmatpush1.msra.mxu0 0.0
        %3174 = vmatprep.subr.mxu0 0.0
        %3175 = vmatpush1.msra.mxu0 0.0
        %3176 = vmatprep.subr.mxu0 0.0
        %3177 = vmatpush1.msra.mxu0 0.0
        %3178 = vmatprep.subr.mxu0 0.0
        %3179 = vmatpush1.msra.mxu0 0.0
        %3180 = vmatprep.subr.mxu0 0.0
        %3181 = vmatpush1.msra.mxu0 0.0
        %3182 = vmatprep.subr.mxu0 0.0
        %3183 = vmatpush1.msra.mxu0 0.0
        %3184 = vmatprep.subr.mxu0 0.0
        %3185 = vmatpush1.msra.mxu0 0.0
        %3186 = vmatprep.subr.mxu0 0.0
        %3187 = vmatpush1.msra.mxu0 0.0
        %3188 = vmatprep.subr.mxu0 0.0
        %3189 = vmatpush1.msra.mxu0 0.0
        %3190 = vmatprep.subr.mxu0 0.0
        %3191 = vmatpush1.msra.mxu0 0.0
        %3192 = vmatprep.subr.mxu0 0.0
        %3193 = vmatpush1.msra.mxu0 0.0
        %3194 = vmatprep.subr.mxu0 0.0
        %3195 = vmatpush1.msra.mxu0 0.0
        %3196 = vmatprep.subr.mxu0 0.0
        %3197 = vmatpush1.msra.mxu0 0.0
        %3198 = vmatprep.mubr.f32.mxu0 0.0
        %3199 = vmatmul.mubr.f32.gmra.mrb[0].mxu0 %v3113
        %v3200 = vpop.f32.mrb[0].mxu0
        %v3201 = vadd.f32 0.0, %v3200
        %v3202 = vpop.f32.mrb[0].mxu0
        %3203 = vmatprep.mubr.f32.mxu0 0.0
        %3204 = vmatmul.mubr.f32.gmra.mrb[0].mxu0 %v3114
        %v3205 = vpop.f32.mrb[0].mxu0
        %v3206 = vadd.f32 0.0, %v3205
        %v3207 = vpop.f32.mrb[0].mxu0
        %3208 = vmatprep.mubr.f32.mxu0 0.0
        %3209 = vmatmul.mubr.f32.gmra.mrb[0].mxu0 %v3115
        %v3210 = vpop.f32.mrb[0].mxu0
        %v3211 = vadd.f32 0.0, %v3210
        %v3212 = vpop.f32.mrb[0].mxu0
        %3213 = vmatprep.mubr.f32.mxu0 0.0
        %3214 = vmatmul.mubr.f32.gmra.mrb[0].mxu0 %v3116
        %v3215 = vpop.f32.mrb[0].mxu0
        %v3216 = vadd.f32 0.0, %v3215
        %v3217 = vpop.f32.mrb[0].mxu0
        %3218 = vdwg.mxu0
        %v3219 = vadd.f32 %v3109, %v3201
        %v3220 = vadd.f32 %v3110, %v3206
        %v3221 = vadd.f32 %v3111, %v3211
        %v3222 = vadd.f32 %v3112, %v3216
        %v3223 = vld [vmem:[#allocation2 + $0x10] sm:$0xff]
        %v3224 = vld [vmem:[#allocation2 + $0x18] sm:$0xff]
        %v3225 = vld [vmem:[#allocation2 + $0x20] sm:$0xff]
        %v3226 = vld [vmem:[#allocation2 + $0x28] sm:$0xf]
        %s3227 = scalar_lea.vmem [#allocation5], 768
        %v3228 = vld [vmem:[%s3227] sm:$0xff]
        %v3229 = vld [vmem:[%s3227 + $0x8] sm:$0xff]
        %v3230 = vld [vmem:[%s3227 + $0x10] sm:$0xff]
        %v3231 = vld [vmem:[%s3227 + $0x18] sm:$0xff]
        %v3232 = vld [vmem:[%s3227 + $0x20] sm:$0xff]
        %v3233 = vld [vmem:[%s3227 + $0x28] sm:$0xff]
        %v3234 = vld [vmem:[%s3227 + $0x30] sm:$0xff]
        %v3235 = vld [vmem:[%s3227 + $0x38] sm:$0xff]
        %v3236 = vld [vmem:[%s3227 + $0x40] sm:$0xff]
        %v3237 = vld [vmem:[%s3227 + $0x48] sm:$0xff]
        %v3238 = vld [vmem:[%s3227 + $0x50] sm:$0xff]
        %v3239 = vld [vmem:[%s3227 + $0x58] sm:$0xff]
        %v3240 = vld [vmem:[%s3227 + $0x60] sm:$0xff]
        %v3241 = vld [vmem:[%s3227 + $0x68] sm:$0xff]
        %v3242 = vld [vmem:[%s3227 + $0x70] sm:$0xff]
        %v3243 = vld [vmem:[%s3227 + $0x78] sm:$0xff]
        %3244 = vmatprep.subr.mxu0 0.0
        %3245 = vmatpush1.msra.mxu0 %v3228
        %3246 = vmatprep.subr.mxu0 0.0
        %3247 = vmatpush1.msra.mxu0 %v3229
        %3248 = vmatprep.subr.mxu0 0.0
        %3249 = vmatpush1.msra.mxu0 %v3230
        %3250 = vmatprep.subr.mxu0 0.0
        %3251 = vmatpush1.msra.mxu0 %v3231
        %3252 = vmatprep.subr.mxu0 0.0
        %3253 = vmatpush1.msra.mxu0 %v3232
        %3254 = vmatprep.subr.mxu0 0.0
        %3255 = vmatpush1.msra.mxu0 %v3233
        %3256 = vmatprep.subr.mxu0 0.0
        %3257 = vmatpush1.msra.mxu0 %v3234
        %3258 = vmatprep.subr.mxu0 0.0
        %3259 = vmatpush1.msra.mxu0 %v3235
        %3260 = vmatprep.subr.mxu0 0.0
        %3261 = vmatpush1.msra.mxu0 %v3236
        %3262 = vmatprep.subr.mxu0 0.0
        %3263 = vmatpush1.msra.mxu0 %v3237
        %3264 = vmatprep.subr.mxu0 0.0
        %3265 = vmatpush1.msra.mxu0 %v3238
        %3266 = vmatprep.subr.mxu0 0.0
        %3267 = vmatpush1.msra.mxu0 %v3239
        %3268 = vmatprep.subr.mxu0 0.0
        %3269 = vmatpush1.msra.mxu0 %v3240
        %3270 = vmatprep.subr.mxu0 0.0
        %3271 = vmatpush1.msra.mxu0 %v3241
        %3272 = vmatprep.subr.mxu0 0.0
        %3273 = vmatpush1.msra.mxu0 %v3242
        %3274 = vmatprep.subr.mxu0 0.0
        %3275 = vmatpush1.msra.mxu0 %v3243
        %3276 = vmatprep.subr.mxu0 0.0
        %3277 = vmatpush1.msra.mxu0 0.0
        %3278 = vmatprep.subr.mxu0 0.0
        %3279 = vmatpush1.msra.mxu0 0.0
        %3280 = vmatprep.subr.mxu0 0.0
        %3281 = vmatpush1.msra.mxu0 0.0
        %3282 = vmatprep.subr.mxu0 0.0
        %3283 = vmatpush1.msra.mxu0 0.0
        %3284 = vmatprep.subr.mxu0 0.0
        %3285 = vmatpush1.msra.mxu0 0.0
        %3286 = vmatprep.subr.mxu0 0.0
        %3287 = vmatpush1.msra.mxu0 0.0
        %3288 = vmatprep.subr.mxu0 0.0
        %3289 = vmatpush1.msra.mxu0 0.0
        %3290 = vmatprep.subr.mxu0 0.0
        %3291 = vmatpush1.msra.mxu0 0.0
        %3292 = vmatprep.subr.mxu0 0.0
        %3293 = vmatpush1.msra.mxu0 0.0
        %3294 = vmatprep.subr.mxu0 0.0
        %3295 = vmatpush1.msra.mxu0 0.0
        %3296 = vmatprep.subr.mxu0 0.0
        %3297 = vmatpush1.msra.mxu0 0.0
        %3298 = vmatprep.subr.mxu0 0.0
        %3299 = vmatpush1.msra.mxu0 0.0
        %3300 = vmatprep.subr.mxu0 0.0
        %3301 = vmatpush1.msra.mxu0 0.0
        %3302 = vmatprep.subr.mxu0 0.0
        %3303 = vmatpush1.msra.mxu0 0.0
        %3304 = vmatprep.subr.mxu0 0.0
        %3305 = vmatpush1.msra.mxu0 0.0
        %3306 = vmatprep.subr.mxu0 0.0
        %3307 = vmatpush1.msra.mxu0 0.0
        %3308 = vmatprep.mubr.f32.mxu0 0.0
        %3309 = vmatmul.mubr.f32.gmra.mrb[0].mxu0 %v3223
        %v3310 = vpop.f32.mrb[0].mxu0
        %v3311 = vadd.f32 0.0, %v3310
        %v3312 = vpop.f32.mrb[0].mxu0
        %3313 = vmatprep.mubr.f32.mxu0 0.0
        %3314 = vmatmul.mubr.f32.gmra.mrb[0].mxu0 %v3224
        %v3315 = vpop.f32.mrb[0].mxu0
        %v3316 = vadd.f32 0.0, %v3315
        %v3317 = vpop.f32.mrb[0].mxu0
        %3318 = vmatprep.mubr.f32.mxu0 0.0
        %3319 = vmatmul.mubr.f32.gmra.mrb[0].mxu0 %v3225
        %v3320 = vpop.f32.mrb[0].mxu0
        %v3321 = vadd.f32 0.0, %v3320
        %v3322 = vpop.f32.mrb[0].mxu0
        %3323 = vmatprep.mubr.f32.mxu0 0.0
        %3324 = vmatmul.mubr.f32.gmra.mrb[0].mxu0 %v3226
        %v3325 = vpop.f32.mrb[0].mxu0
        %v3326 = vadd.f32 0.0, %v3325
        %v3327 = vpop.f32.mrb[0].mxu0
        %3328 = vdwg.mxu0
        %v3329 = vadd.f32 %v3219, %v3311
        %v3330 = vadd.f32 %v3220, %v3316
        %v3331 = vadd.f32 %v3221, %v3321
        %v3332 = vadd.f32 %v3222, %v3326
        %v3333 = vld [vmem:[#allocation2 + $0x11] sm:$0xff]
        %v3334 = vld [vmem:[#allocation2 + $0x19] sm:$0xff]
        %v3335 = vld [vmem:[#allocation2 + $0x21] sm:$0xff]
        %v3336 = vld [vmem:[#allocation2 + $0x29] sm:$0xf]
        %s3337 = scalar_lea.vmem [#allocation5], 896
        %v3338 = vld [vmem:[%s3337] sm:$0xff]
        %v3339 = vld [vmem:[%s3337 + $0x8] sm:$0xff]
        %v3340 = vld [vmem:[%s3337 + $0x10] sm:$0xff]
        %v3341 = vld [vmem:[%s3337 + $0x18] sm:$0xff]
        %v3342 = vld [vmem:[%s3337 + $0x20] sm:$0xff]
        %v3343 = vld [vmem:[%s3337 + $0x28] sm:$0xff]
        %v3344 = vld [vmem:[%s3337 + $0x30] sm:$0xff]
        %v3345 = vld [vmem:[%s3337 + $0x38] sm:$0xff]
        %v3346 = vld [vmem:[%s3337 + $0x40] sm:$0xff]
        %v3347 = vld [vmem:[%s3337 + $0x48] sm:$0xff]
        %v3348 = vld [vmem:[%s3337 + $0x50] sm:$0xff]
        %v3349 = vld [vmem:[%s3337 + $0x58] sm:$0xff]
        %v3350 = vld [vmem:[%s3337 + $0x60] sm:$0xff]
        %v3351 = vld [vmem:[%s3337 + $0x68] sm:$0xff]
        %v3352 = vld [vmem:[%s3337 + $0x70] sm:$0xff]
        %v3353 = vld [vmem:[%s3337 + $0x78] sm:$0xff]
        %3354 = vmatprep.subr.mxu0 0.0
        %3355 = vmatpush1.msra.mxu0 %v3338
        %3356 = vmatprep.subr.mxu0 0.0
        %3357 = vmatpush1.msra.mxu0 %v3339
        %3358 = vmatprep.subr.mxu0 0.0
        %3359 = vmatpush1.msra.mxu0 %v3340
        %3360 = vmatprep.subr.mxu0 0.0
        %3361 = vmatpush1.msra.mxu0 %v3341
        %3362 = vmatprep.subr.mxu0 0.0
        %3363 = vmatpush1.msra.mxu0 %v3342
        %3364 = vmatprep.subr.mxu0 0.0
        %3365 = vmatpush1.msra.mxu0 %v3343
        %3366 = vmatprep.subr.mxu0 0.0
        %3367 = vmatpush1.msra.mxu0 %v3344
        %3368 = vmatprep.subr.mxu0 0.0
        %3369 = vmatpush1.msra.mxu0 %v3345
        %3370 = vmatprep.subr.mxu0 0.0
        %3371 = vmatpush1.msra.mxu0 %v3346
        %3372 = vmatprep.subr.mxu0 0.0
        %3373 = vmatpush1.msra.mxu0 %v3347
        %3374 = vmatprep.subr.mxu0 0.0
        %3375 = vmatpush1.msra.mxu0 %v3348
        %3376 = vmatprep.subr.mxu0 0.0
        %3377 = vmatpush1.msra.mxu0 %v3349
        %3378 = vmatprep.subr.mxu0 0.0
        %3379 = vmatpush1.msra.mxu0 %v3350
        %3380 = vmatprep.subr.mxu0 0.0
        %3381 = vmatpush1.msra.mxu0 %v3351
        %3382 = vmatprep.subr.mxu0 0.0
        %3383 = vmatpush1.msra.mxu0 %v3352
        %3384 = vmatprep.subr.mxu0 0.0
        %3385 = vmatpush1.msra.mxu0 %v3353
        %3386 = vmatprep.subr.mxu0 0.0
        %3387 = vmatpush1.msra.mxu0 0.0
        %3388 = vmatprep.subr.mxu0 0.0
        %3389 = vmatpush1.msra.mxu0 0.0
        %3390 = vmatprep.subr.mxu0 0.0
        %3391 = vmatpush1.msra.mxu0 0.0
        %3392 = vmatprep.subr.mxu0 0.0
        %3393 = vmatpush1.msra.mxu0 0.0
        %3394 = vmatprep.subr.mxu0 0.0
        %3395 = vmatpush1.msra.mxu0 0.0
        %3396 = vmatprep.subr.mxu0 0.0
        %3397 = vmatpush1.msra.mxu0 0.0
        %3398 = vmatprep.subr.mxu0 0.0
        %3399 = vmatpush1.msra.mxu0 0.0
        %3400 = vmatprep.subr.mxu0 0.0
        %3401 = vmatpush1.msra.mxu0 0.0
        %3402 = vmatprep.subr.mxu0 0.0
        %3403 = vmatpush1.msra.mxu0 0.0
        %3404 = vmatprep.subr.mxu0 0.0
        %3405 = vmatpush1.msra.mxu0 0.0
        %3406 = vmatprep.subr.mxu0 0.0
        %3407 = vmatpush1.msra.mxu0 0.0
        %3408 = vmatprep.subr.mxu0 0.0
        %3409 = vmatpush1.msra.mxu0 0.0
        %3410 = vmatprep.subr.mxu0 0.0
        %3411 = vmatpush1.msra.mxu0 0.0
        %3412 = vmatprep.subr.mxu0 0.0
        %3413 = vmatpush1.msra.mxu0 0.0
        %3414 = vmatprep.subr.mxu0 0.0
        %3415 = vmatpush1.msra.mxu0 0.0
        %3416 = vmatprep.subr.mxu0 0.0
        %3417 = vmatpush1.msra.mxu0 0.0
        %3418 = vmatprep.mubr.f32.mxu0 0.0
        %3419 = vmatmul.mubr.f32.gmra.mrb[0].mxu0 %v3333
        %v3420 = vpop.f32.mrb[0].mxu0
        %v3421 = vadd.f32 0.0, %v3420
        %v3422 = vpop.f32.mrb[0].mxu0
        %3423 = vmatprep.mubr.f32.mxu0 0.0
        %3424 = vmatmul.mubr.f32.gmra.mrb[0].mxu0 %v3334
        %v3425 = vpop.f32.mrb[0].mxu0
        %v3426 = vadd.f32 0.0, %v3425
        %v3427 = vpop.f32.mrb[0].mxu0
        %3428 = vmatprep.mubr.f32.mxu0 0.0
        %3429 = vmatmul.mubr.f32.gmra.mrb[0].mxu0 %v3335
        %v3430 = vpop.f32.mrb[0].mxu0
        %v3431 = vadd.f32 0.0, %v3430
        %v3432 = vpop.f32.mrb[0].mxu0
        %3433 = vmatprep.mubr.f32.mxu0 0.0
        %3434 = vmatmul.mubr.f32.gmra.mrb[0].mxu0 %v3336
        %v3435 = vpop.f32.mrb[0].mxu0
        %v3436 = vadd.f32 0.0, %v3435
        %v3437 = vpop.f32.mrb[0].mxu0
        %3438 = vdwg.mxu0
        %v3439 = vadd.f32 %v3329, %v3421
        %v3440 = vadd.f32 %v3330, %v3426
        %v3441 = vadd.f32 %v3331, %v3431
        %v3442 = vadd.f32 %v3332, %v3436
        %v3443 = vld [vmem:[#allocation2 + $0x12] sm:$0xff]
        %v3444 = vld [vmem:[#allocation2 + $0x1a] sm:$0xff]
        %v3445 = vld [vmem:[#allocation2 + $0x22] sm:$0xff]
        %v3446 = vld [vmem:[#allocation2 + $0x2a] sm:$0xf]
        %s3447 = scalar_lea.vmem [#allocation5], 1024
        %v3448 = vld [vmem:[%s3447] sm:$0xff]
        %v3449 = vld [vmem:[%s3447 + $0x8] sm:$0xff]
        %v3450 = vld [vmem:[%s3447 + $0x10] sm:$0xff]
        %v3451 = vld [vmem:[%s3447 + $0x18] sm:$0xff]
        %v3452 = vld [vmem:[%s3447 + $0x20] sm:$0xff]
        %v3453 = vld [vmem:[%s3447 + $0x28] sm:$0xff]
        %v3454 = vld [vmem:[%s3447 + $0x30] sm:$0xff]
        %v3455 = vld [vmem:[%s3447 + $0x38] sm:$0xff]
        %v3456 = vld [vmem:[%s3447 + $0x40] sm:$0xff]
        %v3457 = vld [vmem:[%s3447 + $0x48] sm:$0xff]
        %v3458 = vld [vmem:[%s3447 + $0x50] sm:$0xff]
        %v3459 = vld [vmem:[%s3447 + $0x58] sm:$0xff]
        %v3460 = vld [vmem:[%s3447 + $0x60] sm:$0xff]
        %v3461 = vld [vmem:[%s3447 + $0x68] sm:$0xff]
        %v3462 = vld [vmem:[%s3447 + $0x70] sm:$0xff]
        %v3463 = vld [vmem:[%s3447 + $0x78] sm:$0xff]
        %3464 = vmatprep.subr.mxu0 0.0
        %3465 = vmatpush1.msra.mxu0 %v3448
        %3466 = vmatprep.subr.mxu0 0.0
        %3467 = vmatpush1.msra.mxu0 %v3449
        %3468 = vmatprep.subr.mxu0 0.0
        %3469 = vmatpush1.msra.mxu0 %v3450
        %3470 = vmatprep.subr.mxu0 0.0
        %3471 = vmatpush1.msra.mxu0 %v3451
        %3472 = vmatprep.subr.mxu0 0.0
        %3473 = vmatpush1.msra.mxu0 %v3452
        %3474 = vmatprep.subr.mxu0 0.0
        %3475 = vmatpush1.msra.mxu0 %v3453
        %3476 = vmatprep.subr.mxu0 0.0
        %3477 = vmatpush1.msra.mxu0 %v3454
        %3478 = vmatprep.subr.mxu0 0.0
        %3479 = vmatpush1.msra.mxu0 %v3455
        %3480 = vmatprep.subr.mxu0 0.0
        %3481 = vmatpush1.msra.mxu0 %v3456
        %3482 = vmatprep.subr.mxu0 0.0
        %3483 = vmatpush1.msra.mxu0 %v3457
        %3484 = vmatprep.subr.mxu0 0.0
        %3485 = vmatpush1.msra.mxu0 %v3458
        %3486 = vmatprep.subr.mxu0 0.0
        %3487 = vmatpush1.msra.mxu0 %v3459
        %3488 = vmatprep.subr.mxu0 0.0
        %3489 = vmatpush1.msra.mxu0 %v3460
        %3490 = vmatprep.subr.mxu0 0.0
        %3491 = vmatpush1.msra.mxu0 %v3461
        %3492 = vmatprep.subr.mxu0 0.0
        %3493 = vmatpush1.msra.mxu0 %v3462
        %3494 = vmatprep.subr.mxu0 0.0
        %3495 = vmatpush1.msra.mxu0 %v3463
        %3496 = vmatprep.subr.mxu0 0.0
        %3497 = vmatpush1.msra.mxu0 0.0
        %3498 = vmatprep.subr.mxu0 0.0
        %3499 = vmatpush1.msra.mxu0 0.0
        %3500 = vmatprep.subr.mxu0 0.0
        %3501 = vmatpush1.msra.mxu0 0.0
        %3502 = vmatprep.subr.mxu0 0.0
        %3503 = vmatpush1.msra.mxu0 0.0
        %3504 = vmatprep.subr.mxu0 0.0
        %3505 = vmatpush1.msra.mxu0 0.0
        %3506 = vmatprep.subr.mxu0 0.0
        %3507 = vmatpush1.msra.mxu0 0.0
        %3508 = vmatprep.subr.mxu0 0.0
        %3509 = vmatpush1.msra.mxu0 0.0
        %3510 = vmatprep.subr.mxu0 0.0
        %3511 = vmatpush1.msra.mxu0 0.0
        %3512 = vmatprep.subr.mxu0 0.0
        %3513 = vmatpush1.msra.mxu0 0.0
        %3514 = vmatprep.subr.mxu0 0.0
        %3515 = vmatpush1.msra.mxu0 0.0
        %3516 = vmatprep.subr.mxu0 0.0
        %3517 = vmatpush1.msra.mxu0 0.0
        %3518 = vmatprep.subr.mxu0 0.0
        %3519 = vmatpush1.msra.mxu0 0.0
        %3520 = vmatprep.subr.mxu0 0.0
        %3521 = vmatpush1.msra.mxu0 0.0
        %3522 = vmatprep.subr.mxu0 0.0
        %3523 = vmatpush1.msra.mxu0 0.0
        %3524 = vmatprep.subr.mxu0 0.0
        %3525 = vmatpush1.msra.mxu0 0.0
        %3526 = vmatprep.subr.mxu0 0.0
        %3527 = vmatpush1.msra.mxu0 0.0
        %3528 = vmatprep.mubr.f32.mxu0 0.0
        %3529 = vmatmul.mubr.f32.gmra.mrb[0].mxu0 %v3443
        %v3530 = vpop.f32.mrb[0].mxu0
        %v3531 = vadd.f32 0.0, %v3530
        %v3532 = vpop.f32.mrb[0].mxu0
        %3533 = vmatprep.mubr.f32.mxu0 0.0
        %3534 = vmatmul.mubr.f32.gmra.mrb[0].mxu0 %v3444
        %v3535 = vpop.f32.mrb[0].mxu0
        %v3536 = vadd.f32 0.0, %v3535
        %v3537 = vpop.f32.mrb[0].mxu0
        %3538 = vmatprep.mubr.f32.mxu0 0.0
        %3539 = vmatmul.mubr.f32.gmra.mrb[0].mxu0 %v3445
        %v3540 = vpop.f32.mrb[0].mxu0
        %v3541 = vadd.f32 0.0, %v3540
        %v3542 = vpop.f32.mrb[0].mxu0
        %3543 = vmatprep.mubr.f32.mxu0 0.0
        %3544 = vmatmul.mubr.f32.gmra.mrb[0].mxu0 %v3446
        %v3545 = vpop.f32.mrb[0].mxu0
        %v3546 = vadd.f32 0.0, %v3545
        %v3547 = vpop.f32.mrb[0].mxu0
        %3548 = vdwg.mxu0
        %v3549 = vadd.f32 %v3439, %v3531
        %v3550 = vadd.f32 %v3440, %v3536
        %v3551 = vadd.f32 %v3441, %v3541
        %v3552 = vadd.f32 %v3442, %v3546
        %3553 = vst [vmem:[%s328] sm:$0xff] 0.0
        %3554 = vst [vmem:[%s328 + $0x8] sm:$0xff] 0.0
        %3555 = vst [vmem:[%s328 + $0x10] sm:$0xff] 0.0
        %3556 = vst [vmem:[%s328 + $0x18] sm:$0xff] 0.0
        %3557 = vst [vmem:[%s328 + $0x20] sm:$0xff] 0.0
        %3558 = vst [vmem:[%s328 + $0x28] sm:$0xff] 0.0
        %3559 = vst [vmem:[%s328 + $0x30] sm:$0xff] 0.0
        %3560 = vst [vmem:[%s328 + $0x38] sm:$0xff] 0.0
        %v3561 = vld [vmem:[%s6] sm:$0x1]
        %v3563 = vlaneseq
        %v3564 = vshrl.u32 %v3563, 7
        %v3565 = vsub.s32 0, %v3564
        %v3566 = vrot.slane %v3561, %v3565
        %v3568 = vadd.f32 %v3549, %v3566
        %v3569 = vadd.f32 %v3550, %v3566
        %v3570 = vadd.f32 %v3551, %v3566
        %v3571 = vadd.f32 %v3552, %v3566
        %3572 = vst [vmem:[%s328] sm:$0xff] %v3568
        %3573 = vst [vmem:[%s328 + $0x8] sm:$0xff] %v3569
        %3574 = vst [vmem:[%s328 + $0x10] sm:$0xff] %v3570
        %3575 = vst [vmem:[%s328 + $0x18] sm:$0xf] %v3571
        %p3576 = scmp.lt.s32.totalorder %s20, 1
        %s3577 = scalar_select %p3576, %s20, 1
        %s3578 = smul.addr %s3577, 8
        %s3579 = smul.addr %s3578, 8
        %s3580 = scalar_lea.vmem %s7, %s3579
        // Predicated region
        $region57: #{decoder_forward.5} parent=47 // pred_check
          %p3581 = pneg %p195
        $region58: #{decoder_forward.5} parent=47 // pred_check_branch
          %3583 = sbr.rel (%p3581) target = $region60
        $region59: #{decoder_forward.5} parent=47 // pred_region
          _
        $region60: #{decoder_forward.5} parent=47 // pred_fallthru
          _
      $region48: #{decoder_forward.5} parent=5 // pred_fallthru
        _
      %p3584 = scmp.le.s32.totalorder 2, %s15
      // Predicated region
      $region61: #{decoder_forward.5} parent=5 // pred_check
        %p3585 = pneg %p3584
      $region62: #{decoder_forward.5} parent=5 // pred_check_branch
        %3587 = sbr.rel (%p3585) target = $region64
      $region63: #{decoder_forward.5} parent=5 // pred_region
        %s3588 = ssub.s32 %s15, 2
        // Predicated region
        $region65: #{decoder_forward.5} parent=63 // pred_check
          %p3589 = pneg %p201
        $region66: #{decoder_forward.5} parent=63 // pred_check_branch
          %3591 = sbr.rel (%p3589) target = $region68
        $region67: #{decoder_forward.5} parent=63 // pred_region
          %p3592 = scmp.lt.s32.totalorder %s21, 1
          %s3593 = scalar_select %p3592, %s21, 1
          %s3594 = smul.addr %s3593, 8
          %s3595 = smul.addr %s3594, 8
          %s3596 = scalar_lea.vmem %s7, %s3595
        $region68: #{decoder_forward.5} parent=63 // pred_fallthru
          _
      $region64: #{decoder_forward.5} parent=5 // pred_fallthru
        _
    $region6: #{decoder_forward.5} parent=1 // loop_footer
      %s19 = sadd.s32 1, %s15
    $region7: #{decoder_forward.5} parent=1 // loop_footer_branch
      %14 = sbr.rel target = $region3
    $region8: #{decoder_forward.5} parent=1 // loop_exit
      _
    %3597 = vsyncpa [#allocation4], 1
    %s3598 = scalar_lea.sflag [#allocation4], 1
    %3599 = vsyncpa %s3598, 1
    %3600 = vsyncpa [#allocation6], 1

// kernel: decoder_forward.7
$region0: #{decoder_forward.7}
  #allocation0 [shape = 'u32[]', space=smem, size = 0x4, offset = 0x4, fixed_abs, tag = 'smem constant byte address 0x4 - core index']
  #allocation1 [shape = 'u32[144,128]{1,0:T(1,128)}', space=vmem, size = 0x12000, scoped, tag = 'internal scratch']
  #allocation2 [shape = 'f32[46,128]{1,0:T(8,128)}', space=vmem, size = 0x6000, scoped, tag = 'scratch operand']
  %s0 = inlined_call_operand.vmem [shape: f32[2,64,128], index: 0, kind: input, shape index: {}]
  %s1 = inlined_call_operand.vmem [shape: f32[2,64,128], index: 1, kind: input, shape index: {}]
  %s2 = inlined_call_operand.vmem [shape: f32[9,128,128], index: 2, kind: input, shape index: {}]
  %s3 = inlined_call_operand.vmem [shape: f32[9,128,128], index: 3, kind: input, shape index: {}]
  %s4 = inlined_call_operand.vmem [shape: f32[1,128], index: 4, kind: input, shape index: {}]
  %s5 = inlined_call_operand.vmem [shape: f32[9,128,128], index: 5, kind: input, shape index: {}]
  %s6 = inlined_call_operand.vmem [shape: f32[1,128], index: 6, kind: input, shape index: {}]
  %s7 = inlined_call_operand.vmem [shape: f32[2,64,128], index: 7, kind: output, shape index: {}]
  %s8 = sld [smem:[#allocation0]]
  $region61: #{decoder_forward.7} parent=0
    _
  %s10 = ssub.s32 1, %s8
  %s11 = scalar_select 0, %s10, %s8
  loop: start=0, step=1, limit=4
  $region2: #{decoder_forward.7} parent=0 // loop_pre_header
    _
  $region3: #{decoder_forward.7} parent=0 // loop_header
    %s13 = sphi 0, %s17
    %p14 = scmp.ge.s32.totalorder %s13, 4
    %s23 = sphi 0, %s25
    %s26 = sphi 0, %s23
    %s27 = sphi 0, %s26
    %s43 = sphi 0, %s27
    %s49 = sphi 0, %s51
    %s52 = sphi 0, %s49
    %s53 = sphi 0, %s52
    %s69 = sphi 0, %s53
    %s73 = sphi 0, %s73
    %s75 = sphi 0, %s73
    %s76 = sphi 0, %s75
    %s90 = sphi 0, %s76
    %s94 = sphi 0, %s94
    %s96 = sphi 0, %s94
    %s97 = sphi 0, %s96
    %s111 = sphi 0, %s97
    %s115 = sphi 0, %s115
    %s117 = sphi 0, %s115
    %s118 = sphi 0, %s117
    %s132 = sphi 0, %s118
    %s136 = sphi 0, %s136
    %s138 = sphi 0, %s136
    %s139 = sphi 0, %s138
    %s153 = sphi 0, %s139
    %s157 = sphi 0, %s157
    %s159 = sphi 0, %s157
    %s160 = sphi 0, %s159
    %s174 = sphi 0, %s160
    %s180 = sphi 0, %s182
    %s183 = sphi 0, %s180
    %s184 = sphi 0, %s183
    %s200 = sphi 0, %s184
  $region4: #{decoder_forward.7} parent=0 // loop_header_branch
    %16 = sbr.rel (%p14) target = $region8
  $region5: #{decoder_forward.7} parent=0 // loop_body
    %s18 = ssub.s32 %s13, 1
    %s19 = ssub.s32 %s13, 2
    %s20 = sadd.s32 %s13, 1
    %s21 = ssub.s32 %s13, %s20
    %p22 = scmp.eq.s32.totalorder %s21, 0
    %s24 = sadd.s32 %s23, 1
    %s25 = scalar_select %p22, %s23, %s24
    %p28 = pneg %p22
    %p29 = scmp.eq.s32.totalorder %s13, 1
    %p30 = por %p28, %p29
    %p31 = scmp.ne.s32.totalorder %s23, %s26
    %p32 = scmp.eq.s32.totalorder %s13, 0
    %p33 = por %p31, %p32
    %p34 = scmp.ne.s32.totalorder %s23, %s26
    %p35 = scmp.eq.s32.totalorder %s18, 1
    %p36 = por %p34, %p35
    %p37 = scmp.ne.s32.totalorder %s26, %s27
    %p38 = scmp.eq.s32.totalorder %s18, 0
    %p39 = por %p37, %p38
    %p40 = scmp.ne.s32.totalorder %s26, %s27
    %p41 = scmp.eq.s32.totalorder %s19, 1
    %p42 = por %p40, %p41
    %p44 = scmp.ne.s32.totalorder %s27, %s43
    %p45 = scmp.eq.s32.totalorder %s19, 0
    %p46 = por %p44, %p45
    %s47 = ssub.s32 %s13, %s20
    %p48 = scmp.eq.s32.totalorder %s47, 0
    %s50 = sadd.s32 %s49, 1
    %s51 = scalar_select %p48, %s49, %s50
    %p54 = pneg %p48
    %p55 = scmp.eq.s32.totalorder %s13, 1
    %p56 = por %p54, %p55
    %p57 = scmp.ne.s32.totalorder %s49, %s52
    %p58 = scmp.eq.s32.totalorder %s13, 0
    %p59 = por %p57, %p58
    %p60 = scmp.ne.s32.totalorder %s49, %s52
    %p61 = scmp.eq.s32.totalorder %s18, 1
    %p62 = por %p60, %p61
    %p63 = scmp.ne.s32.totalorder %s52, %s53
    %p64 = scmp.eq.s32.totalorder %s18, 0
    %p65 = por %p63, %p64
    %p66 = scmp.ne.s32.totalorder %s52, %s53
    %p67 = scmp.eq.s32.totalorder %s19, 1
    %p68 = por %p66, %p67
    %p70 = scmp.ne.s32.totalorder %s53, %s69
    %p71 = scmp.eq.s32.totalorder %s19, 0
    %p72 = por %p70, %p71
    %s74 = sadd.s32 %s73, 1
    %p77 = scmp.eq.s32.totalorder %s13, 1
    %p78 = scmp.ne.s32.totalorder %s73, %s75
    %p79 = scmp.eq.s32.totalorder %s13, 0
    %p80 = por %p78, %p79
    %p81 = scmp.ne.s32.totalorder %s73, %s75
    %p82 = scmp.eq.s32.totalorder %s18, 1
    %p83 = por %p81, %p82
    %p84 = scmp.ne.s32.totalorder %s75, %s76
    %p85 = scmp.eq.s32.totalorder %s18, 0
    %p86 = por %p84, %p85
    %p87 = scmp.ne.s32.totalorder %s75, %s76
    %p88 = scmp.eq.s32.totalorder %s19, 1
    %p89 = por %p87, %p88
    %p91 = scmp.ne.s32.totalorder %s76, %s90
    %p92 = scmp.eq.s32.totalorder %s19, 0
    %p93 = por %p91, %p92
    %s95 = sadd.s32 %s94, 1
    %p98 = scmp.eq.s32.totalorder %s13, 1
    %p99 = scmp.ne.s32.totalorder %s94, %s96
    %p100 = scmp.eq.s32.totalorder %s13, 0
    %p101 = por %p99, %p100
    %p102 = scmp.ne.s32.totalorder %s94, %s96
    %p103 = scmp.eq.s32.totalorder %s18, 1
    %p104 = por %p102, %p103
    %p105 = scmp.ne.s32.totalorder %s96, %s97
    %p106 = scmp.eq.s32.totalorder %s18, 0
    %p107 = por %p105, %p106
    %p108 = scmp.ne.s32.totalorder %s96, %s97
    %p109 = scmp.eq.s32.totalorder %s19, 1
    %p110 = por %p108, %p109
    %p112 = scmp.ne.s32.totalorder %s97, %s111
    %p113 = scmp.eq.s32.totalorder %s19, 0
    %p114 = por %p112, %p113
    %s116 = sadd.s32 %s115, 1
    %p119 = scmp.eq.s32.totalorder %s13, 1
    %p120 = scmp.ne.s32.totalorder %s115, %s117
    %p121 = scmp.eq.s32.totalorder %s13, 0
    %p122 = por %p120, %p121
    %p123 = scmp.ne.s32.totalorder %s115, %s117
    %p124 = scmp.eq.s32.totalorder %s18, 1
    %p125 = por %p123, %p124
    %p126 = scmp.ne.s32.totalorder %s117, %s118
    %p127 = scmp.eq.s32.totalorder %s18, 0
    %p128 = por %p126, %p127
    %p129 = scmp.ne.s32.totalorder %s117, %s118
    %p130 = scmp.eq.s32.totalorder %s19, 1
    %p131 = por %p129, %p130
    %p133 = scmp.ne.s32.totalorder %s118, %s132
    %p134 = scmp.eq.s32.totalorder %s19, 0
    %p135 = por %p133, %p134
    %s137 = sadd.s32 %s136, 1
    %p140 = scmp.eq.s32.totalorder %s13, 1
    %p141 = scmp.ne.s32.totalorder %s136, %s138
    %p142 = scmp.eq.s32.totalorder %s13, 0
    %p143 = por %p141, %p142
    %p144 = scmp.ne.s32.totalorder %s136, %s138
    %p145 = scmp.eq.s32.totalorder %s18, 1
    %p146 = por %p144, %p145
    %p147 = scmp.ne.s32.totalorder %s138, %s139
    %p148 = scmp.eq.s32.totalorder %s18, 0
    %p149 = por %p147, %p148
    %p150 = scmp.ne.s32.totalorder %s138, %s139
    %p151 = scmp.eq.s32.totalorder %s19, 1
    %p152 = por %p150, %p151
    %p154 = scmp.ne.s32.totalorder %s139, %s153
    %p155 = scmp.eq.s32.totalorder %s19, 0
    %p156 = por %p154, %p155
    %s158 = sadd.s32 %s157, 1
    %p161 = scmp.eq.s32.totalorder %s13, 1
    %p162 = scmp.ne.s32.totalorder %s157, %s159
    %p163 = scmp.eq.s32.totalorder %s13, 0
    %p164 = por %p162, %p163
    %p165 = scmp.ne.s32.totalorder %s157, %s159
    %p166 = scmp.eq.s32.totalorder %s18, 1
    %p167 = por %p165, %p166
    %p168 = scmp.ne.s32.totalorder %s159, %s160
    %p169 = scmp.eq.s32.totalorder %s18, 0
    %p170 = por %p168, %p169
    %p171 = scmp.ne.s32.totalorder %s159, %s160
    %p172 = scmp.eq.s32.totalorder %s19, 1
    %p173 = por %p171, %p172
    %p175 = scmp.ne.s32.totalorder %s160, %s174
    %p176 = scmp.eq.s32.totalorder %s19, 0
    %p177 = por %p175, %p176
    %s178 = ssub.s32 %s13, %s20
    %p179 = scmp.eq.s32.totalorder %s178, 0
    %s181 = sadd.s32 %s180, 1
    %s182 = scalar_select %p179, %s180, %s181
    %p185 = pneg %p179
    %p186 = scmp.eq.s32.totalorder %s13, 1
    %p187 = por %p185, %p186
    %p188 = scmp.ne.s32.totalorder %s180, %s183
    %p189 = scmp.eq.s32.totalorder %s13, 0
    %p190 = por %p188, %p189
    %p191 = scmp.ne.s32.totalorder %s180, %s183
    %p192 = scmp.eq.s32.totalorder %s18, 1
    %p193 = por %p191, %p192
    %p194 = scmp.ne.s32.totalorder %s183, %s184
    %p195 = scmp.eq.s32.totalorder %s18, 0
    %p196 = por %p194, %p195
    %p197 = scmp.ne.s32.totalorder %s183, %s184
    %p198 = scmp.eq.s32.totalorder %s19, 1
    %p199 = por %p197, %p198
    %p201 = scmp.ne.s32.totalorder %s184, %s200
    %p202 = scmp.eq.s32.totalorder %s19, 0
    %p203 = por %p201, %p202
    %p204 = scmp.le.s32.totalorder 1, %s13
    %p205 = scmp.lt.s32.totalorder %s13, 3
    %p206 = pnand %p204, %p205
    %p207 = pneg %p206
    // Predicated region
    $region9: #{decoder_forward.7} parent=5 // pred_check
      _
    $region10: #{decoder_forward.7} parent=5 // pred_check_branch
      %209 = sbr.rel (%p206) target = $region12
    $region11: #{decoder_forward.7} parent=5 // pred_region
      %s210 = ssub.s32 %s13, 1
      // Predicated region
      $region13: #{decoder_forward.7} parent=11 // pred_check
        %p211 = pneg %p86
      $region14: #{decoder_forward.7} parent=11 // pred_check_branch
        %213 = sbr.rel (%p211) target = $region16
      $region15: #{decoder_forward.7} parent=11 // pred_region
        _
      $region16: #{decoder_forward.7} parent=11 // pred_fallthru
        _
      // Predicated region
      $region17: #{decoder_forward.7} parent=11 // pred_check
        %p214 = pneg %p107
      $region18: #{decoder_forward.7} parent=11 // pred_check_branch
        %216 = sbr.rel (%p214) target = $region20
      $region19: #{decoder_forward.7} parent=11 // pred_region
        _
      $region20: #{decoder_forward.7} parent=11 // pred_fallthru
        _
      // Predicated region
      $region21: #{decoder_forward.7} parent=11 // pred_check
        %p217 = pneg %p128
      $region22: #{decoder_forward.7} parent=11 // pred_check_branch
        %219 = sbr.rel (%p217) target = $region24
      $region23: #{decoder_forward.7} parent=11 // pred_region
        _
      $region24: #{decoder_forward.7} parent=11 // pred_fallthru
        _
      // Predicated region
      $region25: #{decoder_forward.7} parent=11 // pred_check
        %p220 = pneg %p149
      $region26: #{decoder_forward.7} parent=11 // pred_check_branch
        %222 = sbr.rel (%p220) target = $region28
      $region27: #{decoder_forward.7} parent=11 // pred_region
        _
      $region28: #{decoder_forward.7} parent=11 // pred_fallthru
        _
      // Predicated region
      $region29: #{decoder_forward.7} parent=11 // pred_check
        %p223 = pneg %p170
      $region30: #{decoder_forward.7} parent=11 // pred_check_branch
        %225 = sbr.rel (%p223) target = $region32
      $region31: #{decoder_forward.7} parent=11 // pred_region
        _
      $region32: #{decoder_forward.7} parent=11 // pred_fallthru
        _
    $region12: #{decoder_forward.7} parent=5 // pred_fallthru
      _
    %p226 = scmp.lt.s32.totalorder %s13, 2
    // Predicated region
    $region33: #{decoder_forward.7} parent=5 // pred_check
      %p227 = pneg %p226
    $region34: #{decoder_forward.7} parent=5 // pred_check_branch
      %229 = sbr.rel (%p227) target = $region36
    $region35: #{decoder_forward.7} parent=5 // pred_region
      // Predicated region
      $region37: #{decoder_forward.7} parent=35 // pred_check
        %p230 = pneg %p33
      $region38: #{decoder_forward.7} parent=35 // pred_check_branch
        %232 = sbr.rel (%p230) target = $region40
      $region39: #{decoder_forward.7} parent=35 // pred_region
        %p233 = scmp.lt.s32.totalorder %s13, 1
        %s234 = scalar_select %p233, %s13, 1
        %s235 = smul.addr %s234, 8
        %s236 = smul.addr %s235, 8
        %s237 = scalar_lea.vmem %s0, %s236
      $region40: #{decoder_forward.7} parent=35 // pred_fallthru
        _
      // Predicated region
      $region41: #{decoder_forward.7} parent=35 // pred_check
        %p238 = pneg %p59
      $region42: #{decoder_forward.7} parent=35 // pred_check_branch
        %240 = sbr.rel (%p238) target = $region44
      $region43: #{decoder_forward.7} parent=35 // pred_region
        %p241 = scmp.lt.s32.totalorder %s13, 1
        %s242 = scalar_select %p241, %s13, 1
        %s243 = smul.addr %s242, 8
        %s244 = smul.addr %s243, 8
        %s245 = scalar_lea.vmem %s1, %s244
      $region44: #{decoder_forward.7} parent=35 // pred_fallthru
        _
    $region36: #{decoder_forward.7} parent=5 // pred_fallthru
      _
    %p246 = scmp.le.s32.totalorder 1, %s13
    %p247 = scmp.lt.s32.totalorder %s13, 3
    %p248 = pnand %p246, %p247
    %p249 = pneg %p248
    // Predicated region
    $region45: #{decoder_forward.7} parent=5 // pred_check
      _
    $region46: #{decoder_forward.7} parent=5 // pred_check_branch
      %251 = sbr.rel (%p248) target = $region48
    $region47: #{decoder_forward.7} parent=5 // pred_region
      %s252 = ssub.s32 %s13, 1
      %p253 = scmp.lt.s32.totalorder %s18, 1
      %s254 = scalar_select %p253, %s18, 1
      %s255 = smul.addr %s254, 8
      %s256 = smul.addr %s255, 8
      %s257 = scalar_lea.vmem %s0, %s256
      %p258 = pneg %p39
      %p259 = pneg %p36
      %p260 = scmp.lt.s32.totalorder %s18, 1
      %s261 = scalar_select %p260, %s18, 1
      %s262 = smul.addr %s261, 8
      %s263 = smul.addr %s262, 8
      %s264 = scalar_lea.vmem %s1, %s263
      %p265 = pneg %p65
      %p266 = pneg %p62
      %p267 = pneg %p86
      %p268 = pneg %p83
      %p269 = pneg %p107
      %p270 = pneg %p104
      %p271 = pneg %p128
      %p272 = pneg %p125
      %p273 = pneg %p149
      %p274 = pneg %p146
      %p275 = pneg %p170
      %p276 = pneg %p167
      %p277 = pneg %p196
      %p278 = pneg %p193
      %p279 = scmp.lt.s32.totalorder %s18, 1
      %s280 = scalar_select %p279, %s18, 1
      %s281 = smul.addr %s280, 8
      %s282 = smul.addr %s281, 8
      %s283 = scalar_lea.vmem %s7, %s282
      %p284 = scmp.lt.s32.totalorder %s18, 1
      %s285 = scalar_select %p284, %s18, 1
      %s286 = smul.addr %s285, 8
      %s287 = smul.addr %s286, 8
      %s288 = scalar_lea.vmem %s0, %s287
      %p289 = scmp.lt.s32.totalorder %s18, 1
      %s290 = scalar_select %p289, %s18, 1
      %s291 = smul.addr %s290, 8
      %s292 = smul.addr %s291, 8
      %s293 = scalar_lea.vmem %s1, %s292
      %p294 = scmp.lt.s32.totalorder %s18, 1
      %s295 = scalar_select %p294, %s18, 1
      %s296 = smul.addr %s295, 8
      %s297 = smul.addr %s296, 8
      %s298 = scalar_lea.vmem %s7, %s297
      %v299 = vld [vmem:[%s288] sm:$0xff]
      %v300 = vld [vmem:[%s288 + $0x8] sm:$0xff]
      %v301 = vld [vmem:[%s288 + $0x10] sm:$0xff]
      %v302 = vld [vmem:[%s288 + $0x18] sm:$0xff]
      %v303 = vld [vmem:[%s288 + $0x20] sm:$0xff]
      %v304 = vld [vmem:[%s288 + $0x28] sm:$0x3f]
      %v305 = vld [vmem:[%s2] sm:$0xff]
      %v306 = vld [vmem:[%s2 + $0x8] sm:$0xff]
      %v307 = vld [vmem:[%s2 + $0x10] sm:$0xff]
      %v308 = vld [vmem:[%s2 + $0x18] sm:$0xff]
      %v309 = vld [vmem:[%s2 + $0x20] sm:$0xff]
      %v310 = vld [vmem:[%s2 + $0x28] sm:$0xff]
      %v311 = vld [vmem:[%s2 + $0x30] sm:$0xff]
      %v312 = vld [vmem:[%s2 + $0x38] sm:$0xff]
      %v313 = vld [vmem:[%s2 + $0x40] sm:$0xff]
      %v314 = vld [vmem:[%s2 + $0x48] sm:$0xff]
      %v315 = vld [vmem:[%s2 + $0x50] sm:$0xff]
      %v316 = vld [vmem:[%s2 + $0x58] sm:$0xff]
      %v317 = vld [vmem:[%s2 + $0x60] sm:$0xff]
      %v318 = vld [vmem:[%s2 + $0x68] sm:$0xff]
      %v319 = vld [vmem:[%s2 + $0x70] sm:$0xff]
      %v320 = vld [vmem:[%s2 + $0x78] sm:$0xff]
      %v321 = vld [vmem:[%s293] sm:$0xff]
      %v322 = vld [vmem:[%s293 + $0x8] sm:$0xff]
      %v323 = vld [vmem:[%s293 + $0x10] sm:$0xff]
      %v324 = vld [vmem:[%s293 + $0x18] sm:$0xff]
      %v325 = vld [vmem:[%s293 + $0x20] sm:$0xff]
      %v326 = vld [vmem:[%s293 + $0x28] sm:$0x3f]
      %v327 = vld [vmem:[%s3] sm:$0xff]
      %v328 = vld [vmem:[%s3 + $0x8] sm:$0xff]
      %v329 = vld [vmem:[%s3 + $0x10] sm:$0xff]
      %v330 = vld [vmem:[%s3 + $0x18] sm:$0xff]
      %v331 = vld [vmem:[%s3 + $0x20] sm:$0xff]
      %v332 = vld [vmem:[%s3 + $0x28] sm:$0xff]
      %v333 = vld [vmem:[%s3 + $0x30] sm:$0xff]
      %v334 = vld [vmem:[%s3 + $0x38] sm:$0xff]
      %v335 = vld [vmem:[%s3 + $0x40] sm:$0xff]
      %v336 = vld [vmem:[%s3 + $0x48] sm:$0xff]
      %v337 = vld [vmem:[%s3 + $0x50] sm:$0xff]
      %v338 = vld [vmem:[%s3 + $0x58] sm:$0xff]
      %v339 = vld [vmem:[%s3 + $0x60] sm:$0xff]
      %v340 = vld [vmem:[%s3 + $0x68] sm:$0xff]
      %v341 = vld [vmem:[%s3 + $0x70] sm:$0xff]
      %v342 = vld [vmem:[%s3 + $0x78] sm:$0xff]
      %343 = vmatprep.subr.mxu0 0.0
      %344 = vmatpush1.msra.mxu0 %v327
      %345 = vmatprep.subr.mxu0 0.0
      %346 = vmatpush1.msra.mxu0 %v328
      %347 = vmatprep.subr.mxu0 0.0
      %348 = vmatpush1.msra.mxu0 %v329
      %349 = vmatprep.subr.mxu0 0.0
      %350 = vmatpush1.msra.mxu0 %v330
      %351 = vmatprep.subr.mxu0 0.0
      %352 = vmatpush1.msra.mxu0 %v331
      %353 = vmatprep.subr.mxu0 0.0
      %354 = vmatpush1.msra.mxu0 %v332
      %355 = vmatprep.subr.mxu0 0.0
      %356 = vmatpush1.msra.mxu0 %v333
      %357 = vmatprep.subr.mxu0 0.0
      %358 = vmatpush1.msra.mxu0 %v334
      %359 = vmatprep.subr.mxu0 0.0
      %360 = vmatpush1.msra.mxu0 %v335
      %361 = vmatprep.subr.mxu0 0.0
      %362 = vmatpush1.msra.mxu0 %v336
      %363 = vmatprep.subr.mxu0 0.0
      %364 = vmatpush1.msra.mxu0 %v337
      %365 = vmatprep.subr.mxu0 0.0
      %366 = vmatpush1.msra.mxu0 %v338
      %367 = vmatprep.subr.mxu0 0.0
      %368 = vmatpush1.msra.mxu0 %v339
      %369 = vmatprep.subr.mxu0 0.0
      %370 = vmatpush1.msra.mxu0 %v340
      %371 = vmatprep.subr.mxu0 0.0
      %372 = vmatpush1.msra.mxu0 %v341
      %373 = vmatprep.subr.mxu0 0.0
      %374 = vmatpush1.msra.mxu0 %v342
      %375 = vmatprep.subr.mxu0 0.0
      %376 = vmatpush1.msra.mxu0 0.0
      %377 = vmatprep.subr.mxu0 0.0
      %378 = vmatpush1.msra.mxu0 0.0
      %379 = vmatprep.subr.mxu0 0.0
      %380 = vmatpush1.msra.mxu0 0.0
      %381 = vmatprep.subr.mxu0 0.0
      %382 = vmatpush1.msra.mxu0 0.0
      %383 = vmatprep.subr.mxu0 0.0
      %384 = vmatpush1.msra.mxu0 0.0
      %385 = vmatprep.subr.mxu0 0.0
      %386 = vmatpush1.msra.mxu0 0.0
      %387 = vmatprep.subr.mxu0 0.0
      %388 = vmatpush1.msra.mxu0 0.0
      %389 = vmatprep.subr.mxu0 0.0
      %390 = vmatpush1.msra.mxu0 0.0
      %391 = vmatprep.subr.mxu0 0.0
      %392 = vmatpush1.msra.mxu0 0.0
      %393 = vmatprep.subr.mxu0 0.0
      %394 = vmatpush1.msra.mxu0 0.0
      %395 = vmatprep.subr.mxu0 0.0
      %396 = vmatpush1.msra.mxu0 0.0
      %397 = vmatprep.subr.mxu0 0.0
      %398 = vmatpush1.msra.mxu0 0.0
      %399 = vmatprep.subr.mxu0 0.0
      %400 = vmatpush1.msra.mxu0 0.0
      %401 = vmatprep.subr.mxu0 0.0
      %402 = vmatpush1.msra.mxu0 0.0
      %403 = vmatprep.subr.mxu0 0.0
      %404 = vmatpush1.msra.mxu0 0.0
      %405 = vmatprep.subr.mxu0 0.0
      %406 = vmatpush1.msra.mxu0 0.0
      %407 = vmatprep.mubr.f32.mxu0 0.0
      %408 = vmatmul.mubr.f32.gmra.mrb[0].mxu0 %v321
      %v409 = vpop.f32.mrb[0].mxu0
      %v410 = vadd.f32 0.0, %v409
      %v411 = vpop.f32.mrb[0].mxu0
      %412 = vmatprep.mubr.f32.mxu0 0.0
      %413 = vmatmul.mubr.f32.gmra.mrb[0].mxu0 %v322
      %v414 = vpop.f32.mrb[0].mxu0
      %v415 = vadd.f32 0.0, %v414
      %v416 = vpop.f32.mrb[0].mxu0
      %417 = vmatprep.mubr.f32.mxu0 0.0
      %418 = vmatmul.mubr.f32.gmra.mrb[0].mxu0 %v323
      %v419 = vpop.f32.mrb[0].mxu0
      %v420 = vadd.f32 0.0, %v419
      %v421 = vpop.f32.mrb[0].mxu0
      %422 = vmatprep.mubr.f32.mxu0 0.0
      %423 = vmatmul.mubr.f32.gmra.mrb[0].mxu0 %v324
      %v424 = vpop.f32.mrb[0].mxu0
      %v425 = vadd.f32 0.0, %v424
      %v426 = vpop.f32.mrb[0].mxu0
      %427 = vmatprep.mubr.f32.mxu0 0.0
      %428 = vmatmul.mubr.f32.gmra.mrb[0].mxu0 %v325
      %v429 = vpop.f32.mrb[0].mxu0
      %v430 = vadd.f32 0.0, %v429
      %v431 = vpop.f32.mrb[0].mxu0
      %432 = vmatprep.mubr.f32.mxu0 0.0
      %433 = vmatmul.mubr.f32.gmra.mrb[0].mxu0 %v326
      %v434 = vpop.f32.mrb[0].mxu0
      %v435 = vadd.f32 0.0, %v434
      %v436 = vpop.f32.mrb[0].mxu0
      %437 = vdwg.mxu0
      %438 = vmatprep.subr.mxu0 0.0
      %439 = vmatpush1.msra.mxu0 %v305
      %440 = vmatprep.subr.mxu0 0.0
      %441 = vmatpush1.msra.mxu0 %v306
      %442 = vmatprep.subr.mxu0 0.0
      %443 = vmatpush1.msra.mxu0 %v307
      %444 = vmatprep.subr.mxu0 0.0
      %445 = vmatpush1.msra.mxu0 %v308
      %446 = vmatprep.subr.mxu0 0.0
      %447 = vmatpush1.msra.mxu0 %v309
      %448 = vmatprep.subr.mxu0 0.0
      %449 = vmatpush1.msra.mxu0 %v310
      %450 = vmatprep.subr.mxu0 0.0
      %451 = vmatpush1.msra.mxu0 %v311
      %452 = vmatprep.subr.mxu0 0.0
      %453 = vmatpush1.msra.mxu0 %v312
      %454 = vmatprep.subr.mxu0 0.0
      %455 = vmatpush1.msra.mxu0 %v313
      %456 = vmatprep.subr.mxu0 0.0
      %457 = vmatpush1.msra.mxu0 %v314
      %458 = vmatprep.subr.mxu0 0.0
      %459 = vmatpush1.msra.mxu0 %v315
      %460 = vmatprep.subr.mxu0 0.0
      %461 = vmatpush1.msra.mxu0 %v316
      %462 = vmatprep.subr.mxu0 0.0
      %463 = vmatpush1.msra.mxu0 %v317
      %464 = vmatprep.subr.mxu0 0.0
      %465 = vmatpush1.msra.mxu0 %v318
      %466 = vmatprep.subr.mxu0 0.0
      %467 = vmatpush1.msra.mxu0 %v319
      %468 = vmatprep.subr.mxu0 0.0
      %469 = vmatpush1.msra.mxu0 %v320
      %470 = vmatprep.subr.mxu0 0.0
      %471 = vmatpush1.msra.mxu0 0.0
      %472 = vmatprep.subr.mxu0 0.0
      %473 = vmatpush1.msra.mxu0 0.0
      %474 = vmatprep.subr.mxu0 0.0
      %475 = vmatpush1.msra.mxu0 0.0
      %476 = vmatprep.subr.mxu0 0.0
      %477 = vmatpush1.msra.mxu0 0.0
      %478 = vmatprep.subr.mxu0 0.0
      %479 = vmatpush1.msra.mxu0 0.0
      %480 = vmatprep.subr.mxu0 0.0
      %481 = vmatpush1.msra.mxu0 0.0
      %482 = vmatprep.subr.mxu0 0.0
      %483 = vmatpush1.msra.mxu0 0.0
      %484 = vmatprep.subr.mxu0 0.0
      %485 = vmatpush1.msra.mxu0 0.0
      %486 = vmatprep.subr.mxu0 0.0
      %487 = vmatpush1.msra.mxu0 0.0
      %488 = vmatprep.subr.mxu0 0.0
      %489 = vmatpush1.msra.mxu0 0.0
      %490 = vmatprep.subr.mxu0 0.0
      %491 = vmatpush1.msra.mxu0 0.0
      %492 = vmatprep.subr.mxu0 0.0
      %493 = vmatpush1.msra.mxu0 0.0
      %494 = vmatprep.subr.mxu0 0.0
      %495 = vmatpush1.msra.mxu0 0.0
      %496 = vmatprep.subr.mxu0 0.0
      %497 = vmatpush1.msra.mxu0 0.0
      %498 = vmatprep.subr.mxu0 0.0
      %499 = vmatpush1.msra.mxu0 0.0
      %500 = vmatprep.subr.mxu0 0.0
      %501 = vmatpush1.msra.mxu0 0.0
      %502 = vmatprep.mubr.f32.mxu0 0.0
      %503 = vmatmul.mubr.f32.gmra.mrb[0].mxu0 %v299
      %v504 = vpop.f32.mrb[0].mxu0
      %v505 = vadd.f32 %v410, %v504
      %v506 = vpop.f32.mrb[0].mxu0
      %507 = vmatprep.mubr.f32.mxu0 0.0
      %508 = vmatmul.mubr.f32.gmra.mrb[0].mxu0 %v300
      %v509 = vpop.f32.mrb[0].mxu0
      %v510 = vadd.f32 %v415, %v509
      %v511 = vpop.f32.mrb[0].mxu0
      %512 = vmatprep.mubr.f32.mxu0 0.0
      %513 = vmatmul.mubr.f32.gmra.mrb[0].mxu0 %v301
      %v514 = vpop.f32.mrb[0].mxu0
      %v515 = vadd.f32 %v420, %v514
      %v516 = vpop.f32.mrb[0].mxu0
      %517 = vmatprep.mubr.f32.mxu0 0.0
      %518 = vmatmul.mubr.f32.gmra.mrb[0].mxu0 %v302
      %v519 = vpop.f32.mrb[0].mxu0
      %v520 = vadd.f32 %v425, %v519
      %v521 = vpop.f32.mrb[0].mxu0
      %522 = vmatprep.mubr.f32.mxu0 0.0
      %523 = vmatmul.mubr.f32.gmra.mrb[0].mxu0 %v303
      %v524 = vpop.f32.mrb[0].mxu0
      %v525 = vadd.f32 %v430, %v524
      %v526 = vpop.f32.mrb[0].mxu0
      %527 = vmatprep.mubr.f32.mxu0 0.0
      %528 = vmatmul.mubr.f32.gmra.mrb[0].mxu0 %v304
      %v529 = vpop.f32.mrb[0].mxu0
      %v530 = vadd.f32 %v435, %v529
      %v531 = vpop.f32.mrb[0].mxu0
      %532 = vdwg.mxu0
      %v533 = vld [vmem:[%s288 + $0x1] sm:$0xff]
      %v534 = vld [vmem:[%s288 + $0x9] sm:$0xff]
      %v535 = vld [vmem:[%s288 + $0x11] sm:$0xff]
      %v536 = vld [vmem:[%s288 + $0x19] sm:$0xff]
      %v537 = vld [vmem:[%s288 + $0x21] sm:$0xff]
      %v538 = vld [vmem:[%s288 + $0x29] sm:$0x3f]
      %s539 = scalar_lea.vmem %s2, 128
      %v540 = vld [vmem:[%s539] sm:$0xff]
      %v541 = vld [vmem:[%s539 + $0x8] sm:$0xff]
      %v542 = vld [vmem:[%s539 + $0x10] sm:$0xff]
      %v543 = vld [vmem:[%s539 + $0x18] sm:$0xff]
      %v544 = vld [vmem:[%s539 + $0x20] sm:$0xff]
      %v545 = vld [vmem:[%s539 + $0x28] sm:$0xff]
      %v546 = vld [vmem:[%s539 + $0x30] sm:$0xff]
      %v547 = vld [vmem:[%s539 + $0x38] sm:$0xff]
      %v548 = vld [vmem:[%s539 + $0x40] sm:$0xff]
      %v549 = vld [vmem:[%s539 + $0x48] sm:$0xff]
      %v550 = vld [vmem:[%s539 + $0x50] sm:$0xff]
      %v551 = vld [vmem:[%s539 + $0x58] sm:$0xff]
      %v552 = vld [vmem:[%s539 + $0x60] sm:$0xff]
      %v553 = vld [vmem:[%s539 + $0x68] sm:$0xff]
      %v554 = vld [vmem:[%s539 + $0x70] sm:$0xff]
      %v555 = vld [vmem:[%s539 + $0x78] sm:$0xff]
      %556 = vmatprep.subr.mxu0 0.0
      %557 = vmatpush1.msra.mxu0 %v540
      %558 = vmatprep.subr.mxu0 0.0
      %559 = vmatpush1.msra.mxu0 %v541
      %560 = vmatprep.subr.mxu0 0.0
      %561 = vmatpush1.msra.mxu0 %v542
      %562 = vmatprep.subr.mxu0 0.0
      %563 = vmatpush1.msra.mxu0 %v543
      %564 = vmatprep.subr.mxu0 0.0
      %565 = vmatpush1.msra.mxu0 %v544
      %566 = vmatprep.subr.mxu0 0.0
      %567 = vmatpush1.msra.mxu0 %v545
      %568 = vmatprep.subr.mxu0 0.0
      %569 = vmatpush1.msra.mxu0 %v546
      %570 = vmatprep.subr.mxu0 0.0
      %571 = vmatpush1.msra.mxu0 %v547
      %572 = vmatprep.subr.mxu0 0.0
      %573 = vmatpush1.msra.mxu0 %v548
      %574 = vmatprep.subr.mxu0 0.0
      %575 = vmatpush1.msra.mxu0 %v549
      %576 = vmatprep.subr.mxu0 0.0
      %577 = vmatpush1.msra.mxu0 %v550
      %578 = vmatprep.subr.mxu0 0.0
      %579 = vmatpush1.msra.mxu0 %v551
      %580 = vmatprep.subr.mxu0 0.0
      %581 = vmatpush1.msra.mxu0 %v552
      %582 = vmatprep.subr.mxu0 0.0
      %583 = vmatpush1.msra.mxu0 %v553
      %584 = vmatprep.subr.mxu0 0.0
      %585 = vmatpush1.msra.mxu0 %v554
      %586 = vmatprep.subr.mxu0 0.0
      %587 = vmatpush1.msra.mxu0 %v555
      %588 = vmatprep.subr.mxu0 0.0
      %589 = vmatpush1.msra.mxu0 0.0
      %590 = vmatprep.subr.mxu0 0.0
      %591 = vmatpush1.msra.mxu0 0.0
      %592 = vmatprep.subr.mxu0 0.0
      %593 = vmatpush1.msra.mxu0 0.0
      %594 = vmatprep.subr.mxu0 0.0
      %595 = vmatpush1.msra.mxu0 0.0
      %596 = vmatprep.subr.mxu0 0.0
      %597 = vmatpush1.msra.mxu0 0.0
      %598 = vmatprep.subr.mxu0 0.0
      %599 = vmatpush1.msra.mxu0 0.0
      %600 = vmatprep.subr.mxu0 0.0
      %601 = vmatpush1.msra.mxu0 0.0
      %602 = vmatprep.subr.mxu0 0.0
      %603 = vmatpush1.msra.mxu0 0.0
      %604 = vmatprep.subr.mxu0 0.0
      %605 = vmatpush1.msra.mxu0 0.0
      %606 = vmatprep.subr.mxu0 0.0
      %607 = vmatpush1.msra.mxu0 0.0
      %608 = vmatprep.subr.mxu0 0.0
      %609 = vmatpush1.msra.mxu0 0.0
      %610 = vmatprep.subr.mxu0 0.0
      %611 = vmatpush1.msra.mxu0 0.0
      %612 = vmatprep.subr.mxu0 0.0
      %613 = vmatpush1.msra.mxu0 0.0
      %614 = vmatprep.subr.mxu0 0.0
      %615 = vmatpush1.msra.mxu0 0.0
      %616 = vmatprep.subr.mxu0 0.0
      %617 = vmatpush1.msra.mxu0 0.0
      %618 = vmatprep.subr.mxu0 0.0
      %619 = vmatpush1.msra.mxu0 0.0
      %620 = vmatprep.mubr.f32.mxu0 0.0
      %621 = vmatmul.mubr.f32.gmra.mrb[0].mxu0 %v533
      %v622 = vpop.f32.mrb[0].mxu0
      %v623 = vadd.f32 0.0, %v622
      %v624 = vpop.f32.mrb[0].mxu0
      %625 = vmatprep.mubr.f32.mxu0 0.0
      %626 = vmatmul.mubr.f32.gmra.mrb[0].mxu0 %v534
      %v627 = vpop.f32.mrb[0].mxu0
      %v628 = vadd.f32 0.0, %v627
      %v629 = vpop.f32.mrb[0].mxu0
      %630 = vmatprep.mubr.f32.mxu0 0.0
      %631 = vmatmul.mubr.f32.gmra.mrb[0].mxu0 %v535
      %v632 = vpop.f32.mrb[0].mxu0
      %v633 = vadd.f32 0.0, %v632
      %v634 = vpop.f32.mrb[0].mxu0
      %635 = vmatprep.mubr.f32.mxu0 0.0
      %636 = vmatmul.mubr.f32.gmra.mrb[0].mxu0 %v536
      %v637 = vpop.f32.mrb[0].mxu0
      %v638 = vadd.f32 0.0, %v637
      %v639 = vpop.f32.mrb[0].mxu0
      %640 = vmatprep.mubr.f32.mxu0 0.0
      %641 = vmatmul.mubr.f32.gmra.mrb[0].mxu0 %v537
      %v642 = vpop.f32.mrb[0].mxu0
      %v643 = vadd.f32 0.0, %v642
      %v644 = vpop.f32.mrb[0].mxu0
      %645 = vmatprep.mubr.f32.mxu0 0.0
      %646 = vmatmul.mubr.f32.gmra.mrb[0].mxu0 %v538
      %v647 = vpop.f32.mrb[0].mxu0
      %v648 = vadd.f32 0.0, %v647
      %v649 = vpop.f32.mrb[0].mxu0
      %650 = vdwg.mxu0
      %v651 = vadd.f32 %v505, %v623
      %v652 = vadd.f32 %v510, %v628
      %v653 = vadd.f32 %v515, %v633
      %v654 = vadd.f32 %v520, %v638
      %v655 = vadd.f32 %v525, %v643
      %v656 = vadd.f32 %v530, %v648
      %v657 = vld [vmem:[%s293 + $0x1] sm:$0xff]
      %v658 = vld [vmem:[%s293 + $0x9] sm:$0xff]
      %v659 = vld [vmem:[%s293 + $0x11] sm:$0xff]
      %v660 = vld [vmem:[%s293 + $0x19] sm:$0xff]
      %v661 = vld [vmem:[%s293 + $0x21] sm:$0xff]
      %v662 = vld [vmem:[%s293 + $0x29] sm:$0x3f]
      %s663 = scalar_lea.vmem %s3, 128
      %v664 = vld [vmem:[%s663] sm:$0xff]
      %v665 = vld [vmem:[%s663 + $0x8] sm:$0xff]
      %v666 = vld [vmem:[%s663 + $0x10] sm:$0xff]
      %v667 = vld [vmem:[%s663 + $0x18] sm:$0xff]
      %v668 = vld [vmem:[%s663 + $0x20] sm:$0xff]
      %v669 = vld [vmem:[%s663 + $0x28] sm:$0xff]
      %v670 = vld [vmem:[%s663 + $0x30] sm:$0xff]
      %v671 = vld [vmem:[%s663 + $0x38] sm:$0xff]
      %v672 = vld [vmem:[%s663 + $0x40] sm:$0xff]
      %v673 = vld [vmem:[%s663 + $0x48] sm:$0xff]
      %v674 = vld [vmem:[%s663 + $0x50] sm:$0xff]
      %v675 = vld [vmem:[%s663 + $0x58] sm:$0xff]
      %v676 = vld [vmem:[%s663 + $0x60] sm:$0xff]
      %v677 = vld [vmem:[%s663 + $0x68] sm:$0xff]
      %v678 = vld [vmem:[%s663 + $0x70] sm:$0xff]
      %v679 = vld [vmem:[%s663 + $0x78] sm:$0xff]
      %680 = vmatprep.subr.mxu0 0.0
      %681 = vmatpush1.msra.mxu0 %v664
      %682 = vmatprep.subr.mxu0 0.0
      %683 = vmatpush1.msra.mxu0 %v665
      %684 = vmatprep.subr.mxu0 0.0
      %685 = vmatpush1.msra.mxu0 %v666
      %686 = vmatprep.subr.mxu0 0.0
      %687 = vmatpush1.msra.mxu0 %v667
      %688 = vmatprep.subr.mxu0 0.0
      %689 = vmatpush1.msra.mxu0 %v668
      %690 = vmatprep.subr.mxu0 0.0
      %691 = vmatpush1.msra.mxu0 %v669
      %692 = vmatprep.subr.mxu0 0.0
      %693 = vmatpush1.msra.mxu0 %v670
      %694 = vmatprep.subr.mxu0 0.0
      %695 = vmatpush1.msra.mxu0 %v671
      %696 = vmatprep.subr.mxu0 0.0
      %697 = vmatpush1.msra.mxu0 %v672
      %698 = vmatprep.subr.mxu0 0.0
      %699 = vmatpush1.msra.mxu0 %v673
      %700 = vmatprep.subr.mxu0 0.0
      %701 = vmatpush1.msra.mxu0 %v674
      %702 = vmatprep.subr.mxu0 0.0
      %703 = vmatpush1.msra.mxu0 %v675
      %704 = vmatprep.subr.mxu0 0.0
      %705 = vmatpush1.msra.mxu0 %v676
      %706 = vmatprep.subr.mxu0 0.0
      %707 = vmatpush1.msra.mxu0 %v677
      %708 = vmatprep.subr.mxu0 0.0
      %709 = vmatpush1.msra.mxu0 %v678
      %710 = vmatprep.subr.mxu0 0.0
      %711 = vmatpush1.msra.mxu0 %v679
      %712 = vmatprep.subr.mxu0 0.0
      %713 = vmatpush1.msra.mxu0 0.0
      %714 = vmatprep.subr.mxu0 0.0
      %715 = vmatpush1.msra.mxu0 0.0
      %716 = vmatprep.subr.mxu0 0.0
      %717 = vmatpush1.msra.mxu0 0.0
      %718 = vmatprep.subr.mxu0 0.0
      %719 = vmatpush1.msra.mxu0 0.0
      %720 = vmatprep.subr.mxu0 0.0
      %721 = vmatpush1.msra.mxu0 0.0
      %722 = vmatprep.subr.mxu0 0.0
      %723 = vmatpush1.msra.mxu0 0.0
      %724 = vmatprep.subr.mxu0 0.0
      %725 = vmatpush1.msra.mxu0 0.0
      %726 = vmatprep.subr.mxu0 0.0
      %727 = vmatpush1.msra.mxu0 0.0
      %728 = vmatprep.subr.mxu0 0.0
      %729 = vmatpush1.msra.mxu0 0.0
      %730 = vmatprep.subr.mxu0 0.0
      %731 = vmatpush1.msra.mxu0 0.0
      %732 = vmatprep.subr.mxu0 0.0
      %733 = vmatpush1.msra.mxu0 0.0
      %734 = vmatprep.subr.mxu0 0.0
      %735 = vmatpush1.msra.mxu0 0.0
      %736 = vmatprep.subr.mxu0 0.0
      %737 = vmatpush1.msra.mxu0 0.0
      %738 = vmatprep.subr.mxu0 0.0
      %739 = vmatpush1.msra.mxu0 0.0
      %740 = vmatprep.subr.mxu0 0.0
      %741 = vmatpush1.msra.mxu0 0.0
      %742 = vmatprep.subr.mxu0 0.0
      %743 = vmatpush1.msra.mxu0 0.0
      %744 = vmatprep.mubr.f32.mxu0 0.0
      %745 = vmatmul.mubr.f32.gmra.mrb[0].mxu0 %v657
      %v746 = vpop.f32.mrb[0].mxu0
      %v747 = vadd.f32 0.0, %v746
      %v748 = vpop.f32.mrb[0].mxu0
      %749 = vmatprep.mubr.f32.mxu0 0.0
      %750 = vmatmul.mubr.f32.gmra.mrb[0].mxu0 %v658
      %v751 = vpop.f32.mrb[0].mxu0
      %v752 = vadd.f32 0.0, %v751
      %v753 = vpop.f32.mrb[0].mxu0
      %754 = vmatprep.mubr.f32.mxu0 0.0
      %755 = vmatmul.mubr.f32.gmra.mrb[0].mxu0 %v659
      %v756 = vpop.f32.mrb[0].mxu0
      %v757 = vadd.f32 0.0, %v756
      %v758 = vpop.f32.mrb[0].mxu0
      %759 = vmatprep.mubr.f32.mxu0 0.0
      %760 = vmatmul.mubr.f32.gmra.mrb[0].mxu0 %v660
      %v761 = vpop.f32.mrb[0].mxu0
      %v762 = vadd.f32 0.0, %v761
      %v763 = vpop.f32.mrb[0].mxu0
      %764 = vmatprep.mubr.f32.mxu0 0.0
      %765 = vmatmul.mubr.f32.gmra.mrb[0].mxu0 %v661
      %v766 = vpop.f32.mrb[0].mxu0
      %v767 = vadd.f32 0.0, %v766
      %v768 = vpop.f32.mrb[0].mxu0
      %769 = vmatprep.mubr.f32.mxu0 0.0
      %770 = vmatmul.mubr.f32.gmra.mrb[0].mxu0 %v662
      %v771 = vpop.f32.mrb[0].mxu0
      %v772 = vadd.f32 0.0, %v771
      %v773 = vpop.f32.mrb[0].mxu0
      %774 = vdwg.mxu0
      %v775 = vadd.f32 %v651, %v747
      %v776 = vadd.f32 %v652, %v752
      %v777 = vadd.f32 %v653, %v757
      %v778 = vadd.f32 %v654, %v762
      %v779 = vadd.f32 %v655, %v767
      %v780 = vadd.f32 %v656, %v772
      %v781 = vld [vmem:[%s288 + $0x2] sm:$0xff]
      %v782 = vld [vmem:[%s288 + $0xa] sm:$0xff]
      %v783 = vld [vmem:[%s288 + $0x12] sm:$0xff]
      %v784 = vld [vmem:[%s288 + $0x1a] sm:$0xff]
      %v785 = vld [vmem:[%s288 + $0x22] sm:$0xff]
      %v786 = vld [vmem:[%s288 + $0x2a] sm:$0x3f]
      %s787 = scalar_lea.vmem %s2, 256
      %v788 = vld [vmem:[%s787] sm:$0xff]
      %v789 = vld [vmem:[%s787 + $0x8] sm:$0xff]
      %v790 = vld [vmem:[%s787 + $0x10] sm:$0xff]
      %v791 = vld [vmem:[%s787 + $0x18] sm:$0xff]
      %v792 = vld [vmem:[%s787 + $0x20] sm:$0xff]
      %v793 = vld [vmem:[%s787 + $0x28] sm:$0xff]
      %v794 = vld [vmem:[%s787 + $0x30] sm:$0xff]
      %v795 = vld [vmem:[%s787 + $0x38] sm:$0xff]
      %v796 = vld [vmem:[%s787 + $0x40] sm:$0xff]
      %v797 = vld [vmem:[%s787 + $0x48] sm:$0xff]
      %v798 = vld [vmem:[%s787 + $0x50] sm:$0xff]
      %v799 = vld [vmem:[%s787 + $0x58] sm:$0xff]
      %v800 = vld [vmem:[%s787 + $0x60] sm:$0xff]
      %v801 = vld [vmem:[%s787 + $0x68] sm:$0xff]
      %v802 = vld [vmem:[%s787 + $0x70] sm:$0xff]
      %v803 = vld [vmem:[%s787 + $0x78] sm:$0xff]
      %804 = vmatprep.subr.mxu0 0.0
      %805 = vmatpush1.msra.mxu0 %v788
      %806 = vmatprep.subr.mxu0 0.0
      %807 = vmatpush1.msra.mxu0 %v789
      %808 = vmatprep.subr.mxu0 0.0
      %809 = vmatpush1.msra.mxu0 %v790
      %810 = vmatprep.subr.mxu0 0.0
      %811 = vmatpush1.msra.mxu0 %v791
      %812 = vmatprep.subr.mxu0 0.0
      %813 = vmatpush1.msra.mxu0 %v792
      %814 = vmatprep.subr.mxu0 0.0
      %815 = vmatpush1.msra.mxu0 %v793
      %816 = vmatprep.subr.mxu0 0.0
      %817 = vmatpush1.msra.mxu0 %v794
      %818 = vmatprep.subr.mxu0 0.0
      %819 = vmatpush1.msra.mxu0 %v795
      %820 = vmatprep.subr.mxu0 0.0
      %821 = vmatpush1.msra.mxu0 %v796
      %822 = vmatprep.subr.mxu0 0.0
      %823 = vmatpush1.msra.mxu0 %v797
      %824 = vmatprep.subr.mxu0 0.0
      %825 = vmatpush1.msra.mxu0 %v798
      %826 = vmatprep.subr.mxu0 0.0
      %827 = vmatpush1.msra.mxu0 %v799
      %828 = vmatprep.subr.mxu0 0.0
      %829 = vmatpush1.msra.mxu0 %v800
      %830 = vmatprep.subr.mxu0 0.0
      %831 = vmatpush1.msra.mxu0 %v801
      %832 = vmatprep.subr.mxu0 0.0
      %833 = vmatpush1.msra.mxu0 %v802
      %834 = vmatprep.subr.mxu0 0.0
      %835 = vmatpush1.msra.mxu0 %v803
      %836 = vmatprep.subr.mxu0 0.0
      %837 = vmatpush1.msra.mxu0 0.0
      %838 = vmatprep.subr.mxu0 0.0
      %839 = vmatpush1.msra.mxu0 0.0
      %840 = vmatprep.subr.mxu0 0.0
      %841 = vmatpush1.msra.mxu0 0.0
      %842 = vmatprep.subr.mxu0 0.0
      %843 = vmatpush1.msra.mxu0 0.0
      %844 = vmatprep.subr.mxu0 0.0
      %845 = vmatpush1.msra.mxu0 0.0
      %846 = vmatprep.subr.mxu0 0.0
      %847 = vmatpush1.msra.mxu0 0.0
      %848 = vmatprep.subr.mxu0 0.0
      %849 = vmatpush1.msra.mxu0 0.0
      %850 = vmatprep.subr.mxu0 0.0
      %851 = vmatpush1.msra.mxu0 0.0
      %852 = vmatprep.subr.mxu0 0.0
      %853 = vmatpush1.msra.mxu0 0.0
      %854 = vmatprep.subr.mxu0 0.0
      %855 = vmatpush1.msra.mxu0 0.0
      %856 = vmatprep.subr.mxu0 0.0
      %857 = vmatpush1.msra.mxu0 0.0
      %858 = vmatprep.subr.mxu0 0.0
      %859 = vmatpush1.msra.mxu0 0.0
      %860 = vmatprep.subr.mxu0 0.0
      %861 = vmatpush1.msra.mxu0 0.0
      %862 = vmatprep.subr.mxu0 0.0
      %863 = vmatpush1.msra.mxu0 0.0
      %864 = vmatprep.subr.mxu0 0.0
      %865 = vmatpush1.msra.mxu0 0.0
      %866 = vmatprep.subr.mxu0 0.0
      %867 = vmatpush1.msra.mxu0 0.0
      %868 = vmatprep.mubr.f32.mxu0 0.0
      %869 = vmatmul.mubr.f32.gmra.mrb[0].mxu0 %v781
      %v870 = vpop.f32.mrb[0].mxu0
      %v871 = vadd.f32 0.0, %v870
      %v872 = vpop.f32.mrb[0].mxu0
      %873 = vmatprep.mubr.f32.mxu0 0.0
      %874 = vmatmul.mubr.f32.gmra.mrb[0].mxu0 %v782
      %v875 = vpop.f32.mrb[0].mxu0
      %v876 = vadd.f32 0.0, %v875
      %v877 = vpop.f32.mrb[0].mxu0
      %878 = vmatprep.mubr.f32.mxu0 0.0
      %879 = vmatmul.mubr.f32.gmra.mrb[0].mxu0 %v783
      %v880 = vpop.f32.mrb[0].mxu0
      %v881 = vadd.f32 0.0, %v880
      %v882 = vpop.f32.mrb[0].mxu0
      %883 = vmatprep.mubr.f32.mxu0 0.0
      %884 = vmatmul.mubr.f32.gmra.mrb[0].mxu0 %v784
      %v885 = vpop.f32.mrb[0].mxu0
      %v886 = vadd.f32 0.0, %v885
      %v887 = vpop.f32.mrb[0].mxu0
      %888 = vmatprep.mubr.f32.mxu0 0.0
      %889 = vmatmul.mubr.f32.gmra.mrb[0].mxu0 %v785
      %v890 = vpop.f32.mrb[0].mxu0
      %v891 = vadd.f32 0.0, %v890
      %v892 = vpop.f32.mrb[0].mxu0
      %893 = vmatprep.mubr.f32.mxu0 0.0
      %894 = vmatmul.mubr.f32.gmra.mrb[0].mxu0 %v786
      %v895 = vpop.f32.mrb[0].mxu0
      %v896 = vadd.f32 0.0, %v895
      %v897 = vpop.f32.mrb[0].mxu0
      %898 = vdwg.mxu0
      %v899 = vadd.f32 %v775, %v871
      %v900 = vadd.f32 %v776, %v876
      %v901 = vadd.f32 %v777, %v881
      %v902 = vadd.f32 %v778, %v886
      %v903 = vadd.f32 %v779, %v891
      %v904 = vadd.f32 %v780, %v896
      %v905 = vld [vmem:[%s293 + $0x2] sm:$0xff]
      %v906 = vld [vmem:[%s293 + $0xa] sm:$0xff]
      %v907 = vld [vmem:[%s293 + $0x12] sm:$0xff]
      %v908 = vld [vmem:[%s293 + $0x1a] sm:$0xff]
      %v909 = vld [vmem:[%s293 + $0x22] sm:$0xff]
      %v910 = vld [vmem:[%s293 + $0x2a] sm:$0x3f]
      %s911 = scalar_lea.vmem %s3, 256
      %v912 = vld [vmem:[%s911] sm:$0xff]
      %v913 = vld [vmem:[%s911 + $0x8] sm:$0xff]
      %v914 = vld [vmem:[%s911 + $0x10] sm:$0xff]
      %v915 = vld [vmem:[%s911 + $0x18] sm:$0xff]
      %v916 = vld [vmem:[%s911 + $0x20] sm:$0xff]
      %v917 = vld [vmem:[%s911 + $0x28] sm:$0xff]
      %v918 = vld [vmem:[%s911 + $0x30] sm:$0xff]
      %v919 = vld [vmem:[%s911 + $0x38] sm:$0xff]
      %v920 = vld [vmem:[%s911 + $0x40] sm:$0xff]
      %v921 = vld [vmem:[%s911 + $0x48] sm:$0xff]
      %v922 = vld [vmem:[%s911 + $0x50] sm:$0xff]
      %v923 = vld [vmem:[%s911 + $0x58] sm:$0xff]
      %v924 = vld [vmem:[%s911 + $0x60] sm:$0xff]
      %v925 = vld [vmem:[%s911 + $0x68] sm:$0xff]
      %v926 = vld [vmem:[%s911 + $0x70] sm:$0xff]
      %v927 = vld [vmem:[%s911 + $0x78] sm:$0xff]
      %928 = vmatprep.subr.mxu0 0.0
      %929 = vmatpush1.msra.mxu0 %v912
      %930 = vmatprep.subr.mxu0 0.0
      %931 = vmatpush1.msra.mxu0 %v913
      %932 = vmatprep.subr.mxu0 0.0
      %933 = vmatpush1.msra.mxu0 %v914
      %934 = vmatprep.subr.mxu0 0.0
      %935 = vmatpush1.msra.mxu0 %v915
      %936 = vmatprep.subr.mxu0 0.0
      %937 = vmatpush1.msra.mxu0 %v916
      %938 = vmatprep.subr.mxu0 0.0
      %939 = vmatpush1.msra.mxu0 %v917
      %940 = vmatprep.subr.mxu0 0.0
      %941 = vmatpush1.msra.mxu0 %v918
      %942 = vmatprep.subr.mxu0 0.0
      %943 = vmatpush1.msra.mxu0 %v919
      %944 = vmatprep.subr.mxu0 0.0
      %945 = vmatpush1.msra.mxu0 %v920
      %946 = vmatprep.subr.mxu0 0.0
      %947 = vmatpush1.msra.mxu0 %v921
      %948 = vmatprep.subr.mxu0 0.0
      %949 = vmatpush1.msra.mxu0 %v922
      %950 = vmatprep.subr.mxu0 0.0
      %951 = vmatpush1.msra.mxu0 %v923
      %952 = vmatprep.subr.mxu0 0.0
      %953 = vmatpush1.msra.mxu0 %v924
      %954 = vmatprep.subr.mxu0 0.0
      %955 = vmatpush1.msra.mxu0 %v925
      %956 = vmatprep.subr.mxu0 0.0
      %957 = vmatpush1.msra.mxu0 %v926
      %958 = vmatprep.subr.mxu0 0.0
      %959 = vmatpush1.msra.mxu0 %v927
      %960 = vmatprep.subr.mxu0 0.0
      %961 = vmatpush1.msra.mxu0 0.0
      %962 = vmatprep.subr.mxu0 0.0
      %963 = vmatpush1.msra.mxu0 0.0
      %964 = vmatprep.subr.mxu0 0.0
      %965 = vmatpush1.msra.mxu0 0.0
      %966 = vmatprep.subr.mxu0 0.0
      %967 = vmatpush1.msra.mxu0 0.0
      %968 = vmatprep.subr.mxu0 0.0
      %969 = vmatpush1.msra.mxu0 0.0
      %970 = vmatprep.subr.mxu0 0.0
      %971 = vmatpush1.msra.mxu0 0.0
      %972 = vmatprep.subr.mxu0 0.0
      %973 = vmatpush1.msra.mxu0 0.0
      %974 = vmatprep.subr.mxu0 0.0
      %975 = vmatpush1.msra.mxu0 0.0
      %976 = vmatprep.subr.mxu0 0.0
      %977 = vmatpush1.msra.mxu0 0.0
      %978 = vmatprep.subr.mxu0 0.0
      %979 = vmatpush1.msra.mxu0 0.0
      %980 = vmatprep.subr.mxu0 0.0
      %981 = vmatpush1.msra.mxu0 0.0
      %982 = vmatprep.subr.mxu0 0.0
      %983 = vmatpush1.msra.mxu0 0.0
      %984 = vmatprep.subr.mxu0 0.0
      %985 = vmatpush1.msra.mxu0 0.0
      %986 = vmatprep.subr.mxu0 0.0
      %987 = vmatpush1.msra.mxu0 0.0
      %988 = vmatprep.subr.mxu0 0.0
      %989 = vmatpush1.msra.mxu0 0.0
      %990 = vmatprep.subr.mxu0 0.0
      %991 = vmatpush1.msra.mxu0 0.0
      %992 = vmatprep.mubr.f32.mxu0 0.0
      %993 = vmatmul.mubr.f32.gmra.mrb[0].mxu0 %v905
      %v994 = vpop.f32.mrb[0].mxu0
      %v995 = vadd.f32 0.0, %v994
      %v996 = vpop.f32.mrb[0].mxu0
      %997 = vmatprep.mubr.f32.mxu0 0.0
      %998 = vmatmul.mubr.f32.gmra.mrb[0].mxu0 %v906
      %v999 = vpop.f32.mrb[0].mxu0
      %v1000 = vadd.f32 0.0, %v999
      %v1001 = vpop.f32.mrb[0].mxu0
      %1002 = vmatprep.mubr.f32.mxu0 0.0
      %1003 = vmatmul.mubr.f32.gmra.mrb[0].mxu0 %v907
      %v1004 = vpop.f32.mrb[0].mxu0
      %v1005 = vadd.f32 0.0, %v1004
      %v1006 = vpop.f32.mrb[0].mxu0
      %1007 = vmatprep.mubr.f32.mxu0 0.0
      %1008 = vmatmul.mubr.f32.gmra.mrb[0].mxu0 %v908
      %v1009 = vpop.f32.mrb[0].mxu0
      %v1010 = vadd.f32 0.0, %v1009
      %v1011 = vpop.f32.mrb[0].mxu0
      %1012 = vmatprep.mubr.f32.mxu0 0.0
      %1013 = vmatmul.mubr.f32.gmra.mrb[0].mxu0 %v909
      %v1014 = vpop.f32.mrb[0].mxu0
      %v1015 = vadd.f32 0.0, %v1014
      %v1016 = vpop.f32.mrb[0].mxu0
      %1017 = vmatprep.mubr.f32.mxu0 0.0
      %1018 = vmatmul.mubr.f32.gmra.mrb[0].mxu0 %v910
      %v1019 = vpop.f32.mrb[0].mxu0
      %v1020 = vadd.f32 0.0, %v1019
      %v1021 = vpop.f32.mrb[0].mxu0
      %1022 = vdwg.mxu0
      %v1023 = vadd.f32 %v899, %v995
      %v1024 = vadd.f32 %v900, %v1000
      %v1025 = vadd.f32 %v901, %v1005
      %v1026 = vadd.f32 %v902, %v1010
      %v1027 = vadd.f32 %v903, %v1015
      %v1028 = vadd.f32 %v904, %v1020
      %v1029 = vld [vmem:[%s288 + $0x8] sm:$0xff]
      %v1030 = vld [vmem:[%s288 + $0x10] sm:$0xff]
      %v1031 = vld [vmem:[%s288 + $0x18] sm:$0xff]
      %v1032 = vld [vmem:[%s288 + $0x20] sm:$0xff]
      %v1033 = vld [vmem:[%s288 + $0x28] sm:$0xff]
      %v1034 = vld [vmem:[%s288 + $0x30] sm:$0x3f]
      %s1035 = scalar_lea.vmem %s2, 384
      %v1036 = vld [vmem:[%s1035] sm:$0xff]
      %v1037 = vld [vmem:[%s1035 + $0x8] sm:$0xff]
      %v1038 = vld [vmem:[%s1035 + $0x10] sm:$0xff]
      %v1039 = vld [vmem:[%s1035 + $0x18] sm:$0xff]
      %v1040 = vld [vmem:[%s1035 + $0x20] sm:$0xff]
      %v1041 = vld [vmem:[%s1035 + $0x28] sm:$0xff]
      %v1042 = vld [vmem:[%s1035 + $0x30] sm:$0xff]
      %v1043 = vld [vmem:[%s1035 + $0x38] sm:$0xff]
      %v1044 = vld [vmem:[%s1035 + $0x40] sm:$0xff]
      %v1045 = vld [vmem:[%s1035 + $0x48] sm:$0xff]
      %v1046 = vld [vmem:[%s1035 + $0x50] sm:$0xff]
      %v1047 = vld [vmem:[%s1035 + $0x58] sm:$0xff]
      %v1048 = vld [vmem:[%s1035 + $0x60] sm:$0xff]
      %v1049 = vld [vmem:[%s1035 + $0x68] sm:$0xff]
      %v1050 = vld [vmem:[%s1035 + $0x70] sm:$0xff]
      %v1051 = vld [vmem:[%s1035 + $0x78] sm:$0xff]
      %1052 = vmatprep.subr.mxu0 0.0
      %1053 = vmatpush1.msra.mxu0 %v1036
      %1054 = vmatprep.subr.mxu0 0.0
      %1055 = vmatpush1.msra.mxu0 %v1037
      %1056 = vmatprep.subr.mxu0 0.0
      %1057 = vmatpush1.msra.mxu0 %v1038
      %1058 = vmatprep.subr.mxu0 0.0
      %1059 = vmatpush1.msra.mxu0 %v1039
      %1060 = vmatprep.subr.mxu0 0.0
      %1061 = vmatpush1.msra.mxu0 %v1040
      %1062 = vmatprep.subr.mxu0 0.0
      %1063 = vmatpush1.msra.mxu0 %v1041
      %1064 = vmatprep.subr.mxu0 0.0
      %1065 = vmatpush1.msra.mxu0 %v1042
      %1066 = vmatprep.subr.mxu0 0.0
      %1067 = vmatpush1.msra.mxu0 %v1043
      %1068 = vmatprep.subr.mxu0 0.0
      %1069 = vmatpush1.msra.mxu0 %v1044
      %1070 = vmatprep.subr.mxu0 0.0
      %1071 = vmatpush1.msra.mxu0 %v1045
      %1072 = vmatprep.subr.mxu0 0.0
      %1073 = vmatpush1.msra.mxu0 %v1046
      %1074 = vmatprep.subr.mxu0 0.0
      %1075 = vmatpush1.msra.mxu0 %v1047
      %1076 = vmatprep.subr.mxu0 0.0
      %1077 = vmatpush1.msra.mxu0 %v1048
      %1078 = vmatprep.subr.mxu0 0.0
      %1079 = vmatpush1.msra.mxu0 %v1049
      %1080 = vmatprep.subr.mxu0 0.0
      %1081 = vmatpush1.msra.mxu0 %v1050
      %1082 = vmatprep.subr.mxu0 0.0
      %1083 = vmatpush1.msra.mxu0 %v1051
      %1084 = vmatprep.subr.mxu0 0.0
      %1085 = vmatpush1.msra.mxu0 0.0
      %1086 = vmatprep.subr.mxu0 0.0
      %1087 = vmatpush1.msra.mxu0 0.0
      %1088 = vmatprep.subr.mxu0 0.0
      %1089 = vmatpush1.msra.mxu0 0.0
      %1090 = vmatprep.subr.mxu0 0.0
      %1091 = vmatpush1.msra.mxu0 0.0
      %1092 = vmatprep.subr.mxu0 0.0
      %1093 = vmatpush1.msra.mxu0 0.0
      %1094 = vmatprep.subr.mxu0 0.0
      %1095 = vmatpush1.msra.mxu0 0.0
      %1096 = vmatprep.subr.mxu0 0.0
      %1097 = vmatpush1.msra.mxu0 0.0
      %1098 = vmatprep.subr.mxu0 0.0
      %1099 = vmatpush1.msra.mxu0 0.0
      %1100 = vmatprep.subr.mxu0 0.0
      %1101 = vmatpush1.msra.mxu0 0.0
      %1102 = vmatprep.subr.mxu0 0.0
      %1103 = vmatpush1.msra.mxu0 0.0
      %1104 = vmatprep.subr.mxu0 0.0
      %1105 = vmatpush1.msra.mxu0 0.0
      %1106 = vmatprep.subr.mxu0 0.0
      %1107 = vmatpush1.msra.mxu0 0.0
      %1108 = vmatprep.subr.mxu0 0.0
      %1109 = vmatpush1.msra.mxu0 0.0
      %1110 = vmatprep.subr.mxu0 0.0
      %1111 = vmatpush1.msra.mxu0 0.0
      %1112 = vmatprep.subr.mxu0 0.0
      %1113 = vmatpush1.msra.mxu0 0.0
      %1114 = vmatprep.subr.mxu0 0.0
      %1115 = vmatpush1.msra.mxu0 0.0
      %1116 = vmatprep.mubr.f32.mxu0 0.0
      %1117 = vmatmul.mubr.f32.gmra.mrb[0].mxu0 %v1029
      %v1118 = vpop.f32.mrb[0].mxu0
      %v1119 = vadd.f32 0.0, %v1118
      %v1120 = vpop.f32.mrb[0].mxu0
      %1121 = vmatprep.mubr.f32.mxu0 0.0
      %1122 = vmatmul.mubr.f32.gmra.mrb[0].mxu0 %v1030
      %v1123 = vpop.f32.mrb[0].mxu0
      %v1124 = vadd.f32 0.0, %v1123
      %v1125 = vpop.f32.mrb[0].mxu0
      %1126 = vmatprep.mubr.f32.mxu0 0.0
      %1127 = vmatmul.mubr.f32.gmra.mrb[0].mxu0 %v1031
      %v1128 = vpop.f32.mrb[0].mxu0
      %v1129 = vadd.f32 0.0, %v1128
      %v1130 = vpop.f32.mrb[0].mxu0
      %1131 = vmatprep.mubr.f32.mxu0 0.0
      %1132 = vmatmul.mubr.f32.gmra.mrb[0].mxu0 %v1032
      %v1133 = vpop.f32.mrb[0].mxu0
      %v1134 = vadd.f32 0.0, %v1133
      %v1135 = vpop.f32.mrb[0].mxu0
      %1136 = vmatprep.mubr.f32.mxu0 0.0
      %1137 = vmatmul.mubr.f32.gmra.mrb[0].mxu0 %v1033
      %v1138 = vpop.f32.mrb[0].mxu0
      %v1139 = vadd.f32 0.0, %v1138
      %v1140 = vpop.f32.mrb[0].mxu0
      %1141 = vmatprep.mubr.f32.mxu0 0.0
      %1142 = vmatmul.mubr.f32.gmra.mrb[0].mxu0 %v1034
      %v1143 = vpop.f32.mrb[0].mxu0
      %v1144 = vadd.f32 0.0, %v1143
      %v1145 = vpop.f32.mrb[0].mxu0
      %1146 = vdwg.mxu0
      %v1147 = vadd.f32 %v1023, %v1119
      %v1148 = vadd.f32 %v1024, %v1124
      %v1149 = vadd.f32 %v1025, %v1129
      %v1150 = vadd.f32 %v1026, %v1134
      %v1151 = vadd.f32 %v1027, %v1139
      %v1152 = vadd.f32 %v1028, %v1144
      %v1153 = vld [vmem:[%s293 + $0x8] sm:$0xff]
      %v1154 = vld [vmem:[%s293 + $0x10] sm:$0xff]
      %v1155 = vld [vmem:[%s293 + $0x18] sm:$0xff]
      %v1156 = vld [vmem:[%s293 + $0x20] sm:$0xff]
      %v1157 = vld [vmem:[%s293 + $0x28] sm:$0xff]
      %v1158 = vld [vmem:[%s293 + $0x30] sm:$0x3f]
      %s1159 = scalar_lea.vmem %s3, 384
      %v1160 = vld [vmem:[%s1159] sm:$0xff]
      %v1161 = vld [vmem:[%s1159 + $0x8] sm:$0xff]
      %v1162 = vld [vmem:[%s1159 + $0x10] sm:$0xff]
      %v1163 = vld [vmem:[%s1159 + $0x18] sm:$0xff]
      %v1164 = vld [vmem:[%s1159 + $0x20] sm:$0xff]
      %v1165 = vld [vmem:[%s1159 + $0x28] sm:$0xff]
      %v1166 = vld [vmem:[%s1159 + $0x30] sm:$0xff]
      %v1167 = vld [vmem:[%s1159 + $0x38] sm:$0xff]
      %v1168 = vld [vmem:[%s1159 + $0x40] sm:$0xff]
      %v1169 = vld [vmem:[%s1159 + $0x48] sm:$0xff]
      %v1170 = vld [vmem:[%s1159 + $0x50] sm:$0xff]
      %v1171 = vld [vmem:[%s1159 + $0x58] sm:$0xff]
      %v1172 = vld [vmem:[%s1159 + $0x60] sm:$0xff]
      %v1173 = vld [vmem:[%s1159 + $0x68] sm:$0xff]
      %v1174 = vld [vmem:[%s1159 + $0x70] sm:$0xff]
      %v1175 = vld [vmem:[%s1159 + $0x78] sm:$0xff]
      %1176 = vmatprep.subr.mxu0 0.0
      %1177 = vmatpush1.msra.mxu0 %v1160
      %1178 = vmatprep.subr.mxu0 0.0
      %1179 = vmatpush1.msra.mxu0 %v1161
      %1180 = vmatprep.subr.mxu0 0.0
      %1181 = vmatpush1.msra.mxu0 %v1162
      %1182 = vmatprep.subr.mxu0 0.0
      %1183 = vmatpush1.msra.mxu0 %v1163
      %1184 = vmatprep.subr.mxu0 0.0
      %1185 = vmatpush1.msra.mxu0 %v1164
      %1186 = vmatprep.subr.mxu0 0.0
      %1187 = vmatpush1.msra.mxu0 %v1165
      %1188 = vmatprep.subr.mxu0 0.0
      %1189 = vmatpush1.msra.mxu0 %v1166
      %1190 = vmatprep.subr.mxu0 0.0
      %1191 = vmatpush1.msra.mxu0 %v1167
      %1192 = vmatprep.subr.mxu0 0.0
      %1193 = vmatpush1.msra.mxu0 %v1168
      %1194 = vmatprep.subr.mxu0 0.0
      %1195 = vmatpush1.msra.mxu0 %v1169
      %1196 = vmatprep.subr.mxu0 0.0
      %1197 = vmatpush1.msra.mxu0 %v1170
      %1198 = vmatprep.subr.mxu0 0.0
      %1199 = vmatpush1.msra.mxu0 %v1171
      %1200 = vmatprep.subr.mxu0 0.0
      %1201 = vmatpush1.msra.mxu0 %v1172
      %1202 = vmatprep.subr.mxu0 0.0
      %1203 = vmatpush1.msra.mxu0 %v1173
      %1204 = vmatprep.subr.mxu0 0.0
      %1205 = vmatpush1.msra.mxu0 %v1174
      %1206 = vmatprep.subr.mxu0 0.0
      %1207 = vmatpush1.msra.mxu0 %v1175
      %1208 = vmatprep.subr.mxu0 0.0
      %1209 = vmatpush1.msra.mxu0 0.0
      %1210 = vmatprep.subr.mxu0 0.0
      %1211 = vmatpush1.msra.mxu0 0.0
      %1212 = vmatprep.subr.mxu0 0.0
      %1213 = vmatpush1.msra.mxu0 0.0
      %1214 = vmatprep.subr.mxu0 0.0
      %1215 = vmatpush1.msra.mxu0 0.0
      %1216 = vmatprep.subr.mxu0 0.0
      %1217 = vmatpush1.msra.mxu0 0.0
      %1218 = vmatprep.subr.mxu0 0.0
      %1219 = vmatpush1.msra.mxu0 0.0
      %1220 = vmatprep.subr.mxu0 0.0
      %1221 = vmatpush1.msra.mxu0 0.0
      %1222 = vmatprep.subr.mxu0 0.0
      %1223 = vmatpush1.msra.mxu0 0.0
      %1224 = vmatprep.subr.mxu0 0.0
      %1225 = vmatpush1.msra.mxu0 0.0
      %1226 = vmatprep.subr.mxu0 0.0
      %1227 = vmatpush1.msra.mxu0 0.0
      %1228 = vmatprep.subr.mxu0 0.0
      %1229 = vmatpush1.msra.mxu0 0.0
      %1230 = vmatprep.subr.mxu0 0.0
      %1231 = vmatpush1.msra.mxu0 0.0
      %1232 = vmatprep.subr.mxu0 0.0
      %1233 = vmatpush1.msra.mxu0 0.0
      %1234 = vmatprep.subr.mxu0 0.0
      %1235 = vmatpush1.msra.mxu0 0.0
      %1236 = vmatprep.subr.mxu0 0.0
      %1237 = vmatpush1.msra.mxu0 0.0
      %1238 = vmatprep.subr.mxu0 0.0
      %1239 = vmatpush1.msra.mxu0 0.0
      %1240 = vmatprep.mubr.f32.mxu0 0.0
      %1241 = vmatmul.mubr.f32.gmra.mrb[0].mxu0 %v1153
      %v1242 = vpop.f32.mrb[0].mxu0
      %v1243 = vadd.f32 0.0, %v1242
      %v1244 = vpop.f32.mrb[0].mxu0
      %1245 = vmatprep.mubr.f32.mxu0 0.0
      %1246 = vmatmul.mubr.f32.gmra.mrb[0].mxu0 %v1154
      %v1247 = vpop.f32.mrb[0].mxu0
      %v1248 = vadd.f32 0.0, %v1247
      %v1249 = vpop.f32.mrb[0].mxu0
      %1250 = vmatprep.mubr.f32.mxu0 0.0
      %1251 = vmatmul.mubr.f32.gmra.mrb[0].mxu0 %v1155
      %v1252 = vpop.f32.mrb[0].mxu0
      %v1253 = vadd.f32 0.0, %v1252
      %v1254 = vpop.f32.mrb[0].mxu0
      %1255 = vmatprep.mubr.f32.mxu0 0.0
      %1256 = vmatmul.mubr.f32.gmra.mrb[0].mxu0 %v1156
      %v1257 = vpop.f32.mrb[0].mxu0
      %v1258 = vadd.f32 0.0, %v1257
      %v1259 = vpop.f32.mrb[0].mxu0
      %1260 = vmatprep.mubr.f32.mxu0 0.0
      %1261 = vmatmul.mubr.f32.gmra.mrb[0].mxu0 %v1157
      %v1262 = vpop.f32.mrb[0].mxu0
      %v1263 = vadd.f32 0.0, %v1262
      %v1264 = vpop.f32.mrb[0].mxu0
      %1265 = vmatprep.mubr.f32.mxu0 0.0
      %1266 = vmatmul.mubr.f32.gmra.mrb[0].mxu0 %v1158
      %v1267 = vpop.f32.mrb[0].mxu0
      %v1268 = vadd.f32 0.0, %v1267
      %v1269 = vpop.f32.mrb[0].mxu0
      %1270 = vdwg.mxu0
      %v1271 = vadd.f32 %v1147, %v1243
      %v1272 = vadd.f32 %v1148, %v1248
      %v1273 = vadd.f32 %v1149, %v1253
      %v1274 = vadd.f32 %v1150, %v1258
      %v1275 = vadd.f32 %v1151, %v1263
      %v1276 = vadd.f32 %v1152, %v1268
      %v1277 = vld [vmem:[%s288 + $0x9] sm:$0xff]
      %v1278 = vld [vmem:[%s288 + $0x11] sm:$0xff]
      %v1279 = vld [vmem:[%s288 + $0x19] sm:$0xff]
      %v1280 = vld [vmem:[%s288 + $0x21] sm:$0xff]
      %v1281 = vld [vmem:[%s288 + $0x29] sm:$0xff]
      %v1282 = vld [vmem:[%s288 + $0x31] sm:$0x3f]
      %s1283 = scalar_lea.vmem %s2, 512
      %v1284 = vld [vmem:[%s1283] sm:$0xff]
      %v1285 = vld [vmem:[%s1283 + $0x8] sm:$0xff]
      %v1286 = vld [vmem:[%s1283 + $0x10] sm:$0xff]
      %v1287 = vld [vmem:[%s1283 + $0x18] sm:$0xff]
      %v1288 = vld [vmem:[%s1283 + $0x20] sm:$0xff]
      %v1289 = vld [vmem:[%s1283 + $0x28] sm:$0xff]
      %v1290 = vld [vmem:[%s1283 + $0x30] sm:$0xff]
      %v1291 = vld [vmem:[%s1283 + $0x38] sm:$0xff]
      %v1292 = vld [vmem:[%s1283 + $0x40] sm:$0xff]
      %v1293 = vld [vmem:[%s1283 + $0x48] sm:$0xff]
      %v1294 = vld [vmem:[%s1283 + $0x50] sm:$0xff]
      %v1295 = vld [vmem:[%s1283 + $0x58] sm:$0xff]
      %v1296 = vld [vmem:[%s1283 + $0x60] sm:$0xff]
      %v1297 = vld [vmem:[%s1283 + $0x68] sm:$0xff]
      %v1298 = vld [vmem:[%s1283 + $0x70] sm:$0xff]
      %v1299 = vld [vmem:[%s1283 + $0x78] sm:$0xff]
      %1300 = vmatprep.subr.mxu0 0.0
      %1301 = vmatpush1.msra.mxu0 %v1284
      %1302 = vmatprep.subr.mxu0 0.0
      %1303 = vmatpush1.msra.mxu0 %v1285
      %1304 = vmatprep.subr.mxu0 0.0
      %1305 = vmatpush1.msra.mxu0 %v1286
      %1306 = vmatprep.subr.mxu0 0.0
      %1307 = vmatpush1.msra.mxu0 %v1287
      %1308 = vmatprep.subr.mxu0 0.0
      %1309 = vmatpush1.msra.mxu0 %v1288
      %1310 = vmatprep.subr.mxu0 0.0
      %1311 = vmatpush1.msra.mxu0 %v1289
      %1312 = vmatprep.subr.mxu0 0.0
      %1313 = vmatpush1.msra.mxu0 %v1290
      %1314 = vmatprep.subr.mxu0 0.0
      %1315 = vmatpush1.msra.mxu0 %v1291
      %1316 = vmatprep.subr.mxu0 0.0
      %1317 = vmatpush1.msra.mxu0 %v1292
      %1318 = vmatprep.subr.mxu0 0.0
      %1319 = vmatpush1.msra.mxu0 %v1293
      %1320 = vmatprep.subr.mxu0 0.0
      %1321 = vmatpush1.msra.mxu0 %v1294
      %1322 = vmatprep.subr.mxu0 0.0
      %1323 = vmatpush1.msra.mxu0 %v1295
      %1324 = vmatprep.subr.mxu0 0.0
      %1325 = vmatpush1.msra.mxu0 %v1296
      %1326 = vmatprep.subr.mxu0 0.0
      %1327 = vmatpush1.msra.mxu0 %v1297
      %1328 = vmatprep.subr.mxu0 0.0
      %1329 = vmatpush1.msra.mxu0 %v1298
      %1330 = vmatprep.subr.mxu0 0.0
      %1331 = vmatpush1.msra.mxu0 %v1299
      %1332 = vmatprep.subr.mxu0 0.0
      %1333 = vmatpush1.msra.mxu0 0.0
      %1334 = vmatprep.subr.mxu0 0.0
      %1335 = vmatpush1.msra.mxu0 0.0
      %1336 = vmatprep.subr.mxu0 0.0
      %1337 = vmatpush1.msra.mxu0 0.0
      %1338 = vmatprep.subr.mxu0 0.0
      %1339 = vmatpush1.msra.mxu0 0.0
      %1340 = vmatprep.subr.mxu0 0.0
      %1341 = vmatpush1.msra.mxu0 0.0
      %1342 = vmatprep.subr.mxu0 0.0
      %1343 = vmatpush1.msra.mxu0 0.0
      %1344 = vmatprep.subr.mxu0 0.0
      %1345 = vmatpush1.msra.mxu0 0.0
      %1346 = vmatprep.subr.mxu0 0.0
      %1347 = vmatpush1.msra.mxu0 0.0
      %1348 = vmatprep.subr.mxu0 0.0
      %1349 = vmatpush1.msra.mxu0 0.0
      %1350 = vmatprep.subr.mxu0 0.0
      %1351 = vmatpush1.msra.mxu0 0.0
      %1352 = vmatprep.subr.mxu0 0.0
      %1353 = vmatpush1.msra.mxu0 0.0
      %1354 = vmatprep.subr.mxu0 0.0
      %1355 = vmatpush1.msra.mxu0 0.0
      %1356 = vmatprep.subr.mxu0 0.0
      %1357 = vmatpush1.msra.mxu0 0.0
      %1358 = vmatprep.subr.mxu0 0.0
      %1359 = vmatpush1.msra.mxu0 0.0
      %1360 = vmatprep.subr.mxu0 0.0
      %1361 = vmatpush1.msra.mxu0 0.0
      %1362 = vmatprep.subr.mxu0 0.0
      %1363 = vmatpush1.msra.mxu0 0.0
      %1364 = vmatprep.mubr.f32.mxu0 0.0
      %1365 = vmatmul.mubr.f32.gmra.mrb[0].mxu0 %v1277
      %v1366 = vpop.f32.mrb[0].mxu0
      %v1367 = vadd.f32 0.0, %v1366
      %v1368 = vpop.f32.mrb[0].mxu0
      %1369 = vmatprep.mubr.f32.mxu0 0.0
      %1370 = vmatmul.mubr.f32.gmra.mrb[0].mxu0 %v1278
      %v1371 = vpop.f32.mrb[0].mxu0
      %v1372 = vadd.f32 0.0, %v1371
      %v1373 = vpop.f32.mrb[0].mxu0
      %1374 = vmatprep.mubr.f32.mxu0 0.0
      %1375 = vmatmul.mubr.f32.gmra.mrb[0].mxu0 %v1279
      %v1376 = vpop.f32.mrb[0].mxu0
      %v1377 = vadd.f32 0.0, %v1376
      %v1378 = vpop.f32.mrb[0].mxu0
      %1379 = vmatprep.mubr.f32.mxu0 0.0
      %1380 = vmatmul.mubr.f32.gmra.mrb[0].mxu0 %v1280
      %v1381 = vpop.f32.mrb[0].mxu0
      %v1382 = vadd.f32 0.0, %v1381
      %v1383 = vpop.f32.mrb[0].mxu0
      %1384 = vmatprep.mubr.f32.mxu0 0.0
      %1385 = vmatmul.mubr.f32.gmra.mrb[0].mxu0 %v1281
      %v1386 = vpop.f32.mrb[0].mxu0
      %v1387 = vadd.f32 0.0, %v1386
      %v1388 = vpop.f32.mrb[0].mxu0
      %1389 = vmatprep.mubr.f32.mxu0 0.0
      %1390 = vmatmul.mubr.f32.gmra.mrb[0].mxu0 %v1282
      %v1391 = vpop.f32.mrb[0].mxu0
      %v1392 = vadd.f32 0.0, %v1391
      %v1393 = vpop.f32.mrb[0].mxu0
      %1394 = vdwg.mxu0
      %v1395 = vadd.f32 %v1271, %v1367
      %v1396 = vadd.f32 %v1272, %v1372
      %v1397 = vadd.f32 %v1273, %v1377
      %v1398 = vadd.f32 %v1274, %v1382
      %v1399 = vadd.f32 %v1275, %v1387
      %v1400 = vadd.f32 %v1276, %v1392
      %v1401 = vld [vmem:[%s293 + $0x9] sm:$0xff]
      %v1402 = vld [vmem:[%s293 + $0x11] sm:$0xff]
      %v1403 = vld [vmem:[%s293 + $0x19] sm:$0xff]
      %v1404 = vld [vmem:[%s293 + $0x21] sm:$0xff]
      %v1405 = vld [vmem:[%s293 + $0x29] sm:$0xff]
      %v1406 = vld [vmem:[%s293 + $0x31] sm:$0x3f]
      %s1407 = scalar_lea.vmem %s3, 512
      %v1408 = vld [vmem:[%s1407] sm:$0xff]
      %v1409 = vld [vmem:[%s1407 + $0x8] sm:$0xff]
      %v1410 = vld [vmem:[%s1407 + $0x10] sm:$0xff]
      %v1411 = vld [vmem:[%s1407 + $0x18] sm:$0xff]
      %v1412 = vld [vmem:[%s1407 + $0x20] sm:$0xff]
      %v1413 = vld [vmem:[%s1407 + $0x28] sm:$0xff]
      %v1414 = vld [vmem:[%s1407 + $0x30] sm:$0xff]
      %v1415 = vld [vmem:[%s1407 + $0x38] sm:$0xff]
      %v1416 = vld [vmem:[%s1407 + $0x40] sm:$0xff]
      %v1417 = vld [vmem:[%s1407 + $0x48] sm:$0xff]
      %v1418 = vld [vmem:[%s1407 + $0x50] sm:$0xff]
      %v1419 = vld [vmem:[%s1407 + $0x58] sm:$0xff]
      %v1420 = vld [vmem:[%s1407 + $0x60] sm:$0xff]
      %v1421 = vld [vmem:[%s1407 + $0x68] sm:$0xff]
      %v1422 = vld [vmem:[%s1407 + $0x70] sm:$0xff]
      %v1423 = vld [vmem:[%s1407 + $0x78] sm:$0xff]
      %1424 = vmatprep.subr.mxu0 0.0
      %1425 = vmatpush1.msra.mxu0 %v1408
      %1426 = vmatprep.subr.mxu0 0.0
      %1427 = vmatpush1.msra.mxu0 %v1409
      %1428 = vmatprep.subr.mxu0 0.0
      %1429 = vmatpush1.msra.mxu0 %v1410
      %1430 = vmatprep.subr.mxu0 0.0
      %1431 = vmatpush1.msra.mxu0 %v1411
      %1432 = vmatprep.subr.mxu0 0.0
      %1433 = vmatpush1.msra.mxu0 %v1412
      %1434 = vmatprep.subr.mxu0 0.0
      %1435 = vmatpush1.msra.mxu0 %v1413
      %1436 = vmatprep.subr.mxu0 0.0
      %1437 = vmatpush1.msra.mxu0 %v1414
      %1438 = vmatprep.subr.mxu0 0.0
      %1439 = vmatpush1.msra.mxu0 %v1415
      %1440 = vmatprep.subr.mxu0 0.0
      %1441 = vmatpush1.msra.mxu0 %v1416
      %1442 = vmatprep.subr.mxu0 0.0
      %1443 = vmatpush1.msra.mxu0 %v1417
      %1444 = vmatprep.subr.mxu0 0.0
      %1445 = vmatpush1.msra.mxu0 %v1418
      %1446 = vmatprep.subr.mxu0 0.0
      %1447 = vmatpush1.msra.mxu0 %v1419
      %1448 = vmatprep.subr.mxu0 0.0
      %1449 = vmatpush1.msra.mxu0 %v1420
      %1450 = vmatprep.subr.mxu0 0.0
      %1451 = vmatpush1.msra.mxu0 %v1421
      %1452 = vmatprep.subr.mxu0 0.0
      %1453 = vmatpush1.msra.mxu0 %v1422
      %1454 = vmatprep.subr.mxu0 0.0
      %1455 = vmatpush1.msra.mxu0 %v1423
      %1456 = vmatprep.subr.mxu0 0.0
      %1457 = vmatpush1.msra.mxu0 0.0
      %1458 = vmatprep.subr.mxu0 0.0
      %1459 = vmatpush1.msra.mxu0 0.0
      %1460 = vmatprep.subr.mxu0 0.0
      %1461 = vmatpush1.msra.mxu0 0.0
      %1462 = vmatprep.subr.mxu0 0.0
      %1463 = vmatpush1.msra.mxu0 0.0
      %1464 = vmatprep.subr.mxu0 0.0
      %1465 = vmatpush1.msra.mxu0 0.0
      %1466 = vmatprep.subr.mxu0 0.0
      %1467 = vmatpush1.msra.mxu0 0.0
      %1468 = vmatprep.subr.mxu0 0.0
      %1469 = vmatpush1.msra.mxu0 0.0
      %1470 = vmatprep.subr.mxu0 0.0
      %1471 = vmatpush1.msra.mxu0 0.0
      %1472 = vmatprep.subr.mxu0 0.0
      %1473 = vmatpush1.msra.mxu0 0.0
      %1474 = vmatprep.subr.mxu0 0.0
      %1475 = vmatpush1.msra.mxu0 0.0
      %1476 = vmatprep.subr.mxu0 0.0
      %1477 = vmatpush1.msra.mxu0 0.0
      %1478 = vmatprep.subr.mxu0 0.0
      %1479 = vmatpush1.msra.mxu0 0.0
      %1480 = vmatprep.subr.mxu0 0.0
      %1481 = vmatpush1.msra.mxu0 0.0
      %1482 = vmatprep.subr.mxu0 0.0
      %1483 = vmatpush1.msra.mxu0 0.0
      %1484 = vmatprep.subr.mxu0 0.0
      %1485 = vmatpush1.msra.mxu0 0.0
      %1486 = vmatprep.subr.mxu0 0.0
      %1487 = vmatpush1.msra.mxu0 0.0
      %1488 = vmatprep.mubr.f32.mxu0 0.0
      %1489 = vmatmul.mubr.f32.gmra.mrb[0].mxu0 %v1401
      %v1490 = vpop.f32.mrb[0].mxu0
      %v1491 = vadd.f32 0.0, %v1490
      %v1492 = vpop.f32.mrb[0].mxu0
      %1493 = vmatprep.mubr.f32.mxu0 0.0
      %1494 = vmatmul.mubr.f32.gmra.mrb[0].mxu0 %v1402
      %v1495 = vpop.f32.mrb[0].mxu0
      %v1496 = vadd.f32 0.0, %v1495
      %v1497 = vpop.f32.mrb[0].mxu0
      %1498 = vmatprep.mubr.f32.mxu0 0.0
      %1499 = vmatmul.mubr.f32.gmra.mrb[0].mxu0 %v1403
      %v1500 = vpop.f32.mrb[0].mxu0
      %v1501 = vadd.f32 0.0, %v1500
      %v1502 = vpop.f32.mrb[0].mxu0
      %1503 = vmatprep.mubr.f32.mxu0 0.0
      %1504 = vmatmul.mubr.f32.gmra.mrb[0].mxu0 %v1404
      %v1505 = vpop.f32.mrb[0].mxu0
      %v1506 = vadd.f32 0.0, %v1505
      %v1507 = vpop.f32.mrb[0].mxu0
      %1508 = vmatprep.mubr.f32.mxu0 0.0
      %1509 = vmatmul.mubr.f32.gmra.mrb[0].mxu0 %v1405
      %v1510 = vpop.f32.mrb[0].mxu0
      %v1511 = vadd.f32 0.0, %v1510
      %v1512 = vpop.f32.mrb[0].mxu0
      %1513 = vmatprep.mubr.f32.mxu0 0.0
      %1514 = vmatmul.mubr.f32.gmra.mrb[0].mxu0 %v1406
      %v1515 = vpop.f32.mrb[0].mxu0
      %v1516 = vadd.f32 0.0, %v1515
      %v1517 = vpop.f32.mrb[0].mxu0
      %1518 = vdwg.mxu0
      %v1519 = vadd.f32 %v1395, %v1491
      %v1520 = vadd.f32 %v1396, %v1496
      %v1521 = vadd.f32 %v1397, %v1501
      %v1522 = vadd.f32 %v1398, %v1506
      %v1523 = vadd.f32 %v1399, %v1511
      %v1524 = vadd.f32 %v1400, %v1516
      %v1525 = vld [vmem:[%s288 + $0xa] sm:$0xff]
      %v1526 = vld [vmem:[%s288 + $0x12] sm:$0xff]
      %v1527 = vld [vmem:[%s288 + $0x1a] sm:$0xff]
      %v1528 = vld [vmem:[%s288 + $0x22] sm:$0xff]
      %v1529 = vld [vmem:[%s288 + $0x2a] sm:$0xff]
      %v1530 = vld [vmem:[%s288 + $0x32] sm:$0x3f]
      %s1531 = scalar_lea.vmem %s2, 640
      %v1532 = vld [vmem:[%s1531] sm:$0xff]
      %v1533 = vld [vmem:[%s1531 + $0x8] sm:$0xff]
      %v1534 = vld [vmem:[%s1531 + $0x10] sm:$0xff]
      %v1535 = vld [vmem:[%s1531 + $0x18] sm:$0xff]
      %v1536 = vld [vmem:[%s1531 + $0x20] sm:$0xff]
      %v1537 = vld [vmem:[%s1531 + $0x28] sm:$0xff]
      %v1538 = vld [vmem:[%s1531 + $0x30] sm:$0xff]
      %v1539 = vld [vmem:[%s1531 + $0x38] sm:$0xff]
      %v1540 = vld [vmem:[%s1531 + $0x40] sm:$0xff]
      %v1541 = vld [vmem:[%s1531 + $0x48] sm:$0xff]
      %v1542 = vld [vmem:[%s1531 + $0x50] sm:$0xff]
      %v1543 = vld [vmem:[%s1531 + $0x58] sm:$0xff]
      %v1544 = vld [vmem:[%s1531 + $0x60] sm:$0xff]
      %v1545 = vld [vmem:[%s1531 + $0x68] sm:$0xff]
      %v1546 = vld [vmem:[%s1531 + $0x70] sm:$0xff]
      %v1547 = vld [vmem:[%s1531 + $0x78] sm:$0xff]
      %1548 = vmatprep.subr.mxu0 0.0
      %1549 = vmatpush1.msra.mxu0 %v1532
      %1550 = vmatprep.subr.mxu0 0.0
      %1551 = vmatpush1.msra.mxu0 %v1533
      %1552 = vmatprep.subr.mxu0 0.0
      %1553 = vmatpush1.msra.mxu0 %v1534
      %1554 = vmatprep.subr.mxu0 0.0
      %1555 = vmatpush1.msra.mxu0 %v1535
      %1556 = vmatprep.subr.mxu0 0.0
      %1557 = vmatpush1.msra.mxu0 %v1536
      %1558 = vmatprep.subr.mxu0 0.0
      %1559 = vmatpush1.msra.mxu0 %v1537
      %1560 = vmatprep.subr.mxu0 0.0
      %1561 = vmatpush1.msra.mxu0 %v1538
      %1562 = vmatprep.subr.mxu0 0.0
      %1563 = vmatpush1.msra.mxu0 %v1539
      %1564 = vmatprep.subr.mxu0 0.0
      %1565 = vmatpush1.msra.mxu0 %v1540
      %1566 = vmatprep.subr.mxu0 0.0
      %1567 = vmatpush1.msra.mxu0 %v1541
      %1568 = vmatprep.subr.mxu0 0.0
      %1569 = vmatpush1.msra.mxu0 %v1542
      %1570 = vmatprep.subr.mxu0 0.0
      %1571 = vmatpush1.msra.mxu0 %v1543
      %1572 = vmatprep.subr.mxu0 0.0
      %1573 = vmatpush1.msra.mxu0 %v1544
      %1574 = vmatprep.subr.mxu0 0.0
      %1575 = vmatpush1.msra.mxu0 %v1545
      %1576 = vmatprep.subr.mxu0 0.0
      %1577 = vmatpush1.msra.mxu0 %v1546
      %1578 = vmatprep.subr.mxu0 0.0
      %1579 = vmatpush1.msra.mxu0 %v1547
      %1580 = vmatprep.subr.mxu0 0.0
      %1581 = vmatpush1.msra.mxu0 0.0
      %1582 = vmatprep.subr.mxu0 0.0
      %1583 = vmatpush1.msra.mxu0 0.0
      %1584 = vmatprep.subr.mxu0 0.0
      %1585 = vmatpush1.msra.mxu0 0.0
      %1586 = vmatprep.subr.mxu0 0.0
      %1587 = vmatpush1.msra.mxu0 0.0
      %1588 = vmatprep.subr.mxu0 0.0
      %1589 = vmatpush1.msra.mxu0 0.0
      %1590 = vmatprep.subr.mxu0 0.0
      %1591 = vmatpush1.msra.mxu0 0.0
      %1592 = vmatprep.subr.mxu0 0.0
      %1593 = vmatpush1.msra.mxu0 0.0
      %1594 = vmatprep.subr.mxu0 0.0
      %1595 = vmatpush1.msra.mxu0 0.0
      %1596 = vmatprep.subr.mxu0 0.0
      %1597 = vmatpush1.msra.mxu0 0.0
      %1598 = vmatprep.subr.mxu0 0.0
      %1599 = vmatpush1.msra.mxu0 0.0
      %1600 = vmatprep.subr.mxu0 0.0
      %1601 = vmatpush1.msra.mxu0 0.0
      %1602 = vmatprep.subr.mxu0 0.0
      %1603 = vmatpush1.msra.mxu0 0.0
      %1604 = vmatprep.subr.mxu0 0.0
      %1605 = vmatpush1.msra.mxu0 0.0
      %1606 = vmatprep.subr.mxu0 0.0
      %1607 = vmatpush1.msra.mxu0 0.0
      %1608 = vmatprep.subr.mxu0 0.0
      %1609 = vmatpush1.msra.mxu0 0.0
      %1610 = vmatprep.subr.mxu0 0.0
      %1611 = vmatpush1.msra.mxu0 0.0
      %1612 = vmatprep.mubr.f32.mxu0 0.0
      %1613 = vmatmul.mubr.f32.gmra.mrb[0].mxu0 %v1525
      %v1614 = vpop.f32.mrb[0].mxu0
      %v1615 = vadd.f32 0.0, %v1614
      %v1616 = vpop.f32.mrb[0].mxu0
      %1617 = vmatprep.mubr.f32.mxu0 0.0
      %1618 = vmatmul.mubr.f32.gmra.mrb[0].mxu0 %v1526
      %v1619 = vpop.f32.mrb[0].mxu0
      %v1620 = vadd.f32 0.0, %v1619
      %v1621 = vpop.f32.mrb[0].mxu0
      %1622 = vmatprep.mubr.f32.mxu0 0.0
      %1623 = vmatmul.mubr.f32.gmra.mrb[0].mxu0 %v1527
      %v1624 = vpop.f32.mrb[0].mxu0
      %v1625 = vadd.f32 0.0, %v1624
      %v1626 = vpop.f32.mrb[0].mxu0
      %1627 = vmatprep.mubr.f32.mxu0 0.0
      %1628 = vmatmul.mubr.f32.gmra.mrb[0].mxu0 %v1528
      %v1629 = vpop.f32.mrb[0].mxu0
      %v1630 = vadd.f32 0.0, %v1629
      %v1631 = vpop.f32.mrb[0].mxu0
      %1632 = vmatprep.mubr.f32.mxu0 0.0
      %1633 = vmatmul.mubr.f32.gmra.mrb[0].mxu0 %v1529
      %v1634 = vpop.f32.mrb[0].mxu0
      %v1635 = vadd.f32 0.0, %v1634
      %v1636 = vpop.f32.mrb[0].mxu0
      %1637 = vmatprep.mubr.f32.mxu0 0.0
      %1638 = vmatmul.mubr.f32.gmra.mrb[0].mxu0 %v1530
      %v1639 = vpop.f32.mrb[0].mxu0
      %v1640 = vadd.f32 0.0, %v1639
      %v1641 = vpop.f32.mrb[0].mxu0
      %1642 = vdwg.mxu0
      %v1643 = vadd.f32 %v1519, %v1615
      %v1644 = vadd.f32 %v1520, %v1620
      %v1645 = vadd.f32 %v1521, %v1625
      %v1646 = vadd.f32 %v1522, %v1630
      %v1647 = vadd.f32 %v1523, %v1635
      %v1648 = vadd.f32 %v1524, %v1640
      %v1649 = vld [vmem:[%s293 + $0xa] sm:$0xff]
      %v1650 = vld [vmem:[%s293 + $0x12] sm:$0xff]
      %v1651 = vld [vmem:[%s293 + $0x1a] sm:$0xff]
      %v1652 = vld [vmem:[%s293 + $0x22] sm:$0xff]
      %v1653 = vld [vmem:[%s293 + $0x2a] sm:$0xff]
      %v1654 = vld [vmem:[%s293 + $0x32] sm:$0x3f]
      %s1655 = scalar_lea.vmem %s3, 640
      %v1656 = vld [vmem:[%s1655] sm:$0xff]
      %v1657 = vld [vmem:[%s1655 + $0x8] sm:$0xff]
      %v1658 = vld [vmem:[%s1655 + $0x10] sm:$0xff]
      %v1659 = vld [vmem:[%s1655 + $0x18] sm:$0xff]
      %v1660 = vld [vmem:[%s1655 + $0x20] sm:$0xff]
      %v1661 = vld [vmem:[%s1655 + $0x28] sm:$0xff]
      %v1662 = vld [vmem:[%s1655 + $0x30] sm:$0xff]
      %v1663 = vld [vmem:[%s1655 + $0x38] sm:$0xff]
      %v1664 = vld [vmem:[%s1655 + $0x40] sm:$0xff]
      %v1665 = vld [vmem:[%s1655 + $0x48] sm:$0xff]
      %v1666 = vld [vmem:[%s1655 + $0x50] sm:$0xff]
      %v1667 = vld [vmem:[%s1655 + $0x58] sm:$0xff]
      %v1668 = vld [vmem:[%s1655 + $0x60] sm:$0xff]
      %v1669 = vld [vmem:[%s1655 + $0x68] sm:$0xff]
      %v1670 = vld [vmem:[%s1655 + $0x70] sm:$0xff]
      %v1671 = vld [vmem:[%s1655 + $0x78] sm:$0xff]
      %1672 = vmatprep.subr.mxu0 0.0
      %1673 = vmatpush1.msra.mxu0 %v1656
      %1674 = vmatprep.subr.mxu0 0.0
      %1675 = vmatpush1.msra.mxu0 %v1657
      %1676 = vmatprep.subr.mxu0 0.0
      %1677 = vmatpush1.msra.mxu0 %v1658
      %1678 = vmatprep.subr.mxu0 0.0
      %1679 = vmatpush1.msra.mxu0 %v1659
      %1680 = vmatprep.subr.mxu0 0.0
      %1681 = vmatpush1.msra.mxu0 %v1660
      %1682 = vmatprep.subr.mxu0 0.0
      %1683 = vmatpush1.msra.mxu0 %v1661
      %1684 = vmatprep.subr.mxu0 0.0
      %1685 = vmatpush1.msra.mxu0 %v1662
      %1686 = vmatprep.subr.mxu0 0.0
      %1687 = vmatpush1.msra.mxu0 %v1663
      %1688 = vmatprep.subr.mxu0 0.0
      %1689 = vmatpush1.msra.mxu0 %v1664
      %1690 = vmatprep.subr.mxu0 0.0
      %1691 = vmatpush1.msra.mxu0 %v1665
      %1692 = vmatprep.subr.mxu0 0.0
      %1693 = vmatpush1.msra.mxu0 %v1666
      %1694 = vmatprep.subr.mxu0 0.0
      %1695 = vmatpush1.msra.mxu0 %v1667
      %1696 = vmatprep.subr.mxu0 0.0
      %1697 = vmatpush1.msra.mxu0 %v1668
      %1698 = vmatprep.subr.mxu0 0.0
      %1699 = vmatpush1.msra.mxu0 %v1669
      %1700 = vmatprep.subr.mxu0 0.0
      %1701 = vmatpush1.msra.mxu0 %v1670
      %1702 = vmatprep.subr.mxu0 0.0
      %1703 = vmatpush1.msra.mxu0 %v1671
      %1704 = vmatprep.subr.mxu0 0.0
      %1705 = vmatpush1.msra.mxu0 0.0
      %1706 = vmatprep.subr.mxu0 0.0
      %1707 = vmatpush1.msra.mxu0 0.0
      %1708 = vmatprep.subr.mxu0 0.0
      %1709 = vmatpush1.msra.mxu0 0.0
      %1710 = vmatprep.subr.mxu0 0.0
      %1711 = vmatpush1.msra.mxu0 0.0
      %1712 = vmatprep.subr.mxu0 0.0
      %1713 = vmatpush1.msra.mxu0 0.0
      %1714 = vmatprep.subr.mxu0 0.0
      %1715 = vmatpush1.msra.mxu0 0.0
      %1716 = vmatprep.subr.mxu0 0.0
      %1717 = vmatpush1.msra.mxu0 0.0
      %1718 = vmatprep.subr.mxu0 0.0
      %1719 = vmatpush1.msra.mxu0 0.0
      %1720 = vmatprep.subr.mxu0 0.0
      %1721 = vmatpush1.msra.mxu0 0.0
      %1722 = vmatprep.subr.mxu0 0.0
      %1723 = vmatpush1.msra.mxu0 0.0
      %1724 = vmatprep.subr.mxu0 0.0
      %1725 = vmatpush1.msra.mxu0 0.0
      %1726 = vmatprep.subr.mxu0 0.0
      %1727 = vmatpush1.msra.mxu0 0.0
      %1728 = vmatprep.subr.mxu0 0.0
      %1729 = vmatpush1.msra.mxu0 0.0
      %1730 = vmatprep.subr.mxu0 0.0
      %1731 = vmatpush1.msra.mxu0 0.0
      %1732 = vmatprep.subr.mxu0 0.0
      %1733 = vmatpush1.msra.mxu0 0.0
      %1734 = vmatprep.subr.mxu0 0.0
      %1735 = vmatpush1.msra.mxu0 0.0
      %1736 = vmatprep.mubr.f32.mxu0 0.0
      %1737 = vmatmul.mubr.f32.gmra.mrb[0].mxu0 %v1649
      %v1738 = vpop.f32.mrb[0].mxu0
      %v1739 = vadd.f32 0.0, %v1738
      %v1740 = vpop.f32.mrb[0].mxu0
      %1741 = vmatprep.mubr.f32.mxu0 0.0
      %1742 = vmatmul.mubr.f32.gmra.mrb[0].mxu0 %v1650
      %v1743 = vpop.f32.mrb[0].mxu0
      %v1744 = vadd.f32 0.0, %v1743
      %v1745 = vpop.f32.mrb[0].mxu0
      %1746 = vmatprep.mubr.f32.mxu0 0.0
      %1747 = vmatmul.mubr.f32.gmra.mrb[0].mxu0 %v1651
      %v1748 = vpop.f32.mrb[0].mxu0
      %v1749 = vadd.f32 0.0, %v1748
      %v1750 = vpop.f32.mrb[0].mxu0
      %1751 = vmatprep.mubr.f32.mxu0 0.0
      %1752 = vmatmul.mubr.f32.gmra.mrb[0].mxu0 %v1652
      %v1753 = vpop.f32.mrb[0].mxu0
      %v1754 = vadd.f32 0.0, %v1753
      %v1755 = vpop.f32.mrb[0].mxu0
      %1756 = vmatprep.mubr.f32.mxu0 0.0
      %1757 = vmatmul.mubr.f32.gmra.mrb[0].mxu0 %v1653
      %v1758 = vpop.f32.mrb[0].mxu0
      %v1759 = vadd.f32 0.0, %v1758
      %v1760 = vpop.f32.mrb[0].mxu0
      %1761 = vmatprep.mubr.f32.mxu0 0.0
      %1762 = vmatmul.mubr.f32.gmra.mrb[0].mxu0 %v1654
      %v1763 = vpop.f32.mrb[0].mxu0
      %v1764 = vadd.f32 0.0, %v1763
      %v1765 = vpop.f32.mrb[0].mxu0
      %1766 = vdwg.mxu0
      %v1767 = vadd.f32 %v1643, %v1739
      %v1768 = vadd.f32 %v1644, %v1744
      %v1769 = vadd.f32 %v1645, %v1749
      %v1770 = vadd.f32 %v1646, %v1754
      %v1771 = vadd.f32 %v1647, %v1759
      %v1772 = vadd.f32 %v1648, %v1764
      %v1773 = vld [vmem:[%s288 + $0x10] sm:$0xff]
      %v1774 = vld [vmem:[%s288 + $0x18] sm:$0xff]
      %v1775 = vld [vmem:[%s288 + $0x20] sm:$0xff]
      %v1776 = vld [vmem:[%s288 + $0x28] sm:$0xff]
      %v1777 = vld [vmem:[%s288 + $0x30] sm:$0xff]
      %v1778 = vld [vmem:[%s288 + $0x38] sm:$0x3f]
      %s1779 = scalar_lea.vmem %s2, 768
      %v1780 = vld [vmem:[%s1779] sm:$0xff]
      %v1781 = vld [vmem:[%s1779 + $0x8] sm:$0xff]
      %v1782 = vld [vmem:[%s1779 + $0x10] sm:$0xff]
      %v1783 = vld [vmem:[%s1779 + $0x18] sm:$0xff]
      %v1784 = vld [vmem:[%s1779 + $0x20] sm:$0xff]
      %v1785 = vld [vmem:[%s1779 + $0x28] sm:$0xff]
      %v1786 = vld [vmem:[%s1779 + $0x30] sm:$0xff]
      %v1787 = vld [vmem:[%s1779 + $0x38] sm:$0xff]
      %v1788 = vld [vmem:[%s1779 + $0x40] sm:$0xff]
      %v1789 = vld [vmem:[%s1779 + $0x48] sm:$0xff]
      %v1790 = vld [vmem:[%s1779 + $0x50] sm:$0xff]
      %v1791 = vld [vmem:[%s1779 + $0x58] sm:$0xff]
      %v1792 = vld [vmem:[%s1779 + $0x60] sm:$0xff]
      %v1793 = vld [vmem:[%s1779 + $0x68] sm:$0xff]
      %v1794 = vld [vmem:[%s1779 + $0x70] sm:$0xff]
      %v1795 = vld [vmem:[%s1779 + $0x78] sm:$0xff]
      %1796 = vmatprep.subr.mxu0 0.0
      %1797 = vmatpush1.msra.mxu0 %v1780
      %1798 = vmatprep.subr.mxu0 0.0
      %1799 = vmatpush1.msra.mxu0 %v1781
      %1800 = vmatprep.subr.mxu0 0.0
      %1801 = vmatpush1.msra.mxu0 %v1782
      %1802 = vmatprep.subr.mxu0 0.0
      %1803 = vmatpush1.msra.mxu0 %v1783
      %1804 = vmatprep.subr.mxu0 0.0
      %1805 = vmatpush1.msra.mxu0 %v1784
      %1806 = vmatprep.subr.mxu0 0.0
      %1807 = vmatpush1.msra.mxu0 %v1785
      %1808 = vmatprep.subr.mxu0 0.0
      %1809 = vmatpush1.msra.mxu0 %v1786
      %1810 = vmatprep.subr.mxu0 0.0
      %1811 = vmatpush1.msra.mxu0 %v1787
      %1812 = vmatprep.subr.mxu0 0.0
      %1813 = vmatpush1.msra.mxu0 %v1788
      %1814 = vmatprep.subr.mxu0 0.0
      %1815 = vmatpush1.msra.mxu0 %v1789
      %1816 = vmatprep.subr.mxu0 0.0
      %1817 = vmatpush1.msra.mxu0 %v1790
      %1818 = vmatprep.subr.mxu0 0.0
      %1819 = vmatpush1.msra.mxu0 %v1791
      %1820 = vmatprep.subr.mxu0 0.0
      %1821 = vmatpush1.msra.mxu0 %v1792
      %1822 = vmatprep.subr.mxu0 0.0
      %1823 = vmatpush1.msra.mxu0 %v1793
      %1824 = vmatprep.subr.mxu0 0.0
      %1825 = vmatpush1.msra.mxu0 %v1794
      %1826 = vmatprep.subr.mxu0 0.0
      %1827 = vmatpush1.msra.mxu0 %v1795
      %1828 = vmatprep.subr.mxu0 0.0
      %1829 = vmatpush1.msra.mxu0 0.0
      %1830 = vmatprep.subr.mxu0 0.0
      %1831 = vmatpush1.msra.mxu0 0.0
      %1832 = vmatprep.subr.mxu0 0.0
      %1833 = vmatpush1.msra.mxu0 0.0
      %1834 = vmatprep.subr.mxu0 0.0
      %1835 = vmatpush1.msra.mxu0 0.0
      %1836 = vmatprep.subr.mxu0 0.0
      %1837 = vmatpush1.msra.mxu0 0.0
      %1838 = vmatprep.subr.mxu0 0.0
      %1839 = vmatpush1.msra.mxu0 0.0
      %1840 = vmatprep.subr.mxu0 0.0
      %1841 = vmatpush1.msra.mxu0 0.0
      %1842 = vmatprep.subr.mxu0 0.0
      %1843 = vmatpush1.msra.mxu0 0.0
      %1844 = vmatprep.subr.mxu0 0.0
      %1845 = vmatpush1.msra.mxu0 0.0
      %1846 = vmatprep.subr.mxu0 0.0
      %1847 = vmatpush1.msra.mxu0 0.0
      %1848 = vmatprep.subr.mxu0 0.0
      %1849 = vmatpush1.msra.mxu0 0.0
      %1850 = vmatprep.subr.mxu0 0.0
      %1851 = vmatpush1.msra.mxu0 0.0
      %1852 = vmatprep.subr.mxu0 0.0
      %1853 = vmatpush1.msra.mxu0 0.0
      %1854 = vmatprep.subr.mxu0 0.0
      %1855 = vmatpush1.msra.mxu0 0.0
      %1856 = vmatprep.subr.mxu0 0.0
      %1857 = vmatpush1.msra.mxu0 0.0
      %1858 = vmatprep.subr.mxu0 0.0
      %1859 = vmatpush1.msra.mxu0 0.0
      %1860 = vmatprep.mubr.f32.mxu0 0.0
      %1861 = vmatmul.mubr.f32.gmra.mrb[0].mxu0 %v1773
      %v1862 = vpop.f32.mrb[0].mxu0
      %v1863 = vadd.f32 0.0, %v1862
      %v1864 = vpop.f32.mrb[0].mxu0
      %1865 = vmatprep.mubr.f32.mxu0 0.0
      %1866 = vmatmul.mubr.f32.gmra.mrb[0].mxu0 %v1774
      %v1867 = vpop.f32.mrb[0].mxu0
      %v1868 = vadd.f32 0.0, %v1867
      %v1869 = vpop.f32.mrb[0].mxu0
      %1870 = vmatprep.mubr.f32.mxu0 0.0
      %1871 = vmatmul.mubr.f32.gmra.mrb[0].mxu0 %v1775
      %v1872 = vpop.f32.mrb[0].mxu0
      %v1873 = vadd.f32 0.0, %v1872
      %v1874 = vpop.f32.mrb[0].mxu0
      %1875 = vmatprep.mubr.f32.mxu0 0.0
      %1876 = vmatmul.mubr.f32.gmra.mrb[0].mxu0 %v1776
      %v1877 = vpop.f32.mrb[0].mxu0
      %v1878 = vadd.f32 0.0, %v1877
      %v1879 = vpop.f32.mrb[0].mxu0
      %1880 = vmatprep.mubr.f32.mxu0 0.0
      %1881 = vmatmul.mubr.f32.gmra.mrb[0].mxu0 %v1777
      %v1882 = vpop.f32.mrb[0].mxu0
      %v1883 = vadd.f32 0.0, %v1882
      %v1884 = vpop.f32.mrb[0].mxu0
      %1885 = vmatprep.mubr.f32.mxu0 0.0
      %1886 = vmatmul.mubr.f32.gmra.mrb[0].mxu0 %v1778
      %v1887 = vpop.f32.mrb[0].mxu0
      %v1888 = vadd.f32 0.0, %v1887
      %v1889 = vpop.f32.mrb[0].mxu0
      %1890 = vdwg.mxu0
      %v1891 = vadd.f32 %v1767, %v1863
      %v1892 = vadd.f32 %v1768, %v1868
      %v1893 = vadd.f32 %v1769, %v1873
      %v1894 = vadd.f32 %v1770, %v1878
      %v1895 = vadd.f32 %v1771, %v1883
      %v1896 = vadd.f32 %v1772, %v1888
      %v1897 = vld [vmem:[%s293 + $0x10] sm:$0xff]
      %v1898 = vld [vmem:[%s293 + $0x18] sm:$0xff]
      %v1899 = vld [vmem:[%s293 + $0x20] sm:$0xff]
      %v1900 = vld [vmem:[%s293 + $0x28] sm:$0xff]
      %v1901 = vld [vmem:[%s293 + $0x30] sm:$0xff]
      %v1902 = vld [vmem:[%s293 + $0x38] sm:$0x3f]
      %s1903 = scalar_lea.vmem %s3, 768
      %v1904 = vld [vmem:[%s1903] sm:$0xff]
      %v1905 = vld [vmem:[%s1903 + $0x8] sm:$0xff]
      %v1906 = vld [vmem:[%s1903 + $0x10] sm:$0xff]
      %v1907 = vld [vmem:[%s1903 + $0x18] sm:$0xff]
      %v1908 = vld [vmem:[%s1903 + $0x20] sm:$0xff]
      %v1909 = vld [vmem:[%s1903 + $0x28] sm:$0xff]
      %v1910 = vld [vmem:[%s1903 + $0x30] sm:$0xff]
      %v1911 = vld [vmem:[%s1903 + $0x38] sm:$0xff]
      %v1912 = vld [vmem:[%s1903 + $0x40] sm:$0xff]
      %v1913 = vld [vmem:[%s1903 + $0x48] sm:$0xff]
      %v1914 = vld [vmem:[%s1903 + $0x50] sm:$0xff]
      %v1915 = vld [vmem:[%s1903 + $0x58] sm:$0xff]
      %v1916 = vld [vmem:[%s1903 + $0x60] sm:$0xff]
      %v1917 = vld [vmem:[%s1903 + $0x68] sm:$0xff]
      %v1918 = vld [vmem:[%s1903 + $0x70] sm:$0xff]
      %v1919 = vld [vmem:[%s1903 + $0x78] sm:$0xff]
      %1920 = vmatprep.subr.mxu0 0.0
      %1921 = vmatpush1.msra.mxu0 %v1904
      %1922 = vmatprep.subr.mxu0 0.0
      %1923 = vmatpush1.msra.mxu0 %v1905
      %1924 = vmatprep.subr.mxu0 0.0
      %1925 = vmatpush1.msra.mxu0 %v1906
      %1926 = vmatprep.subr.mxu0 0.0
      %1927 = vmatpush1.msra.mxu0 %v1907
      %1928 = vmatprep.subr.mxu0 0.0
      %1929 = vmatpush1.msra.mxu0 %v1908
      %1930 = vmatprep.subr.mxu0 0.0
      %1931 = vmatpush1.msra.mxu0 %v1909
      %1932 = vmatprep.subr.mxu0 0.0
      %1933 = vmatpush1.msra.mxu0 %v1910
      %1934 = vmatprep.subr.mxu0 0.0
      %1935 = vmatpush1.msra.mxu0 %v1911
      %1936 = vmatprep.subr.mxu0 0.0
      %1937 = vmatpush1.msra.mxu0 %v1912
      %1938 = vmatprep.subr.mxu0 0.0
      %1939 = vmatpush1.msra.mxu0 %v1913
      %1940 = vmatprep.subr.mxu0 0.0
      %1941 = vmatpush1.msra.mxu0 %v1914
      %1942 = vmatprep.subr.mxu0 0.0
      %1943 = vmatpush1.msra.mxu0 %v1915
      %1944 = vmatprep.subr.mxu0 0.0
      %1945 = vmatpush1.msra.mxu0 %v1916
      %1946 = vmatprep.subr.mxu0 0.0
      %1947 = vmatpush1.msra.mxu0 %v1917
      %1948 = vmatprep.subr.mxu0 0.0
      %1949 = vmatpush1.msra.mxu0 %v1918
      %1950 = vmatprep.subr.mxu0 0.0
      %1951 = vmatpush1.msra.mxu0 %v1919
      %1952 = vmatprep.subr.mxu0 0.0
      %1953 = vmatpush1.msra.mxu0 0.0
      %1954 = vmatprep.subr.mxu0 0.0
      %1955 = vmatpush1.msra.mxu0 0.0
      %1956 = vmatprep.subr.mxu0 0.0
      %1957 = vmatpush1.msra.mxu0 0.0
      %1958 = vmatprep.subr.mxu0 0.0
      %1959 = vmatpush1.msra.mxu0 0.0
      %1960 = vmatprep.subr.mxu0 0.0
      %1961 = vmatpush1.msra.mxu0 0.0
      %1962 = vmatprep.subr.mxu0 0.0
      %1963 = vmatpush1.msra.mxu0 0.0
      %1964 = vmatprep.subr.mxu0 0.0
      %1965 = vmatpush1.msra.mxu0 0.0
      %1966 = vmatprep.subr.mxu0 0.0
      %1967 = vmatpush1.msra.mxu0 0.0
      %1968 = vmatprep.subr.mxu0 0.0
      %1969 = vmatpush1.msra.mxu0 0.0
      %1970 = vmatprep.subr.mxu0 0.0
      %1971 = vmatpush1.msra.mxu0 0.0
      %1972 = vmatprep.subr.mxu0 0.0
      %1973 = vmatpush1.msra.mxu0 0.0
      %1974 = vmatprep.subr.mxu0 0.0
      %1975 = vmatpush1.msra.mxu0 0.0
      %1976 = vmatprep.subr.mxu0 0.0
      %1977 = vmatpush1.msra.mxu0 0.0
      %1978 = vmatprep.subr.mxu0 0.0
      %1979 = vmatpush1.msra.mxu0 0.0
      %1980 = vmatprep.subr.mxu0 0.0
      %1981 = vmatpush1.msra.mxu0 0.0
      %1982 = vmatprep.subr.mxu0 0.0
      %1983 = vmatpush1.msra.mxu0 0.0
      %1984 = vmatprep.mubr.f32.mxu0 0.0
      %1985 = vmatmul.mubr.f32.gmra.mrb[0].mxu0 %v1897
      %v1986 = vpop.f32.mrb[0].mxu0
      %v1987 = vadd.f32 0.0, %v1986
      %v1988 = vpop.f32.mrb[0].mxu0
      %1989 = vmatprep.mubr.f32.mxu0 0.0
      %1990 = vmatmul.mubr.f32.gmra.mrb[0].mxu0 %v1898
      %v1991 = vpop.f32.mrb[0].mxu0
      %v1992 = vadd.f32 0.0, %v1991
      %v1993 = vpop.f32.mrb[0].mxu0
      %1994 = vmatprep.mubr.f32.mxu0 0.0
      %1995 = vmatmul.mubr.f32.gmra.mrb[0].mxu0 %v1899
      %v1996 = vpop.f32.mrb[0].mxu0
      %v1997 = vadd.f32 0.0, %v1996
      %v1998 = vpop.f32.mrb[0].mxu0
      %1999 = vmatprep.mubr.f32.mxu0 0.0
      %2000 = vmatmul.mubr.f32.gmra.mrb[0].mxu0 %v1900
      %v2001 = vpop.f32.mrb[0].mxu0
      %v2002 = vadd.f32 0.0, %v2001
      %v2003 = vpop.f32.mrb[0].mxu0
      %2004 = vmatprep.mubr.f32.mxu0 0.0
      %2005 = vmatmul.mubr.f32.gmra.mrb[0].mxu0 %v1901
      %v2006 = vpop.f32.mrb[0].mxu0
      %v2007 = vadd.f32 0.0, %v2006
      %v2008 = vpop.f32.mrb[0].mxu0
      %2009 = vmatprep.mubr.f32.mxu0 0.0
      %2010 = vmatmul.mubr.f32.gmra.mrb[0].mxu0 %v1902
      %v2011 = vpop.f32.mrb[0].mxu0
      %v2012 = vadd.f32 0.0, %v2011
      %v2013 = vpop.f32.mrb[0].mxu0
      %2014 = vdwg.mxu0
      %v2015 = vadd.f32 %v1891, %v1987
      %v2016 = vadd.f32 %v1892, %v1992
      %v2017 = vadd.f32 %v1893, %v1997
      %v2018 = vadd.f32 %v1894, %v2002
      %v2019 = vadd.f32 %v1895, %v2007
      %v2020 = vadd.f32 %v1896, %v2012
      %v2021 = vld [vmem:[%s288 + $0x11] sm:$0xff]
      %v2022 = vld [vmem:[%s288 + $0x19] sm:$0xff]
      %v2023 = vld [vmem:[%s288 + $0x21] sm:$0xff]
      %v2024 = vld [vmem:[%s288 + $0x29] sm:$0xff]
      %v2025 = vld [vmem:[%s288 + $0x31] sm:$0xff]
      %v2026 = vld [vmem:[%s288 + $0x39] sm:$0x3f]
      %s2027 = scalar_lea.vmem %s2, 896
      %v2028 = vld [vmem:[%s2027] sm:$0xff]
      %v2029 = vld [vmem:[%s2027 + $0x8] sm:$0xff]
      %v2030 = vld [vmem:[%s2027 + $0x10] sm:$0xff]
      %v2031 = vld [vmem:[%s2027 + $0x18] sm:$0xff]
      %v2032 = vld [vmem:[%s2027 + $0x20] sm:$0xff]
      %v2033 = vld [vmem:[%s2027 + $0x28] sm:$0xff]
      %v2034 = vld [vmem:[%s2027 + $0x30] sm:$0xff]
      %v2035 = vld [vmem:[%s2027 + $0x38] sm:$0xff]
      %v2036 = vld [vmem:[%s2027 + $0x40] sm:$0xff]
      %v2037 = vld [vmem:[%s2027 + $0x48] sm:$0xff]
      %v2038 = vld [vmem:[%s2027 + $0x50] sm:$0xff]
      %v2039 = vld [vmem:[%s2027 + $0x58] sm:$0xff]
      %v2040 = vld [vmem:[%s2027 + $0x60] sm:$0xff]
      %v2041 = vld [vmem:[%s2027 + $0x68] sm:$0xff]
      %v2042 = vld [vmem:[%s2027 + $0x70] sm:$0xff]
      %v2043 = vld [vmem:[%s2027 + $0x78] sm:$0xff]
      %2044 = vmatprep.subr.mxu0 0.0
      %2045 = vmatpush1.msra.mxu0 %v2028
      %2046 = vmatprep.subr.mxu0 0.0
      %2047 = vmatpush1.msra.mxu0 %v2029
      %2048 = vmatprep.subr.mxu0 0.0
      %2049 = vmatpush1.msra.mxu0 %v2030
      %2050 = vmatprep.subr.mxu0 0.0
      %2051 = vmatpush1.msra.mxu0 %v2031
      %2052 = vmatprep.subr.mxu0 0.0
      %2053 = vmatpush1.msra.mxu0 %v2032
      %2054 = vmatprep.subr.mxu0 0.0
      %2055 = vmatpush1.msra.mxu0 %v2033
      %2056 = vmatprep.subr.mxu0 0.0
      %2057 = vmatpush1.msra.mxu0 %v2034
      %2058 = vmatprep.subr.mxu0 0.0
      %2059 = vmatpush1.msra.mxu0 %v2035
      %2060 = vmatprep.subr.mxu0 0.0
      %2061 = vmatpush1.msra.mxu0 %v2036
      %2062 = vmatprep.subr.mxu0 0.0
      %2063 = vmatpush1.msra.mxu0 %v2037
      %2064 = vmatprep.subr.mxu0 0.0
      %2065 = vmatpush1.msra.mxu0 %v2038
      %2066 = vmatprep.subr.mxu0 0.0
      %2067 = vmatpush1.msra.mxu0 %v2039
      %2068 = vmatprep.subr.mxu0 0.0
      %2069 = vmatpush1.msra.mxu0 %v2040
      %2070 = vmatprep.subr.mxu0 0.0
      %2071 = vmatpush1.msra.mxu0 %v2041
      %2072 = vmatprep.subr.mxu0 0.0
      %2073 = vmatpush1.msra.mxu0 %v2042
      %2074 = vmatprep.subr.mxu0 0.0
      %2075 = vmatpush1.msra.mxu0 %v2043
      %2076 = vmatprep.subr.mxu0 0.0
      %2077 = vmatpush1.msra.mxu0 0.0
      %2078 = vmatprep.subr.mxu0 0.0
      %2079 = vmatpush1.msra.mxu0 0.0
      %2080 = vmatprep.subr.mxu0 0.0
      %2081 = vmatpush1.msra.mxu0 0.0
      %2082 = vmatprep.subr.mxu0 0.0
      %2083 = vmatpush1.msra.mxu0 0.0
      %2084 = vmatprep.subr.mxu0 0.0
      %2085 = vmatpush1.msra.mxu0 0.0
      %2086 = vmatprep.subr.mxu0 0.0
      %2087 = vmatpush1.msra.mxu0 0.0
      %2088 = vmatprep.subr.mxu0 0.0
      %2089 = vmatpush1.msra.mxu0 0.0
      %2090 = vmatprep.subr.mxu0 0.0
      %2091 = vmatpush1.msra.mxu0 0.0
      %2092 = vmatprep.subr.mxu0 0.0
      %2093 = vmatpush1.msra.mxu0 0.0
      %2094 = vmatprep.subr.mxu0 0.0
      %2095 = vmatpush1.msra.mxu0 0.0
      %2096 = vmatprep.subr.mxu0 0.0
      %2097 = vmatpush1.msra.mxu0 0.0
      %2098 = vmatprep.subr.mxu0 0.0
      %2099 = vmatpush1.msra.mxu0 0.0
      %2100 = vmatprep.subr.mxu0 0.0
      %2101 = vmatpush1.msra.mxu0 0.0
      %2102 = vmatprep.subr.mxu0 0.0
      %2103 = vmatpush1.msra.mxu0 0.0
      %2104 = vmatprep.subr.mxu0 0.0
      %2105 = vmatpush1.msra.mxu0 0.0
      %2106 = vmatprep.subr.mxu0 0.0
      %2107 = vmatpush1.msra.mxu0 0.0
      %2108 = vmatprep.mubr.f32.mxu0 0.0
      %2109 = vmatmul.mubr.f32.gmra.mrb[0].mxu0 %v2021
      %v2110 = vpop.f32.mrb[0].mxu0
      %v2111 = vadd.f32 0.0, %v2110
      %v2112 = vpop.f32.mrb[0].mxu0
      %2113 = vmatprep.mubr.f32.mxu0 0.0
      %2114 = vmatmul.mubr.f32.gmra.mrb[0].mxu0 %v2022
      %v2115 = vpop.f32.mrb[0].mxu0
      %v2116 = vadd.f32 0.0, %v2115
      %v2117 = vpop.f32.mrb[0].mxu0
      %2118 = vmatprep.mubr.f32.mxu0 0.0
      %2119 = vmatmul.mubr.f32.gmra.mrb[0].mxu0 %v2023
      %v2120 = vpop.f32.mrb[0].mxu0
      %v2121 = vadd.f32 0.0, %v2120
      %v2122 = vpop.f32.mrb[0].mxu0
      %2123 = vmatprep.mubr.f32.mxu0 0.0
      %2124 = vmatmul.mubr.f32.gmra.mrb[0].mxu0 %v2024
      %v2125 = vpop.f32.mrb[0].mxu0
      %v2126 = vadd.f32 0.0, %v2125
      %v2127 = vpop.f32.mrb[0].mxu0
      %2128 = vmatprep.mubr.f32.mxu0 0.0
      %2129 = vmatmul.mubr.f32.gmra.mrb[0].mxu0 %v2025
      %v2130 = vpop.f32.mrb[0].mxu0
      %v2131 = vadd.f32 0.0, %v2130
      %v2132 = vpop.f32.mrb[0].mxu0
      %2133 = vmatprep.mubr.f32.mxu0 0.0
      %2134 = vmatmul.mubr.f32.gmra.mrb[0].mxu0 %v2026
      %v2135 = vpop.f32.mrb[0].mxu0
      %v2136 = vadd.f32 0.0, %v2135
      %v2137 = vpop.f32.mrb[0].mxu0
      %2138 = vdwg.mxu0
      %v2139 = vadd.f32 %v2015, %v2111
      %v2140 = vadd.f32 %v2016, %v2116
      %v2141 = vadd.f32 %v2017, %v2121
      %v2142 = vadd.f32 %v2018, %v2126
      %v2143 = vadd.f32 %v2019, %v2131
      %v2144 = vadd.f32 %v2020, %v2136
      %v2145 = vld [vmem:[%s293 + $0x11] sm:$0xff]
      %v2146 = vld [vmem:[%s293 + $0x19] sm:$0xff]
      %v2147 = vld [vmem:[%s293 + $0x21] sm:$0xff]
      %v2148 = vld [vmem:[%s293 + $0x29] sm:$0xff]
      %v2149 = vld [vmem:[%s293 + $0x31] sm:$0xff]
      %v2150 = vld [vmem:[%s293 + $0x39] sm:$0x3f]
      %s2151 = scalar_lea.vmem %s3, 896
      %v2152 = vld [vmem:[%s2151] sm:$0xff]
      %v2153 = vld [vmem:[%s2151 + $0x8] sm:$0xff]
      %v2154 = vld [vmem:[%s2151 + $0x10] sm:$0xff]
      %v2155 = vld [vmem:[%s2151 + $0x18] sm:$0xff]
      %v2156 = vld [vmem:[%s2151 + $0x20] sm:$0xff]
      %v2157 = vld [vmem:[%s2151 + $0x28] sm:$0xff]
      %v2158 = vld [vmem:[%s2151 + $0x30] sm:$0xff]
      %v2159 = vld [vmem:[%s2151 + $0x38] sm:$0xff]
      %v2160 = vld [vmem:[%s2151 + $0x40] sm:$0xff]
      %v2161 = vld [vmem:[%s2151 + $0x48] sm:$0xff]
      %v2162 = vld [vmem:[%s2151 + $0x50] sm:$0xff]
      %v2163 = vld [vmem:[%s2151 + $0x58] sm:$0xff]
      %v2164 = vld [vmem:[%s2151 + $0x60] sm:$0xff]
      %v2165 = vld [vmem:[%s2151 + $0x68] sm:$0xff]
      %v2166 = vld [vmem:[%s2151 + $0x70] sm:$0xff]
      %v2167 = vld [vmem:[%s2151 + $0x78] sm:$0xff]
      %2168 = vmatprep.subr.mxu0 0.0
      %2169 = vmatpush1.msra.mxu0 %v2152
      %2170 = vmatprep.subr.mxu0 0.0
      %2171 = vmatpush1.msra.mxu0 %v2153
      %2172 = vmatprep.subr.mxu0 0.0
      %2173 = vmatpush1.msra.mxu0 %v2154
      %2174 = vmatprep.subr.mxu0 0.0
      %2175 = vmatpush1.msra.mxu0 %v2155
      %2176 = vmatprep.subr.mxu0 0.0
      %2177 = vmatpush1.msra.mxu0 %v2156
      %2178 = vmatprep.subr.mxu0 0.0
      %2179 = vmatpush1.msra.mxu0 %v2157
      %2180 = vmatprep.subr.mxu0 0.0
      %2181 = vmatpush1.msra.mxu0 %v2158
      %2182 = vmatprep.subr.mxu0 0.0
      %2183 = vmatpush1.msra.mxu0 %v2159
      %2184 = vmatprep.subr.mxu0 0.0
      %2185 = vmatpush1.msra.mxu0 %v2160
      %2186 = vmatprep.subr.mxu0 0.0
      %2187 = vmatpush1.msra.mxu0 %v2161
      %2188 = vmatprep.subr.mxu0 0.0
      %2189 = vmatpush1.msra.mxu0 %v2162
      %2190 = vmatprep.subr.mxu0 0.0
      %2191 = vmatpush1.msra.mxu0 %v2163
      %2192 = vmatprep.subr.mxu0 0.0
      %2193 = vmatpush1.msra.mxu0 %v2164
      %2194 = vmatprep.subr.mxu0 0.0
      %2195 = vmatpush1.msra.mxu0 %v2165
      %2196 = vmatprep.subr.mxu0 0.0
      %2197 = vmatpush1.msra.mxu0 %v2166
      %2198 = vmatprep.subr.mxu0 0.0
      %2199 = vmatpush1.msra.mxu0 %v2167
      %2200 = vmatprep.subr.mxu0 0.0
      %2201 = vmatpush1.msra.mxu0 0.0
      %2202 = vmatprep.subr.mxu0 0.0
      %2203 = vmatpush1.msra.mxu0 0.0
      %2204 = vmatprep.subr.mxu0 0.0
      %2205 = vmatpush1.msra.mxu0 0.0
      %2206 = vmatprep.subr.mxu0 0.0
      %2207 = vmatpush1.msra.mxu0 0.0
      %2208 = vmatprep.subr.mxu0 0.0
      %2209 = vmatpush1.msra.mxu0 0.0
      %2210 = vmatprep.subr.mxu0 0.0
      %2211 = vmatpush1.msra.mxu0 0.0
      %2212 = vmatprep.subr.mxu0 0.0
      %2213 = vmatpush1.msra.mxu0 0.0
      %2214 = vmatprep.subr.mxu0 0.0
      %2215 = vmatpush1.msra.mxu0 0.0
      %2216 = vmatprep.subr.mxu0 0.0
      %2217 = vmatpush1.msra.mxu0 0.0
      %2218 = vmatprep.subr.mxu0 0.0
      %2219 = vmatpush1.msra.mxu0 0.0
      %2220 = vmatprep.subr.mxu0 0.0
      %2221 = vmatpush1.msra.mxu0 0.0
      %2222 = vmatprep.subr.mxu0 0.0
      %2223 = vmatpush1.msra.mxu0 0.0
      %2224 = vmatprep.subr.mxu0 0.0
      %2225 = vmatpush1.msra.mxu0 0.0
      %2226 = vmatprep.subr.mxu0 0.0
      %2227 = vmatpush1.msra.mxu0 0.0
      %2228 = vmatprep.subr.mxu0 0.0
      %2229 = vmatpush1.msra.mxu0 0.0
      %2230 = vmatprep.subr.mxu0 0.0
      %2231 = vmatpush1.msra.mxu0 0.0
      %2232 = vmatprep.mubr.f32.mxu0 0.0
      %2233 = vmatmul.mubr.f32.gmra.mrb[0].mxu0 %v2145
      %v2234 = vpop.f32.mrb[0].mxu0
      %v2235 = vadd.f32 0.0, %v2234
      %v2236 = vpop.f32.mrb[0].mxu0
      %2237 = vmatprep.mubr.f32.mxu0 0.0
      %2238 = vmatmul.mubr.f32.gmra.mrb[0].mxu0 %v2146
      %v2239 = vpop.f32.mrb[0].mxu0
      %v2240 = vadd.f32 0.0, %v2239
      %v2241 = vpop.f32.mrb[0].mxu0
      %2242 = vmatprep.mubr.f32.mxu0 0.0
      %2243 = vmatmul.mubr.f32.gmra.mrb[0].mxu0 %v2147
      %v2244 = vpop.f32.mrb[0].mxu0
      %v2245 = vadd.f32 0.0, %v2244
      %v2246 = vpop.f32.mrb[0].mxu0
      %2247 = vmatprep.mubr.f32.mxu0 0.0
      %2248 = vmatmul.mubr.f32.gmra.mrb[0].mxu0 %v2148
      %v2249 = vpop.f32.mrb[0].mxu0
      %v2250 = vadd.f32 0.0, %v2249
      %v2251 = vpop.f32.mrb[0].mxu0
      %2252 = vmatprep.mubr.f32.mxu0 0.0
      %2253 = vmatmul.mubr.f32.gmra.mrb[0].mxu0 %v2149
      %v2254 = vpop.f32.mrb[0].mxu0
      %v2255 = vadd.f32 0.0, %v2254
      %v2256 = vpop.f32.mrb[0].mxu0
      %2257 = vmatprep.mubr.f32.mxu0 0.0
      %2258 = vmatmul.mubr.f32.gmra.mrb[0].mxu0 %v2150
      %v2259 = vpop.f32.mrb[0].mxu0
      %v2260 = vadd.f32 0.0, %v2259
      %v2261 = vpop.f32.mrb[0].mxu0
      %2262 = vdwg.mxu0
      %v2263 = vadd.f32 %v2139, %v2235
      %v2264 = vadd.f32 %v2140, %v2240
      %v2265 = vadd.f32 %v2141, %v2245
      %v2266 = vadd.f32 %v2142, %v2250
      %v2267 = vadd.f32 %v2143, %v2255
      %v2268 = vadd.f32 %v2144, %v2260
      %v2269 = vld [vmem:[%s288 + $0x12] sm:$0xff]
      %v2270 = vld [vmem:[%s288 + $0x1a] sm:$0xff]
      %v2271 = vld [vmem:[%s288 + $0x22] sm:$0xff]
      %v2272 = vld [vmem:[%s288 + $0x2a] sm:$0xff]
      %v2273 = vld [vmem:[%s288 + $0x32] sm:$0xff]
      %v2274 = vld [vmem:[%s288 + $0x3a] sm:$0x3f]
      %s2275 = scalar_lea.vmem %s2, 1024
      %v2276 = vld [vmem:[%s2275] sm:$0xff]
      %v2277 = vld [vmem:[%s2275 + $0x8] sm:$0xff]
      %v2278 = vld [vmem:[%s2275 + $0x10] sm:$0xff]
      %v2279 = vld [vmem:[%s2275 + $0x18] sm:$0xff]
      %v2280 = vld [vmem:[%s2275 + $0x20] sm:$0xff]
      %v2281 = vld [vmem:[%s2275 + $0x28] sm:$0xff]
      %v2282 = vld [vmem:[%s2275 + $0x30] sm:$0xff]
      %v2283 = vld [vmem:[%s2275 + $0x38] sm:$0xff]
      %v2284 = vld [vmem:[%s2275 + $0x40] sm:$0xff]
      %v2285 = vld [vmem:[%s2275 + $0x48] sm:$0xff]
      %v2286 = vld [vmem:[%s2275 + $0x50] sm:$0xff]
      %v2287 = vld [vmem:[%s2275 + $0x58] sm:$0xff]
      %v2288 = vld [vmem:[%s2275 + $0x60] sm:$0xff]
      %v2289 = vld [vmem:[%s2275 + $0x68] sm:$0xff]
      %v2290 = vld [vmem:[%s2275 + $0x70] sm:$0xff]
      %v2291 = vld [vmem:[%s2275 + $0x78] sm:$0xff]
      %2292 = vmatprep.subr.mxu0 0.0
      %2293 = vmatpush1.msra.mxu0 %v2276
      %2294 = vmatprep.subr.mxu0 0.0
      %2295 = vmatpush1.msra.mxu0 %v2277
      %2296 = vmatprep.subr.mxu0 0.0
      %2297 = vmatpush1.msra.mxu0 %v2278
      %2298 = vmatprep.subr.mxu0 0.0
      %2299 = vmatpush1.msra.mxu0 %v2279
      %2300 = vmatprep.subr.mxu0 0.0
      %2301 = vmatpush1.msra.mxu0 %v2280
      %2302 = vmatprep.subr.mxu0 0.0
      %2303 = vmatpush1.msra.mxu0 %v2281
      %2304 = vmatprep.subr.mxu0 0.0
      %2305 = vmatpush1.msra.mxu0 %v2282
      %2306 = vmatprep.subr.mxu0 0.0
      %2307 = vmatpush1.msra.mxu0 %v2283
      %2308 = vmatprep.subr.mxu0 0.0
      %2309 = vmatpush1.msra.mxu0 %v2284
      %2310 = vmatprep.subr.mxu0 0.0
      %2311 = vmatpush1.msra.mxu0 %v2285
      %2312 = vmatprep.subr.mxu0 0.0
      %2313 = vmatpush1.msra.mxu0 %v2286
      %2314 = vmatprep.subr.mxu0 0.0
      %2315 = vmatpush1.msra.mxu0 %v2287
      %2316 = vmatprep.subr.mxu0 0.0
      %2317 = vmatpush1.msra.mxu0 %v2288
      %2318 = vmatprep.subr.mxu0 0.0
      %2319 = vmatpush1.msra.mxu0 %v2289
      %2320 = vmatprep.subr.mxu0 0.0
      %2321 = vmatpush1.msra.mxu0 %v2290
      %2322 = vmatprep.subr.mxu0 0.0
      %2323 = vmatpush1.msra.mxu0 %v2291
      %2324 = vmatprep.subr.mxu0 0.0
      %2325 = vmatpush1.msra.mxu0 0.0
      %2326 = vmatprep.subr.mxu0 0.0
      %2327 = vmatpush1.msra.mxu0 0.0
      %2328 = vmatprep.subr.mxu0 0.0
      %2329 = vmatpush1.msra.mxu0 0.0
      %2330 = vmatprep.subr.mxu0 0.0
      %2331 = vmatpush1.msra.mxu0 0.0
      %2332 = vmatprep.subr.mxu0 0.0
      %2333 = vmatpush1.msra.mxu0 0.0
      %2334 = vmatprep.subr.mxu0 0.0
      %2335 = vmatpush1.msra.mxu0 0.0
      %2336 = vmatprep.subr.mxu0 0.0
      %2337 = vmatpush1.msra.mxu0 0.0
      %2338 = vmatprep.subr.mxu0 0.0
      %2339 = vmatpush1.msra.mxu0 0.0
      %2340 = vmatprep.subr.mxu0 0.0
      %2341 = vmatpush1.msra.mxu0 0.0
      %2342 = vmatprep.subr.mxu0 0.0
      %2343 = vmatpush1.msra.mxu0 0.0
      %2344 = vmatprep.subr.mxu0 0.0
      %2345 = vmatpush1.msra.mxu0 0.0
      %2346 = vmatprep.subr.mxu0 0.0
      %2347 = vmatpush1.msra.mxu0 0.0
      %2348 = vmatprep.subr.mxu0 0.0
      %2349 = vmatpush1.msra.mxu0 0.0
      %2350 = vmatprep.subr.mxu0 0.0
      %2351 = vmatpush1.msra.mxu0 0.0
      %2352 = vmatprep.subr.mxu0 0.0
      %2353 = vmatpush1.msra.mxu0 0.0
      %2354 = vmatprep.subr.mxu0 0.0
      %2355 = vmatpush1.msra.mxu0 0.0
      %2356 = vmatprep.mubr.f32.mxu0 0.0
      %2357 = vmatmul.mubr.f32.gmra.mrb[0].mxu0 %v2269
      %v2358 = vpop.f32.mrb[0].mxu0
      %v2359 = vadd.f32 0.0, %v2358
      %v2360 = vpop.f32.mrb[0].mxu0
      %2361 = vmatprep.mubr.f32.mxu0 0.0
      %2362 = vmatmul.mubr.f32.gmra.mrb[0].mxu0 %v2270
      %v2363 = vpop.f32.mrb[0].mxu0
      %v2364 = vadd.f32 0.0, %v2363
      %v2365 = vpop.f32.mrb[0].mxu0
      %2366 = vmatprep.mubr.f32.mxu0 0.0
      %2367 = vmatmul.mubr.f32.gmra.mrb[0].mxu0 %v2271
      %v2368 = vpop.f32.mrb[0].mxu0
      %v2369 = vadd.f32 0.0, %v2368
      %v2370 = vpop.f32.mrb[0].mxu0
      %2371 = vmatprep.mubr.f32.mxu0 0.0
      %2372 = vmatmul.mubr.f32.gmra.mrb[0].mxu0 %v2272
      %v2373 = vpop.f32.mrb[0].mxu0
      %v2374 = vadd.f32 0.0, %v2373
      %v2375 = vpop.f32.mrb[0].mxu0
      %2376 = vmatprep.mubr.f32.mxu0 0.0
      %2377 = vmatmul.mubr.f32.gmra.mrb[0].mxu0 %v2273
      %v2378 = vpop.f32.mrb[0].mxu0
      %v2379 = vadd.f32 0.0, %v2378
      %v2380 = vpop.f32.mrb[0].mxu0
      %2381 = vmatprep.mubr.f32.mxu0 0.0
      %2382 = vmatmul.mubr.f32.gmra.mrb[0].mxu0 %v2274
      %v2383 = vpop.f32.mrb[0].mxu0
      %v2384 = vadd.f32 0.0, %v2383
      %v2385 = vpop.f32.mrb[0].mxu0
      %2386 = vdwg.mxu0
      %v2387 = vadd.f32 %v2263, %v2359
      %v2388 = vadd.f32 %v2264, %v2364
      %v2389 = vadd.f32 %v2265, %v2369
      %v2390 = vadd.f32 %v2266, %v2374
      %v2391 = vadd.f32 %v2267, %v2379
      %v2392 = vadd.f32 %v2268, %v2384
      %v2393 = vld [vmem:[%s293 + $0x12] sm:$0xff]
      %v2394 = vld [vmem:[%s293 + $0x1a] sm:$0xff]
      %v2395 = vld [vmem:[%s293 + $0x22] sm:$0xff]
      %v2396 = vld [vmem:[%s293 + $0x2a] sm:$0xff]
      %v2397 = vld [vmem:[%s293 + $0x32] sm:$0xff]
      %v2398 = vld [vmem:[%s293 + $0x3a] sm:$0x3f]
      %s2399 = scalar_lea.vmem %s3, 1024
      %v2400 = vld [vmem:[%s2399] sm:$0xff]
      %v2401 = vld [vmem:[%s2399 + $0x8] sm:$0xff]
      %v2402 = vld [vmem:[%s2399 + $0x10] sm:$0xff]
      %v2403 = vld [vmem:[%s2399 + $0x18] sm:$0xff]
      %v2404 = vld [vmem:[%s2399 + $0x20] sm:$0xff]
      %v2405 = vld [vmem:[%s2399 + $0x28] sm:$0xff]
      %v2406 = vld [vmem:[%s2399 + $0x30] sm:$0xff]
      %v2407 = vld [vmem:[%s2399 + $0x38] sm:$0xff]
      %v2408 = vld [vmem:[%s2399 + $0x40] sm:$0xff]
      %v2409 = vld [vmem:[%s2399 + $0x48] sm:$0xff]
      %v2410 = vld [vmem:[%s2399 + $0x50] sm:$0xff]
      %v2411 = vld [vmem:[%s2399 + $0x58] sm:$0xff]
      %v2412 = vld [vmem:[%s2399 + $0x60] sm:$0xff]
      %v2413 = vld [vmem:[%s2399 + $0x68] sm:$0xff]
      %v2414 = vld [vmem:[%s2399 + $0x70] sm:$0xff]
      %v2415 = vld [vmem:[%s2399 + $0x78] sm:$0xff]
      %2416 = vmatprep.subr.mxu0 0.0
      %2417 = vmatpush1.msra.mxu0 %v2400
      %2418 = vmatprep.subr.mxu0 0.0
      %2419 = vmatpush1.msra.mxu0 %v2401
      %2420 = vmatprep.subr.mxu0 0.0
      %2421 = vmatpush1.msra.mxu0 %v2402
      %2422 = vmatprep.subr.mxu0 0.0
      %2423 = vmatpush1.msra.mxu0 %v2403
      %2424 = vmatprep.subr.mxu0 0.0
      %2425 = vmatpush1.msra.mxu0 %v2404
      %2426 = vmatprep.subr.mxu0 0.0
      %2427 = vmatpush1.msra.mxu0 %v2405
      %2428 = vmatprep.subr.mxu0 0.0
      %2429 = vmatpush1.msra.mxu0 %v2406
      %2430 = vmatprep.subr.mxu0 0.0
      %2431 = vmatpush1.msra.mxu0 %v2407
      %2432 = vmatprep.subr.mxu0 0.0
      %2433 = vmatpush1.msra.mxu0 %v2408
      %2434 = vmatprep.subr.mxu0 0.0
      %2435 = vmatpush1.msra.mxu0 %v2409
      %2436 = vmatprep.subr.mxu0 0.0
      %2437 = vmatpush1.msra.mxu0 %v2410
      %2438 = vmatprep.subr.mxu0 0.0
      %2439 = vmatpush1.msra.mxu0 %v2411
      %2440 = vmatprep.subr.mxu0 0.0
      %2441 = vmatpush1.msra.mxu0 %v2412
      %2442 = vmatprep.subr.mxu0 0.0
      %2443 = vmatpush1.msra.mxu0 %v2413
      %2444 = vmatprep.subr.mxu0 0.0
      %2445 = vmatpush1.msra.mxu0 %v2414
      %2446 = vmatprep.subr.mxu0 0.0
      %2447 = vmatpush1.msra.mxu0 %v2415
      %2448 = vmatprep.subr.mxu0 0.0
      %2449 = vmatpush1.msra.mxu0 0.0
      %2450 = vmatprep.subr.mxu0 0.0
      %2451 = vmatpush1.msra.mxu0 0.0
      %2452 = vmatprep.subr.mxu0 0.0
      %2453 = vmatpush1.msra.mxu0 0.0
      %2454 = vmatprep.subr.mxu0 0.0
      %2455 = vmatpush1.msra.mxu0 0.0
      %2456 = vmatprep.subr.mxu0 0.0
      %2457 = vmatpush1.msra.mxu0 0.0
      %2458 = vmatprep.subr.mxu0 0.0
      %2459 = vmatpush1.msra.mxu0 0.0
      %2460 = vmatprep.subr.mxu0 0.0
      %2461 = vmatpush1.msra.mxu0 0.0
      %2462 = vmatprep.subr.mxu0 0.0
      %2463 = vmatpush1.msra.mxu0 0.0
      %2464 = vmatprep.subr.mxu0 0.0
      %2465 = vmatpush1.msra.mxu0 0.0
      %2466 = vmatprep.subr.mxu0 0.0
      %2467 = vmatpush1.msra.mxu0 0.0
      %2468 = vmatprep.subr.mxu0 0.0
      %2469 = vmatpush1.msra.mxu0 0.0
      %2470 = vmatprep.subr.mxu0 0.0
      %2471 = vmatpush1.msra.mxu0 0.0
      %2472 = vmatprep.subr.mxu0 0.0
      %2473 = vmatpush1.msra.mxu0 0.0
      %2474 = vmatprep.subr.mxu0 0.0
      %2475 = vmatpush1.msra.mxu0 0.0
      %2476 = vmatprep.subr.mxu0 0.0
      %2477 = vmatpush1.msra.mxu0 0.0
      %2478 = vmatprep.subr.mxu0 0.0
      %2479 = vmatpush1.msra.mxu0 0.0
      %2480 = vmatprep.mubr.f32.mxu0 0.0
      %2481 = vmatmul.mubr.f32.gmra.mrb[0].mxu0 %v2393
      %v2482 = vpop.f32.mrb[0].mxu0
      %v2483 = vadd.f32 0.0, %v2482
      %v2484 = vpop.f32.mrb[0].mxu0
      %2485 = vmatprep.mubr.f32.mxu0 0.0
      %2486 = vmatmul.mubr.f32.gmra.mrb[0].mxu0 %v2394
      %v2487 = vpop.f32.mrb[0].mxu0
      %v2488 = vadd.f32 0.0, %v2487
      %v2489 = vpop.f32.mrb[0].mxu0
      %2490 = vmatprep.mubr.f32.mxu0 0.0
      %2491 = vmatmul.mubr.f32.gmra.mrb[0].mxu0 %v2395
      %v2492 = vpop.f32.mrb[0].mxu0
      %v2493 = vadd.f32 0.0, %v2492
      %v2494 = vpop.f32.mrb[0].mxu0
      %2495 = vmatprep.mubr.f32.mxu0 0.0
      %2496 = vmatmul.mubr.f32.gmra.mrb[0].mxu0 %v2396
      %v2497 = vpop.f32.mrb[0].mxu0
      %v2498 = vadd.f32 0.0, %v2497
      %v2499 = vpop.f32.mrb[0].mxu0
      %2500 = vmatprep.mubr.f32.mxu0 0.0
      %2501 = vmatmul.mubr.f32.gmra.mrb[0].mxu0 %v2397
      %v2502 = vpop.f32.mrb[0].mxu0
      %v2503 = vadd.f32 0.0, %v2502
      %v2504 = vpop.f32.mrb[0].mxu0
      %2505 = vmatprep.mubr.f32.mxu0 0.0
      %2506 = vmatmul.mubr.f32.gmra.mrb[0].mxu0 %v2398
      %v2507 = vpop.f32.mrb[0].mxu0
      %v2508 = vadd.f32 0.0, %v2507
      %v2509 = vpop.f32.mrb[0].mxu0
      %2510 = vdwg.mxu0
      %v2511 = vadd.f32 %v2387, %v2483
      %v2512 = vadd.f32 %v2388, %v2488
      %v2513 = vadd.f32 %v2389, %v2493
      %v2514 = vadd.f32 %v2390, %v2498
      %v2515 = vadd.f32 %v2391, %v2503
      %v2516 = vadd.f32 %v2392, %v2508
      %v2517 = vld [vmem:[%s4] sm:$0x1]
      %v2519 = vlaneseq
      %v2520 = vshrl.u32 %v2519, 7
      %v2521 = vsub.s32 0, %v2520
      %v2522 = vrot.slane %v2517, %v2521
      %v2524 = vadd.f32 %v2511, %v2522
      %v2525 = vadd.f32 %v2512, %v2522
      %v2526 = vadd.f32 %v2513, %v2522
      %v2527 = vadd.f32 %v2514, %v2522
      %v2528 = vadd.f32 %v2515, %v2522
      %v2529 = vadd.f32 %v2516, %v2522
      %v2530 = vmax.f32 %v2524, 0.0
      %v2531 = vmax.f32 %v2525, 0.0
      %v2532 = vmax.f32 %v2526, 0.0
      %v2533 = vmax.f32 %v2527, 0.0
      %v2534 = vmax.f32 %v2528, 0.0
      %v2535 = vmax.f32 %v2529, 0.0
      %2536 = vst [vmem:[#allocation2] sm:$0xff] %v2530
      %2537 = vst [vmem:[#allocation2 + $0x8] sm:$0xff] %v2531
      %2538 = vst [vmem:[#allocation2 + $0x10] sm:$0xff] %v2532
      %2539 = vst [vmem:[#allocation2 + $0x18] sm:$0xff] %v2533
      %2540 = vst [vmem:[#allocation2 + $0x20] sm:$0xff] %v2534
      %2541 = vst [vmem:[#allocation2 + $0x28] sm:$0x3f] %v2535
      %v2542 = vld [vmem:[#allocation2] sm:$0xff]
      %v2543 = vld [vmem:[#allocation2 + $0x8] sm:$0xff]
      %v2544 = vld [vmem:[#allocation2 + $0x10] sm:$0xff]
      %v2545 = vld [vmem:[#allocation2 + $0x18] sm:$0xf]
      %v2546 = vld [vmem:[%s5] sm:$0xff]
      %v2547 = vld [vmem:[%s5 + $0x8] sm:$0xff]
      %v2548 = vld [vmem:[%s5 + $0x10] sm:$0xff]
      %v2549 = vld [vmem:[%s5 + $0x18] sm:$0xff]
      %v2550 = vld [vmem:[%s5 + $0x20] sm:$0xff]
      %v2551 = vld [vmem:[%s5 + $0x28] sm:$0xff]
      %v2552 = vld [vmem:[%s5 + $0x30] sm:$0xff]
      %v2553 = vld [vmem:[%s5 + $0x38] sm:$0xff]
      %v2554 = vld [vmem:[%s5 + $0x40] sm:$0xff]
      %v2555 = vld [vmem:[%s5 + $0x48] sm:$0xff]
      %v2556 = vld [vmem:[%s5 + $0x50] sm:$0xff]
      %v2557 = vld [vmem:[%s5 + $0x58] sm:$0xff]
      %v2558 = vld [vmem:[%s5 + $0x60] sm:$0xff]
      %v2559 = vld [vmem:[%s5 + $0x68] sm:$0xff]
      %v2560 = vld [vmem:[%s5 + $0x70] sm:$0xff]
      %v2561 = vld [vmem:[%s5 + $0x78] sm:$0xff]
      %v2562 = vld [vmem:[#allocation2 + $0x1] sm:$0xff]
      %v2563 = vld [vmem:[#allocation2 + $0x9] sm:$0xff]
      %v2564 = vld [vmem:[#allocation2 + $0x11] sm:$0xff]
      %v2565 = vld [vmem:[#allocation2 + $0x19] sm:$0xf]
      %s2566 = scalar_lea.vmem %s5, 128
      %v2567 = vld [vmem:[%s2566] sm:$0xff]
      %v2568 = vld [vmem:[%s2566 + $0x8] sm:$0xff]
      %v2569 = vld [vmem:[%s2566 + $0x10] sm:$0xff]
      %v2570 = vld [vmem:[%s2566 + $0x18] sm:$0xff]
      %v2571 = vld [vmem:[%s2566 + $0x20] sm:$0xff]
      %v2572 = vld [vmem:[%s2566 + $0x28] sm:$0xff]
      %v2573 = vld [vmem:[%s2566 + $0x30] sm:$0xff]
      %v2574 = vld [vmem:[%s2566 + $0x38] sm:$0xff]
      %v2575 = vld [vmem:[%s2566 + $0x40] sm:$0xff]
      %v2576 = vld [vmem:[%s2566 + $0x48] sm:$0xff]
      %v2577 = vld [vmem:[%s2566 + $0x50] sm:$0xff]
      %v2578 = vld [vmem:[%s2566 + $0x58] sm:$0xff]
      %v2579 = vld [vmem:[%s2566 + $0x60] sm:$0xff]
      %v2580 = vld [vmem:[%s2566 + $0x68] sm:$0xff]
      %v2581 = vld [vmem:[%s2566 + $0x70] sm:$0xff]
      %v2582 = vld [vmem:[%s2566 + $0x78] sm:$0xff]
      %2583 = vmatprep.subr.mxu0 0.0
      %2584 = vmatpush1.msra.mxu0 %v2567
      %2585 = vmatprep.subr.mxu0 0.0
      %2586 = vmatpush1.msra.mxu0 %v2568
      %2587 = vmatprep.subr.mxu0 0.0
      %2588 = vmatpush1.msra.mxu0 %v2569
      %2589 = vmatprep.subr.mxu0 0.0
      %2590 = vmatpush1.msra.mxu0 %v2570
      %2591 = vmatprep.subr.mxu0 0.0
      %2592 = vmatpush1.msra.mxu0 %v2571
      %2593 = vmatprep.subr.mxu0 0.0
      %2594 = vmatpush1.msra.mxu0 %v2572
      %2595 = vmatprep.subr.mxu0 0.0
      %2596 = vmatpush1.msra.mxu0 %v2573
      %2597 = vmatprep.subr.mxu0 0.0
      %2598 = vmatpush1.msra.mxu0 %v2574
      %2599 = vmatprep.subr.mxu0 0.0
      %2600 = vmatpush1.msra.mxu0 %v2575
      %2601 = vmatprep.subr.mxu0 0.0
      %2602 = vmatpush1.msra.mxu0 %v2576
      %2603 = vmatprep.subr.mxu0 0.0
      %2604 = vmatpush1.msra.mxu0 %v2577
      %2605 = vmatprep.subr.mxu0 0.0
      %2606 = vmatpush1.msra.mxu0 %v2578
      %2607 = vmatprep.subr.mxu0 0.0
      %2608 = vmatpush1.msra.mxu0 %v2579
      %2609 = vmatprep.subr.mxu0 0.0
      %2610 = vmatpush1.msra.mxu0 %v2580
      %2611 = vmatprep.subr.mxu0 0.0
      %2612 = vmatpush1.msra.mxu0 %v2581
      %2613 = vmatprep.subr.mxu0 0.0
      %2614 = vmatpush1.msra.mxu0 %v2582
      %2615 = vmatprep.subr.mxu0 0.0
      %2616 = vmatpush1.msra.mxu0 0.0
      %2617 = vmatprep.subr.mxu0 0.0
      %2618 = vmatpush1.msra.mxu0 0.0
      %2619 = vmatprep.subr.mxu0 0.0
      %2620 = vmatpush1.msra.mxu0 0.0
      %2621 = vmatprep.subr.mxu0 0.0
      %2622 = vmatpush1.msra.mxu0 0.0
      %2623 = vmatprep.subr.mxu0 0.0
      %2624 = vmatpush1.msra.mxu0 0.0
      %2625 = vmatprep.subr.mxu0 0.0
      %2626 = vmatpush1.msra.mxu0 0.0
      %2627 = vmatprep.subr.mxu0 0.0
      %2628 = vmatpush1.msra.mxu0 0.0
      %2629 = vmatprep.subr.mxu0 0.0
      %2630 = vmatpush1.msra.mxu0 0.0
      %2631 = vmatprep.subr.mxu0 0.0
      %2632 = vmatpush1.msra.mxu0 0.0
      %2633 = vmatprep.subr.mxu0 0.0
      %2634 = vmatpush1.msra.mxu0 0.0
      %2635 = vmatprep.subr.mxu0 0.0
      %2636 = vmatpush1.msra.mxu0 0.0
      %2637 = vmatprep.subr.mxu0 0.0
      %2638 = vmatpush1.msra.mxu0 0.0
      %2639 = vmatprep.subr.mxu0 0.0
      %2640 = vmatpush1.msra.mxu0 0.0
      %2641 = vmatprep.subr.mxu0 0.0
      %2642 = vmatpush1.msra.mxu0 0.0
      %2643 = vmatprep.subr.mxu0 0.0
      %2644 = vmatpush1.msra.mxu0 0.0
      %2645 = vmatprep.subr.mxu0 0.0
      %2646 = vmatpush1.msra.mxu0 0.0
      %2647 = vmatprep.mubr.f32.mxu0 0.0
      %2648 = vmatmul.mubr.f32.gmra.mrb[0].mxu0 %v2562
      %v2649 = vpop.f32.mrb[0].mxu0
      %v2650 = vadd.f32 0.0, %v2649
      %v2651 = vpop.f32.mrb[0].mxu0
      %2652 = vmatprep.mubr.f32.mxu0 0.0
      %2653 = vmatmul.mubr.f32.gmra.mrb[0].mxu0 %v2563
      %v2654 = vpop.f32.mrb[0].mxu0
      %v2655 = vadd.f32 0.0, %v2654
      %v2656 = vpop.f32.mrb[0].mxu0
      %2657 = vmatprep.mubr.f32.mxu0 0.0
      %2658 = vmatmul.mubr.f32.gmra.mrb[0].mxu0 %v2564
      %v2659 = vpop.f32.mrb[0].mxu0
      %v2660 = vadd.f32 0.0, %v2659
      %v2661 = vpop.f32.mrb[0].mxu0
      %2662 = vmatprep.mubr.f32.mxu0 0.0
      %2663 = vmatmul.mubr.f32.gmra.mrb[0].mxu0 %v2565
      %v2664 = vpop.f32.mrb[0].mxu0
      %v2665 = vadd.f32 0.0, %v2664
      %v2666 = vpop.f32.mrb[0].mxu0
      %2667 = vdwg.mxu0
      %2668 = vmatprep.subr.mxu0 0.0
      %2669 = vmatpush1.msra.mxu0 %v2546
      %2670 = vmatprep.subr.mxu0 0.0
      %2671 = vmatpush1.msra.mxu0 %v2547
      %2672 = vmatprep.subr.mxu0 0.0
      %2673 = vmatpush1.msra.mxu0 %v2548
      %2674 = vmatprep.subr.mxu0 0.0
      %2675 = vmatpush1.msra.mxu0 %v2549
      %2676 = vmatprep.subr.mxu0 0.0
      %2677 = vmatpush1.msra.mxu0 %v2550
      %2678 = vmatprep.subr.mxu0 0.0
      %2679 = vmatpush1.msra.mxu0 %v2551
      %2680 = vmatprep.subr.mxu0 0.0
      %2681 = vmatpush1.msra.mxu0 %v2552
      %2682 = vmatprep.subr.mxu0 0.0
      %2683 = vmatpush1.msra.mxu0 %v2553
      %2684 = vmatprep.subr.mxu0 0.0
      %2685 = vmatpush1.msra.mxu0 %v2554
      %2686 = vmatprep.subr.mxu0 0.0
      %2687 = vmatpush1.msra.mxu0 %v2555
      %2688 = vmatprep.subr.mxu0 0.0
      %2689 = vmatpush1.msra.mxu0 %v2556
      %2690 = vmatprep.subr.mxu0 0.0
      %2691 = vmatpush1.msra.mxu0 %v2557
      %2692 = vmatprep.subr.mxu0 0.0
      %2693 = vmatpush1.msra.mxu0 %v2558
      %2694 = vmatprep.subr.mxu0 0.0
      %2695 = vmatpush1.msra.mxu0 %v2559
      %2696 = vmatprep.subr.mxu0 0.0
      %2697 = vmatpush1.msra.mxu0 %v2560
      %2698 = vmatprep.subr.mxu0 0.0
      %2699 = vmatpush1.msra.mxu0 %v2561
      %2700 = vmatprep.subr.mxu0 0.0
      %2701 = vmatpush1.msra.mxu0 0.0
      %2702 = vmatprep.subr.mxu0 0.0
      %2703 = vmatpush1.msra.mxu0 0.0
      %2704 = vmatprep.subr.mxu0 0.0
      %2705 = vmatpush1.msra.mxu0 0.0
      %2706 = vmatprep.subr.mxu0 0.0
      %2707 = vmatpush1.msra.mxu0 0.0
      %2708 = vmatprep.subr.mxu0 0.0
      %2709 = vmatpush1.msra.mxu0 0.0
      %2710 = vmatprep.subr.mxu0 0.0
      %2711 = vmatpush1.msra.mxu0 0.0
      %2712 = vmatprep.subr.mxu0 0.0
      %2713 = vmatpush1.msra.mxu0 0.0
      %2714 = vmatprep.subr.mxu0 0.0
      %2715 = vmatpush1.msra.mxu0 0.0
      %2716 = vmatprep.subr.mxu0 0.0
      %2717 = vmatpush1.msra.mxu0 0.0
      %2718 = vmatprep.subr.mxu0 0.0
      %2719 = vmatpush1.msra.mxu0 0.0
      %2720 = vmatprep.subr.mxu0 0.0
      %2721 = vmatpush1.msra.mxu0 0.0
      %2722 = vmatprep.subr.mxu0 0.0
      %2723 = vmatpush1.msra.mxu0 0.0
      %2724 = vmatprep.subr.mxu0 0.0
      %2725 = vmatpush1.msra.mxu0 0.0
      %2726 = vmatprep.subr.mxu0 0.0
      %2727 = vmatpush1.msra.mxu0 0.0
      %2728 = vmatprep.subr.mxu0 0.0
      %2729 = vmatpush1.msra.mxu0 0.0
      %2730 = vmatprep.subr.mxu0 0.0
      %2731 = vmatpush1.msra.mxu0 0.0
      %2732 = vmatprep.mubr.f32.mxu0 0.0
      %2733 = vmatmul.mubr.f32.gmra.mrb[0].mxu0 %v2542
      %v2734 = vpop.f32.mrb[0].mxu0
      %v2735 = vadd.f32 %v2650, %v2734
      %v2736 = vpop.f32.mrb[0].mxu0
      %2737 = vmatprep.mubr.f32.mxu0 0.0
      %2738 = vmatmul.mubr.f32.gmra.mrb[0].mxu0 %v2543
      %v2739 = vpop.f32.mrb[0].mxu0
      %v2740 = vadd.f32 %v2655, %v2739
      %v2741 = vpop.f32.mrb[0].mxu0
      %2742 = vmatprep.mubr.f32.mxu0 0.0
      %2743 = vmatmul.mubr.f32.gmra.mrb[0].mxu0 %v2544
      %v2744 = vpop.f32.mrb[0].mxu0
      %v2745 = vadd.f32 %v2660, %v2744
      %v2746 = vpop.f32.mrb[0].mxu0
      %2747 = vmatprep.mubr.f32.mxu0 0.0
      %2748 = vmatmul.mubr.f32.gmra.mrb[0].mxu0 %v2545
      %v2749 = vpop.f32.mrb[0].mxu0
      %v2750 = vadd.f32 %v2665, %v2749
      %v2751 = vpop.f32.mrb[0].mxu0
      %2752 = vdwg.mxu0
      %v2753 = vld [vmem:[#allocation2 + $0x2] sm:$0xff]
      %v2754 = vld [vmem:[#allocation2 + $0xa] sm:$0xff]
      %v2755 = vld [vmem:[#allocation2 + $0x12] sm:$0xff]
      %v2756 = vld [vmem:[#allocation2 + $0x1a] sm:$0xf]
      %s2757 = scalar_lea.vmem %s5, 256
      %v2758 = vld [vmem:[%s2757] sm:$0xff]
      %v2759 = vld [vmem:[%s2757 + $0x8] sm:$0xff]
      %v2760 = vld [vmem:[%s2757 + $0x10] sm:$0xff]
      %v2761 = vld [vmem:[%s2757 + $0x18] sm:$0xff]
      %v2762 = vld [vmem:[%s2757 + $0x20] sm:$0xff]
      %v2763 = vld [vmem:[%s2757 + $0x28] sm:$0xff]
      %v2764 = vld [vmem:[%s2757 + $0x30] sm:$0xff]
      %v2765 = vld [vmem:[%s2757 + $0x38] sm:$0xff]
      %v2766 = vld [vmem:[%s2757 + $0x40] sm:$0xff]
      %v2767 = vld [vmem:[%s2757 + $0x48] sm:$0xff]
      %v2768 = vld [vmem:[%s2757 + $0x50] sm:$0xff]
      %v2769 = vld [vmem:[%s2757 + $0x58] sm:$0xff]
      %v2770 = vld [vmem:[%s2757 + $0x60] sm:$0xff]
      %v2771 = vld [vmem:[%s2757 + $0x68] sm:$0xff]
      %v2772 = vld [vmem:[%s2757 + $0x70] sm:$0xff]
      %v2773 = vld [vmem:[%s2757 + $0x78] sm:$0xff]
      %2774 = vmatprep.subr.mxu0 0.0
      %2775 = vmatpush1.msra.mxu0 %v2758
      %2776 = vmatprep.subr.mxu0 0.0
      %2777 = vmatpush1.msra.mxu0 %v2759
      %2778 = vmatprep.subr.mxu0 0.0
      %2779 = vmatpush1.msra.mxu0 %v2760
      %2780 = vmatprep.subr.mxu0 0.0
      %2781 = vmatpush1.msra.mxu0 %v2761
      %2782 = vmatprep.subr.mxu0 0.0
      %2783 = vmatpush1.msra.mxu0 %v2762
      %2784 = vmatprep.subr.mxu0 0.0
      %2785 = vmatpush1.msra.mxu0 %v2763
      %2786 = vmatprep.subr.mxu0 0.0
      %2787 = vmatpush1.msra.mxu0 %v2764
      %2788 = vmatprep.subr.mxu0 0.0
      %2789 = vmatpush1.msra.mxu0 %v2765
      %2790 = vmatprep.subr.mxu0 0.0
      %2791 = vmatpush1.msra.mxu0 %v2766
      %2792 = vmatprep.subr.mxu0 0.0
      %2793 = vmatpush1.msra.mxu0 %v2767
      %2794 = vmatprep.subr.mxu0 0.0
      %2795 = vmatpush1.msra.mxu0 %v2768
      %2796 = vmatprep.subr.mxu0 0.0
      %2797 = vmatpush1.msra.mxu0 %v2769
      %2798 = vmatprep.subr.mxu0 0.0
      %2799 = vmatpush1.msra.mxu0 %v2770
      %2800 = vmatprep.subr.mxu0 0.0
      %2801 = vmatpush1.msra.mxu0 %v2771
      %2802 = vmatprep.subr.mxu0 0.0
      %2803 = vmatpush1.msra.mxu0 %v2772
      %2804 = vmatprep.subr.mxu0 0.0
      %2805 = vmatpush1.msra.mxu0 %v2773
      %2806 = vmatprep.subr.mxu0 0.0
      %2807 = vmatpush1.msra.mxu0 0.0
      %2808 = vmatprep.subr.mxu0 0.0
      %2809 = vmatpush1.msra.mxu0 0.0
      %2810 = vmatprep.subr.mxu0 0.0
      %2811 = vmatpush1.msra.mxu0 0.0
      %2812 = vmatprep.subr.mxu0 0.0
      %2813 = vmatpush1.msra.mxu0 0.0
      %2814 = vmatprep.subr.mxu0 0.0
      %2815 = vmatpush1.msra.mxu0 0.0
      %2816 = vmatprep.subr.mxu0 0.0
      %2817 = vmatpush1.msra.mxu0 0.0
      %2818 = vmatprep.subr.mxu0 0.0
      %2819 = vmatpush1.msra.mxu0 0.0
      %2820 = vmatprep.subr.mxu0 0.0
      %2821 = vmatpush1.msra.mxu0 0.0
      %2822 = vmatprep.subr.mxu0 0.0
      %2823 = vmatpush1.msra.mxu0 0.0
      %2824 = vmatprep.subr.mxu0 0.0
      %2825 = vmatpush1.msra.mxu0 0.0
      %2826 = vmatprep.subr.mxu0 0.0
      %2827 = vmatpush1.msra.mxu0 0.0
      %2828 = vmatprep.subr.mxu0 0.0
      %2829 = vmatpush1.msra.mxu0 0.0
      %2830 = vmatprep.subr.mxu0 0.0
      %2831 = vmatpush1.msra.mxu0 0.0
      %2832 = vmatprep.subr.mxu0 0.0
      %2833 = vmatpush1.msra.mxu0 0.0
      %2834 = vmatprep.subr.mxu0 0.0
      %2835 = vmatpush1.msra.mxu0 0.0
      %2836 = vmatprep.subr.mxu0 0.0
      %2837 = vmatpush1.msra.mxu0 0.0
      %2838 = vmatprep.mubr.f32.mxu0 0.0
      %2839 = vmatmul.mubr.f32.gmra.mrb[0].mxu0 %v2753
      %v2840 = vpop.f32.mrb[0].mxu0
      %v2841 = vadd.f32 0.0, %v2840
      %v2842 = vpop.f32.mrb[0].mxu0
      %2843 = vmatprep.mubr.f32.mxu0 0.0
      %2844 = vmatmul.mubr.f32.gmra.mrb[0].mxu0 %v2754
      %v2845 = vpop.f32.mrb[0].mxu0
      %v2846 = vadd.f32 0.0, %v2845
      %v2847 = vpop.f32.mrb[0].mxu0
      %2848 = vmatprep.mubr.f32.mxu0 0.0
      %2849 = vmatmul.mubr.f32.gmra.mrb[0].mxu0 %v2755
      %v2850 = vpop.f32.mrb[0].mxu0
      %v2851 = vadd.f32 0.0, %v2850
      %v2852 = vpop.f32.mrb[0].mxu0
      %2853 = vmatprep.mubr.f32.mxu0 0.0
      %2854 = vmatmul.mubr.f32.gmra.mrb[0].mxu0 %v2756
      %v2855 = vpop.f32.mrb[0].mxu0
      %v2856 = vadd.f32 0.0, %v2855
      %v2857 = vpop.f32.mrb[0].mxu0
      %2858 = vdwg.mxu0
      %v2859 = vadd.f32 %v2735, %v2841
      %v2860 = vadd.f32 %v2740, %v2846
      %v2861 = vadd.f32 %v2745, %v2851
      %v2862 = vadd.f32 %v2750, %v2856
      %v2863 = vld [vmem:[#allocation2 + $0x8] sm:$0xff]
      %v2864 = vld [vmem:[#allocation2 + $0x10] sm:$0xff]
      %v2865 = vld [vmem:[#allocation2 + $0x18] sm:$0xff]
      %v2866 = vld [vmem:[#allocation2 + $0x20] sm:$0xf]
      %s2867 = scalar_lea.vmem %s5, 384
      %v2868 = vld [vmem:[%s2867] sm:$0xff]
      %v2869 = vld [vmem:[%s2867 + $0x8] sm:$0xff]
      %v2870 = vld [vmem:[%s2867 + $0x10] sm:$0xff]
      %v2871 = vld [vmem:[%s2867 + $0x18] sm:$0xff]
      %v2872 = vld [vmem:[%s2867 + $0x20] sm:$0xff]
      %v2873 = vld [vmem:[%s2867 + $0x28] sm:$0xff]
      %v2874 = vld [vmem:[%s2867 + $0x30] sm:$0xff]
      %v2875 = vld [vmem:[%s2867 + $0x38] sm:$0xff]
      %v2876 = vld [vmem:[%s2867 + $0x40] sm:$0xff]
      %v2877 = vld [vmem:[%s2867 + $0x48] sm:$0xff]
      %v2878 = vld [vmem:[%s2867 + $0x50] sm:$0xff]
      %v2879 = vld [vmem:[%s2867 + $0x58] sm:$0xff]
      %v2880 = vld [vmem:[%s2867 + $0x60] sm:$0xff]
      %v2881 = vld [vmem:[%s2867 + $0x68] sm:$0xff]
      %v2882 = vld [vmem:[%s2867 + $0x70] sm:$0xff]
      %v2883 = vld [vmem:[%s2867 + $0x78] sm:$0xff]
      %2884 = vmatprep.subr.mxu0 0.0
      %2885 = vmatpush1.msra.mxu0 %v2868
      %2886 = vmatprep.subr.mxu0 0.0
      %2887 = vmatpush1.msra.mxu0 %v2869
      %2888 = vmatprep.subr.mxu0 0.0
      %2889 = vmatpush1.msra.mxu0 %v2870
      %2890 = vmatprep.subr.mxu0 0.0
      %2891 = vmatpush1.msra.mxu0 %v2871
      %2892 = vmatprep.subr.mxu0 0.0
      %2893 = vmatpush1.msra.mxu0 %v2872
      %2894 = vmatprep.subr.mxu0 0.0
      %2895 = vmatpush1.msra.mxu0 %v2873
      %2896 = vmatprep.subr.mxu0 0.0
      %2897 = vmatpush1.msra.mxu0 %v2874
      %2898 = vmatprep.subr.mxu0 0.0
      %2899 = vmatpush1.msra.mxu0 %v2875
      %2900 = vmatprep.subr.mxu0 0.0
      %2901 = vmatpush1.msra.mxu0 %v2876
      %2902 = vmatprep.subr.mxu0 0.0
      %2903 = vmatpush1.msra.mxu0 %v2877
      %2904 = vmatprep.subr.mxu0 0.0
      %2905 = vmatpush1.msra.mxu0 %v2878
      %2906 = vmatprep.subr.mxu0 0.0
      %2907 = vmatpush1.msra.mxu0 %v2879
      %2908 = vmatprep.subr.mxu0 0.0
      %2909 = vmatpush1.msra.mxu0 %v2880
      %2910 = vmatprep.subr.mxu0 0.0
      %2911 = vmatpush1.msra.mxu0 %v2881
      %2912 = vmatprep.subr.mxu0 0.0
      %2913 = vmatpush1.msra.mxu0 %v2882
      %2914 = vmatprep.subr.mxu0 0.0
      %2915 = vmatpush1.msra.mxu0 %v2883
      %2916 = vmatprep.subr.mxu0 0.0
      %2917 = vmatpush1.msra.mxu0 0.0
      %2918 = vmatprep.subr.mxu0 0.0
      %2919 = vmatpush1.msra.mxu0 0.0
      %2920 = vmatprep.subr.mxu0 0.0
      %2921 = vmatpush1.msra.mxu0 0.0
      %2922 = vmatprep.subr.mxu0 0.0
      %2923 = vmatpush1.msra.mxu0 0.0
      %2924 = vmatprep.subr.mxu0 0.0
      %2925 = vmatpush1.msra.mxu0 0.0
      %2926 = vmatprep.subr.mxu0 0.0
      %2927 = vmatpush1.msra.mxu0 0.0
      %2928 = vmatprep.subr.mxu0 0.0
      %2929 = vmatpush1.msra.mxu0 0.0
      %2930 = vmatprep.subr.mxu0 0.0
      %2931 = vmatpush1.msra.mxu0 0.0
      %2932 = vmatprep.subr.mxu0 0.0
      %2933 = vmatpush1.msra.mxu0 0.0
      %2934 = vmatprep.subr.mxu0 0.0
      %2935 = vmatpush1.msra.mxu0 0.0
      %2936 = vmatprep.subr.mxu0 0.0
      %2937 = vmatpush1.msra.mxu0 0.0
      %2938 = vmatprep.subr.mxu0 0.0
      %2939 = vmatpush1.msra.mxu0 0.0
      %2940 = vmatprep.subr.mxu0 0.0
      %2941 = vmatpush1.msra.mxu0 0.0
      %2942 = vmatprep.subr.mxu0 0.0
      %2943 = vmatpush1.msra.mxu0 0.0
      %2944 = vmatprep.subr.mxu0 0.0
      %2945 = vmatpush1.msra.mxu0 0.0
      %2946 = vmatprep.subr.mxu0 0.0
      %2947 = vmatpush1.msra.mxu0 0.0
      %2948 = vmatprep.mubr.f32.mxu0 0.0
      %2949 = vmatmul.mubr.f32.gmra.mrb[0].mxu0 %v2863
      %v2950 = vpop.f32.mrb[0].mxu0
      %v2951 = vadd.f32 0.0, %v2950
      %v2952 = vpop.f32.mrb[0].mxu0
      %2953 = vmatprep.mubr.f32.mxu0 0.0
      %2954 = vmatmul.mubr.f32.gmra.mrb[0].mxu0 %v2864
      %v2955 = vpop.f32.mrb[0].mxu0
      %v2956 = vadd.f32 0.0, %v2955
      %v2957 = vpop.f32.mrb[0].mxu0
      %2958 = vmatprep.mubr.f32.mxu0 0.0
      %2959 = vmatmul.mubr.f32.gmra.mrb[0].mxu0 %v2865
      %v2960 = vpop.f32.mrb[0].mxu0
      %v2961 = vadd.f32 0.0, %v2960
      %v2962 = vpop.f32.mrb[0].mxu0
      %2963 = vmatprep.mubr.f32.mxu0 0.0
      %2964 = vmatmul.mubr.f32.gmra.mrb[0].mxu0 %v2866
      %v2965 = vpop.f32.mrb[0].mxu0
      %v2966 = vadd.f32 0.0, %v2965
      %v2967 = vpop.f32.mrb[0].mxu0
      %2968 = vdwg.mxu0
      %v2969 = vadd.f32 %v2859, %v2951
      %v2970 = vadd.f32 %v2860, %v2956
      %v2971 = vadd.f32 %v2861, %v2961
      %v2972 = vadd.f32 %v2862, %v2966
      %v2973 = vld [vmem:[#allocation2 + $0x9] sm:$0xff]
      %v2974 = vld [vmem:[#allocation2 + $0x11] sm:$0xff]
      %v2975 = vld [vmem:[#allocation2 + $0x19] sm:$0xff]
      %v2976 = vld [vmem:[#allocation2 + $0x21] sm:$0xf]
      %s2977 = scalar_lea.vmem %s5, 512
      %v2978 = vld [vmem:[%s2977] sm:$0xff]
      %v2979 = vld [vmem:[%s2977 + $0x8] sm:$0xff]
      %v2980 = vld [vmem:[%s2977 + $0x10] sm:$0xff]
      %v2981 = vld [vmem:[%s2977 + $0x18] sm:$0xff]
      %v2982 = vld [vmem:[%s2977 + $0x20] sm:$0xff]
      %v2983 = vld [vmem:[%s2977 + $0x28] sm:$0xff]
      %v2984 = vld [vmem:[%s2977 + $0x30] sm:$0xff]
      %v2985 = vld [vmem:[%s2977 + $0x38] sm:$0xff]
      %v2986 = vld [vmem:[%s2977 + $0x40] sm:$0xff]
      %v2987 = vld [vmem:[%s2977 + $0x48] sm:$0xff]
      %v2988 = vld [vmem:[%s2977 + $0x50] sm:$0xff]
      %v2989 = vld [vmem:[%s2977 + $0x58] sm:$0xff]
      %v2990 = vld [vmem:[%s2977 + $0x60] sm:$0xff]
      %v2991 = vld [vmem:[%s2977 + $0x68] sm:$0xff]
      %v2992 = vld [vmem:[%s2977 + $0x70] sm:$0xff]
      %v2993 = vld [vmem:[%s2977 + $0x78] sm:$0xff]
      %2994 = vmatprep.subr.mxu0 0.0
      %2995 = vmatpush1.msra.mxu0 %v2978
      %2996 = vmatprep.subr.mxu0 0.0
      %2997 = vmatpush1.msra.mxu0 %v2979
      %2998 = vmatprep.subr.mxu0 0.0
      %2999 = vmatpush1.msra.mxu0 %v2980
      %3000 = vmatprep.subr.mxu0 0.0
      %3001 = vmatpush1.msra.mxu0 %v2981
      %3002 = vmatprep.subr.mxu0 0.0
      %3003 = vmatpush1.msra.mxu0 %v2982
      %3004 = vmatprep.subr.mxu0 0.0
      %3005 = vmatpush1.msra.mxu0 %v2983
      %3006 = vmatprep.subr.mxu0 0.0
      %3007 = vmatpush1.msra.mxu0 %v2984
      %3008 = vmatprep.subr.mxu0 0.0
      %3009 = vmatpush1.msra.mxu0 %v2985
      %3010 = vmatprep.subr.mxu0 0.0
      %3011 = vmatpush1.msra.mxu0 %v2986
      %3012 = vmatprep.subr.mxu0 0.0
      %3013 = vmatpush1.msra.mxu0 %v2987
      %3014 = vmatprep.subr.mxu0 0.0
      %3015 = vmatpush1.msra.mxu0 %v2988
      %3016 = vmatprep.subr.mxu0 0.0
      %3017 = vmatpush1.msra.mxu0 %v2989
      %3018 = vmatprep.subr.mxu0 0.0
      %3019 = vmatpush1.msra.mxu0 %v2990
      %3020 = vmatprep.subr.mxu0 0.0
      %3021 = vmatpush1.msra.mxu0 %v2991
      %3022 = vmatprep.subr.mxu0 0.0
      %3023 = vmatpush1.msra.mxu0 %v2992
      %3024 = vmatprep.subr.mxu0 0.0
      %3025 = vmatpush1.msra.mxu0 %v2993
      %3026 = vmatprep.subr.mxu0 0.0
      %3027 = vmatpush1.msra.mxu0 0.0
      %3028 = vmatprep.subr.mxu0 0.0
      %3029 = vmatpush1.msra.mxu0 0.0
      %3030 = vmatprep.subr.mxu0 0.0
      %3031 = vmatpush1.msra.mxu0 0.0
      %3032 = vmatprep.subr.mxu0 0.0
      %3033 = vmatpush1.msra.mxu0 0.0
      %3034 = vmatprep.subr.mxu0 0.0
      %3035 = vmatpush1.msra.mxu0 0.0
      %3036 = vmatprep.subr.mxu0 0.0
      %3037 = vmatpush1.msra.mxu0 0.0
      %3038 = vmatprep.subr.mxu0 0.0
      %3039 = vmatpush1.msra.mxu0 0.0
      %3040 = vmatprep.subr.mxu0 0.0
      %3041 = vmatpush1.msra.mxu0 0.0
      %3042 = vmatprep.subr.mxu0 0.0
      %3043 = vmatpush1.msra.mxu0 0.0
      %3044 = vmatprep.subr.mxu0 0.0
      %3045 = vmatpush1.msra.mxu0 0.0
      %3046 = vmatprep.subr.mxu0 0.0
      %3047 = vmatpush1.msra.mxu0 0.0
      %3048 = vmatprep.subr.mxu0 0.0
      %3049 = vmatpush1.msra.mxu0 0.0
      %3050 = vmatprep.subr.mxu0 0.0
      %3051 = vmatpush1.msra.mxu0 0.0
      %3052 = vmatprep.subr.mxu0 0.0
      %3053 = vmatpush1.msra.mxu0 0.0
      %3054 = vmatprep.subr.mxu0 0.0
      %3055 = vmatpush1.msra.mxu0 0.0
      %3056 = vmatprep.subr.mxu0 0.0
      %3057 = vmatpush1.msra.mxu0 0.0
      %3058 = vmatprep.mubr.f32.mxu0 0.0
      %3059 = vmatmul.mubr.f32.gmra.mrb[0].mxu0 %v2973
      %v3060 = vpop.f32.mrb[0].mxu0
      %v3061 = vadd.f32 0.0, %v3060
      %v3062 = vpop.f32.mrb[0].mxu0
      %3063 = vmatprep.mubr.f32.mxu0 0.0
      %3064 = vmatmul.mubr.f32.gmra.mrb[0].mxu0 %v2974
      %v3065 = vpop.f32.mrb[0].mxu0
      %v3066 = vadd.f32 0.0, %v3065
      %v3067 = vpop.f32.mrb[0].mxu0
      %3068 = vmatprep.mubr.f32.mxu0 0.0
      %3069 = vmatmul.mubr.f32.gmra.mrb[0].mxu0 %v2975
      %v3070 = vpop.f32.mrb[0].mxu0
      %v3071 = vadd.f32 0.0, %v3070
      %v3072 = vpop.f32.mrb[0].mxu0
      %3073 = vmatprep.mubr.f32.mxu0 0.0
      %3074 = vmatmul.mubr.f32.gmra.mrb[0].mxu0 %v2976
      %v3075 = vpop.f32.mrb[0].mxu0
      %v3076 = vadd.f32 0.0, %v3075
      %v3077 = vpop.f32.mrb[0].mxu0
      %3078 = vdwg.mxu0
      %v3079 = vadd.f32 %v2969, %v3061
      %v3080 = vadd.f32 %v2970, %v3066
      %v3081 = vadd.f32 %v2971, %v3071
      %v3082 = vadd.f32 %v2972, %v3076
      %v3083 = vld [vmem:[#allocation2 + $0xa] sm:$0xff]
      %v3084 = vld [vmem:[#allocation2 + $0x12] sm:$0xff]
      %v3085 = vld [vmem:[#allocation2 + $0x1a] sm:$0xff]
      %v3086 = vld [vmem:[#allocation2 + $0x22] sm:$0xf]
      %s3087 = scalar_lea.vmem %s5, 640
      %v3088 = vld [vmem:[%s3087] sm:$0xff]
      %v3089 = vld [vmem:[%s3087 + $0x8] sm:$0xff]
      %v3090 = vld [vmem:[%s3087 + $0x10] sm:$0xff]
      %v3091 = vld [vmem:[%s3087 + $0x18] sm:$0xff]
      %v3092 = vld [vmem:[%s3087 + $0x20] sm:$0xff]
      %v3093 = vld [vmem:[%s3087 + $0x28] sm:$0xff]
      %v3094 = vld [vmem:[%s3087 + $0x30] sm:$0xff]
      %v3095 = vld [vmem:[%s3087 + $0x38] sm:$0xff]
      %v3096 = vld [vmem:[%s3087 + $0x40] sm:$0xff]
      %v3097 = vld [vmem:[%s3087 + $0x48] sm:$0xff]
      %v3098 = vld [vmem:[%s3087 + $0x50] sm:$0xff]
      %v3099 = vld [vmem:[%s3087 + $0x58] sm:$0xff]
      %v3100 = vld [vmem:[%s3087 + $0x60] sm:$0xff]
      %v3101 = vld [vmem:[%s3087 + $0x68] sm:$0xff]
      %v3102 = vld [vmem:[%s3087 + $0x70] sm:$0xff]
      %v3103 = vld [vmem:[%s3087 + $0x78] sm:$0xff]
      %3104 = vmatprep.subr.mxu0 0.0
      %3105 = vmatpush1.msra.mxu0 %v3088
      %3106 = vmatprep.subr.mxu0 0.0
      %3107 = vmatpush1.msra.mxu0 %v3089
      %3108 = vmatprep.subr.mxu0 0.0
      %3109 = vmatpush1.msra.mxu0 %v3090
      %3110 = vmatprep.subr.mxu0 0.0
      %3111 = vmatpush1.msra.mxu0 %v3091
      %3112 = vmatprep.subr.mxu0 0.0
      %3113 = vmatpush1.msra.mxu0 %v3092
      %3114 = vmatprep.subr.mxu0 0.0
      %3115 = vmatpush1.msra.mxu0 %v3093
      %3116 = vmatprep.subr.mxu0 0.0
      %3117 = vmatpush1.msra.mxu0 %v3094
      %3118 = vmatprep.subr.mxu0 0.0
      %3119 = vmatpush1.msra.mxu0 %v3095
      %3120 = vmatprep.subr.mxu0 0.0
      %3121 = vmatpush1.msra.mxu0 %v3096
      %3122 = vmatprep.subr.mxu0 0.0
      %3123 = vmatpush1.msra.mxu0 %v3097
      %3124 = vmatprep.subr.mxu0 0.0
      %3125 = vmatpush1.msra.mxu0 %v3098
      %3126 = vmatprep.subr.mxu0 0.0
      %3127 = vmatpush1.msra.mxu0 %v3099
      %3128 = vmatprep.subr.mxu0 0.0
      %3129 = vmatpush1.msra.mxu0 %v3100
      %3130 = vmatprep.subr.mxu0 0.0
      %3131 = vmatpush1.msra.mxu0 %v3101
      %3132 = vmatprep.subr.mxu0 0.0
      %3133 = vmatpush1.msra.mxu0 %v3102
      %3134 = vmatprep.subr.mxu0 0.0
      %3135 = vmatpush1.msra.mxu0 %v3103
      %3136 = vmatprep.subr.mxu0 0.0
      %3137 = vmatpush1.msra.mxu0 0.0
      %3138 = vmatprep.subr.mxu0 0.0
      %3139 = vmatpush1.msra.mxu0 0.0
      %3140 = vmatprep.subr.mxu0 0.0
      %3141 = vmatpush1.msra.mxu0 0.0
      %3142 = vmatprep.subr.mxu0 0.0
      %3143 = vmatpush1.msra.mxu0 0.0
      %3144 = vmatprep.subr.mxu0 0.0
      %3145 = vmatpush1.msra.mxu0 0.0
      %3146 = vmatprep.subr.mxu0 0.0
      %3147 = vmatpush1.msra.mxu0 0.0
      %3148 = vmatprep.subr.mxu0 0.0
      %3149 = vmatpush1.msra.mxu0 0.0
      %3150 = vmatprep.subr.mxu0 0.0
      %3151 = vmatpush1.msra.mxu0 0.0
      %3152 = vmatprep.subr.mxu0 0.0
      %3153 = vmatpush1.msra.mxu0 0.0
      %3154 = vmatprep.subr.mxu0 0.0
      %3155 = vmatpush1.msra.mxu0 0.0
      %3156 = vmatprep.subr.mxu0 0.0
      %3157 = vmatpush1.msra.mxu0 0.0
      %3158 = vmatprep.subr.mxu0 0.0
      %3159 = vmatpush1.msra.mxu0 0.0
      %3160 = vmatprep.subr.mxu0 0.0
      %3161 = vmatpush1.msra.mxu0 0.0
      %3162 = vmatprep.subr.mxu0 0.0
      %3163 = vmatpush1.msra.mxu0 0.0
      %3164 = vmatprep.subr.mxu0 0.0
      %3165 = vmatpush1.msra.mxu0 0.0
      %3166 = vmatprep.subr.mxu0 0.0
      %3167 = vmatpush1.msra.mxu0 0.0
      %3168 = vmatprep.mubr.f32.mxu0 0.0
      %3169 = vmatmul.mubr.f32.gmra.mrb[0].mxu0 %v3083
      %v3170 = vpop.f32.mrb[0].mxu0
      %v3171 = vadd.f32 0.0, %v3170
      %v3172 = vpop.f32.mrb[0].mxu0
      %3173 = vmatprep.mubr.f32.mxu0 0.0
      %3174 = vmatmul.mubr.f32.gmra.mrb[0].mxu0 %v3084
      %v3175 = vpop.f32.mrb[0].mxu0
      %v3176 = vadd.f32 0.0, %v3175
      %v3177 = vpop.f32.mrb[0].mxu0
      %3178 = vmatprep.mubr.f32.mxu0 0.0
      %3179 = vmatmul.mubr.f32.gmra.mrb[0].mxu0 %v3085
      %v3180 = vpop.f32.mrb[0].mxu0
      %v3181 = vadd.f32 0.0, %v3180
      %v3182 = vpop.f32.mrb[0].mxu0
      %3183 = vmatprep.mubr.f32.mxu0 0.0
      %3184 = vmatmul.mubr.f32.gmra.mrb[0].mxu0 %v3086
      %v3185 = vpop.f32.mrb[0].mxu0
      %v3186 = vadd.f32 0.0, %v3185
      %v3187 = vpop.f32.mrb[0].mxu0
      %3188 = vdwg.mxu0
      %v3189 = vadd.f32 %v3079, %v3171
      %v3190 = vadd.f32 %v3080, %v3176
      %v3191 = vadd.f32 %v3081, %v3181
      %v3192 = vadd.f32 %v3082, %v3186
      %v3193 = vld [vmem:[#allocation2 + $0x10] sm:$0xff]
      %v3194 = vld [vmem:[#allocation2 + $0x18] sm:$0xff]
      %v3195 = vld [vmem:[#allocation2 + $0x20] sm:$0xff]
      %v3196 = vld [vmem:[#allocation2 + $0x28] sm:$0xf]
      %s3197 = scalar_lea.vmem %s5, 768
      %v3198 = vld [vmem:[%s3197] sm:$0xff]
      %v3199 = vld [vmem:[%s3197 + $0x8] sm:$0xff]
      %v3200 = vld [vmem:[%s3197 + $0x10] sm:$0xff]
      %v3201 = vld [vmem:[%s3197 + $0x18] sm:$0xff]
      %v3202 = vld [vmem:[%s3197 + $0x20] sm:$0xff]
      %v3203 = vld [vmem:[%s3197 + $0x28] sm:$0xff]
      %v3204 = vld [vmem:[%s3197 + $0x30] sm:$0xff]
      %v3205 = vld [vmem:[%s3197 + $0x38] sm:$0xff]
      %v3206 = vld [vmem:[%s3197 + $0x40] sm:$0xff]
      %v3207 = vld [vmem:[%s3197 + $0x48] sm:$0xff]
      %v3208 = vld [vmem:[%s3197 + $0x50] sm:$0xff]
      %v3209 = vld [vmem:[%s3197 + $0x58] sm:$0xff]
      %v3210 = vld [vmem:[%s3197 + $0x60] sm:$0xff]
      %v3211 = vld [vmem:[%s3197 + $0x68] sm:$0xff]
      %v3212 = vld [vmem:[%s3197 + $0x70] sm:$0xff]
      %v3213 = vld [vmem:[%s3197 + $0x78] sm:$0xff]
      %3214 = vmatprep.subr.mxu0 0.0
      %3215 = vmatpush1.msra.mxu0 %v3198
      %3216 = vmatprep.subr.mxu0 0.0
      %3217 = vmatpush1.msra.mxu0 %v3199
      %3218 = vmatprep.subr.mxu0 0.0
      %3219 = vmatpush1.msra.mxu0 %v3200
      %3220 = vmatprep.subr.mxu0 0.0
      %3221 = vmatpush1.msra.mxu0 %v3201
      %3222 = vmatprep.subr.mxu0 0.0
      %3223 = vmatpush1.msra.mxu0 %v3202
      %3224 = vmatprep.subr.mxu0 0.0
      %3225 = vmatpush1.msra.mxu0 %v3203
      %3226 = vmatprep.subr.mxu0 0.0
      %3227 = vmatpush1.msra.mxu0 %v3204
      %3228 = vmatprep.subr.mxu0 0.0
      %3229 = vmatpush1.msra.mxu0 %v3205
      %3230 = vmatprep.subr.mxu0 0.0
      %3231 = vmatpush1.msra.mxu0 %v3206
      %3232 = vmatprep.subr.mxu0 0.0
      %3233 = vmatpush1.msra.mxu0 %v3207
      %3234 = vmatprep.subr.mxu0 0.0
      %3235 = vmatpush1.msra.mxu0 %v3208
      %3236 = vmatprep.subr.mxu0 0.0
      %3237 = vmatpush1.msra.mxu0 %v3209
      %3238 = vmatprep.subr.mxu0 0.0
      %3239 = vmatpush1.msra.mxu0 %v3210
      %3240 = vmatprep.subr.mxu0 0.0
      %3241 = vmatpush1.msra.mxu0 %v3211
      %3242 = vmatprep.subr.mxu0 0.0
      %3243 = vmatpush1.msra.mxu0 %v3212
      %3244 = vmatprep.subr.mxu0 0.0
      %3245 = vmatpush1.msra.mxu0 %v3213
      %3246 = vmatprep.subr.mxu0 0.0
      %3247 = vmatpush1.msra.mxu0 0.0
      %3248 = vmatprep.subr.mxu0 0.0
      %3249 = vmatpush1.msra.mxu0 0.0
      %3250 = vmatprep.subr.mxu0 0.0
      %3251 = vmatpush1.msra.mxu0 0.0
      %3252 = vmatprep.subr.mxu0 0.0
      %3253 = vmatpush1.msra.mxu0 0.0
      %3254 = vmatprep.subr.mxu0 0.0
      %3255 = vmatpush1.msra.mxu0 0.0
      %3256 = vmatprep.subr.mxu0 0.0
      %3257 = vmatpush1.msra.mxu0 0.0
      %3258 = vmatprep.subr.mxu0 0.0
      %3259 = vmatpush1.msra.mxu0 0.0
      %3260 = vmatprep.subr.mxu0 0.0
      %3261 = vmatpush1.msra.mxu0 0.0
      %3262 = vmatprep.subr.mxu0 0.0
      %3263 = vmatpush1.msra.mxu0 0.0
      %3264 = vmatprep.subr.mxu0 0.0
      %3265 = vmatpush1.msra.mxu0 0.0
      %3266 = vmatprep.subr.mxu0 0.0
      %3267 = vmatpush1.msra.mxu0 0.0
      %3268 = vmatprep.subr.mxu0 0.0
      %3269 = vmatpush1.msra.mxu0 0.0
      %3270 = vmatprep.subr.mxu0 0.0
      %3271 = vmatpush1.msra.mxu0 0.0
      %3272 = vmatprep.subr.mxu0 0.0
      %3273 = vmatpush1.msra.mxu0 0.0
      %3274 = vmatprep.subr.mxu0 0.0
      %3275 = vmatpush1.msra.mxu0 0.0
      %3276 = vmatprep.subr.mxu0 0.0
      %3277 = vmatpush1.msra.mxu0 0.0
      %3278 = vmatprep.mubr.f32.mxu0 0.0
      %3279 = vmatmul.mubr.f32.gmra.mrb[0].mxu0 %v3193
      %v3280 = vpop.f32.mrb[0].mxu0
      %v3281 = vadd.f32 0.0, %v3280
      %v3282 = vpop.f32.mrb[0].mxu0
      %3283 = vmatprep.mubr.f32.mxu0 0.0
      %3284 = vmatmul.mubr.f32.gmra.mrb[0].mxu0 %v3194
      %v3285 = vpop.f32.mrb[0].mxu0
      %v3286 = vadd.f32 0.0, %v3285
      %v3287 = vpop.f32.mrb[0].mxu0
      %3288 = vmatprep.mubr.f32.mxu0 0.0
      %3289 = vmatmul.mubr.f32.gmra.mrb[0].mxu0 %v3195
      %v3290 = vpop.f32.mrb[0].mxu0
      %v3291 = vadd.f32 0.0, %v3290
      %v3292 = vpop.f32.mrb[0].mxu0
      %3293 = vmatprep.mubr.f32.mxu0 0.0
      %3294 = vmatmul.mubr.f32.gmra.mrb[0].mxu0 %v3196
      %v3295 = vpop.f32.mrb[0].mxu0
      %v3296 = vadd.f32 0.0, %v3295
      %v3297 = vpop.f32.mrb[0].mxu0
      %3298 = vdwg.mxu0
      %v3299 = vadd.f32 %v3189, %v3281
      %v3300 = vadd.f32 %v3190, %v3286
      %v3301 = vadd.f32 %v3191, %v3291
      %v3302 = vadd.f32 %v3192, %v3296
      %v3303 = vld [vmem:[#allocation2 + $0x11] sm:$0xff]
      %v3304 = vld [vmem:[#allocation2 + $0x19] sm:$0xff]
      %v3305 = vld [vmem:[#allocation2 + $0x21] sm:$0xff]
      %v3306 = vld [vmem:[#allocation2 + $0x29] sm:$0xf]
      %s3307 = scalar_lea.vmem %s5, 896
      %v3308 = vld [vmem:[%s3307] sm:$0xff]
      %v3309 = vld [vmem:[%s3307 + $0x8] sm:$0xff]
      %v3310 = vld [vmem:[%s3307 + $0x10] sm:$0xff]
      %v3311 = vld [vmem:[%s3307 + $0x18] sm:$0xff]
      %v3312 = vld [vmem:[%s3307 + $0x20] sm:$0xff]
      %v3313 = vld [vmem:[%s3307 + $0x28] sm:$0xff]
      %v3314 = vld [vmem:[%s3307 + $0x30] sm:$0xff]
      %v3315 = vld [vmem:[%s3307 + $0x38] sm:$0xff]
      %v3316 = vld [vmem:[%s3307 + $0x40] sm:$0xff]
      %v3317 = vld [vmem:[%s3307 + $0x48] sm:$0xff]
      %v3318 = vld [vmem:[%s3307 + $0x50] sm:$0xff]
      %v3319 = vld [vmem:[%s3307 + $0x58] sm:$0xff]
      %v3320 = vld [vmem:[%s3307 + $0x60] sm:$0xff]
      %v3321 = vld [vmem:[%s3307 + $0x68] sm:$0xff]
      %v3322 = vld [vmem:[%s3307 + $0x70] sm:$0xff]
      %v3323 = vld [vmem:[%s3307 + $0x78] sm:$0xff]
      %3324 = vmatprep.subr.mxu0 0.0
      %3325 = vmatpush1.msra.mxu0 %v3308
      %3326 = vmatprep.subr.mxu0 0.0
      %3327 = vmatpush1.msra.mxu0 %v3309
      %3328 = vmatprep.subr.mxu0 0.0
      %3329 = vmatpush1.msra.mxu0 %v3310
      %3330 = vmatprep.subr.mxu0 0.0
      %3331 = vmatpush1.msra.mxu0 %v3311
      %3332 = vmatprep.subr.mxu0 0.0
      %3333 = vmatpush1.msra.mxu0 %v3312
      %3334 = vmatprep.subr.mxu0 0.0
      %3335 = vmatpush1.msra.mxu0 %v3313
      %3336 = vmatprep.subr.mxu0 0.0
      %3337 = vmatpush1.msra.mxu0 %v3314
      %3338 = vmatprep.subr.mxu0 0.0
      %3339 = vmatpush1.msra.mxu0 %v3315
      %3340 = vmatprep.subr.mxu0 0.0
      %3341 = vmatpush1.msra.mxu0 %v3316
      %3342 = vmatprep.subr.mxu0 0.0
      %3343 = vmatpush1.msra.mxu0 %v3317
      %3344 = vmatprep.subr.mxu0 0.0
      %3345 = vmatpush1.msra.mxu0 %v3318
      %3346 = vmatprep.subr.mxu0 0.0
      %3347 = vmatpush1.msra.mxu0 %v3319
      %3348 = vmatprep.subr.mxu0 0.0
      %3349 = vmatpush1.msra.mxu0 %v3320
      %3350 = vmatprep.subr.mxu0 0.0
      %3351 = vmatpush1.msra.mxu0 %v3321
      %3352 = vmatprep.subr.mxu0 0.0
      %3353 = vmatpush1.msra.mxu0 %v3322
      %3354 = vmatprep.subr.mxu0 0.0
      %3355 = vmatpush1.msra.mxu0 %v3323
      %3356 = vmatprep.subr.mxu0 0.0
      %3357 = vmatpush1.msra.mxu0 0.0
      %3358 = vmatprep.subr.mxu0 0.0
      %3359 = vmatpush1.msra.mxu0 0.0
      %3360 = vmatprep.subr.mxu0 0.0
      %3361 = vmatpush1.msra.mxu0 0.0
      %3362 = vmatprep.subr.mxu0 0.0
      %3363 = vmatpush1.msra.mxu0 0.0
      %3364 = vmatprep.subr.mxu0 0.0
      %3365 = vmatpush1.msra.mxu0 0.0
      %3366 = vmatprep.subr.mxu0 0.0
      %3367 = vmatpush1.msra.mxu0 0.0
      %3368 = vmatprep.subr.mxu0 0.0
      %3369 = vmatpush1.msra.mxu0 0.0
      %3370 = vmatprep.subr.mxu0 0.0
      %3371 = vmatpush1.msra.mxu0 0.0
      %3372 = vmatprep.subr.mxu0 0.0
      %3373 = vmatpush1.msra.mxu0 0.0
      %3374 = vmatprep.subr.mxu0 0.0
      %3375 = vmatpush1.msra.mxu0 0.0
      %3376 = vmatprep.subr.mxu0 0.0
      %3377 = vmatpush1.msra.mxu0 0.0
      %3378 = vmatprep.subr.mxu0 0.0
      %3379 = vmatpush1.msra.mxu0 0.0
      %3380 = vmatprep.subr.mxu0 0.0
      %3381 = vmatpush1.msra.mxu0 0.0
      %3382 = vmatprep.subr.mxu0 0.0
      %3383 = vmatpush1.msra.mxu0 0.0
      %3384 = vmatprep.subr.mxu0 0.0
      %3385 = vmatpush1.msra.mxu0 0.0
      %3386 = vmatprep.subr.mxu0 0.0
      %3387 = vmatpush1.msra.mxu0 0.0
      %3388 = vmatprep.mubr.f32.mxu0 0.0
      %3389 = vmatmul.mubr.f32.gmra.mrb[0].mxu0 %v3303
      %v3390 = vpop.f32.mrb[0].mxu0
      %v3391 = vadd.f32 0.0, %v3390
      %v3392 = vpop.f32.mrb[0].mxu0
      %3393 = vmatprep.mubr.f32.mxu0 0.0
      %3394 = vmatmul.mubr.f32.gmra.mrb[0].mxu0 %v3304
      %v3395 = vpop.f32.mrb[0].mxu0
      %v3396 = vadd.f32 0.0, %v3395
      %v3397 = vpop.f32.mrb[0].mxu0
      %3398 = vmatprep.mubr.f32.mxu0 0.0
      %3399 = vmatmul.mubr.f32.gmra.mrb[0].mxu0 %v3305
      %v3400 = vpop.f32.mrb[0].mxu0
      %v3401 = vadd.f32 0.0, %v3400
      %v3402 = vpop.f32.mrb[0].mxu0
      %3403 = vmatprep.mubr.f32.mxu0 0.0
      %3404 = vmatmul.mubr.f32.gmra.mrb[0].mxu0 %v3306
      %v3405 = vpop.f32.mrb[0].mxu0
      %v3406 = vadd.f32 0.0, %v3405
      %v3407 = vpop.f32.mrb[0].mxu0
      %3408 = vdwg.mxu0
      %v3409 = vadd.f32 %v3299, %v3391
      %v3410 = vadd.f32 %v3300, %v3396
      %v3411 = vadd.f32 %v3301, %v3401
      %v3412 = vadd.f32 %v3302, %v3406
      %v3413 = vld [vmem:[#allocation2 + $0x12] sm:$0xff]
      %v3414 = vld [vmem:[#allocation2 + $0x1a] sm:$0xff]
      %v3415 = vld [vmem:[#allocation2 + $0x22] sm:$0xff]
      %v3416 = vld [vmem:[#allocation2 + $0x2a] sm:$0xf]
      %s3417 = scalar_lea.vmem %s5, 1024
      %v3418 = vld [vmem:[%s3417] sm:$0xff]
      %v3419 = vld [vmem:[%s3417 + $0x8] sm:$0xff]
      %v3420 = vld [vmem:[%s3417 + $0x10] sm:$0xff]
      %v3421 = vld [vmem:[%s3417 + $0x18] sm:$0xff]
      %v3422 = vld [vmem:[%s3417 + $0x20] sm:$0xff]
      %v3423 = vld [vmem:[%s3417 + $0x28] sm:$0xff]
      %v3424 = vld [vmem:[%s3417 + $0x30] sm:$0xff]
      %v3425 = vld [vmem:[%s3417 + $0x38] sm:$0xff]
      %v3426 = vld [vmem:[%s3417 + $0x40] sm:$0xff]
      %v3427 = vld [vmem:[%s3417 + $0x48] sm:$0xff]
      %v3428 = vld [vmem:[%s3417 + $0x50] sm:$0xff]
      %v3429 = vld [vmem:[%s3417 + $0x58] sm:$0xff]
      %v3430 = vld [vmem:[%s3417 + $0x60] sm:$0xff]
      %v3431 = vld [vmem:[%s3417 + $0x68] sm:$0xff]
      %v3432 = vld [vmem:[%s3417 + $0x70] sm:$0xff]
      %v3433 = vld [vmem:[%s3417 + $0x78] sm:$0xff]
      %3434 = vmatprep.subr.mxu0 0.0
      %3435 = vmatpush1.msra.mxu0 %v3418
      %3436 = vmatprep.subr.mxu0 0.0
      %3437 = vmatpush1.msra.mxu0 %v3419
      %3438 = vmatprep.subr.mxu0 0.0
      %3439 = vmatpush1.msra.mxu0 %v3420
      %3440 = vmatprep.subr.mxu0 0.0
      %3441 = vmatpush1.msra.mxu0 %v3421
      %3442 = vmatprep.subr.mxu0 0.0
      %3443 = vmatpush1.msra.mxu0 %v3422
      %3444 = vmatprep.subr.mxu0 0.0
      %3445 = vmatpush1.msra.mxu0 %v3423
      %3446 = vmatprep.subr.mxu0 0.0
      %3447 = vmatpush1.msra.mxu0 %v3424
      %3448 = vmatprep.subr.mxu0 0.0
      %3449 = vmatpush1.msra.mxu0 %v3425
      %3450 = vmatprep.subr.mxu0 0.0
      %3451 = vmatpush1.msra.mxu0 %v3426
      %3452 = vmatprep.subr.mxu0 0.0
      %3453 = vmatpush1.msra.mxu0 %v3427
      %3454 = vmatprep.subr.mxu0 0.0
      %3455 = vmatpush1.msra.mxu0 %v3428
      %3456 = vmatprep.subr.mxu0 0.0
      %3457 = vmatpush1.msra.mxu0 %v3429
      %3458 = vmatprep.subr.mxu0 0.0
      %3459 = vmatpush1.msra.mxu0 %v3430
      %3460 = vmatprep.subr.mxu0 0.0
      %3461 = vmatpush1.msra.mxu0 %v3431
      %3462 = vmatprep.subr.mxu0 0.0
      %3463 = vmatpush1.msra.mxu0 %v3432
      %3464 = vmatprep.subr.mxu0 0.0
      %3465 = vmatpush1.msra.mxu0 %v3433
      %3466 = vmatprep.subr.mxu0 0.0
      %3467 = vmatpush1.msra.mxu0 0.0
      %3468 = vmatprep.subr.mxu0 0.0
      %3469 = vmatpush1.msra.mxu0 0.0
      %3470 = vmatprep.subr.mxu0 0.0
      %3471 = vmatpush1.msra.mxu0 0.0
      %3472 = vmatprep.subr.mxu0 0.0
      %3473 = vmatpush1.msra.mxu0 0.0
      %3474 = vmatprep.subr.mxu0 0.0
      %3475 = vmatpush1.msra.mxu0 0.0
      %3476 = vmatprep.subr.mxu0 0.0
      %3477 = vmatpush1.msra.mxu0 0.0
      %3478 = vmatprep.subr.mxu0 0.0
      %3479 = vmatpush1.msra.mxu0 0.0
      %3480 = vmatprep.subr.mxu0 0.0
      %3481 = vmatpush1.msra.mxu0 0.0
      %3482 = vmatprep.subr.mxu0 0.0
      %3483 = vmatpush1.msra.mxu0 0.0
      %3484 = vmatprep.subr.mxu0 0.0
      %3485 = vmatpush1.msra.mxu0 0.0
      %3486 = vmatprep.subr.mxu0 0.0
      %3487 = vmatpush1.msra.mxu0 0.0
      %3488 = vmatprep.subr.mxu0 0.0
      %3489 = vmatpush1.msra.mxu0 0.0
      %3490 = vmatprep.subr.mxu0 0.0
      %3491 = vmatpush1.msra.mxu0 0.0
      %3492 = vmatprep.subr.mxu0 0.0
      %3493 = vmatpush1.msra.mxu0 0.0
      %3494 = vmatprep.subr.mxu0 0.0
      %3495 = vmatpush1.msra.mxu0 0.0
      %3496 = vmatprep.subr.mxu0 0.0
      %3497 = vmatpush1.msra.mxu0 0.0
      %3498 = vmatprep.mubr.f32.mxu0 0.0
      %3499 = vmatmul.mubr.f32.gmra.mrb[0].mxu0 %v3413
      %v3500 = vpop.f32.mrb[0].mxu0
      %v3501 = vadd.f32 0.0, %v3500
      %v3502 = vpop.f32.mrb[0].mxu0
      %3503 = vmatprep.mubr.f32.mxu0 0.0
      %3504 = vmatmul.mubr.f32.gmra.mrb[0].mxu0 %v3414
      %v3505 = vpop.f32.mrb[0].mxu0
      %v3506 = vadd.f32 0.0, %v3505
      %v3507 = vpop.f32.mrb[0].mxu0
      %3508 = vmatprep.mubr.f32.mxu0 0.0
      %3509 = vmatmul.mubr.f32.gmra.mrb[0].mxu0 %v3415
      %v3510 = vpop.f32.mrb[0].mxu0
      %v3511 = vadd.f32 0.0, %v3510
      %v3512 = vpop.f32.mrb[0].mxu0
      %3513 = vmatprep.mubr.f32.mxu0 0.0
      %3514 = vmatmul.mubr.f32.gmra.mrb[0].mxu0 %v3416
      %v3515 = vpop.f32.mrb[0].mxu0
      %v3516 = vadd.f32 0.0, %v3515
      %v3517 = vpop.f32.mrb[0].mxu0
      %3518 = vdwg.mxu0
      %v3519 = vadd.f32 %v3409, %v3501
      %v3520 = vadd.f32 %v3410, %v3506
      %v3521 = vadd.f32 %v3411, %v3511
      %v3522 = vadd.f32 %v3412, %v3516
      %3523 = vst [vmem:[%s298] sm:$0xff] 0.0
      %3524 = vst [vmem:[%s298 + $0x8] sm:$0xff] 0.0
      %3525 = vst [vmem:[%s298 + $0x10] sm:$0xff] 0.0
      %3526 = vst [vmem:[%s298 + $0x18] sm:$0xff] 0.0
      %3527 = vst [vmem:[%s298 + $0x20] sm:$0xff] 0.0
      %3528 = vst [vmem:[%s298 + $0x28] sm:$0xff] 0.0
      %3529 = vst [vmem:[%s298 + $0x30] sm:$0xff] 0.0
      %3530 = vst [vmem:[%s298 + $0x38] sm:$0xff] 0.0
      %v3531 = vld [vmem:[%s6] sm:$0x1]
      %v3533 = vlaneseq
      %v3534 = vshrl.u32 %v3533, 7
      %v3535 = vsub.s32 0, %v3534
      %v3536 = vrot.slane %v3531, %v3535
      %v3538 = vadd.f32 %v3519, %v3536
      %v3539 = vadd.f32 %v3520, %v3536
      %v3540 = vadd.f32 %v3521, %v3536
      %v3541 = vadd.f32 %v3522, %v3536
      %3542 = vst [vmem:[%s298] sm:$0xff] %v3538
      %3543 = vst [vmem:[%s298 + $0x8] sm:$0xff] %v3539
      %3544 = vst [vmem:[%s298 + $0x10] sm:$0xff] %v3540
      %3545 = vst [vmem:[%s298 + $0x18] sm:$0xf] %v3541
      %p3546 = scmp.lt.s32.totalorder %s18, 1
      %s3547 = scalar_select %p3546, %s18, 1
      %s3548 = smul.addr %s3547, 8
      %s3549 = smul.addr %s3548, 8
      %s3550 = scalar_lea.vmem %s7, %s3549
      // Predicated region
      $region49: #{decoder_forward.7} parent=47 // pred_check
        %p3551 = pneg %p193
      $region50: #{decoder_forward.7} parent=47 // pred_check_branch
        %3553 = sbr.rel (%p3551) target = $region52
      $region51: #{decoder_forward.7} parent=47 // pred_region
        _
      $region52: #{decoder_forward.7} parent=47 // pred_fallthru
        _
    $region48: #{decoder_forward.7} parent=5 // pred_fallthru
      _
    %p3554 = scmp.le.s32.totalorder 2, %s13
    // Predicated region
    $region53: #{decoder_forward.7} parent=5 // pred_check
      %p3555 = pneg %p3554
    $region54: #{decoder_forward.7} parent=5 // pred_check_branch
      %3557 = sbr.rel (%p3555) target = $region56
    $region55: #{decoder_forward.7} parent=5 // pred_region
      %s3558 = ssub.s32 %s13, 2
      // Predicated region
      $region57: #{decoder_forward.7} parent=55 // pred_check
        %p3559 = pneg %p199
      $region58: #{decoder_forward.7} parent=55 // pred_check_branch
        %3561 = sbr.rel (%p3559) target = $region60
      $region59: #{decoder_forward.7} parent=55 // pred_region
        %p3562 = scmp.lt.s32.totalorder %s19, 1
        %s3563 = scalar_select %p3562, %s19, 1
        %s3564 = smul.addr %s3563, 8
        %s3565 = smul.addr %s3564, 8
        %s3566 = scalar_lea.vmem %s7, %s3565
      $region60: #{decoder_forward.7} parent=55 // pred_fallthru
        _
    $region56: #{decoder_forward.7} parent=5 // pred_fallthru
      _
  $region6: #{decoder_forward.7} parent=0 // loop_footer
    %s17 = sadd.s32 1, %s13
  $region7: #{decoder_forward.7} parent=0 // loop_footer_branch
    %12 = sbr.rel target = $region3
  $region8: #{decoder_forward.7} parent=0 // loop_exit
    _

</llo_original>
